<compile_context>
chip_gen: v7x
topology: tpu7x:2x2x1
jax: 0.10.0
libtpu: 0.0.40
codegen_flags: <defaults>
</compile_context>

<pallas_src>
import math
from functools import partial

import jax
import jax.numpy as jnp
from jax.experimental import pallas as pl
from jax.experimental.pallas import tpu as pltpu


# ---------------------------------------------------------------------------
# Hardware-adaptive budgets / tiling helpers
# ---------------------------------------------------------------------------
def _default_vmem_limit():
    """<= 48 MiB on 64-MiB-VMEM chips (v7x), up to 96 MiB on 128-MiB chips."""
    cap = 64 * 1024 * 1024
    try:
        cap = int(pltpu.get_tpu_info().vmem_capacity_bytes)
    except Exception:
        pass
    return int(min(cap * 3 // 4, 96 * 1024 * 1024))


_VMEM_LIMIT = _default_vmem_limit()


def _pick_tile(dim, align, cap, min_blocks=1):
    """Largest tile that divides `dim`, is a multiple of `align`, is <= `cap`
    and (when `dim` allows) leaves at least `min_blocks` blocks so a 'parallel'
    grid axis can be sharded across the 2 TensorCores of a v7x chip.
    Falls back to the full dimension (always layout-legal)."""
    if dim % align != 0:
        return dim
    limit = min(cap, dim)
    if min_blocks > 1 and dim // align >= min_blocks:
        limit = min(limit, dim // min_blocks)
    t = (limit // align) * align
    while t >= align:
        if dim % t == 0:
            return t
        t -= align
    return dim


def _mxu_align(dim):
    # 256-wide tiles fully occupy the 2x256^2 MXU of v6e/v7x; 128 is fine on v5e
    # and for dims that are not 256-multiples.
    return 256 if dim % 256 == 0 else 128


# ---------------------------------------------------------------------------
# Kernel 1: fully-fused SAGEConv ('mean' aggregate, 'sum' combine)
#   out = act( h_dst @ W_self + mean_k(h_src[nbr_idx[:, k]]) @ W_neigh + b )
# ---------------------------------------------------------------------------
def sage_conv_pallas(nbr_idx, h, w_self, w_neigh, b, activation="none"):
    n_dst, fanout = nbr_idx.shape
    n_src, d = h.shape
    f = w_self.shape[1]
    assert w_self.shape == (d, f) and w_neigh.shape == (d, f) and b.shape == (f,)
    assert n_dst == n_src  # self-contained block approximation: src == dst nodes

    tm = _pick_tile(n_dst, 8, 256, min_blocks=2)       # >=2 row blocks when possible
    tn = _pick_tile(f, _mxu_align(f), 512)
    inv_fanout = 1.0 / float(fanout)
    grid = (n_dst // tm, f // tn)

    def kernel(idx_ref, hsrc_ref, hdst_ref, ws_ref, wn_ref, b_ref, o_ref):
        # --- [tm, n_src] aggregation matrix: exact one-hot neighbour counts ---
        idx = idx_ref[...]                                        # [tm, fanout] i32
        iota = jax.lax.broadcasted_iota(jnp.int32, (tm, n_src), 1)
        counts = jnp.where(idx[:, 0:1] == iota, 1.0, 0.0)
        for k in range(1, fanout):                                # static unroll
            counts = counts + jnp.where(idx[:, k:k + 1] == iota, 1.0, 0.0)
        # --- neighbour mean on the MXU: (counts @ h_src) * 1/fanout ----------
        h_neigh = jnp.dot(counts.astype(jnp.bfloat16),
                          hsrc_ref[...].astype(jnp.bfloat16),
                          preferred_element_type=jnp.float32) * inv_fanout
        # --- 'sum' combine: two bf16 matmuls into one f32 accumulator --------
        acc = jnp.dot(hdst_ref[...].astype(jnp.bfloat16),
                      ws_ref[...].astype(jnp.bfloat16),
                      preferred_element_type=jnp.float32)
        acc = acc + jnp.dot(h_neigh.astype(jnp.bfloat16),
                            wn_ref[...].astype(jnp.bfloat16),
                            preferred_element_type=jnp.float32)
        y = acc + b_ref[...].astype(jnp.float32)
        if activation == "relu":
            y = jnp.maximum(y, 0.0)
        elif activation == "abs":
            y = jnp.abs(y)
        o_ref[...] = y.astype(o_ref.dtype)

    return pl.pallas_call(
        kernel,
        out_shape=jax.ShapeDtypeStruct((n_dst, f), h.dtype),
        grid_spec=pltpu.PrefetchScalarGridSpec(
            num_scalar_prefetch=0,
            grid=grid,
            in_specs=[
                pl.BlockSpec((tm, fanout), lambda i, j: (i, 0)),   # neighbour ids
                pl.BlockSpec((n_src, d), lambda i, j: (0, 0)),     # full h (gather src)
                pl.BlockSpec((tm, d), lambda i, j: (i, 0)),        # h tile (self path)
                pl.BlockSpec((d, tn), lambda i, j: (0, j)),        # W_self
                pl.BlockSpec((d, tn), lambda i, j: (0, j)),        # W_neigh
                pl.BlockSpec((1, tn), lambda i, j: (0, j)),        # bias
            ],
            out_specs=pl.BlockSpec((tm, tn), lambda i, j: (i, j)),
        ),
        compiler_params=pltpu.CompilerParams(
            dimension_semantics=("parallel", "parallel"),
            vmem_limit_bytes=_VMEM_LIMIT,
        ),
    )(nbr_idx, h, h, w_self, w_neigh, b.reshape(1, f))


# ---------------------------------------------------------------------------
# Kernel 2: fused multi-input linear   y = act( sum_i xs[i] @ ws[i] + b )
# Replaces feature concats (inception 'concat' + fc_combine) with multi-input
# accumulation so no [M, sum(K_i)] intermediate ever hits HBM.  K_i stay
# un-tiled (full): they are model feature dims and fit VMEM comfortably.
# ---------------------------------------------------------------------------
def linear_combine_pallas(xs, ws, b, activation="none"):
    xs, ws = list(xs), list(ws)
    n_in = len(xs)
    m = xs[0].shape[0]
    f = ws[0].shape[1]
    ks = [x.shape[1] for x in xs]
    for x, w, k in zip(xs, ws, ks):
        assert x.shape == (m, k) and w.shape == (k, f)
    assert b.shape == (f,)

    tm = _pick_tile(m, 8, 512, min_blocks=2)
    tn = _pick_tile(f, _mxu_align(f), 512)
    grid = (m // tm, f // tn)

    def kernel(*refs):
        x_refs = refs[:n_in]
        w_refs = refs[n_in:2 * n_in]
        b_ref = refs[2 * n_in]
        o_ref = refs[2 * n_in + 1]
        acc = jnp.dot(x_refs[0][...].astype(jnp.bfloat16),
                      w_refs[0][...].astype(jnp.bfloat16),
                      preferred_element_type=jnp.float32)
        for t in range(1, n_in):                                  # static unroll
            acc = acc + jnp.dot(x_refs[t][...].astype(jnp.bfloat16),
                                w_refs[t][...].astype(jnp.bfloat16),
                                preferred_element_type=jnp.float32)
        y = acc + b_ref[...].astype(jnp.float32)
        if activation == "relu":
            y = jnp.maximum(y, 0.0)
        elif activation == "abs":
            y = jnp.abs(y)
        o_ref[...] = y.astype(o_ref.dtype)

    in_specs = (
        [pl.BlockSpec((tm, k), lambda i, j: (i, 0)) for k in ks]
        + [pl.BlockSpec((k, tn), lambda i, j: (0, j)) for k in ks]
        + [pl.BlockSpec((1, tn), lambda i, j: (0, j))]
    )
    return pl.pallas_call(
        kernel,
        out_shape=jax.ShapeDtypeStruct((m, f), xs[0].dtype),
        grid_spec=pltpu.PrefetchScalarGridSpec(
            num_scalar_prefetch=0,
            grid=grid,
            in_specs=in_specs,
            out_specs=pl.BlockSpec((tm, tn), lambda i, j: (i, j)),
        ),
        compiler_params=pltpu.CompilerParams(
            dimension_semantics=("parallel", "parallel"),
            vmem_limit_bytes=_VMEM_LIMIT,
        ),
    )(*xs, *ws, b.reshape(1, f))


# ---------------------------------------------------------------------------
# Pure-JAX reference ops (for the correctness check)
# ---------------------------------------------------------------------------
def _apply_act(y, activation):
    if activation == "relu":
        return jnp.maximum(y, 0.0)
    if activation == "abs":
        return jnp.abs(y)
    return y


def sage_conv_ref(nbr_idx, h, w_self, w_neigh, b, activation="none"):
    gathered = jnp.take(h, nbr_idx, axis=0)          # [N, fanout, D]
    h_neigh = jnp.mean(gathered, axis=1)
    y = (jnp.dot(h, w_self, precision=jax.lax.Precision.HIGHEST)
         + jnp.dot(h_neigh, w_neigh, precision=jax.lax.Precision.HIGHEST) + b)
    return _apply_act(y, activation)


def linear_combine_ref(xs, ws, b, activation="none"):
    y = b
    for x, w in zip(xs, ws):
        y = y + jnp.dot(x, w, precision=jax.lax.Precision.HIGHEST)
    return _apply_act(y, activation)


PALLAS_OPS = {"sage": sage_conv_pallas, "linear": linear_combine_pallas}
REF_OPS = {"sage": sage_conv_ref, "linear": linear_combine_ref}


# ---------------------------------------------------------------------------
# Model: SAGEConv / GCN / InceptionBlock / InceptionGCN forward
# ---------------------------------------------------------------------------
def sage_conv(params, nbr_idx, h, activation, ops):
    return ops["sage"](nbr_idx, h, params["w_self"], params["w_neigh"],
                       params["b"], activation)


def gcn_forward(params, blocks, features, ops, final_activation="none"):
    # h = relu(fc_init(features)); dropout is a no-op for the configs used here.
    h = ops["linear"]([features], [params["fc_init"]["w"]],
                      params["fc_init"]["b"], "relu")
    n_layers = len(params["layers"])
    for i, lp in enumerate(params["layers"]):
        act = "relu" if i < n_layers - 1 else final_activation
        h = sage_conv(lp, blocks[i], h, act, ops)
    return h  # .squeeze(1) is a no-op for out_dim > 1


def inception_block_forward(params, blocks3, h, raw_features, ops):
    outs = []
    for i, gp in enumerate(params["gcns"]):
        depth = len(gp["layers"])                     # n_layers + 1 SAGEConv layers
        in_feats = h if i == 0 else raw_features      # blocks[-depth].srcdata['ntype']
        outs.append(gcn_forward(gp, blocks3[-depth:], in_feats, ops,
                                final_activation="abs"))   # th.abs fused in-kernel
    # combine_type='concat' + fc_combine == sum of per-branch matmuls (no concat)
    out_dim = outs[0].shape[1]
    w_full = params["fc_combine"]["w"]
    ws = [w_full[t * out_dim:(t + 1) * out_dim] for t in range(len(outs))]
    return ops["linear"](outs, ws, params["fc_combine"]["b"], "none")


def inception_gcn_forward(params, blocks, features, ops):
    h = gcn_forward(params["gcn1"], [blocks[0]], features, ops)
    for i, bp in enumerate(params["incp_blocks"]):
        h = inception_block_forward(bp, blocks[1 + 3 * i:4 + 3 * i], h, features, ops)
    h = gcn_forward(params["gcn2"], [blocks[-1]], h, ops)
    return h


# ---------------------------------------------------------------------------
# Parameter init (deterministic, nn.Linear-style uniform)
# ---------------------------------------------------------------------------
def _init_dense(key, fan_in, fan_out):
    kw, kb = jax.random.split(key)
    bound = 1.0 / math.sqrt(fan_in)
    return {"w": jax.random.uniform(kw, (fan_in, fan_out), jnp.float32, -bound, bound),
            "b": jax.random.uniform(kb, (fan_out,), jnp.float32, -bound, bound)}


def _init_sage(key, in_dim, out_dim):
    k1, k2 = jax.random.split(key)
    fs, fn = _init_dense(k1, in_dim, out_dim), _init_dense(k2, in_dim, out_dim)
    return {"w_self": fs["w"], "w_neigh": fn["w"], "b": fs["b"] + fn["b"]}


def _init_gcn(key, in_dim, hidden_dim, out_dim, n_layers):
    keys = jax.random.split(key, n_layers + 2)
    layers = []
    d = hidden_dim
    for i in range(n_layers):
        layers.append(_init_sage(keys[1 + i], d, hidden_dim))
        d = hidden_dim
    layers.append(_init_sage(keys[n_layers + 1], d, out_dim))
    return {"fc_init": _init_dense(keys[0], in_dim, hidden_dim), "layers": layers}


def _init_inception_block(key, in_dim, raw_dim, hidden_dim, out_dim, n_layers_list):
    keys = jax.random.split(key, len(n_layers_list) + 1)
    gcns = []
    for i, nl in enumerate(n_layers_list):
        gin = in_dim if i == 0 else raw_dim           # branches >0 read raw features
        gcns.append(_init_gcn(keys[i], gin, hidden_dim, out_dim, nl))
    fc_combine = _init_dense(keys[-1], len(n_layers_list) * out_dim, out_dim)
    return {"gcns": gcns, "fc_combine": fc_combine}


def init_inception_gcn(key, in_dim, hidden_dim, out_dim, n_layers):
    n_blocks = (n_layers - 1) // 3
    keys = jax.random.split(key, n_blocks + 2)
    gcn1 = _init_gcn(keys[0], in_dim, hidden_dim, hidden_dim, 0)
    incp = [_init_inception_block(keys[1 + i], hidden_dim, in_dim, hidden_dim,
                                  hidden_dim, [2, 1, 0]) for i in range(n_blocks)]
    gcn2 = _init_gcn(keys[-1], hidden_dim, hidden_dim, out_dim, 0)
    return {"gcn1": gcn1, "incp_blocks": incp, "gcn2": gcn2}


# ---------------------------------------------------------------------------
# Demo / self-check
# ---------------------------------------------------------------------------
if __name__ == "__main__":
    N_NODES = 256    # nodes per block (multiple of 8 -> clean sublane tiling)
    IN_DIM = 128     # raw feature dim (multiple of 128 -> lane-dense tiles)
    HIDDEN = 128
    OUT_DIM = 128
    FANOUT = 8       # sampled neighbours per node ('mean' aggregator axis)
    N_LAYERS = 4     # -> n_blocks = (4 - 1) // 3 = 1 inception block, 5 graph blocks

    root = jax.random.PRNGKey(0)
    k_feat, k_graph, k_param = jax.random.split(root, 3)

    features = jax.random.normal(k_feat, (N_NODES, IN_DIM), jnp.float32)
    n_graph_blocks = 1 + 3 * ((N_LAYERS - 1) // 3) + 1
    blocks = [
        jax.random.randint(k, (N_NODES, FANOUT), 0, N_NODES, jnp.int32)
        for k in jax.random.split(k_graph, n_graph_blocks)
    ]
    params = init_inception_gcn(k_param, IN_DIM, HIDDEN, OUT_DIM, N_LAYERS)

    fwd = jax.jit(partial(inception_gcn_forward, ops=PALLAS_OPS))
    out = jax.block_until_ready(fwd(params, blocks, features))
    assert out.shape == (N_NODES, OUT_DIM)

    ref = jax.block_until_ready(
        inception_gcn_forward(params, blocks, features, ops=REF_OPS))
    # bf16 MXU operands (with f32 accumulation) vs an all-f32 reference:
    # slightly looser tolerance than a pure-f32 kernel would need.
    assert jnp.allclose(out, ref, atol=5e-2, rtol=5e-2), \
        "Pallas forward mismatch vs pure-JAX reference"

    print("KERNEL_OK")
</pallas_src>

<mosaic_0001>
module attributes {stable_mosaic.version = 11 : i64} {
  func.func @kernel(%arg0: i32, %arg1: i32, %arg2: memref<128x128xf32, #tpu.memory_space<vmem>>, %arg3: memref<128x128xf32, #tpu.memory_space<vmem>>, %arg4: memref<1x128xf32, #tpu.memory_space<vmem>>, %arg5: memref<128x128xf32, #tpu.memory_space<vmem>>) attributes {dimension_semantics = [#tpu.dimension_semantics<parallel>, #tpu.dimension_semantics<parallel>], iteration_bounds = array<i64: 2, 1>, scalar_prefetch = 0 : i64, scratch_operands = 0 : i64, tpu.core_type = #tpu.core_type<tc>, window_params = [{transform_indices = @transform_0, window_bounds = array<i64: 128, 128>}, {transform_indices = @transform_1, window_bounds = array<i64: 128, 128>}, {transform_indices = @transform_2, window_bounds = array<i64: 1, 128>}, {transform_indices = @transform_3, window_bounds = array<i64: 128, 128>}]} {
    %c0 = arith.constant 0 : index
    %c0_0 = arith.constant 0 : index
    %0 = vector.load %arg2[%c0, %c0_0] : memref<128x128xf32, #tpu.memory_space<vmem>>, vector<128x128xf32>
    %1 = arith.truncf %0 : vector<128x128xf32> to vector<128x128xbf16>
    %c0_1 = arith.constant 0 : index
    %c0_2 = arith.constant 0 : index
    %2 = vector.load %arg3[%c0_1, %c0_2] : memref<128x128xf32, #tpu.memory_space<vmem>>, vector<128x128xf32>
    %3 = arith.truncf %2 : vector<128x128xf32> to vector<128x128xbf16>
    %cst = arith.constant dense<0.000000e+00> : vector<128x128xf32>
    %4 = tpu.matmul %1, %3, %cst {dimension_numbers = #tpu.dot_dimension_numbers<[1], [0], [0], [1], [0, 0, 1, 1], [], []>} : vector<128x128xbf16>, vector<128x128xbf16>, vector<128x128xf32> -> vector<128x128xf32>
    %c0_3 = arith.constant 0 : index
    %c0_4 = arith.constant 0 : index
    %5 = vector.load %arg4[%c0_3, %c0_4] : memref<1x128xf32, #tpu.memory_space<vmem>>, vector<1x128xf32>
    %6 = vector.broadcast %5 : vector<1x128xf32> to vector<128x128xf32>
    %7 = arith.addf %4, %6 : vector<128x128xf32>
    %cst_5 = arith.constant 0.000000e+00 : f32
    %8 = vector.broadcast %cst_5 : f32 to vector<128x128xf32>
    %9 = arith.maximumf %7, %8 : vector<128x128xf32>
    %c0_6 = arith.constant 0 : index
    %c0_7 = arith.constant 0 : index
    %10 = vector.load %arg5[%c0_6, %c0_7] : memref<128x128xf32, #tpu.memory_space<vmem>>, vector<128x128xf32>
    tpu.vector_store %arg5[%c0_6, %c0_7], %9 {strides = array<i32>} : memref<128x128xf32, #tpu.memory_space<vmem>>, vector<128x128xf32>,
    return
  }
  func.func @transform_0(%arg0: i32, %arg1: i32) -> (i32, i32) {
    %c0_i32 = arith.constant 0 : i32
    %c0_i32_0 = arith.constant 0 : i32
    return %arg0, %c0_i32 : i32, i32
  }
  func.func @transform_1(%arg0: i32, %arg1: i32) -> (i32, i32) {
    %c0_i32 = arith.constant 0 : i32
    %c0_i32_0 = arith.constant 0 : i32
    return %c0_i32, %arg1 : i32, i32
  }
  func.func @transform_2(%arg0: i32, %arg1: i32) -> (i32, i32) {
    %c0_i32 = arith.constant 0 : i32
    %c0_i32_0 = arith.constant 0 : i32
    return %c0_i32, %arg1 : i32, i32
  }
  func.func @transform_3(%arg0: i32, %arg1: i32) -> (i32, i32) {
    %c0_i32 = arith.constant 0 : i32
    return %arg0, %arg1 : i32, i32
  }
}

module attributes {stable_mosaic.version = 11 : i64} {
  func.func @kernel(%arg0: i32, %arg1: i32, %arg2: memref<128x8xi32, #tpu.memory_space<vmem>>, %arg3: memref<256x128xf32, #tpu.memory_space<vmem>>, %arg4: memref<128x128xf32, #tpu.memory_space<vmem>>, %arg5: memref<128x128xf32, #tpu.memory_space<vmem>>, %arg6: memref<128x128xf32, #tpu.memory_space<vmem>>, %arg7: memref<1x128xf32, #tpu.memory_space<vmem>>, %arg8: memref<128x128xf32, #tpu.memory_space<vmem>>) attributes {dimension_semantics = [#tpu.dimension_semantics<parallel>, #tpu.dimension_semantics<parallel>], iteration_bounds = array<i64: 2, 1>, scalar_prefetch = 0 : i64, scratch_operands = 0 : i64, tpu.core_type = #tpu.core_type<tc>, window_params = [{transform_indices = @transform_0, window_bounds = array<i64: 128, 8>}, {pipeline_mode = #tpu.pipeline_mode<synchronous>, transform_indices = @transform_1, window_bounds = array<i64: 256, 128>}, {transform_indices = @transform_2, window_bounds = array<i64: 128, 128>}, {transform_indices = @transform_3, window_bounds = array<i64: 128, 128>}, {transform_indices = @transform_4, window_bounds = array<i64: 128, 128>}, {transform_indices = @transform_5, window_bounds = array<i64: 1, 128>}, {transform_indices = @transform_6, window_bounds = array<i64: 128, 128>}]} {
    %c0 = arith.constant 0 : index
    %c0_0 = arith.constant 0 : index
    %0 = vector.load %arg2[%c0, %c0_0] : memref<128x8xi32, #tpu.memory_space<vmem>>, vector<128x8xi32>
    %1 = tpu.iota {dimensions = array<i32: 1>} : vector<128x256xi32>
    %2 = vector.extract_strided_slice %0 {offsets = [0, 0], sizes = [128, 1], strides = [1, 1]} : vector<128x8xi32> to vector<128x1xi32>
    %3 = vector.broadcast %2 : vector<128x1xi32> to vector<128x256xi32>
    %4 = arith.cmpi eq, %3, %1 : vector<128x256xi32>
    %cst = arith.constant 1.000000e+00 : f32
    %cst_1 = arith.constant 0.000000e+00 : f32
    %5 = vector.broadcast %cst : f32 to vector<128x256xf32>
    %6 = vector.broadcast %cst_1 : f32 to vector<128x256xf32>
    %7 = arith.select %4, %5, %6 : vector<128x256xi1>, vector<128x256xf32>
    %8 = vector.extract_strided_slice %0 {offsets = [0, 1], sizes = [128, 1], strides = [1, 1]} : vector<128x8xi32> to vector<128x1xi32>
    %9 = vector.broadcast %8 : vector<128x1xi32> to vector<128x256xi32>
    %10 = arith.cmpi eq, %9, %1 : vector<128x256xi32>
    %cst_2 = arith.constant 1.000000e+00 : f32
    %cst_3 = arith.constant 0.000000e+00 : f32
    %11 = vector.broadcast %cst_2 : f32 to vector<128x256xf32>
    %12 = vector.broadcast %cst_3 : f32 to vector<128x256xf32>
    %13 = arith.select %10, %11, %12 : vector<128x256xi1>, vector<128x256xf32>
    %14 = arith.addf %7, %13 : vector<128x256xf32>
    %15 = vector.extract_strided_slice %0 {offsets = [0, 2], sizes = [128, 1], strides = [1, 1]} : vector<128x8xi32> to vector<128x1xi32>
    %16 = vector.broadcast %15 : vector<128x1xi32> to vector<128x256xi32>
    %17 = arith.cmpi eq, %16, %1 : vector<128x256xi32>
    %cst_4 = arith.constant 1.000000e+00 : f32
    %cst_5 = arith.constant 0.000000e+00 : f32
    %18 = vector.broadcast %cst_4 : f32 to vector<128x256xf32>
    %19 = vector.broadcast %cst_5 : f32 to vector<128x256xf32>
    %20 = arith.select %17, %18, %19 : vector<128x256xi1>, vector<128x256xf32>
    %21 = arith.addf %14, %20 : vector<128x256xf32>
    %22 = vector.extract_strided_slice %0 {offsets = [0, 3], sizes = [128, 1], strides = [1, 1]} : vector<128x8xi32> to vector<128x1xi32>
    %23 = vector.broadcast %22 : vector<128x1xi32> to vector<128x256xi32>
    %24 = arith.cmpi eq, %23, %1 : vector<128x256xi32>
    %cst_6 = arith.constant 1.000000e+00 : f32
    %cst_7 = arith.constant 0.000000e+00 : f32
    %25 = vector.broadcast %cst_6 : f32 to vector<128x256xf32>
    %26 = vector.broadcast %cst_7 : f32 to vector<128x256xf32>
    %27 = arith.select %24, %25, %26 : vector<128x256xi1>, vector<128x256xf32>
    %28 = arith.addf %21, %27 : vector<128x256xf32>
    %29 = vector.extract_strided_slice %0 {offsets = [0, 4], sizes = [128, 1], strides = [1, 1]} : vector<128x8xi32> to vector<128x1xi32>
    %30 = vector.broadcast %29 : vector<128x1xi32> to vector<128x256xi32>
    %31 = arith.cmpi eq, %30, %1 : vector<128x256xi32>
    %cst_8 = arith.constant 1.000000e+00 : f32
    %cst_9 = arith.constant 0.000000e+00 : f32
    %32 = vector.broadcast %cst_8 : f32 to vector<128x256xf32>
    %33 = vector.broadcast %cst_9 : f32 to vector<128x256xf32>
    %34 = arith.select %31, %32, %33 : vector<128x256xi1>, vector<128x256xf32>
    %35 = arith.addf %28, %34 : vector<128x256xf32>
    %36 = vector.extract_strided_slice %0 {offsets = [0, 5], sizes = [128, 1], strides = [1, 1]} : vector<128x8xi32> to vector<128x1xi32>
    %37 = vector.broadcast %36 : vector<128x1xi32> to vector<128x256xi32>
    %38 = arith.cmpi eq, %37, %1 : vector<128x256xi32>
    %cst_10 = arith.constant 1.000000e+00 : f32
    %cst_11 = arith.constant 0.000000e+00 : f32
    %39 = vector.broadcast %cst_10 : f32 to vector<128x256xf32>
    %40 = vector.broadcast %cst_11 : f32 to vector<128x256xf32>
    %41 = arith.select %38, %39, %40 : vector<128x256xi1>, vector<128x256xf32>
    %42 = arith.addf %35, %41 : vector<128x256xf32>
    %43 = vector.extract_strided_slice %0 {offsets = [0, 6], sizes = [128, 1], strides = [1, 1]} : vector<128x8xi32> to vector<128x1xi32>
    %44 = vector.broadcast %43 : vector<128x1xi32> to vector<128x256xi32>
    %45 = arith.cmpi eq, %44, %1 : vector<128x256xi32>
    %cst_12 = arith.constant 1.000000e+00 : f32
    %cst_13 = arith.constant 0.000000e+00 : f32
    %46 = vector.broadcast %cst_12 : f32 to vector<128x256xf32>
    %47 = vector.broadcast %cst_13 : f32 to vector<128x256xf32>
    %48 = arith.select %45, %46, %47 : vector<128x256xi1>, vector<128x256xf32>
    %49 = arith.addf %42, %48 : vector<128x256xf32>
    %50 = vector.extract_strided_slice %0 {offsets = [0, 7], sizes = [128, 1], strides = [1, 1]} : vector<128x8xi32> to vector<128x1xi32>
    %51 = vector.broadcast %50 : vector<128x1xi32> to vector<128x256xi32>
    %52 = arith.cmpi eq, %51, %1 : vector<128x256xi32>
    %cst_14 = arith.constant 1.000000e+00 : f32
    %cst_15 = arith.constant 0.000000e+00 : f32
    %53 = vector.broadcast %cst_14 : f32 to vector<128x256xf32>
    %54 = vector.broadcast %cst_15 : f32 to vector<128x256xf32>
    %55 = arith.select %52, %53, %54 : vector<128x256xi1>, vector<128x256xf32>
    %56 = arith.addf %49, %55 : vector<128x256xf32>
    %57 = arith.truncf %56 : vector<128x256xf32> to vector<128x256xbf16>
    %c0_16 = arith.constant 0 : index
    %c0_17 = arith.constant 0 : index
    %58 = vector.load %arg3[%c0_16, %c0_17] : memref<256x128xf32, #tpu.memory_space<vmem>>, vector<256x128xf32>
    %59 = arith.truncf %58 : vector<256x128xf32> to vector<256x128xbf16>
    %cst_18 = arith.constant dense<0.000000e+00> : vector<128x128xf32>
    %60 = tpu.matmul %57, %59, %cst_18 {dimension_numbers = #tpu.dot_dimension_numbers<[1], [0], [0], [1], [0, 0, 1, 1], [], []>} : vector<128x256xbf16>, vector<256x128xbf16>, vector<128x128xf32> -> vector<128x128xf32>
    %cst_19 = arith.constant 1.250000e-01 : f32
    %61 = vector.broadcast %cst_19 : f32 to vector<128x128xf32>
    %62 = arith.mulf %60, %61 : vector<128x128xf32>
    %c0_20 = arith.constant 0 : index
    %c0_21 = arith.constant 0 : index
    %63 = vector.load %arg4[%c0_20, %c0_21] : memref<128x128xf32, #tpu.memory_space<vmem>>, vector<128x128xf32>
    %64 = arith.truncf %63 : vector<128x128xf32> to vector<128x128xbf16>
    %c0_22 = arith.constant 0 : index
    %c0_23 = arith.constant 0 : index
    %65 = vector.load %arg5[%c0_22, %c0_23] : memref<128x128xf32, #tpu.memory_space<vmem>>, vector<128x128xf32>
    %66 = arith.truncf %65 : vector<128x128xf32> to vector<128x128xbf16>
    %cst_24 = arith.constant dense<0.000000e+00> : vector<128x128xf32>
    %67 = tpu.matmul %64, %66, %cst_24 {dimension_numbers = #tpu.dot_dimension_numbers<[1], [0], [0], [1], [0, 0, 1, 1], [], []>} : vector<128x128xbf16>, vector<128x128xbf16>, vector<128x128xf32> -> vector<128x128xf32>
    %68 = arith.truncf %62 : vector<128x128xf32> to vector<128x128xbf16>
    %c0_25 = arith.constant 0 : index
    %c0_26 = arith.constant 0 : index
    %69 = vector.load %arg6[%c0_25, %c0_26] : memref<128x128xf32, #tpu.memory_space<vmem>>, vector<128x128xf32>
    %70 = arith.truncf %69 : vector<128x128xf32> to vector<128x128xbf16>
    %cst_27 = arith.constant dense<0.000000e+00> : vector<128x128xf32>
    %71 = tpu.matmul %68, %70, %cst_27 {dimension_numbers = #tpu.dot_dimension_numbers<[1], [0], [0], [1], [0, 0, 1, 1], [], []>} : vector<128x128xbf16>, vector<128x128xbf16>, vector<128x128xf32> -> vector<128x128xf32>
    %72 = arith.addf %67, %71 : vector<128x128xf32>
    %c0_28 = arith.constant 0 : index
    %c0_29 = arith.constant 0 : index
    %73 = vector.load %arg7[%c0_28, %c0_29] : memref<1x128xf32, #tpu.memory_space<vmem>>, vector<1x128xf32>
    %74 = vector.broadcast %73 : vector<1x128xf32> to vector<128x128xf32>
    %75 = arith.addf %72, %74 : vector<128x128xf32>
    %c0_30 = arith.constant 0 : index
    %c0_31 = arith.constant 0 : index
    %76 = vector.load %arg8[%c0_30, %c0_31] : memref<128x128xf32, #tpu.memory_space<vmem>>, vector<128x128xf32>
    tpu.vector_store %arg8[%c0_30, %c0_31], %75 {strides = array<i32>} : memref<128x128xf32, #tpu.memory_space<vmem>>, vector<128x128xf32>,
    return
  }
  func.func @transform_0(%arg0: i32, %arg1: i32) -> (i32, i32) {
    %c0_i32 = arith.constant 0 : i32
    %c0_i32_0 = arith.constant 0 : i32
    return %arg0, %c0_i32 : i32, i32
  }
  func.func @transform_1(%arg0: i32, %arg1: i32) -> (i32, i32) {
    %c0_i32 = arith.constant 0 : i32
    %c0_i32_0 = arith.constant 0 : i32
    %c0_i32_1 = arith.constant 0 : i32
    return %c0_i32, %c0_i32_0 : i32, i32
  }
  func.func @transform_2(%arg0: i32, %arg1: i32) -> (i32, i32) {
    %c0_i32 = arith.constant 0 : i32
    %c0_i32_0 = arith.constant 0 : i32
    return %arg0, %c0_i32 : i32, i32
  }
  func.func @transform_3(%arg0: i32, %arg1: i32) -> (i32, i32) {
    %c0_i32 = arith.constant 0 : i32
    %c0_i32_0 = arith.constant 0 : i32
    return %c0_i32, %arg1 : i32, i32
  }
  func.func @transform_4(%arg0: i32, %arg1: i32) -> (i32, i32) {
    %c0_i32 = arith.constant 0 : i32
    %c0_i32_0 = arith.constant 0 : i32
    return %c0_i32, %arg1 : i32, i32
  }
  func.func @transform_5(%arg0: i32, %arg1: i32) -> (i32, i32) {
    %c0_i32 = arith.constant 0 : i32
    %c0_i32_0 = arith.constant 0 : i32
    return %c0_i32, %arg1 : i32, i32
  }
  func.func @transform_6(%arg0: i32, %arg1: i32) -> (i32, i32) {
    %c0_i32 = arith.constant 0 : i32
    return %arg0, %arg1 : i32, i32
  }
}

module attributes {stable_mosaic.version = 11 : i64} {
  func.func @kernel(%arg0: i32, %arg1: i32, %arg2: memref<128x8xi32, #tpu.memory_space<vmem>>, %arg3: memref<256x128xf32, #tpu.memory_space<vmem>>, %arg4: memref<128x128xf32, #tpu.memory_space<vmem>>, %arg5: memref<128x128xf32, #tpu.memory_space<vmem>>, %arg6: memref<128x128xf32, #tpu.memory_space<vmem>>, %arg7: memref<1x128xf32, #tpu.memory_space<vmem>>, %arg8: memref<128x128xf32, #tpu.memory_space<vmem>>) attributes {dimension_semantics = [#tpu.dimension_semantics<parallel>, #tpu.dimension_semantics<parallel>], iteration_bounds = array<i64: 2, 1>, scalar_prefetch = 0 : i64, scratch_operands = 0 : i64, tpu.core_type = #tpu.core_type<tc>, window_params = [{transform_indices = @transform_0, window_bounds = array<i64: 128, 8>}, {pipeline_mode = #tpu.pipeline_mode<synchronous>, transform_indices = @transform_1, window_bounds = array<i64: 256, 128>}, {transform_indices = @transform_2, window_bounds = array<i64: 128, 128>}, {transform_indices = @transform_3, window_bounds = array<i64: 128, 128>}, {transform_indices = @transform_4, window_bounds = array<i64: 128, 128>}, {transform_indices = @transform_5, window_bounds = array<i64: 1, 128>}, {transform_indices = @transform_6, window_bounds = array<i64: 128, 128>}]} {
    %c0 = arith.constant 0 : index
    %c0_0 = arith.constant 0 : index
    %0 = vector.load %arg2[%c0, %c0_0] : memref<128x8xi32, #tpu.memory_space<vmem>>, vector<128x8xi32>
    %1 = tpu.iota {dimensions = array<i32: 1>} : vector<128x256xi32>
    %2 = vector.extract_strided_slice %0 {offsets = [0, 0], sizes = [128, 1], strides = [1, 1]} : vector<128x8xi32> to vector<128x1xi32>
    %3 = vector.broadcast %2 : vector<128x1xi32> to vector<128x256xi32>
    %4 = arith.cmpi eq, %3, %1 : vector<128x256xi32>
    %cst = arith.constant 1.000000e+00 : f32
    %cst_1 = arith.constant 0.000000e+00 : f32
    %5 = vector.broadcast %cst : f32 to vector<128x256xf32>
    %6 = vector.broadcast %cst_1 : f32 to vector<128x256xf32>
    %7 = arith.select %4, %5, %6 : vector<128x256xi1>, vector<128x256xf32>
    %8 = vector.extract_strided_slice %0 {offsets = [0, 1], sizes = [128, 1], strides = [1, 1]} : vector<128x8xi32> to vector<128x1xi32>
    %9 = vector.broadcast %8 : vector<128x1xi32> to vector<128x256xi32>
    %10 = arith.cmpi eq, %9, %1 : vector<128x256xi32>
    %cst_2 = arith.constant 1.000000e+00 : f32
    %cst_3 = arith.constant 0.000000e+00 : f32
    %11 = vector.broadcast %cst_2 : f32 to vector<128x256xf32>
    %12 = vector.broadcast %cst_3 : f32 to vector<128x256xf32>
    %13 = arith.select %10, %11, %12 : vector<128x256xi1>, vector<128x256xf32>
    %14 = arith.addf %7, %13 : vector<128x256xf32>
    %15 = vector.extract_strided_slice %0 {offsets = [0, 2], sizes = [128, 1], strides = [1, 1]} : vector<128x8xi32> to vector<128x1xi32>
    %16 = vector.broadcast %15 : vector<128x1xi32> to vector<128x256xi32>
    %17 = arith.cmpi eq, %16, %1 : vector<128x256xi32>
    %cst_4 = arith.constant 1.000000e+00 : f32
    %cst_5 = arith.constant 0.000000e+00 : f32
    %18 = vector.broadcast %cst_4 : f32 to vector<128x256xf32>
    %19 = vector.broadcast %cst_5 : f32 to vector<128x256xf32>
    %20 = arith.select %17, %18, %19 : vector<128x256xi1>, vector<128x256xf32>
    %21 = arith.addf %14, %20 : vector<128x256xf32>
    %22 = vector.extract_strided_slice %0 {offsets = [0, 3], sizes = [128, 1], strides = [1, 1]} : vector<128x8xi32> to vector<128x1xi32>
    %23 = vector.broadcast %22 : vector<128x1xi32> to vector<128x256xi32>
    %24 = arith.cmpi eq, %23, %1 : vector<128x256xi32>
    %cst_6 = arith.constant 1.000000e+00 : f32
    %cst_7 = arith.constant 0.000000e+00 : f32
    %25 = vector.broadcast %cst_6 : f32 to vector<128x256xf32>
    %26 = vector.broadcast %cst_7 : f32 to vector<128x256xf32>
    %27 = arith.select %24, %25, %26 : vector<128x256xi1>, vector<128x256xf32>
    %28 = arith.addf %21, %27 : vector<128x256xf32>
    %29 = vector.extract_strided_slice %0 {offsets = [0, 4], sizes = [128, 1], strides = [1, 1]} : vector<128x8xi32> to vector<128x1xi32>
    %30 = vector.broadcast %29 : vector<128x1xi32> to vector<128x256xi32>
    %31 = arith.cmpi eq, %30, %1 : vector<128x256xi32>
    %cst_8 = arith.constant 1.000000e+00 : f32
    %cst_9 = arith.constant 0.000000e+00 : f32
    %32 = vector.broadcast %cst_8 : f32 to vector<128x256xf32>
    %33 = vector.broadcast %cst_9 : f32 to vector<128x256xf32>
    %34 = arith.select %31, %32, %33 : vector<128x256xi1>, vector<128x256xf32>
    %35 = arith.addf %28, %34 : vector<128x256xf32>
    %36 = vector.extract_strided_slice %0 {offsets = [0, 5], sizes = [128, 1], strides = [1, 1]} : vector<128x8xi32> to vector<128x1xi32>
    %37 = vector.broadcast %36 : vector<128x1xi32> to vector<128x256xi32>
    %38 = arith.cmpi eq, %37, %1 : vector<128x256xi32>
    %cst_10 = arith.constant 1.000000e+00 : f32
    %cst_11 = arith.constant 0.000000e+00 : f32
    %39 = vector.broadcast %cst_10 : f32 to vector<128x256xf32>
    %40 = vector.broadcast %cst_11 : f32 to vector<128x256xf32>
    %41 = arith.select %38, %39, %40 : vector<128x256xi1>, vector<128x256xf32>
    %42 = arith.addf %35, %41 : vector<128x256xf32>
    %43 = vector.extract_strided_slice %0 {offsets = [0, 6], sizes = [128, 1], strides = [1, 1]} : vector<128x8xi32> to vector<128x1xi32>
    %44 = vector.broadcast %43 : vector<128x1xi32> to vector<128x256xi32>
    %45 = arith.cmpi eq, %44, %1 : vector<128x256xi32>
    %cst_12 = arith.constant 1.000000e+00 : f32
    %cst_13 = arith.constant 0.000000e+00 : f32
    %46 = vector.broadcast %cst_12 : f32 to vector<128x256xf32>
    %47 = vector.broadcast %cst_13 : f32 to vector<128x256xf32>
    %48 = arith.select %45, %46, %47 : vector<128x256xi1>, vector<128x256xf32>
    %49 = arith.addf %42, %48 : vector<128x256xf32>
    %50 = vector.extract_strided_slice %0 {offsets = [0, 7], sizes = [128, 1], strides = [1, 1]} : vector<128x8xi32> to vector<128x1xi32>
    %51 = vector.broadcast %50 : vector<128x1xi32> to vector<128x256xi32>
    %52 = arith.cmpi eq, %51, %1 : vector<128x256xi32>
    %cst_14 = arith.constant 1.000000e+00 : f32
    %cst_15 = arith.constant 0.000000e+00 : f32
    %53 = vector.broadcast %cst_14 : f32 to vector<128x256xf32>
    %54 = vector.broadcast %cst_15 : f32 to vector<128x256xf32>
    %55 = arith.select %52, %53, %54 : vector<128x256xi1>, vector<128x256xf32>
    %56 = arith.addf %49, %55 : vector<128x256xf32>
    %57 = arith.truncf %56 : vector<128x256xf32> to vector<128x256xbf16>
    %c0_16 = arith.constant 0 : index
    %c0_17 = arith.constant 0 : index
    %58 = vector.load %arg3[%c0_16, %c0_17] : memref<256x128xf32, #tpu.memory_space<vmem>>, vector<256x128xf32>
    %59 = arith.truncf %58 : vector<256x128xf32> to vector<256x128xbf16>
    %cst_18 = arith.constant dense<0.000000e+00> : vector<128x128xf32>
    %60 = tpu.matmul %57, %59, %cst_18 {dimension_numbers = #tpu.dot_dimension_numbers<[1], [0], [0], [1], [0, 0, 1, 1], [], []>} : vector<128x256xbf16>, vector<256x128xbf16>, vector<128x128xf32> -> vector<128x128xf32>
    %cst_19 = arith.constant 1.250000e-01 : f32
    %61 = vector.broadcast %cst_19 : f32 to vector<128x128xf32>
    %62 = arith.mulf %60, %61 : vector<128x128xf32>
    %c0_20 = arith.constant 0 : index
    %c0_21 = arith.constant 0 : index
    %63 = vector.load %arg4[%c0_20, %c0_21] : memref<128x128xf32, #tpu.memory_space<vmem>>, vector<128x128xf32>
    %64 = arith.truncf %63 : vector<128x128xf32> to vector<128x128xbf16>
    %c0_22 = arith.constant 0 : index
    %c0_23 = arith.constant 0 : index
    %65 = vector.load %arg5[%c0_22, %c0_23] : memref<128x128xf32, #tpu.memory_space<vmem>>, vector<128x128xf32>
    %66 = arith.truncf %65 : vector<128x128xf32> to vector<128x128xbf16>
    %cst_24 = arith.constant dense<0.000000e+00> : vector<128x128xf32>
    %67 = tpu.matmul %64, %66, %cst_24 {dimension_numbers = #tpu.dot_dimension_numbers<[1], [0], [0], [1], [0, 0, 1, 1], [], []>} : vector<128x128xbf16>, vector<128x128xbf16>, vector<128x128xf32> -> vector<128x128xf32>
    %68 = arith.truncf %62 : vector<128x128xf32> to vector<128x128xbf16>
    %c0_25 = arith.constant 0 : index
    %c0_26 = arith.constant 0 : index
    %69 = vector.load %arg6[%c0_25, %c0_26] : memref<128x128xf32, #tpu.memory_space<vmem>>, vector<128x128xf32>
    %70 = arith.truncf %69 : vector<128x128xf32> to vector<128x128xbf16>
    %cst_27 = arith.constant dense<0.000000e+00> : vector<128x128xf32>
    %71 = tpu.matmul %68, %70, %cst_27 {dimension_numbers = #tpu.dot_dimension_numbers<[1], [0], [0], [1], [0, 0, 1, 1], [], []>} : vector<128x128xbf16>, vector<128x128xbf16>, vector<128x128xf32> -> vector<128x128xf32>
    %72 = arith.addf %67, %71 : vector<128x128xf32>
    %c0_28 = arith.constant 0 : index
    %c0_29 = arith.constant 0 : index
    %73 = vector.load %arg7[%c0_28, %c0_29] : memref<1x128xf32, #tpu.memory_space<vmem>>, vector<1x128xf32>
    %74 = vector.broadcast %73 : vector<1x128xf32> to vector<128x128xf32>
    %75 = arith.addf %72, %74 : vector<128x128xf32>
    %cst_30 = arith.constant 0.000000e+00 : f32
    %76 = vector.broadcast %cst_30 : f32 to vector<128x128xf32>
    %77 = arith.maximumf %75, %76 : vector<128x128xf32>
    %c0_31 = arith.constant 0 : index
    %c0_32 = arith.constant 0 : index
    %78 = vector.load %arg8[%c0_31, %c0_32] : memref<128x128xf32, #tpu.memory_space<vmem>>, vector<128x128xf32>
    tpu.vector_store %arg8[%c0_31, %c0_32], %77 {strides = array<i32>} : memref<128x128xf32, #tpu.memory_space<vmem>>, vector<128x128xf32>,
    return
  }
  func.func @transform_0(%arg0: i32, %arg1: i32) -> (i32, i32) {
    %c0_i32 = arith.constant 0 : i32
    %c0_i32_0 = arith.constant 0 : i32
    return %arg0, %c0_i32 : i32, i32
  }
  func.func @transform_1(%arg0: i32, %arg1: i32) -> (i32, i32) {
    %c0_i32 = arith.constant 0 : i32
    %c0_i32_0 = arith.constant 0 : i32
    %c0_i32_1 = arith.constant 0 : i32
    return %c0_i32, %c0_i32_0 : i32, i32
  }
  func.func @transform_2(%arg0: i32, %arg1: i32) -> (i32, i32) {
    %c0_i32 = arith.constant 0 : i32
    %c0_i32_0 = arith.constant 0 : i32
    return %arg0, %c0_i32 : i32, i32
  }
  func.func @transform_3(%arg0: i32, %arg1: i32) -> (i32, i32) {
    %c0_i32 = arith.constant 0 : i32
    %c0_i32_0 = arith.constant 0 : i32
    return %c0_i32, %arg1 : i32, i32
  }
  func.func @transform_4(%arg0: i32, %arg1: i32) -> (i32, i32) {
    %c0_i32 = arith.constant 0 : i32
    %c0_i32_0 = arith.constant 0 : i32
    return %c0_i32, %arg1 : i32, i32
  }
  func.func @transform_5(%arg0: i32, %arg1: i32) -> (i32, i32) {
    %c0_i32 = arith.constant 0 : i32
    %c0_i32_0 = arith.constant 0 : i32
    return %c0_i32, %arg1 : i32, i32
  }
  func.func @transform_6(%arg0: i32, %arg1: i32) -> (i32, i32) {
    %c0_i32 = arith.constant 0 : i32
    return %arg0, %arg1 : i32, i32
  }
}

module attributes {stable_mosaic.version = 11 : i64} {
  func.func @kernel(%arg0: i32, %arg1: i32, %arg2: memref<128x8xi32, #tpu.memory_space<vmem>>, %arg3: memref<256x128xf32, #tpu.memory_space<vmem>>, %arg4: memref<128x128xf32, #tpu.memory_space<vmem>>, %arg5: memref<128x128xf32, #tpu.memory_space<vmem>>, %arg6: memref<128x128xf32, #tpu.memory_space<vmem>>, %arg7: memref<1x128xf32, #tpu.memory_space<vmem>>, %arg8: memref<128x128xf32, #tpu.memory_space<vmem>>) attributes {dimension_semantics = [#tpu.dimension_semantics<parallel>, #tpu.dimension_semantics<parallel>], iteration_bounds = array<i64: 2, 1>, scalar_prefetch = 0 : i64, scratch_operands = 0 : i64, tpu.core_type = #tpu.core_type<tc>, window_params = [{transform_indices = @transform_0, window_bounds = array<i64: 128, 8>}, {pipeline_mode = #tpu.pipeline_mode<synchronous>, transform_indices = @transform_1, window_bounds = array<i64: 256, 128>}, {transform_indices = @transform_2, window_bounds = array<i64: 128, 128>}, {transform_indices = @transform_3, window_bounds = array<i64: 128, 128>}, {transform_indices = @transform_4, window_bounds = array<i64: 128, 128>}, {transform_indices = @transform_5, window_bounds = array<i64: 1, 128>}, {transform_indices = @transform_6, window_bounds = array<i64: 128, 128>}]} {
    %c0 = arith.constant 0 : index
    %c0_0 = arith.constant 0 : index
    %0 = vector.load %arg2[%c0, %c0_0] : memref<128x8xi32, #tpu.memory_space<vmem>>, vector<128x8xi32>
    %1 = tpu.iota {dimensions = array<i32: 1>} : vector<128x256xi32>
    %2 = vector.extract_strided_slice %0 {offsets = [0, 0], sizes = [128, 1], strides = [1, 1]} : vector<128x8xi32> to vector<128x1xi32>
    %3 = vector.broadcast %2 : vector<128x1xi32> to vector<128x256xi32>
    %4 = arith.cmpi eq, %3, %1 : vector<128x256xi32>
    %cst = arith.constant 1.000000e+00 : f32
    %cst_1 = arith.constant 0.000000e+00 : f32
    %5 = vector.broadcast %cst : f32 to vector<128x256xf32>
    %6 = vector.broadcast %cst_1 : f32 to vector<128x256xf32>
    %7 = arith.select %4, %5, %6 : vector<128x256xi1>, vector<128x256xf32>
    %8 = vector.extract_strided_slice %0 {offsets = [0, 1], sizes = [128, 1], strides = [1, 1]} : vector<128x8xi32> to vector<128x1xi32>
    %9 = vector.broadcast %8 : vector<128x1xi32> to vector<128x256xi32>
    %10 = arith.cmpi eq, %9, %1 : vector<128x256xi32>
    %cst_2 = arith.constant 1.000000e+00 : f32
    %cst_3 = arith.constant 0.000000e+00 : f32
    %11 = vector.broadcast %cst_2 : f32 to vector<128x256xf32>
    %12 = vector.broadcast %cst_3 : f32 to vector<128x256xf32>
    %13 = arith.select %10, %11, %12 : vector<128x256xi1>, vector<128x256xf32>
    %14 = arith.addf %7, %13 : vector<128x256xf32>
    %15 = vector.extract_strided_slice %0 {offsets = [0, 2], sizes = [128, 1], strides = [1, 1]} : vector<128x8xi32> to vector<128x1xi32>
    %16 = vector.broadcast %15 : vector<128x1xi32> to vector<128x256xi32>
    %17 = arith.cmpi eq, %16, %1 : vector<128x256xi32>
    %cst_4 = arith.constant 1.000000e+00 : f32
    %cst_5 = arith.constant 0.000000e+00 : f32
    %18 = vector.broadcast %cst_4 : f32 to vector<128x256xf32>
    %19 = vector.broadcast %cst_5 : f32 to vector<128x256xf32>
    %20 = arith.select %17, %18, %19 : vector<128x256xi1>, vector<128x256xf32>
    %21 = arith.addf %14, %20 : vector<128x256xf32>
    %22 = vector.extract_strided_slice %0 {offsets = [0, 3], sizes = [128, 1], strides = [1, 1]} : vector<128x8xi32> to vector<128x1xi32>
    %23 = vector.broadcast %22 : vector<128x1xi32> to vector<128x256xi32>
    %24 = arith.cmpi eq, %23, %1 : vector<128x256xi32>
    %cst_6 = arith.constant 1.000000e+00 : f32
    %cst_7 = arith.constant 0.000000e+00 : f32
    %25 = vector.broadcast %cst_6 : f32 to vector<128x256xf32>
    %26 = vector.broadcast %cst_7 : f32 to vector<128x256xf32>
    %27 = arith.select %24, %25, %26 : vector<128x256xi1>, vector<128x256xf32>
    %28 = arith.addf %21, %27 : vector<128x256xf32>
    %29 = vector.extract_strided_slice %0 {offsets = [0, 4], sizes = [128, 1], strides = [1, 1]} : vector<128x8xi32> to vector<128x1xi32>
    %30 = vector.broadcast %29 : vector<128x1xi32> to vector<128x256xi32>
    %31 = arith.cmpi eq, %30, %1 : vector<128x256xi32>
    %cst_8 = arith.constant 1.000000e+00 : f32
    %cst_9 = arith.constant 0.000000e+00 : f32
    %32 = vector.broadcast %cst_8 : f32 to vector<128x256xf32>
    %33 = vector.broadcast %cst_9 : f32 to vector<128x256xf32>
    %34 = arith.select %31, %32, %33 : vector<128x256xi1>, vector<128x256xf32>
    %35 = arith.addf %28, %34 : vector<128x256xf32>
    %36 = vector.extract_strided_slice %0 {offsets = [0, 5], sizes = [128, 1], strides = [1, 1]} : vector<128x8xi32> to vector<128x1xi32>
    %37 = vector.broadcast %36 : vector<128x1xi32> to vector<128x256xi32>
    %38 = arith.cmpi eq, %37, %1 : vector<128x256xi32>
    %cst_10 = arith.constant 1.000000e+00 : f32
    %cst_11 = arith.constant 0.000000e+00 : f32
    %39 = vector.broadcast %cst_10 : f32 to vector<128x256xf32>
    %40 = vector.broadcast %cst_11 : f32 to vector<128x256xf32>
    %41 = arith.select %38, %39, %40 : vector<128x256xi1>, vector<128x256xf32>
    %42 = arith.addf %35, %41 : vector<128x256xf32>
    %43 = vector.extract_strided_slice %0 {offsets = [0, 6], sizes = [128, 1], strides = [1, 1]} : vector<128x8xi32> to vector<128x1xi32>
    %44 = vector.broadcast %43 : vector<128x1xi32> to vector<128x256xi32>
    %45 = arith.cmpi eq, %44, %1 : vector<128x256xi32>
    %cst_12 = arith.constant 1.000000e+00 : f32
    %cst_13 = arith.constant 0.000000e+00 : f32
    %46 = vector.broadcast %cst_12 : f32 to vector<128x256xf32>
    %47 = vector.broadcast %cst_13 : f32 to vector<128x256xf32>
    %48 = arith.select %45, %46, %47 : vector<128x256xi1>, vector<128x256xf32>
    %49 = arith.addf %42, %48 : vector<128x256xf32>
    %50 = vector.extract_strided_slice %0 {offsets = [0, 7], sizes = [128, 1], strides = [1, 1]} : vector<128x8xi32> to vector<128x1xi32>
    %51 = vector.broadcast %50 : vector<128x1xi32> to vector<128x256xi32>
    %52 = arith.cmpi eq, %51, %1 : vector<128x256xi32>
    %cst_14 = arith.constant 1.000000e+00 : f32
    %cst_15 = arith.constant 0.000000e+00 : f32
    %53 = vector.broadcast %cst_14 : f32 to vector<128x256xf32>
    %54 = vector.broadcast %cst_15 : f32 to vector<128x256xf32>
    %55 = arith.select %52, %53, %54 : vector<128x256xi1>, vector<128x256xf32>
    %56 = arith.addf %49, %55 : vector<128x256xf32>
    %57 = arith.truncf %56 : vector<128x256xf32> to vector<128x256xbf16>
    %c0_16 = arith.constant 0 : index
    %c0_17 = arith.constant 0 : index
    %58 = vector.load %arg3[%c0_16, %c0_17] : memref<256x128xf32, #tpu.memory_space<vmem>>, vector<256x128xf32>
    %59 = arith.truncf %58 : vector<256x128xf32> to vector<256x128xbf16>
    %cst_18 = arith.constant dense<0.000000e+00> : vector<128x128xf32>
    %60 = tpu.matmul %57, %59, %cst_18 {dimension_numbers = #tpu.dot_dimension_numbers<[1], [0], [0], [1], [0, 0, 1, 1], [], []>} : vector<128x256xbf16>, vector<256x128xbf16>, vector<128x128xf32> -> vector<128x128xf32>
    %cst_19 = arith.constant 1.250000e-01 : f32
    %61 = vector.broadcast %cst_19 : f32 to vector<128x128xf32>
    %62 = arith.mulf %60, %61 : vector<128x128xf32>
    %c0_20 = arith.constant 0 : index
    %c0_21 = arith.constant 0 : index
    %63 = vector.load %arg4[%c0_20, %c0_21] : memref<128x128xf32, #tpu.memory_space<vmem>>, vector<128x128xf32>
    %64 = arith.truncf %63 : vector<128x128xf32> to vector<128x128xbf16>
    %c0_22 = arith.constant 0 : index
    %c0_23 = arith.constant 0 : index
    %65 = vector.load %arg5[%c0_22, %c0_23] : memref<128x128xf32, #tpu.memory_space<vmem>>, vector<128x128xf32>
    %66 = arith.truncf %65 : vector<128x128xf32> to vector<128x128xbf16>
    %cst_24 = arith.constant dense<0.000000e+00> : vector<128x128xf32>
    %67 = tpu.matmul %64, %66, %cst_24 {dimension_numbers = #tpu.dot_dimension_numbers<[1], [0], [0], [1], [0, 0, 1, 1], [], []>} : vector<128x128xbf16>, vector<128x128xbf16>, vector<128x128xf32> -> vector<128x128xf32>
    %68 = arith.truncf %62 : vector<128x128xf32> to vector<128x128xbf16>
    %c0_25 = arith.constant 0 : index
    %c0_26 = arith.constant 0 : index
    %69 = vector.load %arg6[%c0_25, %c0_26] : memref<128x128xf32, #tpu.memory_space<vmem>>, vector<128x128xf32>
    %70 = arith.truncf %69 : vector<128x128xf32> to vector<128x128xbf16>
    %cst_27 = arith.constant dense<0.000000e+00> : vector<128x128xf32>
    %71 = tpu.matmul %68, %70, %cst_27 {dimension_numbers = #tpu.dot_dimension_numbers<[1], [0], [0], [1], [0, 0, 1, 1], [], []>} : vector<128x128xbf16>, vector<128x128xbf16>, vector<128x128xf32> -> vector<128x128xf32>
    %72 = arith.addf %67, %71 : vector<128x128xf32>
    %c0_28 = arith.constant 0 : index
    %c0_29 = arith.constant 0 : index
    %73 = vector.load %arg7[%c0_28, %c0_29] : memref<1x128xf32, #tpu.memory_space<vmem>>, vector<1x128xf32>
    %74 = vector.broadcast %73 : vector<1x128xf32> to vector<128x128xf32>
    %75 = arith.addf %72, %74 : vector<128x128xf32>
    %76 = math.absf %75 : vector<128x128xf32>
    %c0_30 = arith.constant 0 : index
    %c0_31 = arith.constant 0 : index
    %77 = vector.load %arg8[%c0_30, %c0_31] : memref<128x128xf32, #tpu.memory_space<vmem>>, vector<128x128xf32>
    tpu.vector_store %arg8[%c0_30, %c0_31], %76 {strides = array<i32>} : memref<128x128xf32, #tpu.memory_space<vmem>>, vector<128x128xf32>,
    return
  }
  func.func @transform_0(%arg0: i32, %arg1: i32) -> (i32, i32) {
    %c0_i32 = arith.constant 0 : i32
    %c0_i32_0 = arith.constant 0 : i32
    return %arg0, %c0_i32 : i32, i32
  }
  func.func @transform_1(%arg0: i32, %arg1: i32) -> (i32, i32) {
    %c0_i32 = arith.constant 0 : i32
    %c0_i32_0 = arith.constant 0 : i32
    %c0_i32_1 = arith.constant 0 : i32
    return %c0_i32, %c0_i32_0 : i32, i32
  }
  func.func @transform_2(%arg0: i32, %arg1: i32) -> (i32, i32) {
    %c0_i32 = arith.constant 0 : i32
    %c0_i32_0 = arith.constant 0 : i32
    return %arg0, %c0_i32 : i32, i32
  }
  func.func @transform_3(%arg0: i32, %arg1: i32) -> (i32, i32) {
    %c0_i32 = arith.constant 0 : i32
    %c0_i32_0 = arith.constant 0 : i32
    return %c0_i32, %arg1 : i32, i32
  }
  func.func @transform_4(%arg0: i32, %arg1: i32) -> (i32, i32) {
    %c0_i32 = arith.constant 0 : i32
    %c0_i32_0 = arith.constant 0 : i32
    return %c0_i32, %arg1 : i32, i32
  }
  func.func @transform_5(%arg0: i32, %arg1: i32) -> (i32, i32) {
    %c0_i32 = arith.constant 0 : i32
    %c0_i32_0 = arith.constant 0 : i32
    return %c0_i32, %arg1 : i32, i32
  }
  func.func @transform_6(%arg0: i32, %arg1: i32) -> (i32, i32) {
    %c0_i32 = arith.constant 0 : i32
    return %arg0, %arg1 : i32, i32
  }
}

module attributes {stable_mosaic.version = 11 : i64} {
  func.func @kernel(%arg0: i32, %arg1: i32, %arg2: memref<128x128xf32, #tpu.memory_space<vmem>>, %arg3: memref<128x128xf32, #tpu.memory_space<vmem>>, %arg4: memref<128x128xf32, #tpu.memory_space<vmem>>, %arg5: memref<128x128xf32, #tpu.memory_space<vmem>>, %arg6: memref<128x128xf32, #tpu.memory_space<vmem>>, %arg7: memref<128x128xf32, #tpu.memory_space<vmem>>, %arg8: memref<1x128xf32, #tpu.memory_space<vmem>>, %arg9: memref<128x128xf32, #tpu.memory_space<vmem>>) attributes {dimension_semantics = [#tpu.dimension_semantics<parallel>, #tpu.dimension_semantics<parallel>], iteration_bounds = array<i64: 2, 1>, scalar_prefetch = 0 : i64, scratch_operands = 0 : i64, tpu.core_type = #tpu.core_type<tc>, window_params = [{transform_indices = @transform_0, window_bounds = array<i64: 128, 128>}, {transform_indices = @transform_1, window_bounds = array<i64: 128, 128>}, {transform_indices = @transform_2, window_bounds = array<i64: 128, 128>}, {transform_indices = @transform_3, window_bounds = array<i64: 128, 128>}, {transform_indices = @transform_4, window_bounds = array<i64: 128, 128>}, {transform_indices = @transform_5, window_bounds = array<i64: 128, 128>}, {transform_indices = @transform_6, window_bounds = array<i64: 1, 128>}, {transform_indices = @transform_7, window_bounds = array<i64: 128, 128>}]} {
    %c0 = arith.constant 0 : index
    %c0_0 = arith.constant 0 : index
    %0 = vector.load %arg2[%c0, %c0_0] : memref<128x128xf32, #tpu.memory_space<vmem>>, vector<128x128xf32>
    %1 = arith.truncf %0 : vector<128x128xf32> to vector<128x128xbf16>
    %c0_1 = arith.constant 0 : index
    %c0_2 = arith.constant 0 : index
    %2 = vector.load %arg5[%c0_1, %c0_2] : memref<128x128xf32, #tpu.memory_space<vmem>>, vector<128x128xf32>
    %3 = arith.truncf %2 : vector<128x128xf32> to vector<128x128xbf16>
    %cst = arith.constant dense<0.000000e+00> : vector<128x128xf32>
    %4 = tpu.matmul %1, %3, %cst {dimension_numbers = #tpu.dot_dimension_numbers<[1], [0], [0], [1], [0, 0, 1, 1], [], []>} : vector<128x128xbf16>, vector<128x128xbf16>, vector<128x128xf32> -> vector<128x128xf32>
    %c0_3 = arith.constant 0 : index
    %c0_4 = arith.constant 0 : index
    %5 = vector.load %arg3[%c0_3, %c0_4] : memref<128x128xf32, #tpu.memory_space<vmem>>, vector<128x128xf32>
    %6 = arith.truncf %5 : vector<128x128xf32> to vector<128x128xbf16>
    %c0_5 = arith.constant 0 : index
    %c0_6 = arith.constant 0 : index
    %7 = vector.load %arg6[%c0_5, %c0_6] : memref<128x128xf32, #tpu.memory_space<vmem>>, vector<128x128xf32>
    %8 = arith.truncf %7 : vector<128x128xf32> to vector<128x128xbf16>
    %cst_7 = arith.constant dense<0.000000e+00> : vector<128x128xf32>
    %9 = tpu.matmul %6, %8, %cst_7 {dimension_numbers = #tpu.dot_dimension_numbers<[1], [0], [0], [1], [0, 0, 1, 1], [], []>} : vector<128x128xbf16>, vector<128x128xbf16>, vector<128x128xf32> -> vector<128x128xf32>
    %10 = arith.addf %4, %9 : vector<128x128xf32>
    %c0_8 = arith.constant 0 : index
    %c0_9 = arith.constant 0 : index
    %11 = vector.load %arg4[%c0_8, %c0_9] : memref<128x128xf32, #tpu.memory_space<vmem>>, vector<128x128xf32>
    %12 = arith.truncf %11 : vector<128x128xf32> to vector<128x128xbf16>
    %c0_10 = arith.constant 0 : index
    %c0_11 = arith.constant 0 : index
    %13 = vector.load %arg7[%c0_10, %c0_11] : memref<128x128xf32, #tpu.memory_space<vmem>>, vector<128x128xf32>
    %14 = arith.truncf %13 : vector<128x128xf32> to vector<128x128xbf16>
    %cst_12 = arith.constant dense<0.000000e+00> : vector<128x128xf32>
    %15 = tpu.matmul %12, %14, %cst_12 {dimension_numbers = #tpu.dot_dimension_numbers<[1], [0], [0], [1], [0, 0, 1, 1], [], []>} : vector<128x128xbf16>, vector<128x128xbf16>, vector<128x128xf32> -> vector<128x128xf32>
    %16 = arith.addf %10, %15 : vector<128x128xf32>
    %c0_13 = arith.constant 0 : index
    %c0_14 = arith.constant 0 : index
    %17 = vector.load %arg8[%c0_13, %c0_14] : memref<1x128xf32, #tpu.memory_space<vmem>>, vector<1x128xf32>
    %18 = vector.broadcast %17 : vector<1x128xf32> to vector<128x128xf32>
    %19 = arith.addf %16, %18 : vector<128x128xf32>
    %c0_15 = arith.constant 0 : index
    %c0_16 = arith.constant 0 : index
    %20 = vector.load %arg9[%c0_15, %c0_16] : memref<128x128xf32, #tpu.memory_space<vmem>>, vector<128x128xf32>
    tpu.vector_store %arg9[%c0_15, %c0_16], %19 {strides = array<i32>} : memref<128x128xf32, #tpu.memory_space<vmem>>, vector<128x128xf32>,
    return
  }
  func.func @transform_0(%arg0: i32, %arg1: i32) -> (i32, i32) {
    %c0_i32 = arith.constant 0 : i32
    %c0_i32_0 = arith.constant 0 : i32
    return %arg0, %c0_i32 : i32, i32
  }
  func.func @transform_1(%arg0: i32, %arg1: i32) -> (i32, i32) {
    %c0_i32 = arith.constant 0 : i32
    %c0_i32_0 = arith.constant 0 : i32
    return %arg0, %c0_i32 : i32, i32
  }
  func.func @transform_2(%arg0: i32, %arg1: i32) -> (i32, i32) {
    %c0_i32 = arith.constant 0 : i32
    %c0_i32_0 = arith.constant 0 : i32
    return %arg0, %c0_i32 : i32, i32
  }
  func.func @transform_3(%arg0: i32, %arg1: i32) -> (i32, i32) {
    %c0_i32 = arith.constant 0 : i32
    %c0_i32_0 = arith.constant 0 : i32
    return %c0_i32, %arg1 : i32, i32
  }
  func.func @transform_4(%arg0: i32, %arg1: i32) -> (i32, i32) {
    %c0_i32 = arith.constant 0 : i32
    %c0_i32_0 = arith.constant 0 : i32
    return %c0_i32, %arg1 : i32, i32
  }
  func.func @transform_5(%arg0: i32, %arg1: i32) -> (i32, i32) {
    %c0_i32 = arith.constant 0 : i32
    %c0_i32_0 = arith.constant 0 : i32
    return %c0_i32, %arg1 : i32, i32
  }
  func.func @transform_6(%arg0: i32, %arg1: i32) -> (i32, i32) {
    %c0_i32 = arith.constant 0 : i32
    %c0_i32_0 = arith.constant 0 : i32
    return %c0_i32, %arg1 : i32, i32
  }
  func.func @transform_7(%arg0: i32, %arg1: i32) -> (i32, i32) {
    %c0_i32 = arith.constant 0 : i32
    return %arg0, %arg1 : i32, i32
  }
}

module attributes {stable_mosaic.version = 11 : i64} {
  func.func @kernel(%arg0: i32, %arg1: i32, %arg2: memref<128x8xi32, #tpu.memory_space<vmem>>, %arg3: memref<256x128xf32, #tpu.memory_space<vmem>>, %arg4: memref<128x128xf32, #tpu.memory_space<vmem>>, %arg5: memref<128x128xf32, #tpu.memory_space<vmem>>, %arg6: memref<128x128xf32, #tpu.memory_space<vmem>>, %arg7: memref<1x128xf32, #tpu.memory_space<vmem>>, %arg8: memref<128x128xf32, #tpu.memory_space<vmem>>) attributes {dimension_semantics = [#tpu.dimension_semantics<parallel>, #tpu.dimension_semantics<parallel>], iteration_bounds = array<i64: 2, 1>, scalar_prefetch = 0 : i64, scratch_operands = 0 : i64, tpu.core_type = #tpu.core_type<tc>, window_params = [{transform_indices = @transform_0, window_bounds = array<i64: 128, 8>}, {pipeline_mode = #tpu.pipeline_mode<synchronous>, transform_indices = @transform_1, window_bounds = array<i64: 256, 128>}, {transform_indices = @transform_2, window_bounds = array<i64: 128, 128>}, {transform_indices = @transform_3, window_bounds = array<i64: 128, 128>}, {transform_indices = @transform_4, window_bounds = array<i64: 128, 128>}, {transform_indices = @transform_5, window_bounds = array<i64: 1, 128>}, {transform_indices = @transform_6, window_bounds = array<i64: 128, 128>}]} {
    %c0 = arith.constant 0 : index
    %c0_0 = arith.constant 0 : index
    %0 = vector.load %arg2[%c0, %c0_0] : memref<128x8xi32, #tpu.memory_space<vmem>>, vector<128x8xi32>
    %1 = tpu.iota {dimensions = array<i32: 1>} : vector<128x256xi32>
    %2 = vector.extract_strided_slice %0 {offsets = [0, 0], sizes = [128, 1], strides = [1, 1]} : vector<128x8xi32> to vector<128x1xi32>
    %3 = vector.broadcast %2 : vector<128x1xi32> to vector<128x256xi32>
    %4 = arith.cmpi eq, %3, %1 : vector<128x256xi32>
    %cst = arith.constant 1.000000e+00 : f32
    %cst_1 = arith.constant 0.000000e+00 : f32
    %5 = vector.broadcast %cst : f32 to vector<128x256xf32>
    %6 = vector.broadcast %cst_1 : f32 to vector<128x256xf32>
    %7 = arith.select %4, %5, %6 : vector<128x256xi1>, vector<128x256xf32>
    %8 = vector.extract_strided_slice %0 {offsets = [0, 1], sizes = [128, 1], strides = [1, 1]} : vector<128x8xi32> to vector<128x1xi32>
    %9 = vector.broadcast %8 : vector<128x1xi32> to vector<128x256xi32>
    %10 = arith.cmpi eq, %9, %1 : vector<128x256xi32>
    %cst_2 = arith.constant 1.000000e+00 : f32
    %cst_3 = arith.constant 0.000000e+00 : f32
    %11 = vector.broadcast %cst_2 : f32 to vector<128x256xf32>
    %12 = vector.broadcast %cst_3 : f32 to vector<128x256xf32>
    %13 = arith.select %10, %11, %12 : vector<128x256xi1>, vector<128x256xf32>
    %14 = arith.addf %7, %13 : vector<128x256xf32>
    %15 = vector.extract_strided_slice %0 {offsets = [0, 2], sizes = [128, 1], strides = [1, 1]} : vector<128x8xi32> to vector<128x1xi32>
    %16 = vector.broadcast %15 : vector<128x1xi32> to vector<128x256xi32>
    %17 = arith.cmpi eq, %16, %1 : vector<128x256xi32>
    %cst_4 = arith.constant 1.000000e+00 : f32
    %cst_5 = arith.constant 0.000000e+00 : f32
    %18 = vector.broadcast %cst_4 : f32 to vector<128x256xf32>
    %19 = vector.broadcast %cst_5 : f32 to vector<128x256xf32>
    %20 = arith.select %17, %18, %19 : vector<128x256xi1>, vector<128x256xf32>
    %21 = arith.addf %14, %20 : vector<128x256xf32>
    %22 = vector.extract_strided_slice %0 {offsets = [0, 3], sizes = [128, 1], strides = [1, 1]} : vector<128x8xi32> to vector<128x1xi32>
    %23 = vector.broadcast %22 : vector<128x1xi32> to vector<128x256xi32>
    %24 = arith.cmpi eq, %23, %1 : vector<128x256xi32>
    %cst_6 = arith.constant 1.000000e+00 : f32
    %cst_7 = arith.constant 0.000000e+00 : f32
    %25 = vector.broadcast %cst_6 : f32 to vector<128x256xf32>
    %26 = vector.broadcast %cst_7 : f32 to vector<128x256xf32>
    %27 = arith.select %24, %25, %26 : vector<128x256xi1>, vector<128x256xf32>
    %28 = arith.addf %21, %27 : vector<128x256xf32>
    %29 = vector.extract_strided_slice %0 {offsets = [0, 4], sizes = [128, 1], strides = [1, 1]} : vector<128x8xi32> to vector<128x1xi32>
    %30 = vector.broadcast %29 : vector<128x1xi32> to vector<128x256xi32>
    %31 = arith.cmpi eq, %30, %1 : vector<128x256xi32>
    %cst_8 = arith.constant 1.000000e+00 : f32
    %cst_9 = arith.constant 0.000000e+00 : f32
    %32 = vector.broadcast %cst_8 : f32 to vector<128x256xf32>
    %33 = vector.broadcast %cst_9 : f32 to vector<128x256xf32>
    %34 = arith.select %31, %32, %33 : vector<128x256xi1>, vector<128x256xf32>
    %35 = arith.addf %28, %34 : vector<128x256xf32>
    %36 = vector.extract_strided_slice %0 {offsets = [0, 5], sizes = [128, 1], strides = [1, 1]} : vector<128x8xi32> to vector<128x1xi32>
    %37 = vector.broadcast %36 : vector<128x1xi32> to vector<128x256xi32>
    %38 = arith.cmpi eq, %37, %1 : vector<128x256xi32>
    %cst_10 = arith.constant 1.000000e+00 : f32
    %cst_11 = arith.constant 0.000000e+00 : f32
    %39 = vector.broadcast %cst_10 : f32 to vector<128x256xf32>
    %40 = vector.broadcast %cst_11 : f32 to vector<128x256xf32>
    %41 = arith.select %38, %39, %40 : vector<128x256xi1>, vector<128x256xf32>
    %42 = arith.addf %35, %41 : vector<128x256xf32>
    %43 = vector.extract_strided_slice %0 {offsets = [0, 6], sizes = [128, 1], strides = [1, 1]} : vector<128x8xi32> to vector<128x1xi32>
    %44 = vector.broadcast %43 : vector<128x1xi32> to vector<128x256xi32>
    %45 = arith.cmpi eq, %44, %1 : vector<128x256xi32>
    %cst_12 = arith.constant 1.000000e+00 : f32
    %cst_13 = arith.constant 0.000000e+00 : f32
    %46 = vector.broadcast %cst_12 : f32 to vector<128x256xf32>
    %47 = vector.broadcast %cst_13 : f32 to vector<128x256xf32>
    %48 = arith.select %45, %46, %47 : vector<128x256xi1>, vector<128x256xf32>
    %49 = arith.addf %42, %48 : vector<128x256xf32>
    %50 = vector.extract_strided_slice %0 {offsets = [0, 7], sizes = [128, 1], strides = [1, 1]} : vector<128x8xi32> to vector<128x1xi32>
    %51 = vector.broadcast %50 : vector<128x1xi32> to vector<128x256xi32>
    %52 = arith.cmpi eq, %51, %1 : vector<128x256xi32>
    %cst_14 = arith.constant 1.000000e+00 : f32
    %cst_15 = arith.constant 0.000000e+00 : f32
    %53 = vector.broadcast %cst_14 : f32 to vector<128x256xf32>
    %54 = vector.broadcast %cst_15 : f32 to vector<128x256xf32>
    %55 = arith.select %52, %53, %54 : vector<128x256xi1>, vector<128x256xf32>
    %56 = arith.addf %49, %55 : vector<128x256xf32>
    %57 = arith.truncf %56 : vector<128x256xf32> to vector<128x256xbf16>
    %c0_16 = arith.constant 0 : index
    %c0_17 = arith.constant 0 : index
    %58 = vector.load %arg3[%c0_16, %c0_17] : memref<256x128xf32, #tpu.memory_space<vmem>>, vector<256x128xf32>
    %59 = arith.truncf %58 : vector<256x128xf32> to vector<256x128xbf16>
    %cst_18 = arith.constant dense<0.000000e+00> : vector<128x128xf32>
    %60 = tpu.matmul %57, %59, %cst_18 {dimension_numbers = #tpu.dot_dimension_numbers<[1], [0], [0], [1], [0, 0, 1, 1], [], []>} : vector<128x256xbf16>, vector<256x128xbf16>, vector<128x128xf32> -> vector<128x128xf32>
    %cst_19 = arith.constant 1.250000e-01 : f32
    %61 = vector.broadcast %cst_19 : f32 to vector<128x128xf32>
    %62 = arith.mulf %60, %61 : vector<128x128xf32>
    %c0_20 = arith.constant 0 : index
    %c0_21 = arith.constant 0 : index
    %63 = vector.load %arg4[%c0_20, %c0_21] : memref<128x128xf32, #tpu.memory_space<vmem>>, vector<128x128xf32>
    %64 = arith.truncf %63 : vector<128x128xf32> to vector<128x128xbf16>
    %c0_22 = arith.constant 0 : index
    %c0_23 = arith.constant 0 : index
    %65 = vector.load %arg5[%c0_22, %c0_23] : memref<128x128xf32, #tpu.memory_space<vmem>>, vector<128x128xf32>
    %66 = arith.truncf %65 : vector<128x128xf32> to vector<128x128xbf16>
    %cst_24 = arith.constant dense<0.000000e+00> : vector<128x128xf32>
    %67 = tpu.matmul %64, %66, %cst_24 {dimension_numbers = #tpu.dot_dimension_numbers<[1], [0], [0], [1], [0, 0, 1, 1], [], []>} : vector<128x128xbf16>, vector<128x128xbf16>, vector<128x128xf32> -> vector<128x128xf32>
    %68 = arith.truncf %62 : vector<128x128xf32> to vector<128x128xbf16>
    %c0_25 = arith.constant 0 : index
    %c0_26 = arith.constant 0 : index
    %69 = vector.load %arg6[%c0_25, %c0_26] : memref<128x128xf32, #tpu.memory_space<vmem>>, vector<128x128xf32>
    %70 = arith.truncf %69 : vector<128x128xf32> to vector<128x128xbf16>
    %cst_27 = arith.constant dense<0.000000e+00> : vector<128x128xf32>
    %71 = tpu.matmul %68, %70, %cst_27 {dimension_numbers = #tpu.dot_dimension_numbers<[1], [0], [0], [1], [0, 0, 1, 1], [], []>} : vector<128x128xbf16>, vector<128x128xbf16>, vector<128x128xf32> -> vector<128x128xf32>
    %72 = arith.addf %67, %71 : vector<128x128xf32>
    %c0_28 = arith.constant 0 : index
    %c0_29 = arith.constant 0 : index
    %73 = vector.load %arg7[%c0_28, %c0_29] : memref<1x128xf32, #tpu.memory_space<vmem>>, vector<1x128xf32>
    %74 = vector.broadcast %73 : vector<1x128xf32> to vector<128x128xf32>
    %75 = arith.addf %72, %74 : vector<128x128xf32>
    %c0_30 = arith.constant 0 : index
    %c0_31 = arith.constant 0 : index
    %76 = vector.load %arg8[%c0_30, %c0_31] : memref<128x128xf32, #tpu.memory_space<vmem>>, vector<128x128xf32>
    tpu.vector_store %arg8[%c0_30, %c0_31], %75 {strides = array<i32>} : memref<128x128xf32, #tpu.memory_space<vmem>>, vector<128x128xf32>,
    return
  }
  func.func @transform_0(%arg0: i32, %arg1: i32) -> (i32, i32) {
    %c0_i32 = arith.constant 0 : i32
    %c0_i32_0 = arith.constant 0 : i32
    return %arg0, %c0_i32 : i32, i32
  }
  func.func @transform_1(%arg0: i32, %arg1: i32) -> (i32, i32) {
    %c0_i32 = arith.constant 0 : i32
    %c0_i32_0 = arith.constant 0 : i32
    %c0_i32_1 = arith.constant 0 : i32
    return %c0_i32, %c0_i32_0 : i32, i32
  }
  func.func @transform_2(%arg0: i32, %arg1: i32) -> (i32, i32) {
    %c0_i32 = arith.constant 0 : i32
    %c0_i32_0 = arith.constant 0 : i32
    return %arg0, %c0_i32 : i32, i32
  }
  func.func @transform_3(%arg0: i32, %arg1: i32) -> (i32, i32) {
    %c0_i32 = arith.constant 0 : i32
    %c0_i32_0 = arith.constant 0 : i32
    return %c0_i32, %arg1 : i32, i32
  }
  func.func @transform_4(%arg0: i32, %arg1: i32) -> (i32, i32) {
    %c0_i32 = arith.constant 0 : i32
    %c0_i32_0 = arith.constant 0 : i32
    return %c0_i32, %arg1 : i32, i32
  }
  func.func @transform_5(%arg0: i32, %arg1: i32) -> (i32, i32) {
    %c0_i32 = arith.constant 0 : i32
    %c0_i32_0 = arith.constant 0 : i32
    return %c0_i32, %arg1 : i32, i32
  }
  func.func @transform_6(%arg0: i32, %arg1: i32) -> (i32, i32) {
    %c0_i32 = arith.constant 0 : i32
    return %arg0, %arg1 : i32, i32
  }
}

</mosaic_0001>

<llo_original>
// kernel: inception_gcn_forward.14
$region0: #{inception_gcn_forward.14}
  #allocation0 [shape = 'u32[]', space=smem, size = 0x4, offset = 0x4, fixed_abs, tag = 'smem constant byte address 0x4 - core index']
  #allocation1 [shape = 'u32[144,128]{1,0:T(1,128)}', space=vmem, size = 0x12000, scoped, tag = 'internal scratch']
  %s0 = inlined_call_operand.vmem [shape: f32[256,128], index: 0, kind: input, shape index: {}]
  %s1 = inlined_call_operand.vmem [shape: f32[128,128], index: 1, kind: input, shape index: {}]
  %s2 = inlined_call_operand.vmem [shape: f32[1,128], index: 2, kind: input, shape index: {}]
  %s3 = inlined_call_operand.vmem [shape: f32[256,128], index: 3, kind: output, shape index: {}]
  %s4 = sld [smem:[#allocation0]]
  $region45: #{inception_gcn_forward.14} parent=0
    _
  %s6 = ssub.s32 1, %s4
  %s7 = scalar_select 0, %s6, %s4
  loop: start=0, step=1, limit=4
  $region2: #{inception_gcn_forward.14} parent=0 // loop_pre_header
    _
  $region3: #{inception_gcn_forward.14} parent=0 // loop_header
    %s9 = sphi 0, %s13
    %p10 = scmp.ge.s32.totalorder %s9, 4
    %s16 = sphi 0, %s28
    %s17 = sphi 0, %s24
    %s18 = sphi 0, %s16
    %s19 = sphi 0, %s17
    %s20 = sphi 0, %s18
    %s21 = sphi 0, %s19
    %s31 = sphi 0, %s33
    %s34 = sphi 0, %s31
    %s35 = sphi 0, %s34
    %s51 = sphi 0, %s35
    %s57 = sphi 0, %s59
    %s60 = sphi 0, %s57
    %s61 = sphi 0, %s60
    %s77 = sphi 0, %s61
    %s83 = sphi 0, %s85
    %s86 = sphi 0, %s83
    %s87 = sphi 0, %s86
    %s103 = sphi 0, %s87
    %s111 = sphi 0, %s113
    %s114 = sphi 0, %s111
    %s115 = sphi 0, %s114
    %s131 = sphi 0, %s115
  $region4: #{inception_gcn_forward.14} parent=0 // loop_header_branch
    %12 = sbr.rel (%p10) target = $region8
  $region5: #{inception_gcn_forward.14} parent=0 // loop_body
    %s14 = ssub.s32 %s9, 1
    %s15 = ssub.s32 %s9, 2
    %s22 = sadd.s32 1, %s17
    %p23 = scmp.ge.s32.totalorder %s22, 1
    %s24 = scalar_select %p23, 0, %s22
    %s25 = sadd.s32 1, %s16
    %s26 = scalar_select %p23, %s25, %s16
    %p27 = scmp.ge.s32.totalorder %s26, 2
    %s28 = scalar_select %p27, 0, %s26
    %s29 = ssub.s32 %s16, %s28
    %p30 = scmp.eq.s32.totalorder %s29, 0
    %s32 = sadd.s32 %s31, 1
    %s33 = scalar_select %p30, %s31, %s32
    %p36 = pneg %p30
    %p37 = scmp.eq.s32.totalorder %s9, 1
    %p38 = por %p36, %p37
    %p39 = scmp.ne.s32.totalorder %s31, %s34
    %p40 = scmp.eq.s32.totalorder %s9, 0
    %p41 = por %p39, %p40
    %p42 = scmp.ne.s32.totalorder %s31, %s34
    %p43 = scmp.eq.s32.totalorder %s14, 1
    %p44 = por %p42, %p43
    %p45 = scmp.ne.s32.totalorder %s34, %s35
    %p46 = scmp.eq.s32.totalorder %s14, 0
    %p47 = por %p45, %p46
    %p48 = scmp.ne.s32.totalorder %s34, %s35
    %p49 = scmp.eq.s32.totalorder %s15, 1
    %p50 = por %p48, %p49
    %p52 = scmp.ne.s32.totalorder %s35, %s51
    %p53 = scmp.eq.s32.totalorder %s15, 0
    %p54 = por %p52, %p53
    %s55 = ssub.s32 %s17, %s24
    %p56 = scmp.eq.s32.totalorder %s55, 0
    %s58 = sadd.s32 %s57, 1
    %s59 = scalar_select %p56, %s57, %s58
    %p62 = pneg %p56
    %p63 = scmp.eq.s32.totalorder %s9, 1
    %p64 = por %p62, %p63
    %p65 = scmp.ne.s32.totalorder %s57, %s60
    %p66 = scmp.eq.s32.totalorder %s9, 0
    %p67 = por %p65, %p66
    %p68 = scmp.ne.s32.totalorder %s57, %s60
    %p69 = scmp.eq.s32.totalorder %s14, 1
    %p70 = por %p68, %p69
    %p71 = scmp.ne.s32.totalorder %s60, %s61
    %p72 = scmp.eq.s32.totalorder %s14, 0
    %p73 = por %p71, %p72
    %p74 = scmp.ne.s32.totalorder %s60, %s61
    %p75 = scmp.eq.s32.totalorder %s15, 1
    %p76 = por %p74, %p75
    %p78 = scmp.ne.s32.totalorder %s61, %s77
    %p79 = scmp.eq.s32.totalorder %s15, 0
    %p80 = por %p78, %p79
    %s81 = ssub.s32 %s17, %s24
    %p82 = scmp.eq.s32.totalorder %s81, 0
    %s84 = sadd.s32 %s83, 1
    %s85 = scalar_select %p82, %s83, %s84
    %p88 = pneg %p82
    %p89 = scmp.eq.s32.totalorder %s9, 1
    %p90 = por %p88, %p89
    %p91 = scmp.ne.s32.totalorder %s83, %s86
    %p92 = scmp.eq.s32.totalorder %s9, 0
    %p93 = por %p91, %p92
    %p94 = scmp.ne.s32.totalorder %s83, %s86
    %p95 = scmp.eq.s32.totalorder %s14, 1
    %p96 = por %p94, %p95
    %p97 = scmp.ne.s32.totalorder %s86, %s87
    %p98 = scmp.eq.s32.totalorder %s14, 0
    %p99 = por %p97, %p98
    %p100 = scmp.ne.s32.totalorder %s86, %s87
    %p101 = scmp.eq.s32.totalorder %s15, 1
    %p102 = por %p100, %p101
    %p104 = scmp.ne.s32.totalorder %s87, %s103
    %p105 = scmp.eq.s32.totalorder %s15, 0
    %p106 = por %p104, %p105
    %s107 = ssub.s32 %s16, %s28
    %s108 = ssub.s32 %s17, %s24
    %s109 = sor.u32 %s107, %s108
    %p110 = scmp.eq.s32.totalorder %s109, 0
    %s112 = sadd.s32 %s111, 1
    %s113 = scalar_select %p110, %s111, %s112
    %p116 = pneg %p110
    %p117 = scmp.eq.s32.totalorder %s9, 1
    %p118 = por %p116, %p117
    %p119 = scmp.ne.s32.totalorder %s111, %s114
    %p120 = scmp.eq.s32.totalorder %s9, 0
    %p121 = por %p119, %p120
    %p122 = scmp.ne.s32.totalorder %s111, %s114
    %p123 = scmp.eq.s32.totalorder %s14, 1
    %p124 = por %p122, %p123
    %p125 = scmp.ne.s32.totalorder %s114, %s115
    %p126 = scmp.eq.s32.totalorder %s14, 0
    %p127 = por %p125, %p126
    %p128 = scmp.ne.s32.totalorder %s114, %s115
    %p129 = scmp.eq.s32.totalorder %s15, 1
    %p130 = por %p128, %p129
    %p132 = scmp.ne.s32.totalorder %s115, %s131
    %p133 = scmp.eq.s32.totalorder %s15, 0
    %p134 = por %p132, %p133
    %p135 = scmp.le.s32.totalorder 1, %s9
    %p136 = scmp.lt.s32.totalorder %s9, 3
    %p137 = pnand %p135, %p136
    %p138 = pneg %p137
    // Predicated region
    $region9: #{inception_gcn_forward.14} parent=5 // pred_check
      _
    $region10: #{inception_gcn_forward.14} parent=5 // pred_check_branch
      %140 = sbr.rel (%p137) target = $region12
    $region11: #{inception_gcn_forward.14} parent=5 // pred_region
      %s141 = ssub.s32 %s9, 1
      // Predicated region
      $region13: #{inception_gcn_forward.14} parent=11 // pred_check
        %p142 = pneg %p73
      $region14: #{inception_gcn_forward.14} parent=11 // pred_check_branch
        %144 = sbr.rel (%p142) target = $region16
      $region15: #{inception_gcn_forward.14} parent=11 // pred_region
        %p145 = scmp.lt.s32.totalorder %s19, 0
        %s146 = scalar_select %p145, %s19, 0
        %s147 = smul.addr %s146, 8
        %s148 = scalar_lea.vmem %s1, %s147
      $region16: #{inception_gcn_forward.14} parent=11 // pred_fallthru
        _
      // Predicated region
      $region17: #{inception_gcn_forward.14} parent=11 // pred_check
        %p149 = pneg %p99
      $region18: #{inception_gcn_forward.14} parent=11 // pred_check_branch
        %151 = sbr.rel (%p149) target = $region20
      $region19: #{inception_gcn_forward.14} parent=11 // pred_region
        %p152 = scmp.lt.s32.totalorder %s19, 0
        %s153 = scalar_select %p152, %s19, 0
        %s154 = scalar_lea.vmem %s2, %s153
      $region20: #{inception_gcn_forward.14} parent=11 // pred_fallthru
        _
    $region12: #{inception_gcn_forward.14} parent=5 // pred_fallthru
      _
    %p155 = scmp.lt.s32.totalorder %s9, 2
    // Predicated region
    $region21: #{inception_gcn_forward.14} parent=5 // pred_check
      %p156 = pneg %p155
    $region22: #{inception_gcn_forward.14} parent=5 // pred_check_branch
      %158 = sbr.rel (%p156) target = $region24
    $region23: #{inception_gcn_forward.14} parent=5 // pred_region
      // Predicated region
      $region25: #{inception_gcn_forward.14} parent=23 // pred_check
        %p159 = pneg %p41
      $region26: #{inception_gcn_forward.14} parent=23 // pred_check_branch
        %161 = sbr.rel (%p159) target = $region28
      $region27: #{inception_gcn_forward.14} parent=23 // pred_region
        %s162 = smul.u32 16, %s16
        %p163 = scmp.lt.s32.totalorder %s162, 31
        %s164 = scalar_select %p163, %s162, 31
        %s165 = smul.addr %s164, 8
        %s166 = scalar_lea.vmem %s0, %s165
        %s167 = smul.u32 16, %s16
      $region28: #{inception_gcn_forward.14} parent=23 // pred_fallthru
        _
    $region24: #{inception_gcn_forward.14} parent=5 // pred_fallthru
      _
    %p168 = scmp.le.s32.totalorder 1, %s9
    %p169 = scmp.lt.s32.totalorder %s9, 3
    %p170 = pnand %p168, %p169
    %p171 = pneg %p170
    // Predicated region
    $region29: #{inception_gcn_forward.14} parent=5 // pred_check
      _
    $region30: #{inception_gcn_forward.14} parent=5 // pred_check_branch
      %173 = sbr.rel (%p170) target = $region32
    $region31: #{inception_gcn_forward.14} parent=5 // pred_region
      %s174 = ssub.s32 %s9, 1
      %s175 = smul.u32 16, %s18
      %p176 = scmp.lt.s32.totalorder %s175, 31
      %s177 = scalar_select %p176, %s175, 31
      %s178 = smul.addr %s177, 8
      %s179 = scalar_lea.vmem %s0, %s178
      %p180 = pneg %p47
      %p181 = pneg %p44
      %p182 = scmp.lt.s32.totalorder %s19, 0
      %s183 = scalar_select %p182, %s19, 0
      %s184 = smul.addr %s183, 8
      %s185 = scalar_lea.vmem %s1, %s184
      %p186 = pneg %p73
      %p187 = pneg %p70
      %p188 = scmp.lt.s32.totalorder %s19, 0
      %s189 = scalar_select %p188, %s19, 0
      %s190 = scalar_lea.vmem %s2, %s189
      %p191 = pneg %p99
      %p192 = pneg %p96
      %p193 = pneg %p127
      %p194 = pneg %p124
      %s195 = smul.u32 16, %s18
      %p196 = scmp.lt.s32.totalorder %s195, 31
      %s197 = scalar_select %p196, %s195, 31
      %p198 = scmp.lt.s32.totalorder %s19, 0
      %s199 = scalar_select %p198, %s19, 0
      %s200 = sadd.s32 %s199, %s197
      %s201 = smul.addr %s200, 8
      %s202 = scalar_lea.vmem %s3, %s201
      %s203 = smul.u32 16, %s18
      %p204 = scmp.lt.s32.totalorder %s203, 31
      %s205 = scalar_select %p204, %s203, 31
      %s206 = smul.addr %s205, 8
      %s207 = scalar_lea.vmem %s0, %s206
      %s208 = smul.u32 16, %s18
      %p209 = scmp.lt.s32.totalorder %s19, 0
      %s210 = scalar_select %p209, %s19, 0
      %s211 = smul.addr %s210, 8
      %s212 = scalar_lea.vmem %s1, %s211
      %p213 = scmp.lt.s32.totalorder %s19, 0
      %s214 = scalar_select %p213, %s19, 0
      %s215 = scalar_lea.vmem %s2, %s214
      %s216 = smul.u32 16, %s18
      %p217 = scmp.lt.s32.totalorder %s216, 31
      %s218 = scalar_select %p217, %s216, 31
      %p219 = scmp.lt.s32.totalorder %s19, 0
      %s220 = scalar_select %p219, %s19, 0
      %s221 = sadd.s32 %s220, %s218
      %s222 = smul.addr %s221, 8
      %s223 = scalar_lea.vmem %s3, %s222
      %s224 = smul.u32 16, %s18
      %v226 = vld [vmem:[%s207] sm:$0xff]
      %v227 = vld [vmem:[%s207 + $0x8] sm:$0xff]
      %v228 = vld [vmem:[%s207 + $0x10] sm:$0xff]
      %v229 = vld [vmem:[%s207 + $0x18] sm:$0xff]
      %v230 = vld [vmem:[%s207 + $0x20] sm:$0xff]
      %v231 = vld [vmem:[%s207 + $0x28] sm:$0xff]
      %v232 = vld [vmem:[%s207 + $0x30] sm:$0xff]
      %v233 = vld [vmem:[%s207 + $0x38] sm:$0xff]
      %v234 = vld [vmem:[%s207 + $0x40] sm:$0xff]
      %v235 = vld [vmem:[%s207 + $0x48] sm:$0xff]
      %v236 = vld [vmem:[%s207 + $0x50] sm:$0xff]
      %v237 = vld [vmem:[%s207 + $0x58] sm:$0xff]
      %v238 = vld [vmem:[%s207 + $0x60] sm:$0xff]
      %v239 = vld [vmem:[%s207 + $0x68] sm:$0xff]
      %v240 = vld [vmem:[%s207 + $0x70] sm:$0xff]
      %v241 = vld [vmem:[%s207 + $0x78] sm:$0xff]
      %v242 = vpack.c.bf16 %v227, %v226
      %v243 = vpack.c.bf16 %v229, %v228
      %v244 = vpack.c.bf16 %v231, %v230
      %v245 = vpack.c.bf16 %v233, %v232
      %v246 = vpack.c.bf16 %v235, %v234
      %v247 = vpack.c.bf16 %v237, %v236
      %v248 = vpack.c.bf16 %v239, %v238
      %v249 = vpack.c.bf16 %v241, %v240
      %v250 = vld [vmem:[%s212] sm:$0xff]
      %v251 = vld [vmem:[%s212 + $0x8] sm:$0xff]
      %v252 = vld [vmem:[%s212 + $0x10] sm:$0xff]
      %v253 = vld [vmem:[%s212 + $0x18] sm:$0xff]
      %v254 = vld [vmem:[%s212 + $0x20] sm:$0xff]
      %v255 = vld [vmem:[%s212 + $0x28] sm:$0xff]
      %v256 = vld [vmem:[%s212 + $0x30] sm:$0xff]
      %v257 = vld [vmem:[%s212 + $0x38] sm:$0xff]
      %v258 = vld [vmem:[%s212 + $0x40] sm:$0xff]
      %v259 = vld [vmem:[%s212 + $0x48] sm:$0xff]
      %v260 = vld [vmem:[%s212 + $0x50] sm:$0xff]
      %v261 = vld [vmem:[%s212 + $0x58] sm:$0xff]
      %v262 = vld [vmem:[%s212 + $0x60] sm:$0xff]
      %v263 = vld [vmem:[%s212 + $0x68] sm:$0xff]
      %v264 = vld [vmem:[%s212 + $0x70] sm:$0xff]
      %v265 = vld [vmem:[%s212 + $0x78] sm:$0xff]
      %v266 = vpack.c.bf16 %v251, %v250
      %v267 = vpack.c.bf16 %v253, %v252
      %v268 = vpack.c.bf16 %v255, %v254
      %v269 = vpack.c.bf16 %v257, %v256
      %v270 = vpack.c.bf16 %v259, %v258
      %v271 = vpack.c.bf16 %v261, %v260
      %v272 = vpack.c.bf16 %v263, %v262
      %v273 = vpack.c.bf16 %v265, %v264
      %v274 = vld [vmem:[%s215] sm:$0x1]
      %v276 = vlaneseq
      %v277 = vshrl.u32 %v276, 7
      %v278 = vsub.s32 0, %v277
      %v279 = vrot.slane %v274, %v278
      %281 = vmatprep.subr.bf16.mxu0 0
      %282 = vmatpush1.bf16.msra.mxu0 %v266
      %283 = vmatprep.subr.bf16.mxu0 0
      %284 = vmatpush1.bf16.msra.mxu0 %v267
      %285 = vmatprep.subr.bf16.mxu0 0
      %286 = vmatpush1.bf16.msra.mxu0 %v268
      %287 = vmatprep.subr.bf16.mxu0 0
      %288 = vmatpush1.bf16.msra.mxu0 %v269
      %289 = vmatprep.subr.bf16.mxu0 0
      %290 = vmatpush1.bf16.msra.mxu0 %v270
      %291 = vmatprep.subr.bf16.mxu0 0
      %292 = vmatpush1.bf16.msra.mxu0 %v271
      %293 = vmatprep.subr.bf16.mxu0 0
      %294 = vmatpush1.bf16.msra.mxu0 %v272
      %295 = vmatprep.subr.bf16.mxu0 0
      %296 = vmatpush1.bf16.msra.mxu0 %v273
      %297 = vmatprep.subr.bf16.mxu0 0
      %298 = vmatpush1.bf16.msra.mxu0 0
      %299 = vmatprep.subr.bf16.mxu0 0
      %300 = vmatpush1.bf16.msra.mxu0 0
      %301 = vmatprep.subr.bf16.mxu0 0
      %302 = vmatpush1.bf16.msra.mxu0 0
      %303 = vmatprep.subr.bf16.mxu0 0
      %304 = vmatpush1.bf16.msra.mxu0 0
      %305 = vmatprep.subr.bf16.mxu0 0
      %306 = vmatpush1.bf16.msra.mxu0 0
      %307 = vmatprep.subr.bf16.mxu0 0
      %308 = vmatpush1.bf16.msra.mxu0 0
      %309 = vmatprep.subr.bf16.mxu0 0
      %310 = vmatpush1.bf16.msra.mxu0 0
      %311 = vmatprep.subr.bf16.mxu0 0
      %312 = vmatpush1.bf16.msra.mxu0 0
      %313 = vmatprep.mubr.bf16.mxu0 0
      %314 = vmatmul.mubr.bf16.gmra.mrb[0].mxu0 %v242
      %v315 = vpop.f32.mrb[0].mxu0
      %v316 = vadd.f32 %v279, %v315
      %v317 = vpop.f32.mrb[0].mxu0
      %v318 = vpop.f32.mrb[0].mxu0
      %v319 = vadd.f32 %v279, %v318
      %v320 = vpop.f32.mrb[0].mxu0
      %321 = vmatprep.mubr.bf16.mxu0 0
      %322 = vmatmul.mubr.bf16.gmra.mrb[0].mxu0 %v243
      %v323 = vpop.f32.mrb[0].mxu0
      %v324 = vadd.f32 %v279, %v323
      %v325 = vpop.f32.mrb[0].mxu0
      %v326 = vpop.f32.mrb[0].mxu0
      %v327 = vadd.f32 %v279, %v326
      %v328 = vpop.f32.mrb[0].mxu0
      %329 = vmatprep.mubr.bf16.mxu0 0
      %330 = vmatmul.mubr.bf16.gmra.mrb[0].mxu0 %v244
      %v331 = vpop.f32.mrb[0].mxu0
      %v332 = vadd.f32 %v279, %v331
      %v333 = vpop.f32.mrb[0].mxu0
      %v334 = vpop.f32.mrb[0].mxu0
      %v335 = vadd.f32 %v279, %v334
      %v336 = vpop.f32.mrb[0].mxu0
      %337 = vmatprep.mubr.bf16.mxu0 0
      %338 = vmatmul.mubr.bf16.gmra.mrb[0].mxu0 %v245
      %v339 = vpop.f32.mrb[0].mxu0
      %v340 = vadd.f32 %v279, %v339
      %v341 = vpop.f32.mrb[0].mxu0
      %v342 = vpop.f32.mrb[0].mxu0
      %v343 = vadd.f32 %v279, %v342
      %v344 = vpop.f32.mrb[0].mxu0
      %345 = vmatprep.mubr.bf16.mxu0 0
      %346 = vmatmul.mubr.bf16.gmra.mrb[0].mxu0 %v246
      %v347 = vpop.f32.mrb[0].mxu0
      %v348 = vadd.f32 %v279, %v347
      %v349 = vpop.f32.mrb[0].mxu0
      %v350 = vpop.f32.mrb[0].mxu0
      %v351 = vadd.f32 %v279, %v350
      %v352 = vpop.f32.mrb[0].mxu0
      %353 = vmatprep.mubr.bf16.mxu0 0
      %354 = vmatmul.mubr.bf16.gmra.mrb[0].mxu0 %v247
      %v355 = vpop.f32.mrb[0].mxu0
      %v356 = vadd.f32 %v279, %v355
      %v357 = vpop.f32.mrb[0].mxu0
      %v358 = vpop.f32.mrb[0].mxu0
      %v359 = vadd.f32 %v279, %v358
      %v360 = vpop.f32.mrb[0].mxu0
      %361 = vmatprep.mubr.bf16.mxu0 0
      %362 = vmatmul.mubr.bf16.gmra.mrb[0].mxu0 %v248
      %v363 = vpop.f32.mrb[0].mxu0
      %v364 = vadd.f32 %v279, %v363
      %v365 = vpop.f32.mrb[0].mxu0
      %v366 = vpop.f32.mrb[0].mxu0
      %v367 = vadd.f32 %v279, %v366
      %v368 = vpop.f32.mrb[0].mxu0
      %369 = vmatprep.mubr.bf16.mxu0 0
      %370 = vmatmul.mubr.bf16.gmra.mrb[0].mxu0 %v249
      %v371 = vpop.f32.mrb[0].mxu0
      %v372 = vadd.f32 %v279, %v371
      %v373 = vpop.f32.mrb[0].mxu0
      %v374 = vpop.f32.mrb[0].mxu0
      %v375 = vadd.f32 %v279, %v374
      %v376 = vpop.f32.mrb[0].mxu0
      %377 = vdwg.mxu0
      %v378 = vmax.f32 %v316, 0.0
      %v379 = vmax.f32 %v319, 0.0
      %v380 = vmax.f32 %v324, 0.0
      %v381 = vmax.f32 %v327, 0.0
      %v382 = vmax.f32 %v332, 0.0
      %v383 = vmax.f32 %v335, 0.0
      %v384 = vmax.f32 %v340, 0.0
      %v385 = vmax.f32 %v343, 0.0
      %v386 = vmax.f32 %v348, 0.0
      %v387 = vmax.f32 %v351, 0.0
      %v388 = vmax.f32 %v356, 0.0
      %v389 = vmax.f32 %v359, 0.0
      %v390 = vmax.f32 %v364, 0.0
      %v391 = vmax.f32 %v367, 0.0
      %v392 = vmax.f32 %v372, 0.0
      %v393 = vmax.f32 %v375, 0.0
      %394 = vst [vmem:[%s223] sm:$0xff] %v378
      %395 = vst [vmem:[%s223 + $0x8] sm:$0xff] %v379
      %396 = vst [vmem:[%s223 + $0x10] sm:$0xff] %v380
      %397 = vst [vmem:[%s223 + $0x18] sm:$0xff] %v381
      %398 = vst [vmem:[%s223 + $0x20] sm:$0xff] %v382
      %399 = vst [vmem:[%s223 + $0x28] sm:$0xff] %v383
      %400 = vst [vmem:[%s223 + $0x30] sm:$0xff] %v384
      %401 = vst [vmem:[%s223 + $0x38] sm:$0xff] %v385
      %402 = vst [vmem:[%s223 + $0x40] sm:$0xff] %v386
      %403 = vst [vmem:[%s223 + $0x48] sm:$0xff] %v387
      %404 = vst [vmem:[%s223 + $0x50] sm:$0xff] %v388
      %405 = vst [vmem:[%s223 + $0x58] sm:$0xff] %v389
      %406 = vst [vmem:[%s223 + $0x60] sm:$0xff] %v390
      %407 = vst [vmem:[%s223 + $0x68] sm:$0xff] %v391
      %408 = vst [vmem:[%s223 + $0x70] sm:$0xff] %v392
      %409 = vst [vmem:[%s223 + $0x78] sm:$0xff] %v393
      %s410 = smul.u32 16, %s18
      %p411 = scmp.lt.s32.totalorder %s410, 31
      %s412 = scalar_select %p411, %s410, 31
      %p413 = scmp.lt.s32.totalorder %s19, 0
      %s414 = scalar_select %p413, %s19, 0
      %s415 = sadd.s32 %s414, %s412
      %s416 = smul.addr %s415, 8
      %s417 = scalar_lea.vmem %s3, %s416
      // Predicated region
      $region33: #{inception_gcn_forward.14} parent=31 // pred_check
        %p418 = pneg %p124
      $region34: #{inception_gcn_forward.14} parent=31 // pred_check_branch
        %420 = sbr.rel (%p418) target = $region36
      $region35: #{inception_gcn_forward.14} parent=31 // pred_region
        %s421 = smul.u32 16, %s18
      $region36: #{inception_gcn_forward.14} parent=31 // pred_fallthru
        _
    $region32: #{inception_gcn_forward.14} parent=5 // pred_fallthru
      _
    %p422 = scmp.le.s32.totalorder 2, %s9
    // Predicated region
    $region37: #{inception_gcn_forward.14} parent=5 // pred_check
      %p423 = pneg %p422
    $region38: #{inception_gcn_forward.14} parent=5 // pred_check_branch
      %425 = sbr.rel (%p423) target = $region40
    $region39: #{inception_gcn_forward.14} parent=5 // pred_region
      %s426 = ssub.s32 %s9, 2
      // Predicated region
      $region41: #{inception_gcn_forward.14} parent=39 // pred_check
        %p427 = pneg %p130
      $region42: #{inception_gcn_forward.14} parent=39 // pred_check_branch
        %429 = sbr.rel (%p427) target = $region44
      $region43: #{inception_gcn_forward.14} parent=39 // pred_region
        %s430 = smul.u32 16, %s20
        %p431 = scmp.lt.s32.totalorder %s430, 31
        %s432 = scalar_select %p431, %s430, 31
        %p433 = scmp.lt.s32.totalorder %s21, 0
        %s434 = scalar_select %p433, %s21, 0
        %s435 = sadd.s32 %s434, %s432
        %s436 = smul.addr %s435, 8
        %s437 = scalar_lea.vmem %s3, %s436
      $region44: #{inception_gcn_forward.14} parent=39 // pred_fallthru
        _
    $region40: #{inception_gcn_forward.14} parent=5 // pred_fallthru
      _
  $region6: #{inception_gcn_forward.14} parent=0 // loop_footer
    %s13 = sadd.s32 1, %s9
  $region7: #{inception_gcn_forward.14} parent=0 // loop_footer_branch
    %8 = sbr.rel target = $region3
  $region8: #{inception_gcn_forward.14} parent=0 // loop_exit
    _

// kernel: inception_gcn_forward.15
$region0: #{inception_gcn_forward.15}
  #allocation0 [shape = 'u32[]', space=smem, size = 0x4, offset = 0x4, fixed_abs, tag = 'smem constant byte address 0x4 - core index']
  #allocation1 [shape = 'u32[144,128]{1,0:T(1,128)}', space=vmem, size = 0x12000, scoped, tag = 'internal scratch']
  %s0 = inlined_call_operand.vmem [shape: s32[256,8], index: 0, kind: input, shape index: {}]
  %s1 = inlined_call_operand.vmem [shape: f32[256,128], index: 1, kind: input, shape index: {}, may-alias: {1,2}]
  %s2 = inlined_call_operand.vmem [shape: f32[256,128], index: 2, kind: input, shape index: {}, may-alias: {1,2}]
  %s3 = inlined_call_operand.vmem [shape: f32[128,128], index: 3, kind: input, shape index: {}]
  %s4 = inlined_call_operand.vmem [shape: f32[128,128], index: 4, kind: input, shape index: {}]
  %s5 = inlined_call_operand.vmem [shape: f32[1,128], index: 5, kind: input, shape index: {}]
  %s6 = inlined_call_operand.vmem [shape: f32[256,128], index: 6, kind: output, shape index: {}]
  %s7 = sld [smem:[#allocation0]]
  $region57: #{inception_gcn_forward.15} parent=0
    _
  %s9 = ssub.s32 1, %s7
  %s10 = scalar_select 0, %s9, %s7
  loop: start=0, step=1, limit=4
  $region2: #{inception_gcn_forward.15} parent=0 // loop_pre_header
    _
  $region3: #{inception_gcn_forward.15} parent=0 // loop_header
    %s12 = sphi 0, %s16
    %p13 = scmp.ge.s32.totalorder %s12, 4
    %s19 = sphi 0, %s31
    %s20 = sphi 0, %s27
    %s21 = sphi 0, %s19
    %s22 = sphi 0, %s20
    %s23 = sphi 0, %s21
    %s24 = sphi 0, %s22
    %s34 = sphi 0, %s36
    %s37 = sphi 0, %s34
    %s38 = sphi 0, %s37
    %s54 = sphi 0, %s38
    %s58 = sphi 0, %s58
    %s60 = sphi 0, %s58
    %s61 = sphi 0, %s60
    %s75 = sphi 0, %s61
    %s81 = sphi 0, %s83
    %s84 = sphi 0, %s81
    %s85 = sphi 0, %s84
    %s101 = sphi 0, %s85
    %s107 = sphi 0, %s109
    %s110 = sphi 0, %s107
    %s111 = sphi 0, %s110
    %s127 = sphi 0, %s111
    %s133 = sphi 0, %s135
    %s136 = sphi 0, %s133
    %s137 = sphi 0, %s136
    %s153 = sphi 0, %s137
    %s159 = sphi 0, %s161
    %s162 = sphi 0, %s159
    %s163 = sphi 0, %s162
    %s179 = sphi 0, %s163
    %s187 = sphi 0, %s189
    %s190 = sphi 0, %s187
    %s191 = sphi 0, %s190
    %s207 = sphi 0, %s191
  $region4: #{inception_gcn_forward.15} parent=0 // loop_header_branch
    %15 = sbr.rel (%p13) target = $region8
  $region5: #{inception_gcn_forward.15} parent=0 // loop_body
    %s17 = ssub.s32 %s12, 1
    %s18 = ssub.s32 %s12, 2
    %s25 = sadd.s32 1, %s20
    %p26 = scmp.ge.s32.totalorder %s25, 1
    %s27 = scalar_select %p26, 0, %s25
    %s28 = sadd.s32 1, %s19
    %s29 = scalar_select %p26, %s28, %s19
    %p30 = scmp.ge.s32.totalorder %s29, 2
    %s31 = scalar_select %p30, 0, %s29
    %s32 = ssub.s32 %s19, %s31
    %p33 = scmp.eq.s32.totalorder %s32, 0
    %s35 = sadd.s32 %s34, 1
    %s36 = scalar_select %p33, %s34, %s35
    %p39 = pneg %p33
    %p40 = scmp.eq.s32.totalorder %s12, 1
    %p41 = por %p39, %p40
    %p42 = scmp.ne.s32.totalorder %s34, %s37
    %p43 = scmp.eq.s32.totalorder %s12, 0
    %p44 = por %p42, %p43
    %p45 = scmp.ne.s32.totalorder %s34, %s37
    %p46 = scmp.eq.s32.totalorder %s17, 1
    %p47 = por %p45, %p46
    %p48 = scmp.ne.s32.totalorder %s37, %s38
    %p49 = scmp.eq.s32.totalorder %s17, 0
    %p50 = por %p48, %p49
    %p51 = scmp.ne.s32.totalorder %s37, %s38
    %p52 = scmp.eq.s32.totalorder %s18, 1
    %p53 = por %p51, %p52
    %p55 = scmp.ne.s32.totalorder %s38, %s54
    %p56 = scmp.eq.s32.totalorder %s18, 0
    %p57 = por %p55, %p56
    %s59 = sadd.s32 %s58, 1
    %p62 = scmp.eq.s32.totalorder %s12, 1
    %p63 = scmp.ne.s32.totalorder %s58, %s60
    %p64 = scmp.eq.s32.totalorder %s12, 0
    %p65 = por %p63, %p64
    %p66 = scmp.ne.s32.totalorder %s58, %s60
    %p67 = scmp.eq.s32.totalorder %s17, 1
    %p68 = por %p66, %p67
    %p69 = scmp.ne.s32.totalorder %s60, %s61
    %p70 = scmp.eq.s32.totalorder %s17, 0
    %p71 = por %p69, %p70
    %p72 = scmp.ne.s32.totalorder %s60, %s61
    %p73 = scmp.eq.s32.totalorder %s18, 1
    %p74 = por %p72, %p73
    %p76 = scmp.ne.s32.totalorder %s61, %s75
    %p77 = scmp.eq.s32.totalorder %s18, 0
    %p78 = por %p76, %p77
    %s79 = ssub.s32 %s19, %s31
    %p80 = scmp.eq.s32.totalorder %s79, 0
    %s82 = sadd.s32 %s81, 1
    %s83 = scalar_select %p80, %s81, %s82
    %p86 = pneg %p80
    %p87 = scmp.eq.s32.totalorder %s12, 1
    %p88 = por %p86, %p87
    %p89 = scmp.ne.s32.totalorder %s81, %s84
    %p90 = scmp.eq.s32.totalorder %s12, 0
    %p91 = por %p89, %p90
    %p92 = scmp.ne.s32.totalorder %s81, %s84
    %p93 = scmp.eq.s32.totalorder %s17, 1
    %p94 = por %p92, %p93
    %p95 = scmp.ne.s32.totalorder %s84, %s85
    %p96 = scmp.eq.s32.totalorder %s17, 0
    %p97 = por %p95, %p96
    %p98 = scmp.ne.s32.totalorder %s84, %s85
    %p99 = scmp.eq.s32.totalorder %s18, 1
    %p100 = por %p98, %p99
    %p102 = scmp.ne.s32.totalorder %s85, %s101
    %p103 = scmp.eq.s32.totalorder %s18, 0
    %p104 = por %p102, %p103
    %s105 = ssub.s32 %s20, %s27
    %p106 = scmp.eq.s32.totalorder %s105, 0
    %s108 = sadd.s32 %s107, 1
    %s109 = scalar_select %p106, %s107, %s108
    %p112 = pneg %p106
    %p113 = scmp.eq.s32.totalorder %s12, 1
    %p114 = por %p112, %p113
    %p115 = scmp.ne.s32.totalorder %s107, %s110
    %p116 = scmp.eq.s32.totalorder %s12, 0
    %p117 = por %p115, %p116
    %p118 = scmp.ne.s32.totalorder %s107, %s110
    %p119 = scmp.eq.s32.totalorder %s17, 1
    %p120 = por %p118, %p119
    %p121 = scmp.ne.s32.totalorder %s110, %s111
    %p122 = scmp.eq.s32.totalorder %s17, 0
    %p123 = por %p121, %p122
    %p124 = scmp.ne.s32.totalorder %s110, %s111
    %p125 = scmp.eq.s32.totalorder %s18, 1
    %p126 = por %p124, %p125
    %p128 = scmp.ne.s32.totalorder %s111, %s127
    %p129 = scmp.eq.s32.totalorder %s18, 0
    %p130 = por %p128, %p129
    %s131 = ssub.s32 %s20, %s27
    %p132 = scmp.eq.s32.totalorder %s131, 0
    %s134 = sadd.s32 %s133, 1
    %s135 = scalar_select %p132, %s133, %s134
    %p138 = pneg %p132
    %p139 = scmp.eq.s32.totalorder %s12, 1
    %p140 = por %p138, %p139
    %p141 = scmp.ne.s32.totalorder %s133, %s136
    %p142 = scmp.eq.s32.totalorder %s12, 0
    %p143 = por %p141, %p142
    %p144 = scmp.ne.s32.totalorder %s133, %s136
    %p145 = scmp.eq.s32.totalorder %s17, 1
    %p146 = por %p144, %p145
    %p147 = scmp.ne.s32.totalorder %s136, %s137
    %p148 = scmp.eq.s32.totalorder %s17, 0
    %p149 = por %p147, %p148
    %p150 = scmp.ne.s32.totalorder %s136, %s137
    %p151 = scmp.eq.s32.totalorder %s18, 1
    %p152 = por %p150, %p151
    %p154 = scmp.ne.s32.totalorder %s137, %s153
    %p155 = scmp.eq.s32.totalorder %s18, 0
    %p156 = por %p154, %p155
    %s157 = ssub.s32 %s20, %s27
    %p158 = scmp.eq.s32.totalorder %s157, 0
    %s160 = sadd.s32 %s159, 1
    %s161 = scalar_select %p158, %s159, %s160
    %p164 = pneg %p158
    %p165 = scmp.eq.s32.totalorder %s12, 1
    %p166 = por %p164, %p165
    %p167 = scmp.ne.s32.totalorder %s159, %s162
    %p168 = scmp.eq.s32.totalorder %s12, 0
    %p169 = por %p167, %p168
    %p170 = scmp.ne.s32.totalorder %s159, %s162
    %p171 = scmp.eq.s32.totalorder %s17, 1
    %p172 = por %p170, %p171
    %p173 = scmp.ne.s32.totalorder %s162, %s163
    %p174 = scmp.eq.s32.totalorder %s17, 0
    %p175 = por %p173, %p174
    %p176 = scmp.ne.s32.totalorder %s162, %s163
    %p177 = scmp.eq.s32.totalorder %s18, 1
    %p178 = por %p176, %p177
    %p180 = scmp.ne.s32.totalorder %s163, %s179
    %p181 = scmp.eq.s32.totalorder %s18, 0
    %p182 = por %p180, %p181
    %s183 = ssub.s32 %s19, %s31
    %s184 = ssub.s32 %s20, %s27
    %s185 = sor.u32 %s183, %s184
    %p186 = scmp.eq.s32.totalorder %s185, 0
    %s188 = sadd.s32 %s187, 1
    %s189 = scalar_select %p186, %s187, %s188
    %p192 = pneg %p186
    %p193 = scmp.eq.s32.totalorder %s12, 1
    %p194 = por %p192, %p193
    %p195 = scmp.ne.s32.totalorder %s187, %s190
    %p196 = scmp.eq.s32.totalorder %s12, 0
    %p197 = por %p195, %p196
    %p198 = scmp.ne.s32.totalorder %s187, %s190
    %p199 = scmp.eq.s32.totalorder %s17, 1
    %p200 = por %p198, %p199
    %p201 = scmp.ne.s32.totalorder %s190, %s191
    %p202 = scmp.eq.s32.totalorder %s17, 0
    %p203 = por %p201, %p202
    %p204 = scmp.ne.s32.totalorder %s190, %s191
    %p205 = scmp.eq.s32.totalorder %s18, 1
    %p206 = por %p204, %p205
    %p208 = scmp.ne.s32.totalorder %s191, %s207
    %p209 = scmp.eq.s32.totalorder %s18, 0
    %p210 = por %p208, %p209
    %p211 = scmp.le.s32.totalorder 1, %s12
    %p212 = scmp.lt.s32.totalorder %s12, 3
    %p213 = pnand %p211, %p212
    %p214 = pneg %p213
    // Predicated region
    $region9: #{inception_gcn_forward.15} parent=5 // pred_check
      _
    $region10: #{inception_gcn_forward.15} parent=5 // pred_check_branch
      %216 = sbr.rel (%p213) target = $region12
    $region11: #{inception_gcn_forward.15} parent=5 // pred_region
      %s217 = ssub.s32 %s12, 1
      // Predicated region
      $region13: #{inception_gcn_forward.15} parent=11 // pred_check
        %p218 = pneg %p71
      $region14: #{inception_gcn_forward.15} parent=11 // pred_check_branch
        %220 = sbr.rel (%p218) target = $region16
      $region15: #{inception_gcn_forward.15} parent=11 // pred_region
        _
      $region16: #{inception_gcn_forward.15} parent=11 // pred_fallthru
        _
      // Predicated region
      $region17: #{inception_gcn_forward.15} parent=11 // pred_check
        %p221 = pneg %p123
      $region18: #{inception_gcn_forward.15} parent=11 // pred_check_branch
        %223 = sbr.rel (%p221) target = $region20
      $region19: #{inception_gcn_forward.15} parent=11 // pred_region
        %p224 = scmp.lt.s32.totalorder %s22, 0
        %s225 = scalar_select %p224, %s22, 0
        %s226 = smul.addr %s225, 8
        %s227 = scalar_lea.vmem %s3, %s226
      $region20: #{inception_gcn_forward.15} parent=11 // pred_fallthru
        _
      // Predicated region
      $region21: #{inception_gcn_forward.15} parent=11 // pred_check
        %p228 = pneg %p149
      $region22: #{inception_gcn_forward.15} parent=11 // pred_check_branch
        %230 = sbr.rel (%p228) target = $region24
      $region23: #{inception_gcn_forward.15} parent=11 // pred_region
        %p231 = scmp.lt.s32.totalorder %s22, 0
        %s232 = scalar_select %p231, %s22, 0
        %s233 = smul.addr %s232, 8
        %s234 = scalar_lea.vmem %s4, %s233
      $region24: #{inception_gcn_forward.15} parent=11 // pred_fallthru
        _
      // Predicated region
      $region25: #{inception_gcn_forward.15} parent=11 // pred_check
        %p235 = pneg %p175
      $region26: #{inception_gcn_forward.15} parent=11 // pred_check_branch
        %237 = sbr.rel (%p235) target = $region28
      $region27: #{inception_gcn_forward.15} parent=11 // pred_region
        %p238 = scmp.lt.s32.totalorder %s22, 0
        %s239 = scalar_select %p238, %s22, 0
        %s240 = scalar_lea.vmem %s5, %s239
      $region28: #{inception_gcn_forward.15} parent=11 // pred_fallthru
        _
    $region12: #{inception_gcn_forward.15} parent=5 // pred_fallthru
      _
    %p241 = scmp.lt.s32.totalorder %s12, 2
    // Predicated region
    $region29: #{inception_gcn_forward.15} parent=5 // pred_check
      %p242 = pneg %p241
    $region30: #{inception_gcn_forward.15} parent=5 // pred_check_branch
      %244 = sbr.rel (%p242) target = $region32
    $region31: #{inception_gcn_forward.15} parent=5 // pred_region
      // Predicated region
      $region33: #{inception_gcn_forward.15} parent=31 // pred_check
        %p245 = pneg %p44
      $region34: #{inception_gcn_forward.15} parent=31 // pred_check_branch
        %247 = sbr.rel (%p245) target = $region36
      $region35: #{inception_gcn_forward.15} parent=31 // pred_region
        %s248 = smul.u32 16, %s19
        %p249 = scmp.lt.s32.totalorder %s248, 31
        %s250 = scalar_select %p249, %s248, 31
        %s251 = smul.addr %s250, 8
        %s252 = scalar_lea.vmem %s0, %s251
        %s253 = smul.u32 16, %s19
      $region36: #{inception_gcn_forward.15} parent=31 // pred_fallthru
        _
      // Predicated region
      $region37: #{inception_gcn_forward.15} parent=31 // pred_check
        %p254 = pneg %p91
      $region38: #{inception_gcn_forward.15} parent=31 // pred_check_branch
        %256 = sbr.rel (%p254) target = $region40
      $region39: #{inception_gcn_forward.15} parent=31 // pred_region
        %s257 = smul.u32 16, %s19
        %p258 = scmp.lt.s32.totalorder %s257, 31
        %s259 = scalar_select %p258, %s257, 31
        %s260 = smul.addr %s259, 8
        %s261 = scalar_lea.vmem %s2, %s260
        %s262 = smul.u32 16, %s19
      $region40: #{inception_gcn_forward.15} parent=31 // pred_fallthru
        _
    $region32: #{inception_gcn_forward.15} parent=5 // pred_fallthru
      _
    %p263 = scmp.le.s32.totalorder 1, %s12
    %p264 = scmp.lt.s32.totalorder %s12, 3
    %p265 = pnand %p263, %p264
    %p266 = pneg %p265
    // Predicated region
    $region41: #{inception_gcn_forward.15} parent=5 // pred_check
      _
    $region42: #{inception_gcn_forward.15} parent=5 // pred_check_branch
      %268 = sbr.rel (%p265) target = $region44
    $region43: #{inception_gcn_forward.15} parent=5 // pred_region
      %s269 = ssub.s32 %s12, 1
      %s270 = smul.u32 16, %s21
      %p271 = scmp.lt.s32.totalorder %s270, 31
      %s272 = scalar_select %p271, %s270, 31
      %s273 = smul.addr %s272, 8
      %s274 = scalar_lea.vmem %s0, %s273
      %p275 = pneg %p50
      %p276 = pneg %p47
      %p277 = pneg %p71
      %p278 = pneg %p68
      %s279 = smul.u32 16, %s21
      %p280 = scmp.lt.s32.totalorder %s279, 31
      %s281 = scalar_select %p280, %s279, 31
      %s282 = smul.addr %s281, 8
      %s283 = scalar_lea.vmem %s2, %s282
      %p284 = pneg %p97
      %p285 = pneg %p94
      %p286 = scmp.lt.s32.totalorder %s22, 0
      %s287 = scalar_select %p286, %s22, 0
      %s288 = smul.addr %s287, 8
      %s289 = scalar_lea.vmem %s3, %s288
      %p290 = pneg %p123
      %p291 = pneg %p120
      %p292 = scmp.lt.s32.totalorder %s22, 0
      %s293 = scalar_select %p292, %s22, 0
      %s294 = smul.addr %s293, 8
      %s295 = scalar_lea.vmem %s4, %s294
      %p296 = pneg %p149
      %p297 = pneg %p146
      %p298 = scmp.lt.s32.totalorder %s22, 0
      %s299 = scalar_select %p298, %s22, 0
      %s300 = scalar_lea.vmem %s5, %s299
      %p301 = pneg %p175
      %p302 = pneg %p172
      %p303 = pneg %p203
      %p304 = pneg %p200
      %s305 = smul.u32 16, %s21
      %p306 = scmp.lt.s32.totalorder %s305, 31
      %s307 = scalar_select %p306, %s305, 31
      %p308 = scmp.lt.s32.totalorder %s22, 0
      %s309 = scalar_select %p308, %s22, 0
      %s310 = sadd.s32 %s309, %s307
      %s311 = smul.addr %s310, 8
      %s312 = scalar_lea.vmem %s6, %s311
      %s313 = smul.u32 16, %s21
      %p314 = scmp.lt.s32.totalorder %s313, 31
      %s315 = scalar_select %p314, %s313, 31
      %s316 = smul.addr %s315, 8
      %s317 = scalar_lea.vmem %s0, %s316
      %s318 = smul.u32 16, %s21
      %s319 = smul.u32 16, %s21
      %p320 = scmp.lt.s32.totalorder %s319, 31
      %s321 = scalar_select %p320, %s319, 31
      %s322 = smul.addr %s321, 8
      %s323 = scalar_lea.vmem %s2, %s322
      %s324 = smul.u32 16, %s21
      %p325 = scmp.lt.s32.totalorder %s22, 0
      %s326 = scalar_select %p325, %s22, 0
      %s327 = smul.addr %s326, 8
      %s328 = scalar_lea.vmem %s3, %s327
      %p329 = scmp.lt.s32.totalorder %s22, 0
      %s330 = scalar_select %p329, %s22, 0
      %s331 = smul.addr %s330, 8
      %s332 = scalar_lea.vmem %s4, %s331
      %p333 = scmp.lt.s32.totalorder %s22, 0
      %s334 = scalar_select %p333, %s22, 0
      %s335 = scalar_lea.vmem %s5, %s334
      %s336 = smul.u32 16, %s21
      %p337 = scmp.lt.s32.totalorder %s336, 31
      %s338 = scalar_select %p337, %s336, 31
      %p339 = scmp.lt.s32.totalorder %s22, 0
      %s340 = scalar_select %p339, %s22, 0
      %s341 = sadd.s32 %s340, %s338
      %s342 = smul.addr %s341, 8
      %s343 = scalar_lea.vmem %s6, %s342
      %s344 = smul.u32 16, %s21
      %v346 = vld [vmem:[%s317] sm:$0xff]
      %v347 = vld [vmem:[%s317 + $0x8] sm:$0xff]
      %v348 = vld [vmem:[%s317 + $0x10] sm:$0xff]
      %v349 = vld [vmem:[%s317 + $0x18] sm:$0xff]
      %v350 = vld [vmem:[%s317 + $0x20] sm:$0xff]
      %v351 = vld [vmem:[%s317 + $0x28] sm:$0xff]
      %v352 = vld [vmem:[%s317 + $0x30] sm:$0xff]
      %v353 = vld [vmem:[%s317 + $0x38] sm:$0xff]
      %v354 = vld [vmem:[%s317 + $0x40] sm:$0xff]
      %v355 = vld [vmem:[%s317 + $0x48] sm:$0xff]
      %v356 = vld [vmem:[%s317 + $0x50] sm:$0xff]
      %v357 = vld [vmem:[%s317 + $0x58] sm:$0xff]
      %v358 = vld [vmem:[%s317 + $0x60] sm:$0xff]
      %v359 = vld [vmem:[%s317 + $0x68] sm:$0xff]
      %v360 = vld [vmem:[%s317 + $0x70] sm:$0xff]
      %v361 = vld [vmem:[%s317 + $0x78] sm:$0xff]
      %v362 = vlaneseq
      %v363 = vand.u32 %v362, 127
      %v364 = vadd.s32 %v363, 128
      %365 = vset.pattern.permute.xlu0 0
      %366 = vperm.xlu0 %365, %v346
      %v367 = vpop.permute.xlu0 %366
      %368 = vset.pattern.permute.xlu0 0
      %369 = vperm.xlu0 %368, %v347
      %v370 = vpop.permute.xlu0 %369
      %371 = vset.pattern.permute.xlu0 0
      %372 = vperm.xlu0 %371, %v348
      %v373 = vpop.permute.xlu0 %372
      %374 = vset.pattern.permute.xlu0 0
      %375 = vperm.xlu0 %374, %v349
      %v376 = vpop.permute.xlu0 %375
      %377 = vset.pattern.permute.xlu0 0
      %378 = vperm.xlu0 %377, %v350
      %v379 = vpop.permute.xlu0 %378
      %380 = vset.pattern.permute.xlu0 0
      %381 = vperm.xlu0 %380, %v351
      %v382 = vpop.permute.xlu0 %381
      %383 = vset.pattern.permute.xlu0 0
      %384 = vperm.xlu0 %383, %v352
      %v385 = vpop.permute.xlu0 %384
      %386 = vset.pattern.permute.xlu0 0
      %387 = vperm.xlu0 %386, %v353
      %v388 = vpop.permute.xlu0 %387
      %389 = vset.pattern.permute.xlu0 0
      %390 = vperm.xlu0 %389, %v354
      %v391 = vpop.permute.xlu0 %390
      %392 = vset.pattern.permute.xlu0 0
      %393 = vperm.xlu0 %392, %v355
      %v394 = vpop.permute.xlu0 %393
      %395 = vset.pattern.permute.xlu0 0
      %396 = vperm.xlu0 %395, %v356
      %v397 = vpop.permute.xlu0 %396
      %398 = vset.pattern.permute.xlu0 0
      %399 = vperm.xlu0 %398, %v357
      %v400 = vpop.permute.xlu0 %399
      %401 = vset.pattern.permute.xlu0 0
      %402 = vperm.xlu0 %401, %v358
      %v403 = vpop.permute.xlu0 %402
      %404 = vset.pattern.permute.xlu0 0
      %405 = vperm.xlu0 %404, %v359
      %v406 = vpop.permute.xlu0 %405
      %407 = vset.pattern.permute.xlu0 0
      %408 = vperm.xlu0 %407, %v360
      %v409 = vpop.permute.xlu0 %408
      %410 = vset.pattern.permute.xlu0 0
      %411 = vperm.xlu0 %410, %v361
      %v412 = vpop.permute.xlu0 %411
      %vm413 = vcmp.eq.s32.totalorder %v367, %v363
      %vm414 = vcmp.eq.s32.totalorder %v367, %v364
      %vm415 = vcmp.eq.s32.totalorder %v370, %v363
      %vm416 = vcmp.eq.s32.totalorder %v370, %v364
      %vm417 = vcmp.eq.s32.totalorder %v373, %v363
      %vm418 = vcmp.eq.s32.totalorder %v373, %v364
      %vm419 = vcmp.eq.s32.totalorder %v376, %v363
      %vm420 = vcmp.eq.s32.totalorder %v376, %v364
      %vm421 = vcmp.eq.s32.totalorder %v379, %v363
      %vm422 = vcmp.eq.s32.totalorder %v379, %v364
      %vm423 = vcmp.eq.s32.totalorder %v382, %v363
      %vm424 = vcmp.eq.s32.totalorder %v382, %v364
      %vm425 = vcmp.eq.s32.totalorder %v385, %v363
      %vm426 = vcmp.eq.s32.totalorder %v385, %v364
      %vm427 = vcmp.eq.s32.totalorder %v388, %v363
      %vm428 = vcmp.eq.s32.totalorder %v388, %v364
      %vm429 = vcmp.eq.s32.totalorder %v391, %v363
      %vm430 = vcmp.eq.s32.totalorder %v391, %v364
      %vm431 = vcmp.eq.s32.totalorder %v394, %v363
      %vm432 = vcmp.eq.s32.totalorder %v394, %v364
      %vm433 = vcmp.eq.s32.totalorder %v397, %v363
      %vm434 = vcmp.eq.s32.totalorder %v397, %v364
      %vm435 = vcmp.eq.s32.totalorder %v400, %v363
      %vm436 = vcmp.eq.s32.totalorder %v400, %v364
      %vm437 = vcmp.eq.s32.totalorder %v403, %v363
      %vm438 = vcmp.eq.s32.totalorder %v403, %v364
      %vm439 = vcmp.eq.s32.totalorder %v406, %v363
      %vm440 = vcmp.eq.s32.totalorder %v406, %v364
      %vm441 = vcmp.eq.s32.totalorder %v409, %v363
      %vm442 = vcmp.eq.s32.totalorder %v409, %v364
      %vm443 = vcmp.eq.s32.totalorder %v412, %v363
      %vm444 = vcmp.eq.s32.totalorder %v412, %v364
      %v445 = vsel %vm413, 1.0, 0.0
      %v446 = vsel %vm414, 1.0, 0.0
      %v447 = vsel %vm415, 1.0, 0.0
      %v448 = vsel %vm416, 1.0, 0.0
      %v449 = vsel %vm417, 1.0, 0.0
      %v450 = vsel %vm418, 1.0, 0.0
      %v451 = vsel %vm419, 1.0, 0.0
      %v452 = vsel %vm420, 1.0, 0.0
      %v453 = vsel %vm421, 1.0, 0.0
      %v454 = vsel %vm422, 1.0, 0.0
      %v455 = vsel %vm423, 1.0, 0.0
      %v456 = vsel %vm424, 1.0, 0.0
      %v457 = vsel %vm425, 1.0, 0.0
      %v458 = vsel %vm426, 1.0, 0.0
      %v459 = vsel %vm427, 1.0, 0.0
      %v460 = vsel %vm428, 1.0, 0.0
      %v461 = vsel %vm429, 1.0, 0.0
      %v462 = vsel %vm430, 1.0, 0.0
      %v463 = vsel %vm431, 1.0, 0.0
      %v464 = vsel %vm432, 1.0, 0.0
      %v465 = vsel %vm433, 1.0, 0.0
      %v466 = vsel %vm434, 1.0, 0.0
      %v467 = vsel %vm435, 1.0, 0.0
      %v468 = vsel %vm436, 1.0, 0.0
      %v469 = vsel %vm437, 1.0, 0.0
      %v470 = vsel %vm438, 1.0, 0.0
      %v471 = vsel %vm439, 1.0, 0.0
      %v472 = vsel %vm440, 1.0, 0.0
      %v473 = vsel %vm441, 1.0, 0.0
      %v474 = vsel %vm442, 1.0, 0.0
      %v475 = vsel %vm443, 1.0, 0.0
      %v476 = vsel %vm444, 1.0, 0.0
      %477 = vset.pattern.permute.xlu0 1
      %478 = vperm.xlu0 %477, %v346
      %v479 = vpop.permute.xlu0 %478
      %480 = vset.pattern.permute.xlu0 1
      %481 = vperm.xlu0 %480, %v347
      %v482 = vpop.permute.xlu0 %481
      %483 = vset.pattern.permute.xlu0 1
      %484 = vperm.xlu0 %483, %v348
      %v485 = vpop.permute.xlu0 %484
      %486 = vset.pattern.permute.xlu0 1
      %487 = vperm.xlu0 %486, %v349
      %v488 = vpop.permute.xlu0 %487
      %489 = vset.pattern.permute.xlu0 1
      %490 = vperm.xlu0 %489, %v350
      %v491 = vpop.permute.xlu0 %490
      %492 = vset.pattern.permute.xlu0 1
      %493 = vperm.xlu0 %492, %v351
      %v494 = vpop.permute.xlu0 %493
      %495 = vset.pattern.permute.xlu0 1
      %496 = vperm.xlu0 %495, %v352
      %v497 = vpop.permute.xlu0 %496
      %498 = vset.pattern.permute.xlu0 1
      %499 = vperm.xlu0 %498, %v353
      %v500 = vpop.permute.xlu0 %499
      %501 = vset.pattern.permute.xlu0 1
      %502 = vperm.xlu0 %501, %v354
      %v503 = vpop.permute.xlu0 %502
      %504 = vset.pattern.permute.xlu0 1
      %505 = vperm.xlu0 %504, %v355
      %v506 = vpop.permute.xlu0 %505
      %507 = vset.pattern.permute.xlu0 1
      %508 = vperm.xlu0 %507, %v356
      %v509 = vpop.permute.xlu0 %508
      %510 = vset.pattern.permute.xlu0 1
      %511 = vperm.xlu0 %510, %v357
      %v512 = vpop.permute.xlu0 %511
      %513 = vset.pattern.permute.xlu0 1
      %514 = vperm.xlu0 %513, %v358
      %v515 = vpop.permute.xlu0 %514
      %516 = vset.pattern.permute.xlu0 1
      %517 = vperm.xlu0 %516, %v359
      %v518 = vpop.permute.xlu0 %517
      %519 = vset.pattern.permute.xlu0 1
      %520 = vperm.xlu0 %519, %v360
      %v521 = vpop.permute.xlu0 %520
      %522 = vset.pattern.permute.xlu0 1
      %523 = vperm.xlu0 %522, %v361
      %v524 = vpop.permute.xlu0 %523
      %vm525 = vcmp.eq.s32.totalorder %v479, %v363
      %vm526 = vcmp.eq.s32.totalorder %v479, %v364
      %vm527 = vcmp.eq.s32.totalorder %v482, %v363
      %vm528 = vcmp.eq.s32.totalorder %v482, %v364
      %vm529 = vcmp.eq.s32.totalorder %v485, %v363
      %vm530 = vcmp.eq.s32.totalorder %v485, %v364
      %vm531 = vcmp.eq.s32.totalorder %v488, %v363
      %vm532 = vcmp.eq.s32.totalorder %v488, %v364
      %vm533 = vcmp.eq.s32.totalorder %v491, %v363
      %vm534 = vcmp.eq.s32.totalorder %v491, %v364
      %vm535 = vcmp.eq.s32.totalorder %v494, %v363
      %vm536 = vcmp.eq.s32.totalorder %v494, %v364
      %vm537 = vcmp.eq.s32.totalorder %v497, %v363
      %vm538 = vcmp.eq.s32.totalorder %v497, %v364
      %vm539 = vcmp.eq.s32.totalorder %v500, %v363
      %vm540 = vcmp.eq.s32.totalorder %v500, %v364
      %vm541 = vcmp.eq.s32.totalorder %v503, %v363
      %vm542 = vcmp.eq.s32.totalorder %v503, %v364
      %vm543 = vcmp.eq.s32.totalorder %v506, %v363
      %vm544 = vcmp.eq.s32.totalorder %v506, %v364
      %vm545 = vcmp.eq.s32.totalorder %v509, %v363
      %vm546 = vcmp.eq.s32.totalorder %v509, %v364
      %vm547 = vcmp.eq.s32.totalorder %v512, %v363
      %vm548 = vcmp.eq.s32.totalorder %v512, %v364
      %vm549 = vcmp.eq.s32.totalorder %v515, %v363
      %vm550 = vcmp.eq.s32.totalorder %v515, %v364
      %vm551 = vcmp.eq.s32.totalorder %v518, %v363
      %vm552 = vcmp.eq.s32.totalorder %v518, %v364
      %vm553 = vcmp.eq.s32.totalorder %v521, %v363
      %vm554 = vcmp.eq.s32.totalorder %v521, %v364
      %vm555 = vcmp.eq.s32.totalorder %v524, %v363
      %vm556 = vcmp.eq.s32.totalorder %v524, %v364
      %v557 = vsel %vm525, 1.0, 0.0
      %v558 = vsel %vm526, 1.0, 0.0
      %v559 = vsel %vm527, 1.0, 0.0
      %v560 = vsel %vm528, 1.0, 0.0
      %v561 = vsel %vm529, 1.0, 0.0
      %v562 = vsel %vm530, 1.0, 0.0
      %v563 = vsel %vm531, 1.0, 0.0
      %v564 = vsel %vm532, 1.0, 0.0
      %v565 = vsel %vm533, 1.0, 0.0
      %v566 = vsel %vm534, 1.0, 0.0
      %v567 = vsel %vm535, 1.0, 0.0
      %v568 = vsel %vm536, 1.0, 0.0
      %v569 = vsel %vm537, 1.0, 0.0
      %v570 = vsel %vm538, 1.0, 0.0
      %v571 = vsel %vm539, 1.0, 0.0
      %v572 = vsel %vm540, 1.0, 0.0
      %v573 = vsel %vm541, 1.0, 0.0
      %v574 = vsel %vm542, 1.0, 0.0
      %v575 = vsel %vm543, 1.0, 0.0
      %v576 = vsel %vm544, 1.0, 0.0
      %v577 = vsel %vm545, 1.0, 0.0
      %v578 = vsel %vm546, 1.0, 0.0
      %v579 = vsel %vm547, 1.0, 0.0
      %v580 = vsel %vm548, 1.0, 0.0
      %v581 = vsel %vm549, 1.0, 0.0
      %v582 = vsel %vm550, 1.0, 0.0
      %v583 = vsel %vm551, 1.0, 0.0
      %v584 = vsel %vm552, 1.0, 0.0
      %v585 = vsel %vm553, 1.0, 0.0
      %v586 = vsel %vm554, 1.0, 0.0
      %v587 = vsel %vm555, 1.0, 0.0
      %v588 = vsel %vm556, 1.0, 0.0
      %v589 = vadd.f32 %v445, %v557
      %v590 = vadd.f32 %v446, %v558
      %v591 = vadd.f32 %v447, %v559
      %v592 = vadd.f32 %v448, %v560
      %v593 = vadd.f32 %v449, %v561
      %v594 = vadd.f32 %v450, %v562
      %v595 = vadd.f32 %v451, %v563
      %v596 = vadd.f32 %v452, %v564
      %v597 = vadd.f32 %v453, %v565
      %v598 = vadd.f32 %v454, %v566
      %v599 = vadd.f32 %v455, %v567
      %v600 = vadd.f32 %v456, %v568
      %v601 = vadd.f32 %v457, %v569
      %v602 = vadd.f32 %v458, %v570
      %v603 = vadd.f32 %v459, %v571
      %v604 = vadd.f32 %v460, %v572
      %v605 = vadd.f32 %v461, %v573
      %v606 = vadd.f32 %v462, %v574
      %v607 = vadd.f32 %v463, %v575
      %v608 = vadd.f32 %v464, %v576
      %v609 = vadd.f32 %v465, %v577
      %v610 = vadd.f32 %v466, %v578
      %v611 = vadd.f32 %v467, %v579
      %v612 = vadd.f32 %v468, %v580
      %v613 = vadd.f32 %v469, %v581
      %v614 = vadd.f32 %v470, %v582
      %v615 = vadd.f32 %v471, %v583
      %v616 = vadd.f32 %v472, %v584
      %v617 = vadd.f32 %v473, %v585
      %v618 = vadd.f32 %v474, %v586
      %v619 = vadd.f32 %v475, %v587
      %v620 = vadd.f32 %v476, %v588
      %621 = vset.pattern.permute.xlu0 2
      %622 = vperm.xlu0 %621, %v346
      %v623 = vpop.permute.xlu0 %622
      %624 = vset.pattern.permute.xlu0 2
      %625 = vperm.xlu0 %624, %v347
      %v626 = vpop.permute.xlu0 %625
      %627 = vset.pattern.permute.xlu0 2
      %628 = vperm.xlu0 %627, %v348
      %v629 = vpop.permute.xlu0 %628
      %630 = vset.pattern.permute.xlu0 2
      %631 = vperm.xlu0 %630, %v349
      %v632 = vpop.permute.xlu0 %631
      %633 = vset.pattern.permute.xlu0 2
      %634 = vperm.xlu0 %633, %v350
      %v635 = vpop.permute.xlu0 %634
      %636 = vset.pattern.permute.xlu0 2
      %637 = vperm.xlu0 %636, %v351
      %v638 = vpop.permute.xlu0 %637
      %639 = vset.pattern.permute.xlu0 2
      %640 = vperm.xlu0 %639, %v352
      %v641 = vpop.permute.xlu0 %640
      %642 = vset.pattern.permute.xlu0 2
      %643 = vperm.xlu0 %642, %v353
      %v644 = vpop.permute.xlu0 %643
      %645 = vset.pattern.permute.xlu0 2
      %646 = vperm.xlu0 %645, %v354
      %v647 = vpop.permute.xlu0 %646
      %648 = vset.pattern.permute.xlu0 2
      %649 = vperm.xlu0 %648, %v355
      %v650 = vpop.permute.xlu0 %649
      %651 = vset.pattern.permute.xlu0 2
      %652 = vperm.xlu0 %651, %v356
      %v653 = vpop.permute.xlu0 %652
      %654 = vset.pattern.permute.xlu0 2
      %655 = vperm.xlu0 %654, %v357
      %v656 = vpop.permute.xlu0 %655
      %657 = vset.pattern.permute.xlu0 2
      %658 = vperm.xlu0 %657, %v358
      %v659 = vpop.permute.xlu0 %658
      %660 = vset.pattern.permute.xlu0 2
      %661 = vperm.xlu0 %660, %v359
      %v662 = vpop.permute.xlu0 %661
      %663 = vset.pattern.permute.xlu0 2
      %664 = vperm.xlu0 %663, %v360
      %v665 = vpop.permute.xlu0 %664
      %666 = vset.pattern.permute.xlu0 2
      %667 = vperm.xlu0 %666, %v361
      %v668 = vpop.permute.xlu0 %667
      %vm669 = vcmp.eq.s32.totalorder %v623, %v363
      %vm670 = vcmp.eq.s32.totalorder %v623, %v364
      %vm671 = vcmp.eq.s32.totalorder %v626, %v363
      %vm672 = vcmp.eq.s32.totalorder %v626, %v364
      %vm673 = vcmp.eq.s32.totalorder %v629, %v363
      %vm674 = vcmp.eq.s32.totalorder %v629, %v364
      %vm675 = vcmp.eq.s32.totalorder %v632, %v363
      %vm676 = vcmp.eq.s32.totalorder %v632, %v364
      %vm677 = vcmp.eq.s32.totalorder %v635, %v363
      %vm678 = vcmp.eq.s32.totalorder %v635, %v364
      %vm679 = vcmp.eq.s32.totalorder %v638, %v363
      %vm680 = vcmp.eq.s32.totalorder %v638, %v364
      %vm681 = vcmp.eq.s32.totalorder %v641, %v363
      %vm682 = vcmp.eq.s32.totalorder %v641, %v364
      %vm683 = vcmp.eq.s32.totalorder %v644, %v363
      %vm684 = vcmp.eq.s32.totalorder %v644, %v364
      %vm685 = vcmp.eq.s32.totalorder %v647, %v363
      %vm686 = vcmp.eq.s32.totalorder %v647, %v364
      %vm687 = vcmp.eq.s32.totalorder %v650, %v363
      %vm688 = vcmp.eq.s32.totalorder %v650, %v364
      %vm689 = vcmp.eq.s32.totalorder %v653, %v363
      %vm690 = vcmp.eq.s32.totalorder %v653, %v364
      %vm691 = vcmp.eq.s32.totalorder %v656, %v363
      %vm692 = vcmp.eq.s32.totalorder %v656, %v364
      %vm693 = vcmp.eq.s32.totalorder %v659, %v363
      %vm694 = vcmp.eq.s32.totalorder %v659, %v364
      %vm695 = vcmp.eq.s32.totalorder %v662, %v363
      %vm696 = vcmp.eq.s32.totalorder %v662, %v364
      %vm697 = vcmp.eq.s32.totalorder %v665, %v363
      %vm698 = vcmp.eq.s32.totalorder %v665, %v364
      %vm699 = vcmp.eq.s32.totalorder %v668, %v363
      %vm700 = vcmp.eq.s32.totalorder %v668, %v364
      %v701 = vsel %vm669, 1.0, 0.0
      %v702 = vsel %vm670, 1.0, 0.0
      %v703 = vsel %vm671, 1.0, 0.0
      %v704 = vsel %vm672, 1.0, 0.0
      %v705 = vsel %vm673, 1.0, 0.0
      %v706 = vsel %vm674, 1.0, 0.0
      %v707 = vsel %vm675, 1.0, 0.0
      %v708 = vsel %vm676, 1.0, 0.0
      %v709 = vsel %vm677, 1.0, 0.0
      %v710 = vsel %vm678, 1.0, 0.0
      %v711 = vsel %vm679, 1.0, 0.0
      %v712 = vsel %vm680, 1.0, 0.0
      %v713 = vsel %vm681, 1.0, 0.0
      %v714 = vsel %vm682, 1.0, 0.0
      %v715 = vsel %vm683, 1.0, 0.0
      %v716 = vsel %vm684, 1.0, 0.0
      %v717 = vsel %vm685, 1.0, 0.0
      %v718 = vsel %vm686, 1.0, 0.0
      %v719 = vsel %vm687, 1.0, 0.0
      %v720 = vsel %vm688, 1.0, 0.0
      %v721 = vsel %vm689, 1.0, 0.0
      %v722 = vsel %vm690, 1.0, 0.0
      %v723 = vsel %vm691, 1.0, 0.0
      %v724 = vsel %vm692, 1.0, 0.0
      %v725 = vsel %vm693, 1.0, 0.0
      %v726 = vsel %vm694, 1.0, 0.0
      %v727 = vsel %vm695, 1.0, 0.0
      %v728 = vsel %vm696, 1.0, 0.0
      %v729 = vsel %vm697, 1.0, 0.0
      %v730 = vsel %vm698, 1.0, 0.0
      %v731 = vsel %vm699, 1.0, 0.0
      %v732 = vsel %vm700, 1.0, 0.0
      %v733 = vadd.f32 %v589, %v701
      %v734 = vadd.f32 %v590, %v702
      %v735 = vadd.f32 %v591, %v703
      %v736 = vadd.f32 %v592, %v704
      %v737 = vadd.f32 %v593, %v705
      %v738 = vadd.f32 %v594, %v706
      %v739 = vadd.f32 %v595, %v707
      %v740 = vadd.f32 %v596, %v708
      %v741 = vadd.f32 %v597, %v709
      %v742 = vadd.f32 %v598, %v710
      %v743 = vadd.f32 %v599, %v711
      %v744 = vadd.f32 %v600, %v712
      %v745 = vadd.f32 %v601, %v713
      %v746 = vadd.f32 %v602, %v714
      %v747 = vadd.f32 %v603, %v715
      %v748 = vadd.f32 %v604, %v716
      %v749 = vadd.f32 %v605, %v717
      %v750 = vadd.f32 %v606, %v718
      %v751 = vadd.f32 %v607, %v719
      %v752 = vadd.f32 %v608, %v720
      %v753 = vadd.f32 %v609, %v721
      %v754 = vadd.f32 %v610, %v722
      %v755 = vadd.f32 %v611, %v723
      %v756 = vadd.f32 %v612, %v724
      %v757 = vadd.f32 %v613, %v725
      %v758 = vadd.f32 %v614, %v726
      %v759 = vadd.f32 %v615, %v727
      %v760 = vadd.f32 %v616, %v728
      %v761 = vadd.f32 %v617, %v729
      %v762 = vadd.f32 %v618, %v730
      %v763 = vadd.f32 %v619, %v731
      %v764 = vadd.f32 %v620, %v732
      %765 = vset.pattern.permute.xlu0 3
      %766 = vperm.xlu0 %765, %v346
      %v767 = vpop.permute.xlu0 %766
      %768 = vset.pattern.permute.xlu0 3
      %769 = vperm.xlu0 %768, %v347
      %v770 = vpop.permute.xlu0 %769
      %771 = vset.pattern.permute.xlu0 3
      %772 = vperm.xlu0 %771, %v348
      %v773 = vpop.permute.xlu0 %772
      %774 = vset.pattern.permute.xlu0 3
      %775 = vperm.xlu0 %774, %v349
      %v776 = vpop.permute.xlu0 %775
      %777 = vset.pattern.permute.xlu0 3
      %778 = vperm.xlu0 %777, %v350
      %v779 = vpop.permute.xlu0 %778
      %780 = vset.pattern.permute.xlu0 3
      %781 = vperm.xlu0 %780, %v351
      %v782 = vpop.permute.xlu0 %781
      %783 = vset.pattern.permute.xlu0 3
      %784 = vperm.xlu0 %783, %v352
      %v785 = vpop.permute.xlu0 %784
      %786 = vset.pattern.permute.xlu0 3
      %787 = vperm.xlu0 %786, %v353
      %v788 = vpop.permute.xlu0 %787
      %789 = vset.pattern.permute.xlu0 3
      %790 = vperm.xlu0 %789, %v354
      %v791 = vpop.permute.xlu0 %790
      %792 = vset.pattern.permute.xlu0 3
      %793 = vperm.xlu0 %792, %v355
      %v794 = vpop.permute.xlu0 %793
      %795 = vset.pattern.permute.xlu0 3
      %796 = vperm.xlu0 %795, %v356
      %v797 = vpop.permute.xlu0 %796
      %798 = vset.pattern.permute.xlu0 3
      %799 = vperm.xlu0 %798, %v357
      %v800 = vpop.permute.xlu0 %799
      %801 = vset.pattern.permute.xlu0 3
      %802 = vperm.xlu0 %801, %v358
      %v803 = vpop.permute.xlu0 %802
      %804 = vset.pattern.permute.xlu0 3
      %805 = vperm.xlu0 %804, %v359
      %v806 = vpop.permute.xlu0 %805
      %807 = vset.pattern.permute.xlu0 3
      %808 = vperm.xlu0 %807, %v360
      %v809 = vpop.permute.xlu0 %808
      %810 = vset.pattern.permute.xlu0 3
      %811 = vperm.xlu0 %810, %v361
      %v812 = vpop.permute.xlu0 %811
      %vm813 = vcmp.eq.s32.totalorder %v767, %v363
      %vm814 = vcmp.eq.s32.totalorder %v767, %v364
      %vm815 = vcmp.eq.s32.totalorder %v770, %v363
      %vm816 = vcmp.eq.s32.totalorder %v770, %v364
      %vm817 = vcmp.eq.s32.totalorder %v773, %v363
      %vm818 = vcmp.eq.s32.totalorder %v773, %v364
      %vm819 = vcmp.eq.s32.totalorder %v776, %v363
      %vm820 = vcmp.eq.s32.totalorder %v776, %v364
      %vm821 = vcmp.eq.s32.totalorder %v779, %v363
      %vm822 = vcmp.eq.s32.totalorder %v779, %v364
      %vm823 = vcmp.eq.s32.totalorder %v782, %v363
      %vm824 = vcmp.eq.s32.totalorder %v782, %v364
      %vm825 = vcmp.eq.s32.totalorder %v785, %v363
      %vm826 = vcmp.eq.s32.totalorder %v785, %v364
      %vm827 = vcmp.eq.s32.totalorder %v788, %v363
      %vm828 = vcmp.eq.s32.totalorder %v788, %v364
      %vm829 = vcmp.eq.s32.totalorder %v791, %v363
      %vm830 = vcmp.eq.s32.totalorder %v791, %v364
      %vm831 = vcmp.eq.s32.totalorder %v794, %v363
      %vm832 = vcmp.eq.s32.totalorder %v794, %v364
      %vm833 = vcmp.eq.s32.totalorder %v797, %v363
      %vm834 = vcmp.eq.s32.totalorder %v797, %v364
      %vm835 = vcmp.eq.s32.totalorder %v800, %v363
      %vm836 = vcmp.eq.s32.totalorder %v800, %v364
      %vm837 = vcmp.eq.s32.totalorder %v803, %v363
      %vm838 = vcmp.eq.s32.totalorder %v803, %v364
      %vm839 = vcmp.eq.s32.totalorder %v806, %v363
      %vm840 = vcmp.eq.s32.totalorder %v806, %v364
      %vm841 = vcmp.eq.s32.totalorder %v809, %v363
      %vm842 = vcmp.eq.s32.totalorder %v809, %v364
      %vm843 = vcmp.eq.s32.totalorder %v812, %v363
      %vm844 = vcmp.eq.s32.totalorder %v812, %v364
      %v845 = vsel %vm813, 1.0, 0.0
      %v846 = vsel %vm814, 1.0, 0.0
      %v847 = vsel %vm815, 1.0, 0.0
      %v848 = vsel %vm816, 1.0, 0.0
      %v849 = vsel %vm817, 1.0, 0.0
      %v850 = vsel %vm818, 1.0, 0.0
      %v851 = vsel %vm819, 1.0, 0.0
      %v852 = vsel %vm820, 1.0, 0.0
      %v853 = vsel %vm821, 1.0, 0.0
      %v854 = vsel %vm822, 1.0, 0.0
      %v855 = vsel %vm823, 1.0, 0.0
      %v856 = vsel %vm824, 1.0, 0.0
      %v857 = vsel %vm825, 1.0, 0.0
      %v858 = vsel %vm826, 1.0, 0.0
      %v859 = vsel %vm827, 1.0, 0.0
      %v860 = vsel %vm828, 1.0, 0.0
      %v861 = vsel %vm829, 1.0, 0.0
      %v862 = vsel %vm830, 1.0, 0.0
      %v863 = vsel %vm831, 1.0, 0.0
      %v864 = vsel %vm832, 1.0, 0.0
      %v865 = vsel %vm833, 1.0, 0.0
      %v866 = vsel %vm834, 1.0, 0.0
      %v867 = vsel %vm835, 1.0, 0.0
      %v868 = vsel %vm836, 1.0, 0.0
      %v869 = vsel %vm837, 1.0, 0.0
      %v870 = vsel %vm838, 1.0, 0.0
      %v871 = vsel %vm839, 1.0, 0.0
      %v872 = vsel %vm840, 1.0, 0.0
      %v873 = vsel %vm841, 1.0, 0.0
      %v874 = vsel %vm842, 1.0, 0.0
      %v875 = vsel %vm843, 1.0, 0.0
      %v876 = vsel %vm844, 1.0, 0.0
      %v877 = vadd.f32 %v733, %v845
      %v878 = vadd.f32 %v734, %v846
      %v879 = vadd.f32 %v735, %v847
      %v880 = vadd.f32 %v736, %v848
      %v881 = vadd.f32 %v737, %v849
      %v882 = vadd.f32 %v738, %v850
      %v883 = vadd.f32 %v739, %v851
      %v884 = vadd.f32 %v740, %v852
      %v885 = vadd.f32 %v741, %v853
      %v886 = vadd.f32 %v742, %v854
      %v887 = vadd.f32 %v743, %v855
      %v888 = vadd.f32 %v744, %v856
      %v889 = vadd.f32 %v745, %v857
      %v890 = vadd.f32 %v746, %v858
      %v891 = vadd.f32 %v747, %v859
      %v892 = vadd.f32 %v748, %v860
      %v893 = vadd.f32 %v749, %v861
      %v894 = vadd.f32 %v750, %v862
      %v895 = vadd.f32 %v751, %v863
      %v896 = vadd.f32 %v752, %v864
      %v897 = vadd.f32 %v753, %v865
      %v898 = vadd.f32 %v754, %v866
      %v899 = vadd.f32 %v755, %v867
      %v900 = vadd.f32 %v756, %v868
      %v901 = vadd.f32 %v757, %v869
      %v902 = vadd.f32 %v758, %v870
      %v903 = vadd.f32 %v759, %v871
      %v904 = vadd.f32 %v760, %v872
      %v905 = vadd.f32 %v761, %v873
      %v906 = vadd.f32 %v762, %v874
      %v907 = vadd.f32 %v763, %v875
      %v908 = vadd.f32 %v764, %v876
      %909 = vset.pattern.permute.xlu0 4
      %910 = vperm.xlu0 %909, %v346
      %v911 = vpop.permute.xlu0 %910
      %912 = vset.pattern.permute.xlu0 4
      %913 = vperm.xlu0 %912, %v347
      %v914 = vpop.permute.xlu0 %913
      %915 = vset.pattern.permute.xlu0 4
      %916 = vperm.xlu0 %915, %v348
      %v917 = vpop.permute.xlu0 %916
      %918 = vset.pattern.permute.xlu0 4
      %919 = vperm.xlu0 %918, %v349
      %v920 = vpop.permute.xlu0 %919
      %921 = vset.pattern.permute.xlu0 4
      %922 = vperm.xlu0 %921, %v350
      %v923 = vpop.permute.xlu0 %922
      %924 = vset.pattern.permute.xlu0 4
      %925 = vperm.xlu0 %924, %v351
      %v926 = vpop.permute.xlu0 %925
      %927 = vset.pattern.permute.xlu0 4
      %928 = vperm.xlu0 %927, %v352
      %v929 = vpop.permute.xlu0 %928
      %930 = vset.pattern.permute.xlu0 4
      %931 = vperm.xlu0 %930, %v353
      %v932 = vpop.permute.xlu0 %931
      %933 = vset.pattern.permute.xlu0 4
      %934 = vperm.xlu0 %933, %v354
      %v935 = vpop.permute.xlu0 %934
      %936 = vset.pattern.permute.xlu0 4
      %937 = vperm.xlu0 %936, %v355
      %v938 = vpop.permute.xlu0 %937
      %939 = vset.pattern.permute.xlu0 4
      %940 = vperm.xlu0 %939, %v356
      %v941 = vpop.permute.xlu0 %940
      %942 = vset.pattern.permute.xlu0 4
      %943 = vperm.xlu0 %942, %v357
      %v944 = vpop.permute.xlu0 %943
      %945 = vset.pattern.permute.xlu0 4
      %946 = vperm.xlu0 %945, %v358
      %v947 = vpop.permute.xlu0 %946
      %948 = vset.pattern.permute.xlu0 4
      %949 = vperm.xlu0 %948, %v359
      %v950 = vpop.permute.xlu0 %949
      %951 = vset.pattern.permute.xlu0 4
      %952 = vperm.xlu0 %951, %v360
      %v953 = vpop.permute.xlu0 %952
      %954 = vset.pattern.permute.xlu0 4
      %955 = vperm.xlu0 %954, %v361
      %v956 = vpop.permute.xlu0 %955
      %vm957 = vcmp.eq.s32.totalorder %v911, %v363
      %vm958 = vcmp.eq.s32.totalorder %v911, %v364
      %vm959 = vcmp.eq.s32.totalorder %v914, %v363
      %vm960 = vcmp.eq.s32.totalorder %v914, %v364
      %vm961 = vcmp.eq.s32.totalorder %v917, %v363
      %vm962 = vcmp.eq.s32.totalorder %v917, %v364
      %vm963 = vcmp.eq.s32.totalorder %v920, %v363
      %vm964 = vcmp.eq.s32.totalorder %v920, %v364
      %vm965 = vcmp.eq.s32.totalorder %v923, %v363
      %vm966 = vcmp.eq.s32.totalorder %v923, %v364
      %vm967 = vcmp.eq.s32.totalorder %v926, %v363
      %vm968 = vcmp.eq.s32.totalorder %v926, %v364
      %vm969 = vcmp.eq.s32.totalorder %v929, %v363
      %vm970 = vcmp.eq.s32.totalorder %v929, %v364
      %vm971 = vcmp.eq.s32.totalorder %v932, %v363
      %vm972 = vcmp.eq.s32.totalorder %v932, %v364
      %vm973 = vcmp.eq.s32.totalorder %v935, %v363
      %vm974 = vcmp.eq.s32.totalorder %v935, %v364
      %vm975 = vcmp.eq.s32.totalorder %v938, %v363
      %vm976 = vcmp.eq.s32.totalorder %v938, %v364
      %vm977 = vcmp.eq.s32.totalorder %v941, %v363
      %vm978 = vcmp.eq.s32.totalorder %v941, %v364
      %vm979 = vcmp.eq.s32.totalorder %v944, %v363
      %vm980 = vcmp.eq.s32.totalorder %v944, %v364
      %vm981 = vcmp.eq.s32.totalorder %v947, %v363
      %vm982 = vcmp.eq.s32.totalorder %v947, %v364
      %vm983 = vcmp.eq.s32.totalorder %v950, %v363
      %vm984 = vcmp.eq.s32.totalorder %v950, %v364
      %vm985 = vcmp.eq.s32.totalorder %v953, %v363
      %vm986 = vcmp.eq.s32.totalorder %v953, %v364
      %vm987 = vcmp.eq.s32.totalorder %v956, %v363
      %vm988 = vcmp.eq.s32.totalorder %v956, %v364
      %v989 = vsel %vm957, 1.0, 0.0
      %v990 = vsel %vm958, 1.0, 0.0
      %v991 = vsel %vm959, 1.0, 0.0
      %v992 = vsel %vm960, 1.0, 0.0
      %v993 = vsel %vm961, 1.0, 0.0
      %v994 = vsel %vm962, 1.0, 0.0
      %v995 = vsel %vm963, 1.0, 0.0
      %v996 = vsel %vm964, 1.0, 0.0
      %v997 = vsel %vm965, 1.0, 0.0
      %v998 = vsel %vm966, 1.0, 0.0
      %v999 = vsel %vm967, 1.0, 0.0
      %v1000 = vsel %vm968, 1.0, 0.0
      %v1001 = vsel %vm969, 1.0, 0.0
      %v1002 = vsel %vm970, 1.0, 0.0
      %v1003 = vsel %vm971, 1.0, 0.0
      %v1004 = vsel %vm972, 1.0, 0.0
      %v1005 = vsel %vm973, 1.0, 0.0
      %v1006 = vsel %vm974, 1.0, 0.0
      %v1007 = vsel %vm975, 1.0, 0.0
      %v1008 = vsel %vm976, 1.0, 0.0
      %v1009 = vsel %vm977, 1.0, 0.0
      %v1010 = vsel %vm978, 1.0, 0.0
      %v1011 = vsel %vm979, 1.0, 0.0
      %v1012 = vsel %vm980, 1.0, 0.0
      %v1013 = vsel %vm981, 1.0, 0.0
      %v1014 = vsel %vm982, 1.0, 0.0
      %v1015 = vsel %vm983, 1.0, 0.0
      %v1016 = vsel %vm984, 1.0, 0.0
      %v1017 = vsel %vm985, 1.0, 0.0
      %v1018 = vsel %vm986, 1.0, 0.0
      %v1019 = vsel %vm987, 1.0, 0.0
      %v1020 = vsel %vm988, 1.0, 0.0
      %v1021 = vadd.f32 %v877, %v989
      %v1022 = vadd.f32 %v878, %v990
      %v1023 = vadd.f32 %v879, %v991
      %v1024 = vadd.f32 %v880, %v992
      %v1025 = vadd.f32 %v881, %v993
      %v1026 = vadd.f32 %v882, %v994
      %v1027 = vadd.f32 %v883, %v995
      %v1028 = vadd.f32 %v884, %v996
      %v1029 = vadd.f32 %v885, %v997
      %v1030 = vadd.f32 %v886, %v998
      %v1031 = vadd.f32 %v887, %v999
      %v1032 = vadd.f32 %v888, %v1000
      %v1033 = vadd.f32 %v889, %v1001
      %v1034 = vadd.f32 %v890, %v1002
      %v1035 = vadd.f32 %v891, %v1003
      %v1036 = vadd.f32 %v892, %v1004
      %v1037 = vadd.f32 %v893, %v1005
      %v1038 = vadd.f32 %v894, %v1006
      %v1039 = vadd.f32 %v895, %v1007
      %v1040 = vadd.f32 %v896, %v1008
      %v1041 = vadd.f32 %v897, %v1009
      %v1042 = vadd.f32 %v898, %v1010
      %v1043 = vadd.f32 %v899, %v1011
      %v1044 = vadd.f32 %v900, %v1012
      %v1045 = vadd.f32 %v901, %v1013
      %v1046 = vadd.f32 %v902, %v1014
      %v1047 = vadd.f32 %v903, %v1015
      %v1048 = vadd.f32 %v904, %v1016
      %v1049 = vadd.f32 %v905, %v1017
      %v1050 = vadd.f32 %v906, %v1018
      %v1051 = vadd.f32 %v907, %v1019
      %v1052 = vadd.f32 %v908, %v1020
      %1053 = vset.pattern.permute.xlu0 5
      %1054 = vperm.xlu0 %1053, %v346
      %v1055 = vpop.permute.xlu0 %1054
      %1056 = vset.pattern.permute.xlu0 5
      %1057 = vperm.xlu0 %1056, %v347
      %v1058 = vpop.permute.xlu0 %1057
      %1059 = vset.pattern.permute.xlu0 5
      %1060 = vperm.xlu0 %1059, %v348
      %v1061 = vpop.permute.xlu0 %1060
      %1062 = vset.pattern.permute.xlu0 5
      %1063 = vperm.xlu0 %1062, %v349
      %v1064 = vpop.permute.xlu0 %1063
      %1065 = vset.pattern.permute.xlu0 5
      %1066 = vperm.xlu0 %1065, %v350
      %v1067 = vpop.permute.xlu0 %1066
      %1068 = vset.pattern.permute.xlu0 5
      %1069 = vperm.xlu0 %1068, %v351
      %v1070 = vpop.permute.xlu0 %1069
      %1071 = vset.pattern.permute.xlu0 5
      %1072 = vperm.xlu0 %1071, %v352
      %v1073 = vpop.permute.xlu0 %1072
      %1074 = vset.pattern.permute.xlu0 5
      %1075 = vperm.xlu0 %1074, %v353
      %v1076 = vpop.permute.xlu0 %1075
      %1077 = vset.pattern.permute.xlu0 5
      %1078 = vperm.xlu0 %1077, %v354
      %v1079 = vpop.permute.xlu0 %1078
      %1080 = vset.pattern.permute.xlu0 5
      %1081 = vperm.xlu0 %1080, %v355
      %v1082 = vpop.permute.xlu0 %1081
      %1083 = vset.pattern.permute.xlu0 5
      %1084 = vperm.xlu0 %1083, %v356
      %v1085 = vpop.permute.xlu0 %1084
      %1086 = vset.pattern.permute.xlu0 5
      %1087 = vperm.xlu0 %1086, %v357
      %v1088 = vpop.permute.xlu0 %1087
      %1089 = vset.pattern.permute.xlu0 5
      %1090 = vperm.xlu0 %1089, %v358
      %v1091 = vpop.permute.xlu0 %1090
      %1092 = vset.pattern.permute.xlu0 5
      %1093 = vperm.xlu0 %1092, %v359
      %v1094 = vpop.permute.xlu0 %1093
      %1095 = vset.pattern.permute.xlu0 5
      %1096 = vperm.xlu0 %1095, %v360
      %v1097 = vpop.permute.xlu0 %1096
      %1098 = vset.pattern.permute.xlu0 5
      %1099 = vperm.xlu0 %1098, %v361
      %v1100 = vpop.permute.xlu0 %1099
      %vm1101 = vcmp.eq.s32.totalorder %v1055, %v363
      %vm1102 = vcmp.eq.s32.totalorder %v1055, %v364
      %vm1103 = vcmp.eq.s32.totalorder %v1058, %v363
      %vm1104 = vcmp.eq.s32.totalorder %v1058, %v364
      %vm1105 = vcmp.eq.s32.totalorder %v1061, %v363
      %vm1106 = vcmp.eq.s32.totalorder %v1061, %v364
      %vm1107 = vcmp.eq.s32.totalorder %v1064, %v363
      %vm1108 = vcmp.eq.s32.totalorder %v1064, %v364
      %vm1109 = vcmp.eq.s32.totalorder %v1067, %v363
      %vm1110 = vcmp.eq.s32.totalorder %v1067, %v364
      %vm1111 = vcmp.eq.s32.totalorder %v1070, %v363
      %vm1112 = vcmp.eq.s32.totalorder %v1070, %v364
      %vm1113 = vcmp.eq.s32.totalorder %v1073, %v363
      %vm1114 = vcmp.eq.s32.totalorder %v1073, %v364
      %vm1115 = vcmp.eq.s32.totalorder %v1076, %v363
      %vm1116 = vcmp.eq.s32.totalorder %v1076, %v364
      %vm1117 = vcmp.eq.s32.totalorder %v1079, %v363
      %vm1118 = vcmp.eq.s32.totalorder %v1079, %v364
      %vm1119 = vcmp.eq.s32.totalorder %v1082, %v363
      %vm1120 = vcmp.eq.s32.totalorder %v1082, %v364
      %vm1121 = vcmp.eq.s32.totalorder %v1085, %v363
      %vm1122 = vcmp.eq.s32.totalorder %v1085, %v364
      %vm1123 = vcmp.eq.s32.totalorder %v1088, %v363
      %vm1124 = vcmp.eq.s32.totalorder %v1088, %v364
      %vm1125 = vcmp.eq.s32.totalorder %v1091, %v363
      %vm1126 = vcmp.eq.s32.totalorder %v1091, %v364
      %vm1127 = vcmp.eq.s32.totalorder %v1094, %v363
      %vm1128 = vcmp.eq.s32.totalorder %v1094, %v364
      %vm1129 = vcmp.eq.s32.totalorder %v1097, %v363
      %vm1130 = vcmp.eq.s32.totalorder %v1097, %v364
      %vm1131 = vcmp.eq.s32.totalorder %v1100, %v363
      %vm1132 = vcmp.eq.s32.totalorder %v1100, %v364
      %v1133 = vsel %vm1101, 1.0, 0.0
      %v1134 = vsel %vm1102, 1.0, 0.0
      %v1135 = vsel %vm1103, 1.0, 0.0
      %v1136 = vsel %vm1104, 1.0, 0.0
      %v1137 = vsel %vm1105, 1.0, 0.0
      %v1138 = vsel %vm1106, 1.0, 0.0
      %v1139 = vsel %vm1107, 1.0, 0.0
      %v1140 = vsel %vm1108, 1.0, 0.0
      %v1141 = vsel %vm1109, 1.0, 0.0
      %v1142 = vsel %vm1110, 1.0, 0.0
      %v1143 = vsel %vm1111, 1.0, 0.0
      %v1144 = vsel %vm1112, 1.0, 0.0
      %v1145 = vsel %vm1113, 1.0, 0.0
      %v1146 = vsel %vm1114, 1.0, 0.0
      %v1147 = vsel %vm1115, 1.0, 0.0
      %v1148 = vsel %vm1116, 1.0, 0.0
      %v1149 = vsel %vm1117, 1.0, 0.0
      %v1150 = vsel %vm1118, 1.0, 0.0
      %v1151 = vsel %vm1119, 1.0, 0.0
      %v1152 = vsel %vm1120, 1.0, 0.0
      %v1153 = vsel %vm1121, 1.0, 0.0
      %v1154 = vsel %vm1122, 1.0, 0.0
      %v1155 = vsel %vm1123, 1.0, 0.0
      %v1156 = vsel %vm1124, 1.0, 0.0
      %v1157 = vsel %vm1125, 1.0, 0.0
      %v1158 = vsel %vm1126, 1.0, 0.0
      %v1159 = vsel %vm1127, 1.0, 0.0
      %v1160 = vsel %vm1128, 1.0, 0.0
      %v1161 = vsel %vm1129, 1.0, 0.0
      %v1162 = vsel %vm1130, 1.0, 0.0
      %v1163 = vsel %vm1131, 1.0, 0.0
      %v1164 = vsel %vm1132, 1.0, 0.0
      %v1165 = vadd.f32 %v1021, %v1133
      %v1166 = vadd.f32 %v1022, %v1134
      %v1167 = vadd.f32 %v1023, %v1135
      %v1168 = vadd.f32 %v1024, %v1136
      %v1169 = vadd.f32 %v1025, %v1137
      %v1170 = vadd.f32 %v1026, %v1138
      %v1171 = vadd.f32 %v1027, %v1139
      %v1172 = vadd.f32 %v1028, %v1140
      %v1173 = vadd.f32 %v1029, %v1141
      %v1174 = vadd.f32 %v1030, %v1142
      %v1175 = vadd.f32 %v1031, %v1143
      %v1176 = vadd.f32 %v1032, %v1144
      %v1177 = vadd.f32 %v1033, %v1145
      %v1178 = vadd.f32 %v1034, %v1146
      %v1179 = vadd.f32 %v1035, %v1147
      %v1180 = vadd.f32 %v1036, %v1148
      %v1181 = vadd.f32 %v1037, %v1149
      %v1182 = vadd.f32 %v1038, %v1150
      %v1183 = vadd.f32 %v1039, %v1151
      %v1184 = vadd.f32 %v1040, %v1152
      %v1185 = vadd.f32 %v1041, %v1153
      %v1186 = vadd.f32 %v1042, %v1154
      %v1187 = vadd.f32 %v1043, %v1155
      %v1188 = vadd.f32 %v1044, %v1156
      %v1189 = vadd.f32 %v1045, %v1157
      %v1190 = vadd.f32 %v1046, %v1158
      %v1191 = vadd.f32 %v1047, %v1159
      %v1192 = vadd.f32 %v1048, %v1160
      %v1193 = vadd.f32 %v1049, %v1161
      %v1194 = vadd.f32 %v1050, %v1162
      %v1195 = vadd.f32 %v1051, %v1163
      %v1196 = vadd.f32 %v1052, %v1164
      %1197 = vset.pattern.permute.xlu0 6
      %1198 = vperm.xlu0 %1197, %v346
      %v1199 = vpop.permute.xlu0 %1198
      %1200 = vset.pattern.permute.xlu0 6
      %1201 = vperm.xlu0 %1200, %v347
      %v1202 = vpop.permute.xlu0 %1201
      %1203 = vset.pattern.permute.xlu0 6
      %1204 = vperm.xlu0 %1203, %v348
      %v1205 = vpop.permute.xlu0 %1204
      %1206 = vset.pattern.permute.xlu0 6
      %1207 = vperm.xlu0 %1206, %v349
      %v1208 = vpop.permute.xlu0 %1207
      %1209 = vset.pattern.permute.xlu0 6
      %1210 = vperm.xlu0 %1209, %v350
      %v1211 = vpop.permute.xlu0 %1210
      %1212 = vset.pattern.permute.xlu0 6
      %1213 = vperm.xlu0 %1212, %v351
      %v1214 = vpop.permute.xlu0 %1213
      %1215 = vset.pattern.permute.xlu0 6
      %1216 = vperm.xlu0 %1215, %v352
      %v1217 = vpop.permute.xlu0 %1216
      %1218 = vset.pattern.permute.xlu0 6
      %1219 = vperm.xlu0 %1218, %v353
      %v1220 = vpop.permute.xlu0 %1219
      %1221 = vset.pattern.permute.xlu0 6
      %1222 = vperm.xlu0 %1221, %v354
      %v1223 = vpop.permute.xlu0 %1222
      %1224 = vset.pattern.permute.xlu0 6
      %1225 = vperm.xlu0 %1224, %v355
      %v1226 = vpop.permute.xlu0 %1225
      %1227 = vset.pattern.permute.xlu0 6
      %1228 = vperm.xlu0 %1227, %v356
      %v1229 = vpop.permute.xlu0 %1228
      %1230 = vset.pattern.permute.xlu0 6
      %1231 = vperm.xlu0 %1230, %v357
      %v1232 = vpop.permute.xlu0 %1231
      %1233 = vset.pattern.permute.xlu0 6
      %1234 = vperm.xlu0 %1233, %v358
      %v1235 = vpop.permute.xlu0 %1234
      %1236 = vset.pattern.permute.xlu0 6
      %1237 = vperm.xlu0 %1236, %v359
      %v1238 = vpop.permute.xlu0 %1237
      %1239 = vset.pattern.permute.xlu0 6
      %1240 = vperm.xlu0 %1239, %v360
      %v1241 = vpop.permute.xlu0 %1240
      %1242 = vset.pattern.permute.xlu0 6
      %1243 = vperm.xlu0 %1242, %v361
      %v1244 = vpop.permute.xlu0 %1243
      %vm1245 = vcmp.eq.s32.totalorder %v1199, %v363
      %vm1246 = vcmp.eq.s32.totalorder %v1199, %v364
      %vm1247 = vcmp.eq.s32.totalorder %v1202, %v363
      %vm1248 = vcmp.eq.s32.totalorder %v1202, %v364
      %vm1249 = vcmp.eq.s32.totalorder %v1205, %v363
      %vm1250 = vcmp.eq.s32.totalorder %v1205, %v364
      %vm1251 = vcmp.eq.s32.totalorder %v1208, %v363
      %vm1252 = vcmp.eq.s32.totalorder %v1208, %v364
      %vm1253 = vcmp.eq.s32.totalorder %v1211, %v363
      %vm1254 = vcmp.eq.s32.totalorder %v1211, %v364
      %vm1255 = vcmp.eq.s32.totalorder %v1214, %v363
      %vm1256 = vcmp.eq.s32.totalorder %v1214, %v364
      %vm1257 = vcmp.eq.s32.totalorder %v1217, %v363
      %vm1258 = vcmp.eq.s32.totalorder %v1217, %v364
      %vm1259 = vcmp.eq.s32.totalorder %v1220, %v363
      %vm1260 = vcmp.eq.s32.totalorder %v1220, %v364
      %vm1261 = vcmp.eq.s32.totalorder %v1223, %v363
      %vm1262 = vcmp.eq.s32.totalorder %v1223, %v364
      %vm1263 = vcmp.eq.s32.totalorder %v1226, %v363
      %vm1264 = vcmp.eq.s32.totalorder %v1226, %v364
      %vm1265 = vcmp.eq.s32.totalorder %v1229, %v363
      %vm1266 = vcmp.eq.s32.totalorder %v1229, %v364
      %vm1267 = vcmp.eq.s32.totalorder %v1232, %v363
      %vm1268 = vcmp.eq.s32.totalorder %v1232, %v364
      %vm1269 = vcmp.eq.s32.totalorder %v1235, %v363
      %vm1270 = vcmp.eq.s32.totalorder %v1235, %v364
      %vm1271 = vcmp.eq.s32.totalorder %v1238, %v363
      %vm1272 = vcmp.eq.s32.totalorder %v1238, %v364
      %vm1273 = vcmp.eq.s32.totalorder %v1241, %v363
      %vm1274 = vcmp.eq.s32.totalorder %v1241, %v364
      %vm1275 = vcmp.eq.s32.totalorder %v1244, %v363
      %vm1276 = vcmp.eq.s32.totalorder %v1244, %v364
      %v1277 = vsel %vm1245, 1.0, 0.0
      %v1278 = vsel %vm1246, 1.0, 0.0
      %v1279 = vsel %vm1247, 1.0, 0.0
      %v1280 = vsel %vm1248, 1.0, 0.0
      %v1281 = vsel %vm1249, 1.0, 0.0
      %v1282 = vsel %vm1250, 1.0, 0.0
      %v1283 = vsel %vm1251, 1.0, 0.0
      %v1284 = vsel %vm1252, 1.0, 0.0
      %v1285 = vsel %vm1253, 1.0, 0.0
      %v1286 = vsel %vm1254, 1.0, 0.0
      %v1287 = vsel %vm1255, 1.0, 0.0
      %v1288 = vsel %vm1256, 1.0, 0.0
      %v1289 = vsel %vm1257, 1.0, 0.0
      %v1290 = vsel %vm1258, 1.0, 0.0
      %v1291 = vsel %vm1259, 1.0, 0.0
      %v1292 = vsel %vm1260, 1.0, 0.0
      %v1293 = vsel %vm1261, 1.0, 0.0
      %v1294 = vsel %vm1262, 1.0, 0.0
      %v1295 = vsel %vm1263, 1.0, 0.0
      %v1296 = vsel %vm1264, 1.0, 0.0
      %v1297 = vsel %vm1265, 1.0, 0.0
      %v1298 = vsel %vm1266, 1.0, 0.0
      %v1299 = vsel %vm1267, 1.0, 0.0
      %v1300 = vsel %vm1268, 1.0, 0.0
      %v1301 = vsel %vm1269, 1.0, 0.0
      %v1302 = vsel %vm1270, 1.0, 0.0
      %v1303 = vsel %vm1271, 1.0, 0.0
      %v1304 = vsel %vm1272, 1.0, 0.0
      %v1305 = vsel %vm1273, 1.0, 0.0
      %v1306 = vsel %vm1274, 1.0, 0.0
      %v1307 = vsel %vm1275, 1.0, 0.0
      %v1308 = vsel %vm1276, 1.0, 0.0
      %v1309 = vadd.f32 %v1165, %v1277
      %v1310 = vadd.f32 %v1166, %v1278
      %v1311 = vadd.f32 %v1167, %v1279
      %v1312 = vadd.f32 %v1168, %v1280
      %v1313 = vadd.f32 %v1169, %v1281
      %v1314 = vadd.f32 %v1170, %v1282
      %v1315 = vadd.f32 %v1171, %v1283
      %v1316 = vadd.f32 %v1172, %v1284
      %v1317 = vadd.f32 %v1173, %v1285
      %v1318 = vadd.f32 %v1174, %v1286
      %v1319 = vadd.f32 %v1175, %v1287
      %v1320 = vadd.f32 %v1176, %v1288
      %v1321 = vadd.f32 %v1177, %v1289
      %v1322 = vadd.f32 %v1178, %v1290
      %v1323 = vadd.f32 %v1179, %v1291
      %v1324 = vadd.f32 %v1180, %v1292
      %v1325 = vadd.f32 %v1181, %v1293
      %v1326 = vadd.f32 %v1182, %v1294
      %v1327 = vadd.f32 %v1183, %v1295
      %v1328 = vadd.f32 %v1184, %v1296
      %v1329 = vadd.f32 %v1185, %v1297
      %v1330 = vadd.f32 %v1186, %v1298
      %v1331 = vadd.f32 %v1187, %v1299
      %v1332 = vadd.f32 %v1188, %v1300
      %v1333 = vadd.f32 %v1189, %v1301
      %v1334 = vadd.f32 %v1190, %v1302
      %v1335 = vadd.f32 %v1191, %v1303
      %v1336 = vadd.f32 %v1192, %v1304
      %v1337 = vadd.f32 %v1193, %v1305
      %v1338 = vadd.f32 %v1194, %v1306
      %v1339 = vadd.f32 %v1195, %v1307
      %v1340 = vadd.f32 %v1196, %v1308
      %1341 = vset.pattern.permute.xlu0 7
      %1342 = vperm.xlu0 %1341, %v346
      %v1343 = vpop.permute.xlu0 %1342
      %1344 = vset.pattern.permute.xlu0 7
      %1345 = vperm.xlu0 %1344, %v347
      %v1346 = vpop.permute.xlu0 %1345
      %1347 = vset.pattern.permute.xlu0 7
      %1348 = vperm.xlu0 %1347, %v348
      %v1349 = vpop.permute.xlu0 %1348
      %1350 = vset.pattern.permute.xlu0 7
      %1351 = vperm.xlu0 %1350, %v349
      %v1352 = vpop.permute.xlu0 %1351
      %1353 = vset.pattern.permute.xlu0 7
      %1354 = vperm.xlu0 %1353, %v350
      %v1355 = vpop.permute.xlu0 %1354
      %1356 = vset.pattern.permute.xlu0 7
      %1357 = vperm.xlu0 %1356, %v351
      %v1358 = vpop.permute.xlu0 %1357
      %1359 = vset.pattern.permute.xlu0 7
      %1360 = vperm.xlu0 %1359, %v352
      %v1361 = vpop.permute.xlu0 %1360
      %1362 = vset.pattern.permute.xlu0 7
      %1363 = vperm.xlu0 %1362, %v353
      %v1364 = vpop.permute.xlu0 %1363
      %1365 = vset.pattern.permute.xlu0 7
      %1366 = vperm.xlu0 %1365, %v354
      %v1367 = vpop.permute.xlu0 %1366
      %1368 = vset.pattern.permute.xlu0 7
      %1369 = vperm.xlu0 %1368, %v355
      %v1370 = vpop.permute.xlu0 %1369
      %1371 = vset.pattern.permute.xlu0 7
      %1372 = vperm.xlu0 %1371, %v356
      %v1373 = vpop.permute.xlu0 %1372
      %1374 = vset.pattern.permute.xlu0 7
      %1375 = vperm.xlu0 %1374, %v357
      %v1376 = vpop.permute.xlu0 %1375
      %1377 = vset.pattern.permute.xlu0 7
      %1378 = vperm.xlu0 %1377, %v358
      %v1379 = vpop.permute.xlu0 %1378
      %1380 = vset.pattern.permute.xlu0 7
      %1381 = vperm.xlu0 %1380, %v359
      %v1382 = vpop.permute.xlu0 %1381
      %1383 = vset.pattern.permute.xlu0 7
      %1384 = vperm.xlu0 %1383, %v360
      %v1385 = vpop.permute.xlu0 %1384
      %1386 = vset.pattern.permute.xlu0 7
      %1387 = vperm.xlu0 %1386, %v361
      %v1388 = vpop.permute.xlu0 %1387
      %vm1389 = vcmp.eq.s32.totalorder %v1343, %v363
      %vm1390 = vcmp.eq.s32.totalorder %v1343, %v364
      %vm1391 = vcmp.eq.s32.totalorder %v1346, %v363
      %vm1392 = vcmp.eq.s32.totalorder %v1346, %v364
      %vm1393 = vcmp.eq.s32.totalorder %v1349, %v363
      %vm1394 = vcmp.eq.s32.totalorder %v1349, %v364
      %vm1395 = vcmp.eq.s32.totalorder %v1352, %v363
      %vm1396 = vcmp.eq.s32.totalorder %v1352, %v364
      %vm1397 = vcmp.eq.s32.totalorder %v1355, %v363
      %vm1398 = vcmp.eq.s32.totalorder %v1355, %v364
      %vm1399 = vcmp.eq.s32.totalorder %v1358, %v363
      %vm1400 = vcmp.eq.s32.totalorder %v1358, %v364
      %vm1401 = vcmp.eq.s32.totalorder %v1361, %v363
      %vm1402 = vcmp.eq.s32.totalorder %v1361, %v364
      %vm1403 = vcmp.eq.s32.totalorder %v1364, %v363
      %vm1404 = vcmp.eq.s32.totalorder %v1364, %v364
      %vm1405 = vcmp.eq.s32.totalorder %v1367, %v363
      %vm1406 = vcmp.eq.s32.totalorder %v1367, %v364
      %vm1407 = vcmp.eq.s32.totalorder %v1370, %v363
      %vm1408 = vcmp.eq.s32.totalorder %v1370, %v364
      %vm1409 = vcmp.eq.s32.totalorder %v1373, %v363
      %vm1410 = vcmp.eq.s32.totalorder %v1373, %v364
      %vm1411 = vcmp.eq.s32.totalorder %v1376, %v363
      %vm1412 = vcmp.eq.s32.totalorder %v1376, %v364
      %vm1413 = vcmp.eq.s32.totalorder %v1379, %v363
      %vm1414 = vcmp.eq.s32.totalorder %v1379, %v364
      %vm1415 = vcmp.eq.s32.totalorder %v1382, %v363
      %vm1416 = vcmp.eq.s32.totalorder %v1382, %v364
      %vm1417 = vcmp.eq.s32.totalorder %v1385, %v363
      %vm1418 = vcmp.eq.s32.totalorder %v1385, %v364
      %vm1419 = vcmp.eq.s32.totalorder %v1388, %v363
      %vm1420 = vcmp.eq.s32.totalorder %v1388, %v364
      %v1421 = vsel %vm1389, 1.0, 0.0
      %v1422 = vsel %vm1390, 1.0, 0.0
      %v1423 = vsel %vm1391, 1.0, 0.0
      %v1424 = vsel %vm1392, 1.0, 0.0
      %v1425 = vsel %vm1393, 1.0, 0.0
      %v1426 = vsel %vm1394, 1.0, 0.0
      %v1427 = vsel %vm1395, 1.0, 0.0
      %v1428 = vsel %vm1396, 1.0, 0.0
      %v1429 = vsel %vm1397, 1.0, 0.0
      %v1430 = vsel %vm1398, 1.0, 0.0
      %v1431 = vsel %vm1399, 1.0, 0.0
      %v1432 = vsel %vm1400, 1.0, 0.0
      %v1433 = vsel %vm1401, 1.0, 0.0
      %v1434 = vsel %vm1402, 1.0, 0.0
      %v1435 = vsel %vm1403, 1.0, 0.0
      %v1436 = vsel %vm1404, 1.0, 0.0
      %v1437 = vsel %vm1405, 1.0, 0.0
      %v1438 = vsel %vm1406, 1.0, 0.0
      %v1439 = vsel %vm1407, 1.0, 0.0
      %v1440 = vsel %vm1408, 1.0, 0.0
      %v1441 = vsel %vm1409, 1.0, 0.0
      %v1442 = vsel %vm1410, 1.0, 0.0
      %v1443 = vsel %vm1411, 1.0, 0.0
      %v1444 = vsel %vm1412, 1.0, 0.0
      %v1445 = vsel %vm1413, 1.0, 0.0
      %v1446 = vsel %vm1414, 1.0, 0.0
      %v1447 = vsel %vm1415, 1.0, 0.0
      %v1448 = vsel %vm1416, 1.0, 0.0
      %v1449 = vsel %vm1417, 1.0, 0.0
      %v1450 = vsel %vm1418, 1.0, 0.0
      %v1451 = vsel %vm1419, 1.0, 0.0
      %v1452 = vsel %vm1420, 1.0, 0.0
      %v1453 = vadd.f32 %v1309, %v1421
      %v1454 = vadd.f32 %v1310, %v1422
      %v1455 = vadd.f32 %v1311, %v1423
      %v1456 = vadd.f32 %v1312, %v1424
      %v1457 = vadd.f32 %v1313, %v1425
      %v1458 = vadd.f32 %v1314, %v1426
      %v1459 = vadd.f32 %v1315, %v1427
      %v1460 = vadd.f32 %v1316, %v1428
      %v1461 = vadd.f32 %v1317, %v1429
      %v1462 = vadd.f32 %v1318, %v1430
      %v1463 = vadd.f32 %v1319, %v1431
      %v1464 = vadd.f32 %v1320, %v1432
      %v1465 = vadd.f32 %v1321, %v1433
      %v1466 = vadd.f32 %v1322, %v1434
      %v1467 = vadd.f32 %v1323, %v1435
      %v1468 = vadd.f32 %v1324, %v1436
      %v1469 = vadd.f32 %v1325, %v1437
      %v1470 = vadd.f32 %v1326, %v1438
      %v1471 = vadd.f32 %v1327, %v1439
      %v1472 = vadd.f32 %v1328, %v1440
      %v1473 = vadd.f32 %v1329, %v1441
      %v1474 = vadd.f32 %v1330, %v1442
      %v1475 = vadd.f32 %v1331, %v1443
      %v1476 = vadd.f32 %v1332, %v1444
      %v1477 = vadd.f32 %v1333, %v1445
      %v1478 = vadd.f32 %v1334, %v1446
      %v1479 = vadd.f32 %v1335, %v1447
      %v1480 = vadd.f32 %v1336, %v1448
      %v1481 = vadd.f32 %v1337, %v1449
      %v1482 = vadd.f32 %v1338, %v1450
      %v1483 = vadd.f32 %v1339, %v1451
      %v1484 = vadd.f32 %v1340, %v1452
      %v1485 = vpack.c.bf16 %v1455, %v1453
      %v1486 = vpack.c.bf16 %v1456, %v1454
      %v1487 = vpack.c.bf16 %v1459, %v1457
      %v1488 = vpack.c.bf16 %v1460, %v1458
      %v1489 = vpack.c.bf16 %v1463, %v1461
      %v1490 = vpack.c.bf16 %v1464, %v1462
      %v1491 = vpack.c.bf16 %v1467, %v1465
      %v1492 = vpack.c.bf16 %v1468, %v1466
      %v1493 = vpack.c.bf16 %v1471, %v1469
      %v1494 = vpack.c.bf16 %v1472, %v1470
      %v1495 = vpack.c.bf16 %v1475, %v1473
      %v1496 = vpack.c.bf16 %v1476, %v1474
      %v1497 = vpack.c.bf16 %v1479, %v1477
      %v1498 = vpack.c.bf16 %v1480, %v1478
      %v1499 = vpack.c.bf16 %v1483, %v1481
      %v1500 = vpack.c.bf16 %v1484, %v1482
      %v1501 = vld [vmem:[%s1] sm:$0xff]
      %v1502 = vld [vmem:[%s1 + $0x8] sm:$0xff]
      %v1503 = vld [vmem:[%s1 + $0x10] sm:$0xff]
      %v1504 = vld [vmem:[%s1 + $0x18] sm:$0xff]
      %v1505 = vld [vmem:[%s1 + $0x20] sm:$0xff]
      %v1506 = vld [vmem:[%s1 + $0x28] sm:$0xff]
      %v1507 = vld [vmem:[%s1 + $0x30] sm:$0xff]
      %v1508 = vld [vmem:[%s1 + $0x38] sm:$0xff]
      %v1509 = vld [vmem:[%s1 + $0x40] sm:$0xff]
      %v1510 = vld [vmem:[%s1 + $0x48] sm:$0xff]
      %v1511 = vld [vmem:[%s1 + $0x50] sm:$0xff]
      %v1512 = vld [vmem:[%s1 + $0x58] sm:$0xff]
      %v1513 = vld [vmem:[%s1 + $0x60] sm:$0xff]
      %v1514 = vld [vmem:[%s1 + $0x68] sm:$0xff]
      %v1515 = vld [vmem:[%s1 + $0x70] sm:$0xff]
      %v1516 = vld [vmem:[%s1 + $0x78] sm:$0xff]
      %v1517 = vld [vmem:[%s1 + $0x80] sm:$0xff]
      %v1518 = vld [vmem:[%s1 + $0x88] sm:$0xff]
      %v1519 = vld [vmem:[%s1 + $0x90] sm:$0xff]
      %v1520 = vld [vmem:[%s1 + $0x98] sm:$0xff]
      %v1521 = vld [vmem:[%s1 + $0xa0] sm:$0xff]
      %v1522 = vld [vmem:[%s1 + $0xa8] sm:$0xff]
      %v1523 = vld [vmem:[%s1 + $0xb0] sm:$0xff]
      %v1524 = vld [vmem:[%s1 + $0xb8] sm:$0xff]
      %v1525 = vld [vmem:[%s1 + $0xc0] sm:$0xff]
      %v1526 = vld [vmem:[%s1 + $0xc8] sm:$0xff]
      %v1527 = vld [vmem:[%s1 + $0xd0] sm:$0xff]
      %v1528 = vld [vmem:[%s1 + $0xd8] sm:$0xff]
      %v1529 = vld [vmem:[%s1 + $0xe0] sm:$0xff]
      %v1530 = vld [vmem:[%s1 + $0xe8] sm:$0xff]
      %v1531 = vld [vmem:[%s1 + $0xf0] sm:$0xff]
      %v1532 = vld [vmem:[%s1 + $0xf8] sm:$0xff]
      %v1533 = vpack.c.bf16 %v1502, %v1501
      %v1534 = vpack.c.bf16 %v1504, %v1503
      %v1535 = vpack.c.bf16 %v1506, %v1505
      %v1536 = vpack.c.bf16 %v1508, %v1507
      %v1537 = vpack.c.bf16 %v1510, %v1509
      %v1538 = vpack.c.bf16 %v1512, %v1511
      %v1539 = vpack.c.bf16 %v1514, %v1513
      %v1540 = vpack.c.bf16 %v1516, %v1515
      %v1541 = vpack.c.bf16 %v1518, %v1517
      %v1542 = vpack.c.bf16 %v1520, %v1519
      %v1543 = vpack.c.bf16 %v1522, %v1521
      %v1544 = vpack.c.bf16 %v1524, %v1523
      %v1545 = vpack.c.bf16 %v1526, %v1525
      %v1546 = vpack.c.bf16 %v1528, %v1527
      %v1547 = vpack.c.bf16 %v1530, %v1529
      %v1548 = vpack.c.bf16 %v1532, %v1531
      %1549 = vmatprep.subr.bf16.mxu0 0
      %1550 = vmatpush1.bf16.msra.mxu0 %v1533
      %1551 = vmatprep.subr.bf16.mxu0 0
      %1552 = vmatpush1.bf16.msra.mxu0 %v1534
      %1553 = vmatprep.subr.bf16.mxu0 0
      %1554 = vmatpush1.bf16.msra.mxu0 %v1535
      %1555 = vmatprep.subr.bf16.mxu0 0
      %1556 = vmatpush1.bf16.msra.mxu0 %v1536
      %1557 = vmatprep.subr.bf16.mxu0 0
      %1558 = vmatpush1.bf16.msra.mxu0 %v1537
      %1559 = vmatprep.subr.bf16.mxu0 0
      %1560 = vmatpush1.bf16.msra.mxu0 %v1538
      %1561 = vmatprep.subr.bf16.mxu0 0
      %1562 = vmatpush1.bf16.msra.mxu0 %v1539
      %1563 = vmatprep.subr.bf16.mxu0 0
      %1564 = vmatpush1.bf16.msra.mxu0 %v1540
      %1565 = vmatprep.subr.bf16.mxu0 0
      %1566 = vmatpush1.bf16.msra.mxu0 %v1541
      %1567 = vmatprep.subr.bf16.mxu0 0
      %1568 = vmatpush1.bf16.msra.mxu0 %v1542
      %1569 = vmatprep.subr.bf16.mxu0 0
      %1570 = vmatpush1.bf16.msra.mxu0 %v1543
      %1571 = vmatprep.subr.bf16.mxu0 0
      %1572 = vmatpush1.bf16.msra.mxu0 %v1544
      %1573 = vmatprep.subr.bf16.mxu0 0
      %1574 = vmatpush1.bf16.msra.mxu0 %v1545
      %1575 = vmatprep.subr.bf16.mxu0 0
      %1576 = vmatpush1.bf16.msra.mxu0 %v1546
      %1577 = vmatprep.subr.bf16.mxu0 0
      %1578 = vmatpush1.bf16.msra.mxu0 %v1547
      %1579 = vmatprep.subr.bf16.mxu0 0
      %1580 = vmatpush1.bf16.msra.mxu0 %v1548
      %1581 = vmatprep.mubr.bf16.mxu0 %v1486
      %1582 = vmatmul.mubr.bf16.gmra.mrb[0].mxu0 %v1485
      %v1583 = vpop.f32.mrb[0].mxu0
      %v1584 = vadd.f32 0.0, %v1583
      %v1585 = vpop.f32.mrb[0].mxu0
      %v1586 = vpop.f32.mrb[0].mxu0
      %v1587 = vadd.f32 0.0, %v1586
      %v1588 = vpop.f32.mrb[0].mxu0
      %1589 = vmatprep.mubr.bf16.mxu0 %v1488
      %1590 = vmatmul.mubr.bf16.gmra.mrb[0].mxu0 %v1487
      %v1591 = vpop.f32.mrb[0].mxu0
      %v1592 = vadd.f32 0.0, %v1591
      %v1593 = vpop.f32.mrb[0].mxu0
      %v1594 = vpop.f32.mrb[0].mxu0
      %v1595 = vadd.f32 0.0, %v1594
      %v1596 = vpop.f32.mrb[0].mxu0
      %1597 = vmatprep.mubr.bf16.mxu0 %v1490
      %1598 = vmatmul.mubr.bf16.gmra.mrb[0].mxu0 %v1489
      %v1599 = vpop.f32.mrb[0].mxu0
      %v1600 = vadd.f32 0.0, %v1599
      %v1601 = vpop.f32.mrb[0].mxu0
      %v1602 = vpop.f32.mrb[0].mxu0
      %v1603 = vadd.f32 0.0, %v1602
      %v1604 = vpop.f32.mrb[0].mxu0
      %1605 = vmatprep.mubr.bf16.mxu0 %v1492
      %1606 = vmatmul.mubr.bf16.gmra.mrb[0].mxu0 %v1491
      %v1607 = vpop.f32.mrb[0].mxu0
      %v1608 = vadd.f32 0.0, %v1607
      %v1609 = vpop.f32.mrb[0].mxu0
      %v1610 = vpop.f32.mrb[0].mxu0
      %v1611 = vadd.f32 0.0, %v1610
      %v1612 = vpop.f32.mrb[0].mxu0
      %1613 = vmatprep.mubr.bf16.mxu0 %v1494
      %1614 = vmatmul.mubr.bf16.gmra.mrb[0].mxu0 %v1493
      %v1615 = vpop.f32.mrb[0].mxu0
      %v1616 = vadd.f32 0.0, %v1615
      %v1617 = vpop.f32.mrb[0].mxu0
      %v1618 = vpop.f32.mrb[0].mxu0
      %v1619 = vadd.f32 0.0, %v1618
      %v1620 = vpop.f32.mrb[0].mxu0
      %1621 = vmatprep.mubr.bf16.mxu0 %v1496
      %1622 = vmatmul.mubr.bf16.gmra.mrb[0].mxu0 %v1495
      %v1623 = vpop.f32.mrb[0].mxu0
      %v1624 = vadd.f32 0.0, %v1623
      %v1625 = vpop.f32.mrb[0].mxu0
      %v1626 = vpop.f32.mrb[0].mxu0
      %v1627 = vadd.f32 0.0, %v1626
      %v1628 = vpop.f32.mrb[0].mxu0
      %1629 = vmatprep.mubr.bf16.mxu0 %v1498
      %1630 = vmatmul.mubr.bf16.gmra.mrb[0].mxu0 %v1497
      %v1631 = vpop.f32.mrb[0].mxu0
      %v1632 = vadd.f32 0.0, %v1631
      %v1633 = vpop.f32.mrb[0].mxu0
      %v1634 = vpop.f32.mrb[0].mxu0
      %v1635 = vadd.f32 0.0, %v1634
      %v1636 = vpop.f32.mrb[0].mxu0
      %1637 = vmatprep.mubr.bf16.mxu0 %v1500
      %1638 = vmatmul.mubr.bf16.gmra.mrb[0].mxu0 %v1499
      %v1639 = vpop.f32.mrb[0].mxu0
      %v1640 = vadd.f32 0.0, %v1639
      %v1641 = vpop.f32.mrb[0].mxu0
      %v1642 = vpop.f32.mrb[0].mxu0
      %v1643 = vadd.f32 0.0, %v1642
      %v1644 = vpop.f32.mrb[0].mxu0
      %1645 = vdwg.mxu0
      %v1646 = vmul.f32 %v1584, 0.125
      %v1647 = vmul.f32 %v1587, 0.125
      %v1648 = vmul.f32 %v1592, 0.125
      %v1649 = vmul.f32 %v1595, 0.125
      %v1650 = vmul.f32 %v1600, 0.125
      %v1651 = vmul.f32 %v1603, 0.125
      %v1652 = vmul.f32 %v1608, 0.125
      %v1653 = vmul.f32 %v1611, 0.125
      %v1654 = vmul.f32 %v1616, 0.125
      %v1655 = vmul.f32 %v1619, 0.125
      %v1656 = vmul.f32 %v1624, 0.125
      %v1657 = vmul.f32 %v1627, 0.125
      %v1658 = vmul.f32 %v1632, 0.125
      %v1659 = vmul.f32 %v1635, 0.125
      %v1660 = vmul.f32 %v1640, 0.125
      %v1661 = vmul.f32 %v1643, 0.125
      %v1662 = vld [vmem:[%s323] sm:$0xff]
      %v1663 = vld [vmem:[%s323 + $0x8] sm:$0xff]
      %v1664 = vld [vmem:[%s323 + $0x10] sm:$0xff]
      %v1665 = vld [vmem:[%s323 + $0x18] sm:$0xff]
      %v1666 = vld [vmem:[%s323 + $0x20] sm:$0xff]
      %v1667 = vld [vmem:[%s323 + $0x28] sm:$0xff]
      %v1668 = vld [vmem:[%s323 + $0x30] sm:$0xff]
      %v1669 = vld [vmem:[%s323 + $0x38] sm:$0xff]
      %v1670 = vld [vmem:[%s323 + $0x40] sm:$0xff]
      %v1671 = vld [vmem:[%s323 + $0x48] sm:$0xff]
      %v1672 = vld [vmem:[%s323 + $0x50] sm:$0xff]
      %v1673 = vld [vmem:[%s323 + $0x58] sm:$0xff]
      %v1674 = vld [vmem:[%s323 + $0x60] sm:$0xff]
      %v1675 = vld [vmem:[%s323 + $0x68] sm:$0xff]
      %v1676 = vld [vmem:[%s323 + $0x70] sm:$0xff]
      %v1677 = vld [vmem:[%s323 + $0x78] sm:$0xff]
      %v1678 = vpack.c.bf16 %v1663, %v1662
      %v1679 = vpack.c.bf16 %v1665, %v1664
      %v1680 = vpack.c.bf16 %v1667, %v1666
      %v1681 = vpack.c.bf16 %v1669, %v1668
      %v1682 = vpack.c.bf16 %v1671, %v1670
      %v1683 = vpack.c.bf16 %v1673, %v1672
      %v1684 = vpack.c.bf16 %v1675, %v1674
      %v1685 = vpack.c.bf16 %v1677, %v1676
      %v1686 = vld [vmem:[%s328] sm:$0xff]
      %v1687 = vld [vmem:[%s328 + $0x8] sm:$0xff]
      %v1688 = vld [vmem:[%s328 + $0x10] sm:$0xff]
      %v1689 = vld [vmem:[%s328 + $0x18] sm:$0xff]
      %v1690 = vld [vmem:[%s328 + $0x20] sm:$0xff]
      %v1691 = vld [vmem:[%s328 + $0x28] sm:$0xff]
      %v1692 = vld [vmem:[%s328 + $0x30] sm:$0xff]
      %v1693 = vld [vmem:[%s328 + $0x38] sm:$0xff]
      %v1694 = vld [vmem:[%s328 + $0x40] sm:$0xff]
      %v1695 = vld [vmem:[%s328 + $0x48] sm:$0xff]
      %v1696 = vld [vmem:[%s328 + $0x50] sm:$0xff]
      %v1697 = vld [vmem:[%s328 + $0x58] sm:$0xff]
      %v1698 = vld [vmem:[%s328 + $0x60] sm:$0xff]
      %v1699 = vld [vmem:[%s328 + $0x68] sm:$0xff]
      %v1700 = vld [vmem:[%s328 + $0x70] sm:$0xff]
      %v1701 = vld [vmem:[%s328 + $0x78] sm:$0xff]
      %v1702 = vpack.c.bf16 %v1687, %v1686
      %v1703 = vpack.c.bf16 %v1689, %v1688
      %v1704 = vpack.c.bf16 %v1691, %v1690
      %v1705 = vpack.c.bf16 %v1693, %v1692
      %v1706 = vpack.c.bf16 %v1695, %v1694
      %v1707 = vpack.c.bf16 %v1697, %v1696
      %v1708 = vpack.c.bf16 %v1699, %v1698
      %v1709 = vpack.c.bf16 %v1701, %v1700
      %v1710 = vpack.c.bf16 %v1647, %v1646
      %v1711 = vpack.c.bf16 %v1649, %v1648
      %v1712 = vpack.c.bf16 %v1651, %v1650
      %v1713 = vpack.c.bf16 %v1653, %v1652
      %v1714 = vpack.c.bf16 %v1655, %v1654
      %v1715 = vpack.c.bf16 %v1657, %v1656
      %v1716 = vpack.c.bf16 %v1659, %v1658
      %v1717 = vpack.c.bf16 %v1661, %v1660
      %v1718 = vld [vmem:[%s332] sm:$0xff]
      %v1719 = vld [vmem:[%s332 + $0x8] sm:$0xff]
      %v1720 = vld [vmem:[%s332 + $0x10] sm:$0xff]
      %v1721 = vld [vmem:[%s332 + $0x18] sm:$0xff]
      %v1722 = vld [vmem:[%s332 + $0x20] sm:$0xff]
      %v1723 = vld [vmem:[%s332 + $0x28] sm:$0xff]
      %v1724 = vld [vmem:[%s332 + $0x30] sm:$0xff]
      %v1725 = vld [vmem:[%s332 + $0x38] sm:$0xff]
      %v1726 = vld [vmem:[%s332 + $0x40] sm:$0xff]
      %v1727 = vld [vmem:[%s332 + $0x48] sm:$0xff]
      %v1728 = vld [vmem:[%s332 + $0x50] sm:$0xff]
      %v1729 = vld [vmem:[%s332 + $0x58] sm:$0xff]
      %v1730 = vld [vmem:[%s332 + $0x60] sm:$0xff]
      %v1731 = vld [vmem:[%s332 + $0x68] sm:$0xff]
      %v1732 = vld [vmem:[%s332 + $0x70] sm:$0xff]
      %v1733 = vld [vmem:[%s332 + $0x78] sm:$0xff]
      %v1734 = vpack.c.bf16 %v1719, %v1718
      %v1735 = vpack.c.bf16 %v1721, %v1720
      %v1736 = vpack.c.bf16 %v1723, %v1722
      %v1737 = vpack.c.bf16 %v1725, %v1724
      %v1738 = vpack.c.bf16 %v1727, %v1726
      %v1739 = vpack.c.bf16 %v1729, %v1728
      %v1740 = vpack.c.bf16 %v1731, %v1730
      %v1741 = vpack.c.bf16 %v1733, %v1732
      %1742 = vmatprep.subr.bf16.mxu0 0
      %1743 = vmatpush1.bf16.msra.mxu0 %v1734
      %1744 = vmatprep.subr.bf16.mxu0 0
      %1745 = vmatpush1.bf16.msra.mxu0 %v1735
      %1746 = vmatprep.subr.bf16.mxu0 0
      %1747 = vmatpush1.bf16.msra.mxu0 %v1736
      %1748 = vmatprep.subr.bf16.mxu0 0
      %1749 = vmatpush1.bf16.msra.mxu0 %v1737
      %1750 = vmatprep.subr.bf16.mxu0 0
      %1751 = vmatpush1.bf16.msra.mxu0 %v1738
      %1752 = vmatprep.subr.bf16.mxu0 0
      %1753 = vmatpush1.bf16.msra.mxu0 %v1739
      %1754 = vmatprep.subr.bf16.mxu0 0
      %1755 = vmatpush1.bf16.msra.mxu0 %v1740
      %1756 = vmatprep.subr.bf16.mxu0 0
      %1757 = vmatpush1.bf16.msra.mxu0 %v1741
      %1758 = vmatprep.subr.bf16.mxu0 0
      %1759 = vmatpush1.bf16.msra.mxu0 0
      %1760 = vmatprep.subr.bf16.mxu0 0
      %1761 = vmatpush1.bf16.msra.mxu0 0
      %1762 = vmatprep.subr.bf16.mxu0 0
      %1763 = vmatpush1.bf16.msra.mxu0 0
      %1764 = vmatprep.subr.bf16.mxu0 0
      %1765 = vmatpush1.bf16.msra.mxu0 0
      %1766 = vmatprep.subr.bf16.mxu0 0
      %1767 = vmatpush1.bf16.msra.mxu0 0
      %1768 = vmatprep.subr.bf16.mxu0 0
      %1769 = vmatpush1.bf16.msra.mxu0 0
      %1770 = vmatprep.subr.bf16.mxu0 0
      %1771 = vmatpush1.bf16.msra.mxu0 0
      %1772 = vmatprep.subr.bf16.mxu0 0
      %1773 = vmatpush1.bf16.msra.mxu0 0
      %1774 = vmatprep.mubr.bf16.mxu0 0
      %1775 = vmatmul.mubr.bf16.gmra.mrb[0].mxu0 %v1710
      %v1776 = vpop.f32.mrb[0].mxu0
      %v1777 = vadd.f32 0.0, %v1776
      %v1778 = vpop.f32.mrb[0].mxu0
      %v1779 = vpop.f32.mrb[0].mxu0
      %v1780 = vadd.f32 0.0, %v1779
      %v1781 = vpop.f32.mrb[0].mxu0
      %1782 = vmatprep.mubr.bf16.mxu0 0
      %1783 = vmatmul.mubr.bf16.gmra.mrb[0].mxu0 %v1711
      %v1784 = vpop.f32.mrb[0].mxu0
      %v1785 = vadd.f32 0.0, %v1784
      %v1786 = vpop.f32.mrb[0].mxu0
      %v1787 = vpop.f32.mrb[0].mxu0
      %v1788 = vadd.f32 0.0, %v1787
      %v1789 = vpop.f32.mrb[0].mxu0
      %1790 = vmatprep.mubr.bf16.mxu0 0
      %1791 = vmatmul.mubr.bf16.gmra.mrb[0].mxu0 %v1712
      %v1792 = vpop.f32.mrb[0].mxu0
      %v1793 = vadd.f32 0.0, %v1792
      %v1794 = vpop.f32.mrb[0].mxu0
      %v1795 = vpop.f32.mrb[0].mxu0
      %v1796 = vadd.f32 0.0, %v1795
      %v1797 = vpop.f32.mrb[0].mxu0
      %1798 = vmatprep.mubr.bf16.mxu0 0
      %1799 = vmatmul.mubr.bf16.gmra.mrb[0].mxu0 %v1713
      %v1800 = vpop.f32.mrb[0].mxu0
      %v1801 = vadd.f32 0.0, %v1800
      %v1802 = vpop.f32.mrb[0].mxu0
      %v1803 = vpop.f32.mrb[0].mxu0
      %v1804 = vadd.f32 0.0, %v1803
      %v1805 = vpop.f32.mrb[0].mxu0
      %1806 = vmatprep.mubr.bf16.mxu0 0
      %1807 = vmatmul.mubr.bf16.gmra.mrb[0].mxu0 %v1714
      %v1808 = vpop.f32.mrb[0].mxu0
      %v1809 = vadd.f32 0.0, %v1808
      %v1810 = vpop.f32.mrb[0].mxu0
      %v1811 = vpop.f32.mrb[0].mxu0
      %v1812 = vadd.f32 0.0, %v1811
      %v1813 = vpop.f32.mrb[0].mxu0
      %1814 = vmatprep.mubr.bf16.mxu0 0
      %1815 = vmatmul.mubr.bf16.gmra.mrb[0].mxu0 %v1715
      %v1816 = vpop.f32.mrb[0].mxu0
      %v1817 = vadd.f32 0.0, %v1816
      %v1818 = vpop.f32.mrb[0].mxu0
      %v1819 = vpop.f32.mrb[0].mxu0
      %v1820 = vadd.f32 0.0, %v1819
      %v1821 = vpop.f32.mrb[0].mxu0
      %1822 = vmatprep.mubr.bf16.mxu0 0
      %1823 = vmatmul.mubr.bf16.gmra.mrb[0].mxu0 %v1716
      %v1824 = vpop.f32.mrb[0].mxu0
      %v1825 = vadd.f32 0.0, %v1824
      %v1826 = vpop.f32.mrb[0].mxu0
      %v1827 = vpop.f32.mrb[0].mxu0
      %v1828 = vadd.f32 0.0, %v1827
      %v1829 = vpop.f32.mrb[0].mxu0
      %1830 = vmatprep.mubr.bf16.mxu0 0
      %1831 = vmatmul.mubr.bf16.gmra.mrb[0].mxu0 %v1717
      %v1832 = vpop.f32.mrb[0].mxu0
      %v1833 = vadd.f32 0.0, %v1832
      %v1834 = vpop.f32.mrb[0].mxu0
      %v1835 = vpop.f32.mrb[0].mxu0
      %v1836 = vadd.f32 0.0, %v1835
      %v1837 = vpop.f32.mrb[0].mxu0
      %1838 = vdwg.mxu0
      %1839 = vmatprep.subr.bf16.mxu0 0
      %1840 = vmatpush1.bf16.msra.mxu0 %v1702
      %1841 = vmatprep.subr.bf16.mxu0 0
      %1842 = vmatpush1.bf16.msra.mxu0 %v1703
      %1843 = vmatprep.subr.bf16.mxu0 0
      %1844 = vmatpush1.bf16.msra.mxu0 %v1704
      %1845 = vmatprep.subr.bf16.mxu0 0
      %1846 = vmatpush1.bf16.msra.mxu0 %v1705
      %1847 = vmatprep.subr.bf16.mxu0 0
      %1848 = vmatpush1.bf16.msra.mxu0 %v1706
      %1849 = vmatprep.subr.bf16.mxu0 0
      %1850 = vmatpush1.bf16.msra.mxu0 %v1707
      %1851 = vmatprep.subr.bf16.mxu0 0
      %1852 = vmatpush1.bf16.msra.mxu0 %v1708
      %1853 = vmatprep.subr.bf16.mxu0 0
      %1854 = vmatpush1.bf16.msra.mxu0 %v1709
      %1855 = vmatprep.subr.bf16.mxu0 0
      %1856 = vmatpush1.bf16.msra.mxu0 0
      %1857 = vmatprep.subr.bf16.mxu0 0
      %1858 = vmatpush1.bf16.msra.mxu0 0
      %1859 = vmatprep.subr.bf16.mxu0 0
      %1860 = vmatpush1.bf16.msra.mxu0 0
      %1861 = vmatprep.subr.bf16.mxu0 0
      %1862 = vmatpush1.bf16.msra.mxu0 0
      %1863 = vmatprep.subr.bf16.mxu0 0
      %1864 = vmatpush1.bf16.msra.mxu0 0
      %1865 = vmatprep.subr.bf16.mxu0 0
      %1866 = vmatpush1.bf16.msra.mxu0 0
      %1867 = vmatprep.subr.bf16.mxu0 0
      %1868 = vmatpush1.bf16.msra.mxu0 0
      %1869 = vmatprep.subr.bf16.mxu0 0
      %1870 = vmatpush1.bf16.msra.mxu0 0
      %1871 = vmatprep.mubr.bf16.mxu0 0
      %1872 = vmatmul.mubr.bf16.gmra.mrb[0].mxu0 %v1678
      %v1873 = vpop.f32.mrb[0].mxu0
      %v1874 = vadd.f32 %v1777, %v1873
      %v1875 = vpop.f32.mrb[0].mxu0
      %v1876 = vpop.f32.mrb[0].mxu0
      %v1877 = vadd.f32 %v1780, %v1876
      %v1878 = vpop.f32.mrb[0].mxu0
      %1879 = vmatprep.mubr.bf16.mxu0 0
      %1880 = vmatmul.mubr.bf16.gmra.mrb[0].mxu0 %v1679
      %v1881 = vpop.f32.mrb[0].mxu0
      %v1882 = vadd.f32 %v1785, %v1881
      %v1883 = vpop.f32.mrb[0].mxu0
      %v1884 = vpop.f32.mrb[0].mxu0
      %v1885 = vadd.f32 %v1788, %v1884
      %v1886 = vpop.f32.mrb[0].mxu0
      %1887 = vmatprep.mubr.bf16.mxu0 0
      %1888 = vmatmul.mubr.bf16.gmra.mrb[0].mxu0 %v1680
      %v1889 = vpop.f32.mrb[0].mxu0
      %v1890 = vadd.f32 %v1793, %v1889
      %v1891 = vpop.f32.mrb[0].mxu0
      %v1892 = vpop.f32.mrb[0].mxu0
      %v1893 = vadd.f32 %v1796, %v1892
      %v1894 = vpop.f32.mrb[0].mxu0
      %1895 = vmatprep.mubr.bf16.mxu0 0
      %1896 = vmatmul.mubr.bf16.gmra.mrb[0].mxu0 %v1681
      %v1897 = vpop.f32.mrb[0].mxu0
      %v1898 = vadd.f32 %v1801, %v1897
      %v1899 = vpop.f32.mrb[0].mxu0
      %v1900 = vpop.f32.mrb[0].mxu0
      %v1901 = vadd.f32 %v1804, %v1900
      %v1902 = vpop.f32.mrb[0].mxu0
      %1903 = vmatprep.mubr.bf16.mxu0 0
      %1904 = vmatmul.mubr.bf16.gmra.mrb[0].mxu0 %v1682
      %v1905 = vpop.f32.mrb[0].mxu0
      %v1906 = vadd.f32 %v1809, %v1905
      %v1907 = vpop.f32.mrb[0].mxu0
      %v1908 = vpop.f32.mrb[0].mxu0
      %v1909 = vadd.f32 %v1812, %v1908
      %v1910 = vpop.f32.mrb[0].mxu0
      %1911 = vmatprep.mubr.bf16.mxu0 0
      %1912 = vmatmul.mubr.bf16.gmra.mrb[0].mxu0 %v1683
      %v1913 = vpop.f32.mrb[0].mxu0
      %v1914 = vadd.f32 %v1817, %v1913
      %v1915 = vpop.f32.mrb[0].mxu0
      %v1916 = vpop.f32.mrb[0].mxu0
      %v1917 = vadd.f32 %v1820, %v1916
      %v1918 = vpop.f32.mrb[0].mxu0
      %1919 = vmatprep.mubr.bf16.mxu0 0
      %1920 = vmatmul.mubr.bf16.gmra.mrb[0].mxu0 %v1684
      %v1921 = vpop.f32.mrb[0].mxu0
      %v1922 = vadd.f32 %v1825, %v1921
      %v1923 = vpop.f32.mrb[0].mxu0
      %v1924 = vpop.f32.mrb[0].mxu0
      %v1925 = vadd.f32 %v1828, %v1924
      %v1926 = vpop.f32.mrb[0].mxu0
      %1927 = vmatprep.mubr.bf16.mxu0 0
      %1928 = vmatmul.mubr.bf16.gmra.mrb[0].mxu0 %v1685
      %v1929 = vpop.f32.mrb[0].mxu0
      %v1930 = vadd.f32 %v1833, %v1929
      %v1931 = vpop.f32.mrb[0].mxu0
      %v1932 = vpop.f32.mrb[0].mxu0
      %v1933 = vadd.f32 %v1836, %v1932
      %v1934 = vpop.f32.mrb[0].mxu0
      %1935 = vdwg.mxu0
      %v1936 = vld [vmem:[%s335] sm:$0x1]
      %v1938 = vlaneseq
      %v1939 = vshrl.u32 %v1938, 7
      %v1940 = vsub.s32 0, %v1939
      %v1941 = vrot.slane %v1936, %v1940
      %v1943 = vadd.f32 %v1874, %v1941
      %v1944 = vadd.f32 %v1877, %v1941
      %v1945 = vadd.f32 %v1882, %v1941
      %v1946 = vadd.f32 %v1885, %v1941
      %v1947 = vadd.f32 %v1890, %v1941
      %v1948 = vadd.f32 %v1893, %v1941
      %v1949 = vadd.f32 %v1898, %v1941
      %v1950 = vadd.f32 %v1901, %v1941
      %v1951 = vadd.f32 %v1906, %v1941
      %v1952 = vadd.f32 %v1909, %v1941
      %v1953 = vadd.f32 %v1914, %v1941
      %v1954 = vadd.f32 %v1917, %v1941
      %v1955 = vadd.f32 %v1922, %v1941
      %v1956 = vadd.f32 %v1925, %v1941
      %v1957 = vadd.f32 %v1930, %v1941
      %v1958 = vadd.f32 %v1933, %v1941
      %1959 = vst [vmem:[%s343] sm:$0xff] %v1943
      %1960 = vst [vmem:[%s343 + $0x8] sm:$0xff] %v1944
      %1961 = vst [vmem:[%s343 + $0x10] sm:$0xff] %v1945
      %1962 = vst [vmem:[%s343 + $0x18] sm:$0xff] %v1946
      %1963 = vst [vmem:[%s343 + $0x20] sm:$0xff] %v1947
      %1964 = vst [vmem:[%s343 + $0x28] sm:$0xff] %v1948
      %1965 = vst [vmem:[%s343 + $0x30] sm:$0xff] %v1949
      %1966 = vst [vmem:[%s343 + $0x38] sm:$0xff] %v1950
      %1967 = vst [vmem:[%s343 + $0x40] sm:$0xff] %v1951
      %1968 = vst [vmem:[%s343 + $0x48] sm:$0xff] %v1952
      %1969 = vst [vmem:[%s343 + $0x50] sm:$0xff] %v1953
      %1970 = vst [vmem:[%s343 + $0x58] sm:$0xff] %v1954
      %1971 = vst [vmem:[%s343 + $0x60] sm:$0xff] %v1955
      %1972 = vst [vmem:[%s343 + $0x68] sm:$0xff] %v1956
      %1973 = vst [vmem:[%s343 + $0x70] sm:$0xff] %v1957
      %1974 = vst [vmem:[%s343 + $0x78] sm:$0xff] %v1958
      %s1975 = smul.u32 16, %s21
      %p1976 = scmp.lt.s32.totalorder %s1975, 31
      %s1977 = scalar_select %p1976, %s1975, 31
      %p1978 = scmp.lt.s32.totalorder %s22, 0
      %s1979 = scalar_select %p1978, %s22, 0
      %s1980 = sadd.s32 %s1979, %s1977
      %s1981 = smul.addr %s1980, 8
      %s1982 = scalar_lea.vmem %s6, %s1981
      // Predicated region
      $region45: #{inception_gcn_forward.15} parent=43 // pred_check
        %p1983 = pneg %p200
      $region46: #{inception_gcn_forward.15} parent=43 // pred_check_branch
        %1985 = sbr.rel (%p1983) target = $region48
      $region47: #{inception_gcn_forward.15} parent=43 // pred_region
        %s1986 = smul.u32 16, %s21
      $region48: #{inception_gcn_forward.15} parent=43 // pred_fallthru
        _
    $region44: #{inception_gcn_forward.15} parent=5 // pred_fallthru
      _
    %p1987 = scmp.le.s32.totalorder 2, %s12
    // Predicated region
    $region49: #{inception_gcn_forward.15} parent=5 // pred_check
      %p1988 = pneg %p1987
    $region50: #{inception_gcn_forward.15} parent=5 // pred_check_branch
      %1990 = sbr.rel (%p1988) target = $region52
    $region51: #{inception_gcn_forward.15} parent=5 // pred_region
      %s1991 = ssub.s32 %s12, 2
      // Predicated region
      $region53: #{inception_gcn_forward.15} parent=51 // pred_check
        %p1992 = pneg %p206
      $region54: #{inception_gcn_forward.15} parent=51 // pred_check_branch
        %1994 = sbr.rel (%p1992) target = $region56
      $region55: #{inception_gcn_forward.15} parent=51 // pred_region
        %s1995 = smul.u32 16, %s23
        %p1996 = scmp.lt.s32.totalorder %s1995, 31
        %s1997 = scalar_select %p1996, %s1995, 31
        %p1998 = scmp.lt.s32.totalorder %s24, 0
        %s1999 = scalar_select %p1998, %s24, 0
        %s2000 = sadd.s32 %s1999, %s1997
        %s2001 = smul.addr %s2000, 8
        %s2002 = scalar_lea.vmem %s6, %s2001
      $region56: #{inception_gcn_forward.15} parent=51 // pred_fallthru
        _
    $region52: #{inception_gcn_forward.15} parent=5 // pred_fallthru
      _
  $region6: #{inception_gcn_forward.15} parent=0 // loop_footer
    %s16 = sadd.s32 1, %s12
  $region7: #{inception_gcn_forward.15} parent=0 // loop_footer_branch
    %11 = sbr.rel target = $region3
  $region8: #{inception_gcn_forward.15} parent=0 // loop_exit
    _

// kernel: inception_gcn_forward.17
$region0: #{inception_gcn_forward.17}
  #allocation0 [shape = 'u32[]', space=smem, size = 0x4, offset = 0x4, fixed_abs, tag = 'smem constant byte address 0x4 - core index']
  #allocation1 [shape = 'u32[144,128]{1,0:T(1,128)}', space=vmem, size = 0x12000, scoped, tag = 'internal scratch']
  %s0 = inlined_call_operand.vmem [shape: s32[256,8], index: 0, kind: input, shape index: {}]
  %s1 = inlined_call_operand.vmem [shape: f32[256,128], index: 1, kind: input, shape index: {}, may-alias: {1,2}]
  %s2 = inlined_call_operand.vmem [shape: f32[256,128], index: 2, kind: input, shape index: {}, may-alias: {1,2}]
  %s3 = inlined_call_operand.vmem [shape: f32[128,128], index: 3, kind: input, shape index: {}]
  %s4 = inlined_call_operand.vmem [shape: f32[128,128], index: 4, kind: input, shape index: {}]
  %s5 = inlined_call_operand.vmem [shape: f32[1,128], index: 5, kind: input, shape index: {}]
  %s6 = inlined_call_operand.vmem [shape: f32[256,128], index: 6, kind: output, shape index: {}]
  %s7 = sld [smem:[#allocation0]]
  $region57: #{inception_gcn_forward.17} parent=0
    _
  %s9 = ssub.s32 1, %s7
  %s10 = scalar_select 0, %s9, %s7
  loop: start=0, step=1, limit=4
  $region2: #{inception_gcn_forward.17} parent=0 // loop_pre_header
    _
  $region3: #{inception_gcn_forward.17} parent=0 // loop_header
    %s12 = sphi 0, %s16
    %p13 = scmp.ge.s32.totalorder %s12, 4
    %s19 = sphi 0, %s31
    %s20 = sphi 0, %s27
    %s21 = sphi 0, %s19
    %s22 = sphi 0, %s20
    %s23 = sphi 0, %s21
    %s24 = sphi 0, %s22
    %s34 = sphi 0, %s36
    %s37 = sphi 0, %s34
    %s38 = sphi 0, %s37
    %s54 = sphi 0, %s38
    %s58 = sphi 0, %s58
    %s60 = sphi 0, %s58
    %s61 = sphi 0, %s60
    %s75 = sphi 0, %s61
    %s81 = sphi 0, %s83
    %s84 = sphi 0, %s81
    %s85 = sphi 0, %s84
    %s101 = sphi 0, %s85
    %s107 = sphi 0, %s109
    %s110 = sphi 0, %s107
    %s111 = sphi 0, %s110
    %s127 = sphi 0, %s111
    %s133 = sphi 0, %s135
    %s136 = sphi 0, %s133
    %s137 = sphi 0, %s136
    %s153 = sphi 0, %s137
    %s159 = sphi 0, %s161
    %s162 = sphi 0, %s159
    %s163 = sphi 0, %s162
    %s179 = sphi 0, %s163
    %s187 = sphi 0, %s189
    %s190 = sphi 0, %s187
    %s191 = sphi 0, %s190
    %s207 = sphi 0, %s191
  $region4: #{inception_gcn_forward.17} parent=0 // loop_header_branch
    %15 = sbr.rel (%p13) target = $region8
  $region5: #{inception_gcn_forward.17} parent=0 // loop_body
    %s17 = ssub.s32 %s12, 1
    %s18 = ssub.s32 %s12, 2
    %s25 = sadd.s32 1, %s20
    %p26 = scmp.ge.s32.totalorder %s25, 1
    %s27 = scalar_select %p26, 0, %s25
    %s28 = sadd.s32 1, %s19
    %s29 = scalar_select %p26, %s28, %s19
    %p30 = scmp.ge.s32.totalorder %s29, 2
    %s31 = scalar_select %p30, 0, %s29
    %s32 = ssub.s32 %s19, %s31
    %p33 = scmp.eq.s32.totalorder %s32, 0
    %s35 = sadd.s32 %s34, 1
    %s36 = scalar_select %p33, %s34, %s35
    %p39 = pneg %p33
    %p40 = scmp.eq.s32.totalorder %s12, 1
    %p41 = por %p39, %p40
    %p42 = scmp.ne.s32.totalorder %s34, %s37
    %p43 = scmp.eq.s32.totalorder %s12, 0
    %p44 = por %p42, %p43
    %p45 = scmp.ne.s32.totalorder %s34, %s37
    %p46 = scmp.eq.s32.totalorder %s17, 1
    %p47 = por %p45, %p46
    %p48 = scmp.ne.s32.totalorder %s37, %s38
    %p49 = scmp.eq.s32.totalorder %s17, 0
    %p50 = por %p48, %p49
    %p51 = scmp.ne.s32.totalorder %s37, %s38
    %p52 = scmp.eq.s32.totalorder %s18, 1
    %p53 = por %p51, %p52
    %p55 = scmp.ne.s32.totalorder %s38, %s54
    %p56 = scmp.eq.s32.totalorder %s18, 0
    %p57 = por %p55, %p56
    %s59 = sadd.s32 %s58, 1
    %p62 = scmp.eq.s32.totalorder %s12, 1
    %p63 = scmp.ne.s32.totalorder %s58, %s60
    %p64 = scmp.eq.s32.totalorder %s12, 0
    %p65 = por %p63, %p64
    %p66 = scmp.ne.s32.totalorder %s58, %s60
    %p67 = scmp.eq.s32.totalorder %s17, 1
    %p68 = por %p66, %p67
    %p69 = scmp.ne.s32.totalorder %s60, %s61
    %p70 = scmp.eq.s32.totalorder %s17, 0
    %p71 = por %p69, %p70
    %p72 = scmp.ne.s32.totalorder %s60, %s61
    %p73 = scmp.eq.s32.totalorder %s18, 1
    %p74 = por %p72, %p73
    %p76 = scmp.ne.s32.totalorder %s61, %s75
    %p77 = scmp.eq.s32.totalorder %s18, 0
    %p78 = por %p76, %p77
    %s79 = ssub.s32 %s19, %s31
    %p80 = scmp.eq.s32.totalorder %s79, 0
    %s82 = sadd.s32 %s81, 1
    %s83 = scalar_select %p80, %s81, %s82
    %p86 = pneg %p80
    %p87 = scmp.eq.s32.totalorder %s12, 1
    %p88 = por %p86, %p87
    %p89 = scmp.ne.s32.totalorder %s81, %s84
    %p90 = scmp.eq.s32.totalorder %s12, 0
    %p91 = por %p89, %p90
    %p92 = scmp.ne.s32.totalorder %s81, %s84
    %p93 = scmp.eq.s32.totalorder %s17, 1
    %p94 = por %p92, %p93
    %p95 = scmp.ne.s32.totalorder %s84, %s85
    %p96 = scmp.eq.s32.totalorder %s17, 0
    %p97 = por %p95, %p96
    %p98 = scmp.ne.s32.totalorder %s84, %s85
    %p99 = scmp.eq.s32.totalorder %s18, 1
    %p100 = por %p98, %p99
    %p102 = scmp.ne.s32.totalorder %s85, %s101
    %p103 = scmp.eq.s32.totalorder %s18, 0
    %p104 = por %p102, %p103
    %s105 = ssub.s32 %s20, %s27
    %p106 = scmp.eq.s32.totalorder %s105, 0
    %s108 = sadd.s32 %s107, 1
    %s109 = scalar_select %p106, %s107, %s108
    %p112 = pneg %p106
    %p113 = scmp.eq.s32.totalorder %s12, 1
    %p114 = por %p112, %p113
    %p115 = scmp.ne.s32.totalorder %s107, %s110
    %p116 = scmp.eq.s32.totalorder %s12, 0
    %p117 = por %p115, %p116
    %p118 = scmp.ne.s32.totalorder %s107, %s110
    %p119 = scmp.eq.s32.totalorder %s17, 1
    %p120 = por %p118, %p119
    %p121 = scmp.ne.s32.totalorder %s110, %s111
    %p122 = scmp.eq.s32.totalorder %s17, 0
    %p123 = por %p121, %p122
    %p124 = scmp.ne.s32.totalorder %s110, %s111
    %p125 = scmp.eq.s32.totalorder %s18, 1
    %p126 = por %p124, %p125
    %p128 = scmp.ne.s32.totalorder %s111, %s127
    %p129 = scmp.eq.s32.totalorder %s18, 0
    %p130 = por %p128, %p129
    %s131 = ssub.s32 %s20, %s27
    %p132 = scmp.eq.s32.totalorder %s131, 0
    %s134 = sadd.s32 %s133, 1
    %s135 = scalar_select %p132, %s133, %s134
    %p138 = pneg %p132
    %p139 = scmp.eq.s32.totalorder %s12, 1
    %p140 = por %p138, %p139
    %p141 = scmp.ne.s32.totalorder %s133, %s136
    %p142 = scmp.eq.s32.totalorder %s12, 0
    %p143 = por %p141, %p142
    %p144 = scmp.ne.s32.totalorder %s133, %s136
    %p145 = scmp.eq.s32.totalorder %s17, 1
    %p146 = por %p144, %p145
    %p147 = scmp.ne.s32.totalorder %s136, %s137
    %p148 = scmp.eq.s32.totalorder %s17, 0
    %p149 = por %p147, %p148
    %p150 = scmp.ne.s32.totalorder %s136, %s137
    %p151 = scmp.eq.s32.totalorder %s18, 1
    %p152 = por %p150, %p151
    %p154 = scmp.ne.s32.totalorder %s137, %s153
    %p155 = scmp.eq.s32.totalorder %s18, 0
    %p156 = por %p154, %p155
    %s157 = ssub.s32 %s20, %s27
    %p158 = scmp.eq.s32.totalorder %s157, 0
    %s160 = sadd.s32 %s159, 1
    %s161 = scalar_select %p158, %s159, %s160
    %p164 = pneg %p158
    %p165 = scmp.eq.s32.totalorder %s12, 1
    %p166 = por %p164, %p165
    %p167 = scmp.ne.s32.totalorder %s159, %s162
    %p168 = scmp.eq.s32.totalorder %s12, 0
    %p169 = por %p167, %p168
    %p170 = scmp.ne.s32.totalorder %s159, %s162
    %p171 = scmp.eq.s32.totalorder %s17, 1
    %p172 = por %p170, %p171
    %p173 = scmp.ne.s32.totalorder %s162, %s163
    %p174 = scmp.eq.s32.totalorder %s17, 0
    %p175 = por %p173, %p174
    %p176 = scmp.ne.s32.totalorder %s162, %s163
    %p177 = scmp.eq.s32.totalorder %s18, 1
    %p178 = por %p176, %p177
    %p180 = scmp.ne.s32.totalorder %s163, %s179
    %p181 = scmp.eq.s32.totalorder %s18, 0
    %p182 = por %p180, %p181
    %s183 = ssub.s32 %s19, %s31
    %s184 = ssub.s32 %s20, %s27
    %s185 = sor.u32 %s183, %s184
    %p186 = scmp.eq.s32.totalorder %s185, 0
    %s188 = sadd.s32 %s187, 1
    %s189 = scalar_select %p186, %s187, %s188
    %p192 = pneg %p186
    %p193 = scmp.eq.s32.totalorder %s12, 1
    %p194 = por %p192, %p193
    %p195 = scmp.ne.s32.totalorder %s187, %s190
    %p196 = scmp.eq.s32.totalorder %s12, 0
    %p197 = por %p195, %p196
    %p198 = scmp.ne.s32.totalorder %s187, %s190
    %p199 = scmp.eq.s32.totalorder %s17, 1
    %p200 = por %p198, %p199
    %p201 = scmp.ne.s32.totalorder %s190, %s191
    %p202 = scmp.eq.s32.totalorder %s17, 0
    %p203 = por %p201, %p202
    %p204 = scmp.ne.s32.totalorder %s190, %s191
    %p205 = scmp.eq.s32.totalorder %s18, 1
    %p206 = por %p204, %p205
    %p208 = scmp.ne.s32.totalorder %s191, %s207
    %p209 = scmp.eq.s32.totalorder %s18, 0
    %p210 = por %p208, %p209
    %p211 = scmp.le.s32.totalorder 1, %s12
    %p212 = scmp.lt.s32.totalorder %s12, 3
    %p213 = pnand %p211, %p212
    %p214 = pneg %p213
    // Predicated region
    $region9: #{inception_gcn_forward.17} parent=5 // pred_check
      _
    $region10: #{inception_gcn_forward.17} parent=5 // pred_check_branch
      %216 = sbr.rel (%p213) target = $region12
    $region11: #{inception_gcn_forward.17} parent=5 // pred_region
      %s217 = ssub.s32 %s12, 1
      // Predicated region
      $region13: #{inception_gcn_forward.17} parent=11 // pred_check
        %p218 = pneg %p71
      $region14: #{inception_gcn_forward.17} parent=11 // pred_check_branch
        %220 = sbr.rel (%p218) target = $region16
      $region15: #{inception_gcn_forward.17} parent=11 // pred_region
        _
      $region16: #{inception_gcn_forward.17} parent=11 // pred_fallthru
        _
      // Predicated region
      $region17: #{inception_gcn_forward.17} parent=11 // pred_check
        %p221 = pneg %p123
      $region18: #{inception_gcn_forward.17} parent=11 // pred_check_branch
        %223 = sbr.rel (%p221) target = $region20
      $region19: #{inception_gcn_forward.17} parent=11 // pred_region
        %p224 = scmp.lt.s32.totalorder %s22, 0
        %s225 = scalar_select %p224, %s22, 0
        %s226 = smul.addr %s225, 8
        %s227 = scalar_lea.vmem %s3, %s226
      $region20: #{inception_gcn_forward.17} parent=11 // pred_fallthru
        _
      // Predicated region
      $region21: #{inception_gcn_forward.17} parent=11 // pred_check
        %p228 = pneg %p149
      $region22: #{inception_gcn_forward.17} parent=11 // pred_check_branch
        %230 = sbr.rel (%p228) target = $region24
      $region23: #{inception_gcn_forward.17} parent=11 // pred_region
        %p231 = scmp.lt.s32.totalorder %s22, 0
        %s232 = scalar_select %p231, %s22, 0
        %s233 = smul.addr %s232, 8
        %s234 = scalar_lea.vmem %s4, %s233
      $region24: #{inception_gcn_forward.17} parent=11 // pred_fallthru
        _
      // Predicated region
      $region25: #{inception_gcn_forward.17} parent=11 // pred_check
        %p235 = pneg %p175
      $region26: #{inception_gcn_forward.17} parent=11 // pred_check_branch
        %237 = sbr.rel (%p235) target = $region28
      $region27: #{inception_gcn_forward.17} parent=11 // pred_region
        %p238 = scmp.lt.s32.totalorder %s22, 0
        %s239 = scalar_select %p238, %s22, 0
        %s240 = scalar_lea.vmem %s5, %s239
      $region28: #{inception_gcn_forward.17} parent=11 // pred_fallthru
        _
    $region12: #{inception_gcn_forward.17} parent=5 // pred_fallthru
      _
    %p241 = scmp.lt.s32.totalorder %s12, 2
    // Predicated region
    $region29: #{inception_gcn_forward.17} parent=5 // pred_check
      %p242 = pneg %p241
    $region30: #{inception_gcn_forward.17} parent=5 // pred_check_branch
      %244 = sbr.rel (%p242) target = $region32
    $region31: #{inception_gcn_forward.17} parent=5 // pred_region
      // Predicated region
      $region33: #{inception_gcn_forward.17} parent=31 // pred_check
        %p245 = pneg %p44
      $region34: #{inception_gcn_forward.17} parent=31 // pred_check_branch
        %247 = sbr.rel (%p245) target = $region36
      $region35: #{inception_gcn_forward.17} parent=31 // pred_region
        %s248 = smul.u32 16, %s19
        %p249 = scmp.lt.s32.totalorder %s248, 31
        %s250 = scalar_select %p249, %s248, 31
        %s251 = smul.addr %s250, 8
        %s252 = scalar_lea.vmem %s0, %s251
        %s253 = smul.u32 16, %s19
      $region36: #{inception_gcn_forward.17} parent=31 // pred_fallthru
        _
      // Predicated region
      $region37: #{inception_gcn_forward.17} parent=31 // pred_check
        %p254 = pneg %p91
      $region38: #{inception_gcn_forward.17} parent=31 // pred_check_branch
        %256 = sbr.rel (%p254) target = $region40
      $region39: #{inception_gcn_forward.17} parent=31 // pred_region
        %s257 = smul.u32 16, %s19
        %p258 = scmp.lt.s32.totalorder %s257, 31
        %s259 = scalar_select %p258, %s257, 31
        %s260 = smul.addr %s259, 8
        %s261 = scalar_lea.vmem %s2, %s260
        %s262 = smul.u32 16, %s19
      $region40: #{inception_gcn_forward.17} parent=31 // pred_fallthru
        _
    $region32: #{inception_gcn_forward.17} parent=5 // pred_fallthru
      _
    %p263 = scmp.le.s32.totalorder 1, %s12
    %p264 = scmp.lt.s32.totalorder %s12, 3
    %p265 = pnand %p263, %p264
    %p266 = pneg %p265
    // Predicated region
    $region41: #{inception_gcn_forward.17} parent=5 // pred_check
      _
    $region42: #{inception_gcn_forward.17} parent=5 // pred_check_branch
      %268 = sbr.rel (%p265) target = $region44
    $region43: #{inception_gcn_forward.17} parent=5 // pred_region
      %s269 = ssub.s32 %s12, 1
      %s270 = smul.u32 16, %s21
      %p271 = scmp.lt.s32.totalorder %s270, 31
      %s272 = scalar_select %p271, %s270, 31
      %s273 = smul.addr %s272, 8
      %s274 = scalar_lea.vmem %s0, %s273
      %p275 = pneg %p50
      %p276 = pneg %p47
      %p277 = pneg %p71
      %p278 = pneg %p68
      %s279 = smul.u32 16, %s21
      %p280 = scmp.lt.s32.totalorder %s279, 31
      %s281 = scalar_select %p280, %s279, 31
      %s282 = smul.addr %s281, 8
      %s283 = scalar_lea.vmem %s2, %s282
      %p284 = pneg %p97
      %p285 = pneg %p94
      %p286 = scmp.lt.s32.totalorder %s22, 0
      %s287 = scalar_select %p286, %s22, 0
      %s288 = smul.addr %s287, 8
      %s289 = scalar_lea.vmem %s3, %s288
      %p290 = pneg %p123
      %p291 = pneg %p120
      %p292 = scmp.lt.s32.totalorder %s22, 0
      %s293 = scalar_select %p292, %s22, 0
      %s294 = smul.addr %s293, 8
      %s295 = scalar_lea.vmem %s4, %s294
      %p296 = pneg %p149
      %p297 = pneg %p146
      %p298 = scmp.lt.s32.totalorder %s22, 0
      %s299 = scalar_select %p298, %s22, 0
      %s300 = scalar_lea.vmem %s5, %s299
      %p301 = pneg %p175
      %p302 = pneg %p172
      %p303 = pneg %p203
      %p304 = pneg %p200
      %s305 = smul.u32 16, %s21
      %p306 = scmp.lt.s32.totalorder %s305, 31
      %s307 = scalar_select %p306, %s305, 31
      %p308 = scmp.lt.s32.totalorder %s22, 0
      %s309 = scalar_select %p308, %s22, 0
      %s310 = sadd.s32 %s309, %s307
      %s311 = smul.addr %s310, 8
      %s312 = scalar_lea.vmem %s6, %s311
      %s313 = smul.u32 16, %s21
      %p314 = scmp.lt.s32.totalorder %s313, 31
      %s315 = scalar_select %p314, %s313, 31
      %s316 = smul.addr %s315, 8
      %s317 = scalar_lea.vmem %s0, %s316
      %s318 = smul.u32 16, %s21
      %s319 = smul.u32 16, %s21
      %p320 = scmp.lt.s32.totalorder %s319, 31
      %s321 = scalar_select %p320, %s319, 31
      %s322 = smul.addr %s321, 8
      %s323 = scalar_lea.vmem %s2, %s322
      %s324 = smul.u32 16, %s21
      %p325 = scmp.lt.s32.totalorder %s22, 0
      %s326 = scalar_select %p325, %s22, 0
      %s327 = smul.addr %s326, 8
      %s328 = scalar_lea.vmem %s3, %s327
      %p329 = scmp.lt.s32.totalorder %s22, 0
      %s330 = scalar_select %p329, %s22, 0
      %s331 = smul.addr %s330, 8
      %s332 = scalar_lea.vmem %s4, %s331
      %p333 = scmp.lt.s32.totalorder %s22, 0
      %s334 = scalar_select %p333, %s22, 0
      %s335 = scalar_lea.vmem %s5, %s334
      %s336 = smul.u32 16, %s21
      %p337 = scmp.lt.s32.totalorder %s336, 31
      %s338 = scalar_select %p337, %s336, 31
      %p339 = scmp.lt.s32.totalorder %s22, 0
      %s340 = scalar_select %p339, %s22, 0
      %s341 = sadd.s32 %s340, %s338
      %s342 = smul.addr %s341, 8
      %s343 = scalar_lea.vmem %s6, %s342
      %s344 = smul.u32 16, %s21
      %v346 = vld [vmem:[%s317] sm:$0xff]
      %v347 = vld [vmem:[%s317 + $0x8] sm:$0xff]
      %v348 = vld [vmem:[%s317 + $0x10] sm:$0xff]
      %v349 = vld [vmem:[%s317 + $0x18] sm:$0xff]
      %v350 = vld [vmem:[%s317 + $0x20] sm:$0xff]
      %v351 = vld [vmem:[%s317 + $0x28] sm:$0xff]
      %v352 = vld [vmem:[%s317 + $0x30] sm:$0xff]
      %v353 = vld [vmem:[%s317 + $0x38] sm:$0xff]
      %v354 = vld [vmem:[%s317 + $0x40] sm:$0xff]
      %v355 = vld [vmem:[%s317 + $0x48] sm:$0xff]
      %v356 = vld [vmem:[%s317 + $0x50] sm:$0xff]
      %v357 = vld [vmem:[%s317 + $0x58] sm:$0xff]
      %v358 = vld [vmem:[%s317 + $0x60] sm:$0xff]
      %v359 = vld [vmem:[%s317 + $0x68] sm:$0xff]
      %v360 = vld [vmem:[%s317 + $0x70] sm:$0xff]
      %v361 = vld [vmem:[%s317 + $0x78] sm:$0xff]
      %v362 = vlaneseq
      %v363 = vand.u32 %v362, 127
      %v364 = vadd.s32 %v363, 128
      %365 = vset.pattern.permute.xlu0 0
      %366 = vperm.xlu0 %365, %v346
      %v367 = vpop.permute.xlu0 %366
      %368 = vset.pattern.permute.xlu0 0
      %369 = vperm.xlu0 %368, %v347
      %v370 = vpop.permute.xlu0 %369
      %371 = vset.pattern.permute.xlu0 0
      %372 = vperm.xlu0 %371, %v348
      %v373 = vpop.permute.xlu0 %372
      %374 = vset.pattern.permute.xlu0 0
      %375 = vperm.xlu0 %374, %v349
      %v376 = vpop.permute.xlu0 %375
      %377 = vset.pattern.permute.xlu0 0
      %378 = vperm.xlu0 %377, %v350
      %v379 = vpop.permute.xlu0 %378
      %380 = vset.pattern.permute.xlu0 0
      %381 = vperm.xlu0 %380, %v351
      %v382 = vpop.permute.xlu0 %381
      %383 = vset.pattern.permute.xlu0 0
      %384 = vperm.xlu0 %383, %v352
      %v385 = vpop.permute.xlu0 %384
      %386 = vset.pattern.permute.xlu0 0
      %387 = vperm.xlu0 %386, %v353
      %v388 = vpop.permute.xlu0 %387
      %389 = vset.pattern.permute.xlu0 0
      %390 = vperm.xlu0 %389, %v354
      %v391 = vpop.permute.xlu0 %390
      %392 = vset.pattern.permute.xlu0 0
      %393 = vperm.xlu0 %392, %v355
      %v394 = vpop.permute.xlu0 %393
      %395 = vset.pattern.permute.xlu0 0
      %396 = vperm.xlu0 %395, %v356
      %v397 = vpop.permute.xlu0 %396
      %398 = vset.pattern.permute.xlu0 0
      %399 = vperm.xlu0 %398, %v357
      %v400 = vpop.permute.xlu0 %399
      %401 = vset.pattern.permute.xlu0 0
      %402 = vperm.xlu0 %401, %v358
      %v403 = vpop.permute.xlu0 %402
      %404 = vset.pattern.permute.xlu0 0
      %405 = vperm.xlu0 %404, %v359
      %v406 = vpop.permute.xlu0 %405
      %407 = vset.pattern.permute.xlu0 0
      %408 = vperm.xlu0 %407, %v360
      %v409 = vpop.permute.xlu0 %408
      %410 = vset.pattern.permute.xlu0 0
      %411 = vperm.xlu0 %410, %v361
      %v412 = vpop.permute.xlu0 %411
      %vm413 = vcmp.eq.s32.totalorder %v367, %v363
      %vm414 = vcmp.eq.s32.totalorder %v367, %v364
      %vm415 = vcmp.eq.s32.totalorder %v370, %v363
      %vm416 = vcmp.eq.s32.totalorder %v370, %v364
      %vm417 = vcmp.eq.s32.totalorder %v373, %v363
      %vm418 = vcmp.eq.s32.totalorder %v373, %v364
      %vm419 = vcmp.eq.s32.totalorder %v376, %v363
      %vm420 = vcmp.eq.s32.totalorder %v376, %v364
      %vm421 = vcmp.eq.s32.totalorder %v379, %v363
      %vm422 = vcmp.eq.s32.totalorder %v379, %v364
      %vm423 = vcmp.eq.s32.totalorder %v382, %v363
      %vm424 = vcmp.eq.s32.totalorder %v382, %v364
      %vm425 = vcmp.eq.s32.totalorder %v385, %v363
      %vm426 = vcmp.eq.s32.totalorder %v385, %v364
      %vm427 = vcmp.eq.s32.totalorder %v388, %v363
      %vm428 = vcmp.eq.s32.totalorder %v388, %v364
      %vm429 = vcmp.eq.s32.totalorder %v391, %v363
      %vm430 = vcmp.eq.s32.totalorder %v391, %v364
      %vm431 = vcmp.eq.s32.totalorder %v394, %v363
      %vm432 = vcmp.eq.s32.totalorder %v394, %v364
      %vm433 = vcmp.eq.s32.totalorder %v397, %v363
      %vm434 = vcmp.eq.s32.totalorder %v397, %v364
      %vm435 = vcmp.eq.s32.totalorder %v400, %v363
      %vm436 = vcmp.eq.s32.totalorder %v400, %v364
      %vm437 = vcmp.eq.s32.totalorder %v403, %v363
      %vm438 = vcmp.eq.s32.totalorder %v403, %v364
      %vm439 = vcmp.eq.s32.totalorder %v406, %v363
      %vm440 = vcmp.eq.s32.totalorder %v406, %v364
      %vm441 = vcmp.eq.s32.totalorder %v409, %v363
      %vm442 = vcmp.eq.s32.totalorder %v409, %v364
      %vm443 = vcmp.eq.s32.totalorder %v412, %v363
      %vm444 = vcmp.eq.s32.totalorder %v412, %v364
      %v445 = vsel %vm413, 1.0, 0.0
      %v446 = vsel %vm414, 1.0, 0.0
      %v447 = vsel %vm415, 1.0, 0.0
      %v448 = vsel %vm416, 1.0, 0.0
      %v449 = vsel %vm417, 1.0, 0.0
      %v450 = vsel %vm418, 1.0, 0.0
      %v451 = vsel %vm419, 1.0, 0.0
      %v452 = vsel %vm420, 1.0, 0.0
      %v453 = vsel %vm421, 1.0, 0.0
      %v454 = vsel %vm422, 1.0, 0.0
      %v455 = vsel %vm423, 1.0, 0.0
      %v456 = vsel %vm424, 1.0, 0.0
      %v457 = vsel %vm425, 1.0, 0.0
      %v458 = vsel %vm426, 1.0, 0.0
      %v459 = vsel %vm427, 1.0, 0.0
      %v460 = vsel %vm428, 1.0, 0.0
      %v461 = vsel %vm429, 1.0, 0.0
      %v462 = vsel %vm430, 1.0, 0.0
      %v463 = vsel %vm431, 1.0, 0.0
      %v464 = vsel %vm432, 1.0, 0.0
      %v465 = vsel %vm433, 1.0, 0.0
      %v466 = vsel %vm434, 1.0, 0.0
      %v467 = vsel %vm435, 1.0, 0.0
      %v468 = vsel %vm436, 1.0, 0.0
      %v469 = vsel %vm437, 1.0, 0.0
      %v470 = vsel %vm438, 1.0, 0.0
      %v471 = vsel %vm439, 1.0, 0.0
      %v472 = vsel %vm440, 1.0, 0.0
      %v473 = vsel %vm441, 1.0, 0.0
      %v474 = vsel %vm442, 1.0, 0.0
      %v475 = vsel %vm443, 1.0, 0.0
      %v476 = vsel %vm444, 1.0, 0.0
      %477 = vset.pattern.permute.xlu0 1
      %478 = vperm.xlu0 %477, %v346
      %v479 = vpop.permute.xlu0 %478
      %480 = vset.pattern.permute.xlu0 1
      %481 = vperm.xlu0 %480, %v347
      %v482 = vpop.permute.xlu0 %481
      %483 = vset.pattern.permute.xlu0 1
      %484 = vperm.xlu0 %483, %v348
      %v485 = vpop.permute.xlu0 %484
      %486 = vset.pattern.permute.xlu0 1
      %487 = vperm.xlu0 %486, %v349
      %v488 = vpop.permute.xlu0 %487
      %489 = vset.pattern.permute.xlu0 1
      %490 = vperm.xlu0 %489, %v350
      %v491 = vpop.permute.xlu0 %490
      %492 = vset.pattern.permute.xlu0 1
      %493 = vperm.xlu0 %492, %v351
      %v494 = vpop.permute.xlu0 %493
      %495 = vset.pattern.permute.xlu0 1
      %496 = vperm.xlu0 %495, %v352
      %v497 = vpop.permute.xlu0 %496
      %498 = vset.pattern.permute.xlu0 1
      %499 = vperm.xlu0 %498, %v353
      %v500 = vpop.permute.xlu0 %499
      %501 = vset.pattern.permute.xlu0 1
      %502 = vperm.xlu0 %501, %v354
      %v503 = vpop.permute.xlu0 %502
      %504 = vset.pattern.permute.xlu0 1
      %505 = vperm.xlu0 %504, %v355
      %v506 = vpop.permute.xlu0 %505
      %507 = vset.pattern.permute.xlu0 1
      %508 = vperm.xlu0 %507, %v356
      %v509 = vpop.permute.xlu0 %508
      %510 = vset.pattern.permute.xlu0 1
      %511 = vperm.xlu0 %510, %v357
      %v512 = vpop.permute.xlu0 %511
      %513 = vset.pattern.permute.xlu0 1
      %514 = vperm.xlu0 %513, %v358
      %v515 = vpop.permute.xlu0 %514
      %516 = vset.pattern.permute.xlu0 1
      %517 = vperm.xlu0 %516, %v359
      %v518 = vpop.permute.xlu0 %517
      %519 = vset.pattern.permute.xlu0 1
      %520 = vperm.xlu0 %519, %v360
      %v521 = vpop.permute.xlu0 %520
      %522 = vset.pattern.permute.xlu0 1
      %523 = vperm.xlu0 %522, %v361
      %v524 = vpop.permute.xlu0 %523
      %vm525 = vcmp.eq.s32.totalorder %v479, %v363
      %vm526 = vcmp.eq.s32.totalorder %v479, %v364
      %vm527 = vcmp.eq.s32.totalorder %v482, %v363
      %vm528 = vcmp.eq.s32.totalorder %v482, %v364
      %vm529 = vcmp.eq.s32.totalorder %v485, %v363
      %vm530 = vcmp.eq.s32.totalorder %v485, %v364
      %vm531 = vcmp.eq.s32.totalorder %v488, %v363
      %vm532 = vcmp.eq.s32.totalorder %v488, %v364
      %vm533 = vcmp.eq.s32.totalorder %v491, %v363
      %vm534 = vcmp.eq.s32.totalorder %v491, %v364
      %vm535 = vcmp.eq.s32.totalorder %v494, %v363
      %vm536 = vcmp.eq.s32.totalorder %v494, %v364
      %vm537 = vcmp.eq.s32.totalorder %v497, %v363
      %vm538 = vcmp.eq.s32.totalorder %v497, %v364
      %vm539 = vcmp.eq.s32.totalorder %v500, %v363
      %vm540 = vcmp.eq.s32.totalorder %v500, %v364
      %vm541 = vcmp.eq.s32.totalorder %v503, %v363
      %vm542 = vcmp.eq.s32.totalorder %v503, %v364
      %vm543 = vcmp.eq.s32.totalorder %v506, %v363
      %vm544 = vcmp.eq.s32.totalorder %v506, %v364
      %vm545 = vcmp.eq.s32.totalorder %v509, %v363
      %vm546 = vcmp.eq.s32.totalorder %v509, %v364
      %vm547 = vcmp.eq.s32.totalorder %v512, %v363
      %vm548 = vcmp.eq.s32.totalorder %v512, %v364
      %vm549 = vcmp.eq.s32.totalorder %v515, %v363
      %vm550 = vcmp.eq.s32.totalorder %v515, %v364
      %vm551 = vcmp.eq.s32.totalorder %v518, %v363
      %vm552 = vcmp.eq.s32.totalorder %v518, %v364
      %vm553 = vcmp.eq.s32.totalorder %v521, %v363
      %vm554 = vcmp.eq.s32.totalorder %v521, %v364
      %vm555 = vcmp.eq.s32.totalorder %v524, %v363
      %vm556 = vcmp.eq.s32.totalorder %v524, %v364
      %v557 = vsel %vm525, 1.0, 0.0
      %v558 = vsel %vm526, 1.0, 0.0
      %v559 = vsel %vm527, 1.0, 0.0
      %v560 = vsel %vm528, 1.0, 0.0
      %v561 = vsel %vm529, 1.0, 0.0
      %v562 = vsel %vm530, 1.0, 0.0
      %v563 = vsel %vm531, 1.0, 0.0
      %v564 = vsel %vm532, 1.0, 0.0
      %v565 = vsel %vm533, 1.0, 0.0
      %v566 = vsel %vm534, 1.0, 0.0
      %v567 = vsel %vm535, 1.0, 0.0
      %v568 = vsel %vm536, 1.0, 0.0
      %v569 = vsel %vm537, 1.0, 0.0
      %v570 = vsel %vm538, 1.0, 0.0
      %v571 = vsel %vm539, 1.0, 0.0
      %v572 = vsel %vm540, 1.0, 0.0
      %v573 = vsel %vm541, 1.0, 0.0
      %v574 = vsel %vm542, 1.0, 0.0
      %v575 = vsel %vm543, 1.0, 0.0
      %v576 = vsel %vm544, 1.0, 0.0
      %v577 = vsel %vm545, 1.0, 0.0
      %v578 = vsel %vm546, 1.0, 0.0
      %v579 = vsel %vm547, 1.0, 0.0
      %v580 = vsel %vm548, 1.0, 0.0
      %v581 = vsel %vm549, 1.0, 0.0
      %v582 = vsel %vm550, 1.0, 0.0
      %v583 = vsel %vm551, 1.0, 0.0
      %v584 = vsel %vm552, 1.0, 0.0
      %v585 = vsel %vm553, 1.0, 0.0
      %v586 = vsel %vm554, 1.0, 0.0
      %v587 = vsel %vm555, 1.0, 0.0
      %v588 = vsel %vm556, 1.0, 0.0
      %v589 = vadd.f32 %v445, %v557
      %v590 = vadd.f32 %v446, %v558
      %v591 = vadd.f32 %v447, %v559
      %v592 = vadd.f32 %v448, %v560
      %v593 = vadd.f32 %v449, %v561
      %v594 = vadd.f32 %v450, %v562
      %v595 = vadd.f32 %v451, %v563
      %v596 = vadd.f32 %v452, %v564
      %v597 = vadd.f32 %v453, %v565
      %v598 = vadd.f32 %v454, %v566
      %v599 = vadd.f32 %v455, %v567
      %v600 = vadd.f32 %v456, %v568
      %v601 = vadd.f32 %v457, %v569
      %v602 = vadd.f32 %v458, %v570
      %v603 = vadd.f32 %v459, %v571
      %v604 = vadd.f32 %v460, %v572
      %v605 = vadd.f32 %v461, %v573
      %v606 = vadd.f32 %v462, %v574
      %v607 = vadd.f32 %v463, %v575
      %v608 = vadd.f32 %v464, %v576
      %v609 = vadd.f32 %v465, %v577
      %v610 = vadd.f32 %v466, %v578
      %v611 = vadd.f32 %v467, %v579
      %v612 = vadd.f32 %v468, %v580
      %v613 = vadd.f32 %v469, %v581
      %v614 = vadd.f32 %v470, %v582
      %v615 = vadd.f32 %v471, %v583
      %v616 = vadd.f32 %v472, %v584
      %v617 = vadd.f32 %v473, %v585
      %v618 = vadd.f32 %v474, %v586
      %v619 = vadd.f32 %v475, %v587
      %v620 = vadd.f32 %v476, %v588
      %621 = vset.pattern.permute.xlu0 2
      %622 = vperm.xlu0 %621, %v346
      %v623 = vpop.permute.xlu0 %622
      %624 = vset.pattern.permute.xlu0 2
      %625 = vperm.xlu0 %624, %v347
      %v626 = vpop.permute.xlu0 %625
      %627 = vset.pattern.permute.xlu0 2
      %628 = vperm.xlu0 %627, %v348
      %v629 = vpop.permute.xlu0 %628
      %630 = vset.pattern.permute.xlu0 2
      %631 = vperm.xlu0 %630, %v349
      %v632 = vpop.permute.xlu0 %631
      %633 = vset.pattern.permute.xlu0 2
      %634 = vperm.xlu0 %633, %v350
      %v635 = vpop.permute.xlu0 %634
      %636 = vset.pattern.permute.xlu0 2
      %637 = vperm.xlu0 %636, %v351
      %v638 = vpop.permute.xlu0 %637
      %639 = vset.pattern.permute.xlu0 2
      %640 = vperm.xlu0 %639, %v352
      %v641 = vpop.permute.xlu0 %640
      %642 = vset.pattern.permute.xlu0 2
      %643 = vperm.xlu0 %642, %v353
      %v644 = vpop.permute.xlu0 %643
      %645 = vset.pattern.permute.xlu0 2
      %646 = vperm.xlu0 %645, %v354
      %v647 = vpop.permute.xlu0 %646
      %648 = vset.pattern.permute.xlu0 2
      %649 = vperm.xlu0 %648, %v355
      %v650 = vpop.permute.xlu0 %649
      %651 = vset.pattern.permute.xlu0 2
      %652 = vperm.xlu0 %651, %v356
      %v653 = vpop.permute.xlu0 %652
      %654 = vset.pattern.permute.xlu0 2
      %655 = vperm.xlu0 %654, %v357
      %v656 = vpop.permute.xlu0 %655
      %657 = vset.pattern.permute.xlu0 2
      %658 = vperm.xlu0 %657, %v358
      %v659 = vpop.permute.xlu0 %658
      %660 = vset.pattern.permute.xlu0 2
      %661 = vperm.xlu0 %660, %v359
      %v662 = vpop.permute.xlu0 %661
      %663 = vset.pattern.permute.xlu0 2
      %664 = vperm.xlu0 %663, %v360
      %v665 = vpop.permute.xlu0 %664
      %666 = vset.pattern.permute.xlu0 2
      %667 = vperm.xlu0 %666, %v361
      %v668 = vpop.permute.xlu0 %667
      %vm669 = vcmp.eq.s32.totalorder %v623, %v363
      %vm670 = vcmp.eq.s32.totalorder %v623, %v364
      %vm671 = vcmp.eq.s32.totalorder %v626, %v363
      %vm672 = vcmp.eq.s32.totalorder %v626, %v364
      %vm673 = vcmp.eq.s32.totalorder %v629, %v363
      %vm674 = vcmp.eq.s32.totalorder %v629, %v364
      %vm675 = vcmp.eq.s32.totalorder %v632, %v363
      %vm676 = vcmp.eq.s32.totalorder %v632, %v364
      %vm677 = vcmp.eq.s32.totalorder %v635, %v363
      %vm678 = vcmp.eq.s32.totalorder %v635, %v364
      %vm679 = vcmp.eq.s32.totalorder %v638, %v363
      %vm680 = vcmp.eq.s32.totalorder %v638, %v364
      %vm681 = vcmp.eq.s32.totalorder %v641, %v363
      %vm682 = vcmp.eq.s32.totalorder %v641, %v364
      %vm683 = vcmp.eq.s32.totalorder %v644, %v363
      %vm684 = vcmp.eq.s32.totalorder %v644, %v364
      %vm685 = vcmp.eq.s32.totalorder %v647, %v363
      %vm686 = vcmp.eq.s32.totalorder %v647, %v364
      %vm687 = vcmp.eq.s32.totalorder %v650, %v363
      %vm688 = vcmp.eq.s32.totalorder %v650, %v364
      %vm689 = vcmp.eq.s32.totalorder %v653, %v363
      %vm690 = vcmp.eq.s32.totalorder %v653, %v364
      %vm691 = vcmp.eq.s32.totalorder %v656, %v363
      %vm692 = vcmp.eq.s32.totalorder %v656, %v364
      %vm693 = vcmp.eq.s32.totalorder %v659, %v363
      %vm694 = vcmp.eq.s32.totalorder %v659, %v364
      %vm695 = vcmp.eq.s32.totalorder %v662, %v363
      %vm696 = vcmp.eq.s32.totalorder %v662, %v364
      %vm697 = vcmp.eq.s32.totalorder %v665, %v363
      %vm698 = vcmp.eq.s32.totalorder %v665, %v364
      %vm699 = vcmp.eq.s32.totalorder %v668, %v363
      %vm700 = vcmp.eq.s32.totalorder %v668, %v364
      %v701 = vsel %vm669, 1.0, 0.0
      %v702 = vsel %vm670, 1.0, 0.0
      %v703 = vsel %vm671, 1.0, 0.0
      %v704 = vsel %vm672, 1.0, 0.0
      %v705 = vsel %vm673, 1.0, 0.0
      %v706 = vsel %vm674, 1.0, 0.0
      %v707 = vsel %vm675, 1.0, 0.0
      %v708 = vsel %vm676, 1.0, 0.0
      %v709 = vsel %vm677, 1.0, 0.0
      %v710 = vsel %vm678, 1.0, 0.0
      %v711 = vsel %vm679, 1.0, 0.0
      %v712 = vsel %vm680, 1.0, 0.0
      %v713 = vsel %vm681, 1.0, 0.0
      %v714 = vsel %vm682, 1.0, 0.0
      %v715 = vsel %vm683, 1.0, 0.0
      %v716 = vsel %vm684, 1.0, 0.0
      %v717 = vsel %vm685, 1.0, 0.0
      %v718 = vsel %vm686, 1.0, 0.0
      %v719 = vsel %vm687, 1.0, 0.0
      %v720 = vsel %vm688, 1.0, 0.0
      %v721 = vsel %vm689, 1.0, 0.0
      %v722 = vsel %vm690, 1.0, 0.0
      %v723 = vsel %vm691, 1.0, 0.0
      %v724 = vsel %vm692, 1.0, 0.0
      %v725 = vsel %vm693, 1.0, 0.0
      %v726 = vsel %vm694, 1.0, 0.0
      %v727 = vsel %vm695, 1.0, 0.0
      %v728 = vsel %vm696, 1.0, 0.0
      %v729 = vsel %vm697, 1.0, 0.0
      %v730 = vsel %vm698, 1.0, 0.0
      %v731 = vsel %vm699, 1.0, 0.0
      %v732 = vsel %vm700, 1.0, 0.0
      %v733 = vadd.f32 %v589, %v701
      %v734 = vadd.f32 %v590, %v702
      %v735 = vadd.f32 %v591, %v703
      %v736 = vadd.f32 %v592, %v704
      %v737 = vadd.f32 %v593, %v705
      %v738 = vadd.f32 %v594, %v706
      %v739 = vadd.f32 %v595, %v707
      %v740 = vadd.f32 %v596, %v708
      %v741 = vadd.f32 %v597, %v709
      %v742 = vadd.f32 %v598, %v710
      %v743 = vadd.f32 %v599, %v711
      %v744 = vadd.f32 %v600, %v712
      %v745 = vadd.f32 %v601, %v713
      %v746 = vadd.f32 %v602, %v714
      %v747 = vadd.f32 %v603, %v715
      %v748 = vadd.f32 %v604, %v716
      %v749 = vadd.f32 %v605, %v717
      %v750 = vadd.f32 %v606, %v718
      %v751 = vadd.f32 %v607, %v719
      %v752 = vadd.f32 %v608, %v720
      %v753 = vadd.f32 %v609, %v721
      %v754 = vadd.f32 %v610, %v722
      %v755 = vadd.f32 %v611, %v723
      %v756 = vadd.f32 %v612, %v724
      %v757 = vadd.f32 %v613, %v725
      %v758 = vadd.f32 %v614, %v726
      %v759 = vadd.f32 %v615, %v727
      %v760 = vadd.f32 %v616, %v728
      %v761 = vadd.f32 %v617, %v729
      %v762 = vadd.f32 %v618, %v730
      %v763 = vadd.f32 %v619, %v731
      %v764 = vadd.f32 %v620, %v732
      %765 = vset.pattern.permute.xlu0 3
      %766 = vperm.xlu0 %765, %v346
      %v767 = vpop.permute.xlu0 %766
      %768 = vset.pattern.permute.xlu0 3
      %769 = vperm.xlu0 %768, %v347
      %v770 = vpop.permute.xlu0 %769
      %771 = vset.pattern.permute.xlu0 3
      %772 = vperm.xlu0 %771, %v348
      %v773 = vpop.permute.xlu0 %772
      %774 = vset.pattern.permute.xlu0 3
      %775 = vperm.xlu0 %774, %v349
      %v776 = vpop.permute.xlu0 %775
      %777 = vset.pattern.permute.xlu0 3
      %778 = vperm.xlu0 %777, %v350
      %v779 = vpop.permute.xlu0 %778
      %780 = vset.pattern.permute.xlu0 3
      %781 = vperm.xlu0 %780, %v351
      %v782 = vpop.permute.xlu0 %781
      %783 = vset.pattern.permute.xlu0 3
      %784 = vperm.xlu0 %783, %v352
      %v785 = vpop.permute.xlu0 %784
      %786 = vset.pattern.permute.xlu0 3
      %787 = vperm.xlu0 %786, %v353
      %v788 = vpop.permute.xlu0 %787
      %789 = vset.pattern.permute.xlu0 3
      %790 = vperm.xlu0 %789, %v354
      %v791 = vpop.permute.xlu0 %790
      %792 = vset.pattern.permute.xlu0 3
      %793 = vperm.xlu0 %792, %v355
      %v794 = vpop.permute.xlu0 %793
      %795 = vset.pattern.permute.xlu0 3
      %796 = vperm.xlu0 %795, %v356
      %v797 = vpop.permute.xlu0 %796
      %798 = vset.pattern.permute.xlu0 3
      %799 = vperm.xlu0 %798, %v357
      %v800 = vpop.permute.xlu0 %799
      %801 = vset.pattern.permute.xlu0 3
      %802 = vperm.xlu0 %801, %v358
      %v803 = vpop.permute.xlu0 %802
      %804 = vset.pattern.permute.xlu0 3
      %805 = vperm.xlu0 %804, %v359
      %v806 = vpop.permute.xlu0 %805
      %807 = vset.pattern.permute.xlu0 3
      %808 = vperm.xlu0 %807, %v360
      %v809 = vpop.permute.xlu0 %808
      %810 = vset.pattern.permute.xlu0 3
      %811 = vperm.xlu0 %810, %v361
      %v812 = vpop.permute.xlu0 %811
      %vm813 = vcmp.eq.s32.totalorder %v767, %v363
      %vm814 = vcmp.eq.s32.totalorder %v767, %v364
      %vm815 = vcmp.eq.s32.totalorder %v770, %v363
      %vm816 = vcmp.eq.s32.totalorder %v770, %v364
      %vm817 = vcmp.eq.s32.totalorder %v773, %v363
      %vm818 = vcmp.eq.s32.totalorder %v773, %v364
      %vm819 = vcmp.eq.s32.totalorder %v776, %v363
      %vm820 = vcmp.eq.s32.totalorder %v776, %v364
      %vm821 = vcmp.eq.s32.totalorder %v779, %v363
      %vm822 = vcmp.eq.s32.totalorder %v779, %v364
      %vm823 = vcmp.eq.s32.totalorder %v782, %v363
      %vm824 = vcmp.eq.s32.totalorder %v782, %v364
      %vm825 = vcmp.eq.s32.totalorder %v785, %v363
      %vm826 = vcmp.eq.s32.totalorder %v785, %v364
      %vm827 = vcmp.eq.s32.totalorder %v788, %v363
      %vm828 = vcmp.eq.s32.totalorder %v788, %v364
      %vm829 = vcmp.eq.s32.totalorder %v791, %v363
      %vm830 = vcmp.eq.s32.totalorder %v791, %v364
      %vm831 = vcmp.eq.s32.totalorder %v794, %v363
      %vm832 = vcmp.eq.s32.totalorder %v794, %v364
      %vm833 = vcmp.eq.s32.totalorder %v797, %v363
      %vm834 = vcmp.eq.s32.totalorder %v797, %v364
      %vm835 = vcmp.eq.s32.totalorder %v800, %v363
      %vm836 = vcmp.eq.s32.totalorder %v800, %v364
      %vm837 = vcmp.eq.s32.totalorder %v803, %v363
      %vm838 = vcmp.eq.s32.totalorder %v803, %v364
      %vm839 = vcmp.eq.s32.totalorder %v806, %v363
      %vm840 = vcmp.eq.s32.totalorder %v806, %v364
      %vm841 = vcmp.eq.s32.totalorder %v809, %v363
      %vm842 = vcmp.eq.s32.totalorder %v809, %v364
      %vm843 = vcmp.eq.s32.totalorder %v812, %v363
      %vm844 = vcmp.eq.s32.totalorder %v812, %v364
      %v845 = vsel %vm813, 1.0, 0.0
      %v846 = vsel %vm814, 1.0, 0.0
      %v847 = vsel %vm815, 1.0, 0.0
      %v848 = vsel %vm816, 1.0, 0.0
      %v849 = vsel %vm817, 1.0, 0.0
      %v850 = vsel %vm818, 1.0, 0.0
      %v851 = vsel %vm819, 1.0, 0.0
      %v852 = vsel %vm820, 1.0, 0.0
      %v853 = vsel %vm821, 1.0, 0.0
      %v854 = vsel %vm822, 1.0, 0.0
      %v855 = vsel %vm823, 1.0, 0.0
      %v856 = vsel %vm824, 1.0, 0.0
      %v857 = vsel %vm825, 1.0, 0.0
      %v858 = vsel %vm826, 1.0, 0.0
      %v859 = vsel %vm827, 1.0, 0.0
      %v860 = vsel %vm828, 1.0, 0.0
      %v861 = vsel %vm829, 1.0, 0.0
      %v862 = vsel %vm830, 1.0, 0.0
      %v863 = vsel %vm831, 1.0, 0.0
      %v864 = vsel %vm832, 1.0, 0.0
      %v865 = vsel %vm833, 1.0, 0.0
      %v866 = vsel %vm834, 1.0, 0.0
      %v867 = vsel %vm835, 1.0, 0.0
      %v868 = vsel %vm836, 1.0, 0.0
      %v869 = vsel %vm837, 1.0, 0.0
      %v870 = vsel %vm838, 1.0, 0.0
      %v871 = vsel %vm839, 1.0, 0.0
      %v872 = vsel %vm840, 1.0, 0.0
      %v873 = vsel %vm841, 1.0, 0.0
      %v874 = vsel %vm842, 1.0, 0.0
      %v875 = vsel %vm843, 1.0, 0.0
      %v876 = vsel %vm844, 1.0, 0.0
      %v877 = vadd.f32 %v733, %v845
      %v878 = vadd.f32 %v734, %v846
      %v879 = vadd.f32 %v735, %v847
      %v880 = vadd.f32 %v736, %v848
      %v881 = vadd.f32 %v737, %v849
      %v882 = vadd.f32 %v738, %v850
      %v883 = vadd.f32 %v739, %v851
      %v884 = vadd.f32 %v740, %v852
      %v885 = vadd.f32 %v741, %v853
      %v886 = vadd.f32 %v742, %v854
      %v887 = vadd.f32 %v743, %v855
      %v888 = vadd.f32 %v744, %v856
      %v889 = vadd.f32 %v745, %v857
      %v890 = vadd.f32 %v746, %v858
      %v891 = vadd.f32 %v747, %v859
      %v892 = vadd.f32 %v748, %v860
      %v893 = vadd.f32 %v749, %v861
      %v894 = vadd.f32 %v750, %v862
      %v895 = vadd.f32 %v751, %v863
      %v896 = vadd.f32 %v752, %v864
      %v897 = vadd.f32 %v753, %v865
      %v898 = vadd.f32 %v754, %v866
      %v899 = vadd.f32 %v755, %v867
      %v900 = vadd.f32 %v756, %v868
      %v901 = vadd.f32 %v757, %v869
      %v902 = vadd.f32 %v758, %v870
      %v903 = vadd.f32 %v759, %v871
      %v904 = vadd.f32 %v760, %v872
      %v905 = vadd.f32 %v761, %v873
      %v906 = vadd.f32 %v762, %v874
      %v907 = vadd.f32 %v763, %v875
      %v908 = vadd.f32 %v764, %v876
      %909 = vset.pattern.permute.xlu0 4
      %910 = vperm.xlu0 %909, %v346
      %v911 = vpop.permute.xlu0 %910
      %912 = vset.pattern.permute.xlu0 4
      %913 = vperm.xlu0 %912, %v347
      %v914 = vpop.permute.xlu0 %913
      %915 = vset.pattern.permute.xlu0 4
      %916 = vperm.xlu0 %915, %v348
      %v917 = vpop.permute.xlu0 %916
      %918 = vset.pattern.permute.xlu0 4
      %919 = vperm.xlu0 %918, %v349
      %v920 = vpop.permute.xlu0 %919
      %921 = vset.pattern.permute.xlu0 4
      %922 = vperm.xlu0 %921, %v350
      %v923 = vpop.permute.xlu0 %922
      %924 = vset.pattern.permute.xlu0 4
      %925 = vperm.xlu0 %924, %v351
      %v926 = vpop.permute.xlu0 %925
      %927 = vset.pattern.permute.xlu0 4
      %928 = vperm.xlu0 %927, %v352
      %v929 = vpop.permute.xlu0 %928
      %930 = vset.pattern.permute.xlu0 4
      %931 = vperm.xlu0 %930, %v353
      %v932 = vpop.permute.xlu0 %931
      %933 = vset.pattern.permute.xlu0 4
      %934 = vperm.xlu0 %933, %v354
      %v935 = vpop.permute.xlu0 %934
      %936 = vset.pattern.permute.xlu0 4
      %937 = vperm.xlu0 %936, %v355
      %v938 = vpop.permute.xlu0 %937
      %939 = vset.pattern.permute.xlu0 4
      %940 = vperm.xlu0 %939, %v356
      %v941 = vpop.permute.xlu0 %940
      %942 = vset.pattern.permute.xlu0 4
      %943 = vperm.xlu0 %942, %v357
      %v944 = vpop.permute.xlu0 %943
      %945 = vset.pattern.permute.xlu0 4
      %946 = vperm.xlu0 %945, %v358
      %v947 = vpop.permute.xlu0 %946
      %948 = vset.pattern.permute.xlu0 4
      %949 = vperm.xlu0 %948, %v359
      %v950 = vpop.permute.xlu0 %949
      %951 = vset.pattern.permute.xlu0 4
      %952 = vperm.xlu0 %951, %v360
      %v953 = vpop.permute.xlu0 %952
      %954 = vset.pattern.permute.xlu0 4
      %955 = vperm.xlu0 %954, %v361
      %v956 = vpop.permute.xlu0 %955
      %vm957 = vcmp.eq.s32.totalorder %v911, %v363
      %vm958 = vcmp.eq.s32.totalorder %v911, %v364
      %vm959 = vcmp.eq.s32.totalorder %v914, %v363
      %vm960 = vcmp.eq.s32.totalorder %v914, %v364
      %vm961 = vcmp.eq.s32.totalorder %v917, %v363
      %vm962 = vcmp.eq.s32.totalorder %v917, %v364
      %vm963 = vcmp.eq.s32.totalorder %v920, %v363
      %vm964 = vcmp.eq.s32.totalorder %v920, %v364
      %vm965 = vcmp.eq.s32.totalorder %v923, %v363
      %vm966 = vcmp.eq.s32.totalorder %v923, %v364
      %vm967 = vcmp.eq.s32.totalorder %v926, %v363
      %vm968 = vcmp.eq.s32.totalorder %v926, %v364
      %vm969 = vcmp.eq.s32.totalorder %v929, %v363
      %vm970 = vcmp.eq.s32.totalorder %v929, %v364
      %vm971 = vcmp.eq.s32.totalorder %v932, %v363
      %vm972 = vcmp.eq.s32.totalorder %v932, %v364
      %vm973 = vcmp.eq.s32.totalorder %v935, %v363
      %vm974 = vcmp.eq.s32.totalorder %v935, %v364
      %vm975 = vcmp.eq.s32.totalorder %v938, %v363
      %vm976 = vcmp.eq.s32.totalorder %v938, %v364
      %vm977 = vcmp.eq.s32.totalorder %v941, %v363
      %vm978 = vcmp.eq.s32.totalorder %v941, %v364
      %vm979 = vcmp.eq.s32.totalorder %v944, %v363
      %vm980 = vcmp.eq.s32.totalorder %v944, %v364
      %vm981 = vcmp.eq.s32.totalorder %v947, %v363
      %vm982 = vcmp.eq.s32.totalorder %v947, %v364
      %vm983 = vcmp.eq.s32.totalorder %v950, %v363
      %vm984 = vcmp.eq.s32.totalorder %v950, %v364
      %vm985 = vcmp.eq.s32.totalorder %v953, %v363
      %vm986 = vcmp.eq.s32.totalorder %v953, %v364
      %vm987 = vcmp.eq.s32.totalorder %v956, %v363
      %vm988 = vcmp.eq.s32.totalorder %v956, %v364
      %v989 = vsel %vm957, 1.0, 0.0
      %v990 = vsel %vm958, 1.0, 0.0
      %v991 = vsel %vm959, 1.0, 0.0
      %v992 = vsel %vm960, 1.0, 0.0
      %v993 = vsel %vm961, 1.0, 0.0
      %v994 = vsel %vm962, 1.0, 0.0
      %v995 = vsel %vm963, 1.0, 0.0
      %v996 = vsel %vm964, 1.0, 0.0
      %v997 = vsel %vm965, 1.0, 0.0
      %v998 = vsel %vm966, 1.0, 0.0
      %v999 = vsel %vm967, 1.0, 0.0
      %v1000 = vsel %vm968, 1.0, 0.0
      %v1001 = vsel %vm969, 1.0, 0.0
      %v1002 = vsel %vm970, 1.0, 0.0
      %v1003 = vsel %vm971, 1.0, 0.0
      %v1004 = vsel %vm972, 1.0, 0.0
      %v1005 = vsel %vm973, 1.0, 0.0
      %v1006 = vsel %vm974, 1.0, 0.0
      %v1007 = vsel %vm975, 1.0, 0.0
      %v1008 = vsel %vm976, 1.0, 0.0
      %v1009 = vsel %vm977, 1.0, 0.0
      %v1010 = vsel %vm978, 1.0, 0.0
      %v1011 = vsel %vm979, 1.0, 0.0
      %v1012 = vsel %vm980, 1.0, 0.0
      %v1013 = vsel %vm981, 1.0, 0.0
      %v1014 = vsel %vm982, 1.0, 0.0
      %v1015 = vsel %vm983, 1.0, 0.0
      %v1016 = vsel %vm984, 1.0, 0.0
      %v1017 = vsel %vm985, 1.0, 0.0
      %v1018 = vsel %vm986, 1.0, 0.0
      %v1019 = vsel %vm987, 1.0, 0.0
      %v1020 = vsel %vm988, 1.0, 0.0
      %v1021 = vadd.f32 %v877, %v989
      %v1022 = vadd.f32 %v878, %v990
      %v1023 = vadd.f32 %v879, %v991
      %v1024 = vadd.f32 %v880, %v992
      %v1025 = vadd.f32 %v881, %v993
      %v1026 = vadd.f32 %v882, %v994
      %v1027 = vadd.f32 %v883, %v995
      %v1028 = vadd.f32 %v884, %v996
      %v1029 = vadd.f32 %v885, %v997
      %v1030 = vadd.f32 %v886, %v998
      %v1031 = vadd.f32 %v887, %v999
      %v1032 = vadd.f32 %v888, %v1000
      %v1033 = vadd.f32 %v889, %v1001
      %v1034 = vadd.f32 %v890, %v1002
      %v1035 = vadd.f32 %v891, %v1003
      %v1036 = vadd.f32 %v892, %v1004
      %v1037 = vadd.f32 %v893, %v1005
      %v1038 = vadd.f32 %v894, %v1006
      %v1039 = vadd.f32 %v895, %v1007
      %v1040 = vadd.f32 %v896, %v1008
      %v1041 = vadd.f32 %v897, %v1009
      %v1042 = vadd.f32 %v898, %v1010
      %v1043 = vadd.f32 %v899, %v1011
      %v1044 = vadd.f32 %v900, %v1012
      %v1045 = vadd.f32 %v901, %v1013
      %v1046 = vadd.f32 %v902, %v1014
      %v1047 = vadd.f32 %v903, %v1015
      %v1048 = vadd.f32 %v904, %v1016
      %v1049 = vadd.f32 %v905, %v1017
      %v1050 = vadd.f32 %v906, %v1018
      %v1051 = vadd.f32 %v907, %v1019
      %v1052 = vadd.f32 %v908, %v1020
      %1053 = vset.pattern.permute.xlu0 5
      %1054 = vperm.xlu0 %1053, %v346
      %v1055 = vpop.permute.xlu0 %1054
      %1056 = vset.pattern.permute.xlu0 5
      %1057 = vperm.xlu0 %1056, %v347
      %v1058 = vpop.permute.xlu0 %1057
      %1059 = vset.pattern.permute.xlu0 5
      %1060 = vperm.xlu0 %1059, %v348
      %v1061 = vpop.permute.xlu0 %1060
      %1062 = vset.pattern.permute.xlu0 5
      %1063 = vperm.xlu0 %1062, %v349
      %v1064 = vpop.permute.xlu0 %1063
      %1065 = vset.pattern.permute.xlu0 5
      %1066 = vperm.xlu0 %1065, %v350
      %v1067 = vpop.permute.xlu0 %1066
      %1068 = vset.pattern.permute.xlu0 5
      %1069 = vperm.xlu0 %1068, %v351
      %v1070 = vpop.permute.xlu0 %1069
      %1071 = vset.pattern.permute.xlu0 5
      %1072 = vperm.xlu0 %1071, %v352
      %v1073 = vpop.permute.xlu0 %1072
      %1074 = vset.pattern.permute.xlu0 5
      %1075 = vperm.xlu0 %1074, %v353
      %v1076 = vpop.permute.xlu0 %1075
      %1077 = vset.pattern.permute.xlu0 5
      %1078 = vperm.xlu0 %1077, %v354
      %v1079 = vpop.permute.xlu0 %1078
      %1080 = vset.pattern.permute.xlu0 5
      %1081 = vperm.xlu0 %1080, %v355
      %v1082 = vpop.permute.xlu0 %1081
      %1083 = vset.pattern.permute.xlu0 5
      %1084 = vperm.xlu0 %1083, %v356
      %v1085 = vpop.permute.xlu0 %1084
      %1086 = vset.pattern.permute.xlu0 5
      %1087 = vperm.xlu0 %1086, %v357
      %v1088 = vpop.permute.xlu0 %1087
      %1089 = vset.pattern.permute.xlu0 5
      %1090 = vperm.xlu0 %1089, %v358
      %v1091 = vpop.permute.xlu0 %1090
      %1092 = vset.pattern.permute.xlu0 5
      %1093 = vperm.xlu0 %1092, %v359
      %v1094 = vpop.permute.xlu0 %1093
      %1095 = vset.pattern.permute.xlu0 5
      %1096 = vperm.xlu0 %1095, %v360
      %v1097 = vpop.permute.xlu0 %1096
      %1098 = vset.pattern.permute.xlu0 5
      %1099 = vperm.xlu0 %1098, %v361
      %v1100 = vpop.permute.xlu0 %1099
      %vm1101 = vcmp.eq.s32.totalorder %v1055, %v363
      %vm1102 = vcmp.eq.s32.totalorder %v1055, %v364
      %vm1103 = vcmp.eq.s32.totalorder %v1058, %v363
      %vm1104 = vcmp.eq.s32.totalorder %v1058, %v364
      %vm1105 = vcmp.eq.s32.totalorder %v1061, %v363
      %vm1106 = vcmp.eq.s32.totalorder %v1061, %v364
      %vm1107 = vcmp.eq.s32.totalorder %v1064, %v363
      %vm1108 = vcmp.eq.s32.totalorder %v1064, %v364
      %vm1109 = vcmp.eq.s32.totalorder %v1067, %v363
      %vm1110 = vcmp.eq.s32.totalorder %v1067, %v364
      %vm1111 = vcmp.eq.s32.totalorder %v1070, %v363
      %vm1112 = vcmp.eq.s32.totalorder %v1070, %v364
      %vm1113 = vcmp.eq.s32.totalorder %v1073, %v363
      %vm1114 = vcmp.eq.s32.totalorder %v1073, %v364
      %vm1115 = vcmp.eq.s32.totalorder %v1076, %v363
      %vm1116 = vcmp.eq.s32.totalorder %v1076, %v364
      %vm1117 = vcmp.eq.s32.totalorder %v1079, %v363
      %vm1118 = vcmp.eq.s32.totalorder %v1079, %v364
      %vm1119 = vcmp.eq.s32.totalorder %v1082, %v363
      %vm1120 = vcmp.eq.s32.totalorder %v1082, %v364
      %vm1121 = vcmp.eq.s32.totalorder %v1085, %v363
      %vm1122 = vcmp.eq.s32.totalorder %v1085, %v364
      %vm1123 = vcmp.eq.s32.totalorder %v1088, %v363
      %vm1124 = vcmp.eq.s32.totalorder %v1088, %v364
      %vm1125 = vcmp.eq.s32.totalorder %v1091, %v363
      %vm1126 = vcmp.eq.s32.totalorder %v1091, %v364
      %vm1127 = vcmp.eq.s32.totalorder %v1094, %v363
      %vm1128 = vcmp.eq.s32.totalorder %v1094, %v364
      %vm1129 = vcmp.eq.s32.totalorder %v1097, %v363
      %vm1130 = vcmp.eq.s32.totalorder %v1097, %v364
      %vm1131 = vcmp.eq.s32.totalorder %v1100, %v363
      %vm1132 = vcmp.eq.s32.totalorder %v1100, %v364
      %v1133 = vsel %vm1101, 1.0, 0.0
      %v1134 = vsel %vm1102, 1.0, 0.0
      %v1135 = vsel %vm1103, 1.0, 0.0
      %v1136 = vsel %vm1104, 1.0, 0.0
      %v1137 = vsel %vm1105, 1.0, 0.0
      %v1138 = vsel %vm1106, 1.0, 0.0
      %v1139 = vsel %vm1107, 1.0, 0.0
      %v1140 = vsel %vm1108, 1.0, 0.0
      %v1141 = vsel %vm1109, 1.0, 0.0
      %v1142 = vsel %vm1110, 1.0, 0.0
      %v1143 = vsel %vm1111, 1.0, 0.0
      %v1144 = vsel %vm1112, 1.0, 0.0
      %v1145 = vsel %vm1113, 1.0, 0.0
      %v1146 = vsel %vm1114, 1.0, 0.0
      %v1147 = vsel %vm1115, 1.0, 0.0
      %v1148 = vsel %vm1116, 1.0, 0.0
      %v1149 = vsel %vm1117, 1.0, 0.0
      %v1150 = vsel %vm1118, 1.0, 0.0
      %v1151 = vsel %vm1119, 1.0, 0.0
      %v1152 = vsel %vm1120, 1.0, 0.0
      %v1153 = vsel %vm1121, 1.0, 0.0
      %v1154 = vsel %vm1122, 1.0, 0.0
      %v1155 = vsel %vm1123, 1.0, 0.0
      %v1156 = vsel %vm1124, 1.0, 0.0
      %v1157 = vsel %vm1125, 1.0, 0.0
      %v1158 = vsel %vm1126, 1.0, 0.0
      %v1159 = vsel %vm1127, 1.0, 0.0
      %v1160 = vsel %vm1128, 1.0, 0.0
      %v1161 = vsel %vm1129, 1.0, 0.0
      %v1162 = vsel %vm1130, 1.0, 0.0
      %v1163 = vsel %vm1131, 1.0, 0.0
      %v1164 = vsel %vm1132, 1.0, 0.0
      %v1165 = vadd.f32 %v1021, %v1133
      %v1166 = vadd.f32 %v1022, %v1134
      %v1167 = vadd.f32 %v1023, %v1135
      %v1168 = vadd.f32 %v1024, %v1136
      %v1169 = vadd.f32 %v1025, %v1137
      %v1170 = vadd.f32 %v1026, %v1138
      %v1171 = vadd.f32 %v1027, %v1139
      %v1172 = vadd.f32 %v1028, %v1140
      %v1173 = vadd.f32 %v1029, %v1141
      %v1174 = vadd.f32 %v1030, %v1142
      %v1175 = vadd.f32 %v1031, %v1143
      %v1176 = vadd.f32 %v1032, %v1144
      %v1177 = vadd.f32 %v1033, %v1145
      %v1178 = vadd.f32 %v1034, %v1146
      %v1179 = vadd.f32 %v1035, %v1147
      %v1180 = vadd.f32 %v1036, %v1148
      %v1181 = vadd.f32 %v1037, %v1149
      %v1182 = vadd.f32 %v1038, %v1150
      %v1183 = vadd.f32 %v1039, %v1151
      %v1184 = vadd.f32 %v1040, %v1152
      %v1185 = vadd.f32 %v1041, %v1153
      %v1186 = vadd.f32 %v1042, %v1154
      %v1187 = vadd.f32 %v1043, %v1155
      %v1188 = vadd.f32 %v1044, %v1156
      %v1189 = vadd.f32 %v1045, %v1157
      %v1190 = vadd.f32 %v1046, %v1158
      %v1191 = vadd.f32 %v1047, %v1159
      %v1192 = vadd.f32 %v1048, %v1160
      %v1193 = vadd.f32 %v1049, %v1161
      %v1194 = vadd.f32 %v1050, %v1162
      %v1195 = vadd.f32 %v1051, %v1163
      %v1196 = vadd.f32 %v1052, %v1164
      %1197 = vset.pattern.permute.xlu0 6
      %1198 = vperm.xlu0 %1197, %v346
      %v1199 = vpop.permute.xlu0 %1198
      %1200 = vset.pattern.permute.xlu0 6
      %1201 = vperm.xlu0 %1200, %v347
      %v1202 = vpop.permute.xlu0 %1201
      %1203 = vset.pattern.permute.xlu0 6
      %1204 = vperm.xlu0 %1203, %v348
      %v1205 = vpop.permute.xlu0 %1204
      %1206 = vset.pattern.permute.xlu0 6
      %1207 = vperm.xlu0 %1206, %v349
      %v1208 = vpop.permute.xlu0 %1207
      %1209 = vset.pattern.permute.xlu0 6
      %1210 = vperm.xlu0 %1209, %v350
      %v1211 = vpop.permute.xlu0 %1210
      %1212 = vset.pattern.permute.xlu0 6
      %1213 = vperm.xlu0 %1212, %v351
      %v1214 = vpop.permute.xlu0 %1213
      %1215 = vset.pattern.permute.xlu0 6
      %1216 = vperm.xlu0 %1215, %v352
      %v1217 = vpop.permute.xlu0 %1216
      %1218 = vset.pattern.permute.xlu0 6
      %1219 = vperm.xlu0 %1218, %v353
      %v1220 = vpop.permute.xlu0 %1219
      %1221 = vset.pattern.permute.xlu0 6
      %1222 = vperm.xlu0 %1221, %v354
      %v1223 = vpop.permute.xlu0 %1222
      %1224 = vset.pattern.permute.xlu0 6
      %1225 = vperm.xlu0 %1224, %v355
      %v1226 = vpop.permute.xlu0 %1225
      %1227 = vset.pattern.permute.xlu0 6
      %1228 = vperm.xlu0 %1227, %v356
      %v1229 = vpop.permute.xlu0 %1228
      %1230 = vset.pattern.permute.xlu0 6
      %1231 = vperm.xlu0 %1230, %v357
      %v1232 = vpop.permute.xlu0 %1231
      %1233 = vset.pattern.permute.xlu0 6
      %1234 = vperm.xlu0 %1233, %v358
      %v1235 = vpop.permute.xlu0 %1234
      %1236 = vset.pattern.permute.xlu0 6
      %1237 = vperm.xlu0 %1236, %v359
      %v1238 = vpop.permute.xlu0 %1237
      %1239 = vset.pattern.permute.xlu0 6
      %1240 = vperm.xlu0 %1239, %v360
      %v1241 = vpop.permute.xlu0 %1240
      %1242 = vset.pattern.permute.xlu0 6
      %1243 = vperm.xlu0 %1242, %v361
      %v1244 = vpop.permute.xlu0 %1243
      %vm1245 = vcmp.eq.s32.totalorder %v1199, %v363
      %vm1246 = vcmp.eq.s32.totalorder %v1199, %v364
      %vm1247 = vcmp.eq.s32.totalorder %v1202, %v363
      %vm1248 = vcmp.eq.s32.totalorder %v1202, %v364
      %vm1249 = vcmp.eq.s32.totalorder %v1205, %v363
      %vm1250 = vcmp.eq.s32.totalorder %v1205, %v364
      %vm1251 = vcmp.eq.s32.totalorder %v1208, %v363
      %vm1252 = vcmp.eq.s32.totalorder %v1208, %v364
      %vm1253 = vcmp.eq.s32.totalorder %v1211, %v363
      %vm1254 = vcmp.eq.s32.totalorder %v1211, %v364
      %vm1255 = vcmp.eq.s32.totalorder %v1214, %v363
      %vm1256 = vcmp.eq.s32.totalorder %v1214, %v364
      %vm1257 = vcmp.eq.s32.totalorder %v1217, %v363
      %vm1258 = vcmp.eq.s32.totalorder %v1217, %v364
      %vm1259 = vcmp.eq.s32.totalorder %v1220, %v363
      %vm1260 = vcmp.eq.s32.totalorder %v1220, %v364
      %vm1261 = vcmp.eq.s32.totalorder %v1223, %v363
      %vm1262 = vcmp.eq.s32.totalorder %v1223, %v364
      %vm1263 = vcmp.eq.s32.totalorder %v1226, %v363
      %vm1264 = vcmp.eq.s32.totalorder %v1226, %v364
      %vm1265 = vcmp.eq.s32.totalorder %v1229, %v363
      %vm1266 = vcmp.eq.s32.totalorder %v1229, %v364
      %vm1267 = vcmp.eq.s32.totalorder %v1232, %v363
      %vm1268 = vcmp.eq.s32.totalorder %v1232, %v364
      %vm1269 = vcmp.eq.s32.totalorder %v1235, %v363
      %vm1270 = vcmp.eq.s32.totalorder %v1235, %v364
      %vm1271 = vcmp.eq.s32.totalorder %v1238, %v363
      %vm1272 = vcmp.eq.s32.totalorder %v1238, %v364
      %vm1273 = vcmp.eq.s32.totalorder %v1241, %v363
      %vm1274 = vcmp.eq.s32.totalorder %v1241, %v364
      %vm1275 = vcmp.eq.s32.totalorder %v1244, %v363
      %vm1276 = vcmp.eq.s32.totalorder %v1244, %v364
      %v1277 = vsel %vm1245, 1.0, 0.0
      %v1278 = vsel %vm1246, 1.0, 0.0
      %v1279 = vsel %vm1247, 1.0, 0.0
      %v1280 = vsel %vm1248, 1.0, 0.0
      %v1281 = vsel %vm1249, 1.0, 0.0
      %v1282 = vsel %vm1250, 1.0, 0.0
      %v1283 = vsel %vm1251, 1.0, 0.0
      %v1284 = vsel %vm1252, 1.0, 0.0
      %v1285 = vsel %vm1253, 1.0, 0.0
      %v1286 = vsel %vm1254, 1.0, 0.0
      %v1287 = vsel %vm1255, 1.0, 0.0
      %v1288 = vsel %vm1256, 1.0, 0.0
      %v1289 = vsel %vm1257, 1.0, 0.0
      %v1290 = vsel %vm1258, 1.0, 0.0
      %v1291 = vsel %vm1259, 1.0, 0.0
      %v1292 = vsel %vm1260, 1.0, 0.0
      %v1293 = vsel %vm1261, 1.0, 0.0
      %v1294 = vsel %vm1262, 1.0, 0.0
      %v1295 = vsel %vm1263, 1.0, 0.0
      %v1296 = vsel %vm1264, 1.0, 0.0
      %v1297 = vsel %vm1265, 1.0, 0.0
      %v1298 = vsel %vm1266, 1.0, 0.0
      %v1299 = vsel %vm1267, 1.0, 0.0
      %v1300 = vsel %vm1268, 1.0, 0.0
      %v1301 = vsel %vm1269, 1.0, 0.0
      %v1302 = vsel %vm1270, 1.0, 0.0
      %v1303 = vsel %vm1271, 1.0, 0.0
      %v1304 = vsel %vm1272, 1.0, 0.0
      %v1305 = vsel %vm1273, 1.0, 0.0
      %v1306 = vsel %vm1274, 1.0, 0.0
      %v1307 = vsel %vm1275, 1.0, 0.0
      %v1308 = vsel %vm1276, 1.0, 0.0
      %v1309 = vadd.f32 %v1165, %v1277
      %v1310 = vadd.f32 %v1166, %v1278
      %v1311 = vadd.f32 %v1167, %v1279
      %v1312 = vadd.f32 %v1168, %v1280
      %v1313 = vadd.f32 %v1169, %v1281
      %v1314 = vadd.f32 %v1170, %v1282
      %v1315 = vadd.f32 %v1171, %v1283
      %v1316 = vadd.f32 %v1172, %v1284
      %v1317 = vadd.f32 %v1173, %v1285
      %v1318 = vadd.f32 %v1174, %v1286
      %v1319 = vadd.f32 %v1175, %v1287
      %v1320 = vadd.f32 %v1176, %v1288
      %v1321 = vadd.f32 %v1177, %v1289
      %v1322 = vadd.f32 %v1178, %v1290
      %v1323 = vadd.f32 %v1179, %v1291
      %v1324 = vadd.f32 %v1180, %v1292
      %v1325 = vadd.f32 %v1181, %v1293
      %v1326 = vadd.f32 %v1182, %v1294
      %v1327 = vadd.f32 %v1183, %v1295
      %v1328 = vadd.f32 %v1184, %v1296
      %v1329 = vadd.f32 %v1185, %v1297
      %v1330 = vadd.f32 %v1186, %v1298
      %v1331 = vadd.f32 %v1187, %v1299
      %v1332 = vadd.f32 %v1188, %v1300
      %v1333 = vadd.f32 %v1189, %v1301
      %v1334 = vadd.f32 %v1190, %v1302
      %v1335 = vadd.f32 %v1191, %v1303
      %v1336 = vadd.f32 %v1192, %v1304
      %v1337 = vadd.f32 %v1193, %v1305
      %v1338 = vadd.f32 %v1194, %v1306
      %v1339 = vadd.f32 %v1195, %v1307
      %v1340 = vadd.f32 %v1196, %v1308
      %1341 = vset.pattern.permute.xlu0 7
      %1342 = vperm.xlu0 %1341, %v346
      %v1343 = vpop.permute.xlu0 %1342
      %1344 = vset.pattern.permute.xlu0 7
      %1345 = vperm.xlu0 %1344, %v347
      %v1346 = vpop.permute.xlu0 %1345
      %1347 = vset.pattern.permute.xlu0 7
      %1348 = vperm.xlu0 %1347, %v348
      %v1349 = vpop.permute.xlu0 %1348
      %1350 = vset.pattern.permute.xlu0 7
      %1351 = vperm.xlu0 %1350, %v349
      %v1352 = vpop.permute.xlu0 %1351
      %1353 = vset.pattern.permute.xlu0 7
      %1354 = vperm.xlu0 %1353, %v350
      %v1355 = vpop.permute.xlu0 %1354
      %1356 = vset.pattern.permute.xlu0 7
      %1357 = vperm.xlu0 %1356, %v351
      %v1358 = vpop.permute.xlu0 %1357
      %1359 = vset.pattern.permute.xlu0 7
      %1360 = vperm.xlu0 %1359, %v352
      %v1361 = vpop.permute.xlu0 %1360
      %1362 = vset.pattern.permute.xlu0 7
      %1363 = vperm.xlu0 %1362, %v353
      %v1364 = vpop.permute.xlu0 %1363
      %1365 = vset.pattern.permute.xlu0 7
      %1366 = vperm.xlu0 %1365, %v354
      %v1367 = vpop.permute.xlu0 %1366
      %1368 = vset.pattern.permute.xlu0 7
      %1369 = vperm.xlu0 %1368, %v355
      %v1370 = vpop.permute.xlu0 %1369
      %1371 = vset.pattern.permute.xlu0 7
      %1372 = vperm.xlu0 %1371, %v356
      %v1373 = vpop.permute.xlu0 %1372
      %1374 = vset.pattern.permute.xlu0 7
      %1375 = vperm.xlu0 %1374, %v357
      %v1376 = vpop.permute.xlu0 %1375
      %1377 = vset.pattern.permute.xlu0 7
      %1378 = vperm.xlu0 %1377, %v358
      %v1379 = vpop.permute.xlu0 %1378
      %1380 = vset.pattern.permute.xlu0 7
      %1381 = vperm.xlu0 %1380, %v359
      %v1382 = vpop.permute.xlu0 %1381
      %1383 = vset.pattern.permute.xlu0 7
      %1384 = vperm.xlu0 %1383, %v360
      %v1385 = vpop.permute.xlu0 %1384
      %1386 = vset.pattern.permute.xlu0 7
      %1387 = vperm.xlu0 %1386, %v361
      %v1388 = vpop.permute.xlu0 %1387
      %vm1389 = vcmp.eq.s32.totalorder %v1343, %v363
      %vm1390 = vcmp.eq.s32.totalorder %v1343, %v364
      %vm1391 = vcmp.eq.s32.totalorder %v1346, %v363
      %vm1392 = vcmp.eq.s32.totalorder %v1346, %v364
      %vm1393 = vcmp.eq.s32.totalorder %v1349, %v363
      %vm1394 = vcmp.eq.s32.totalorder %v1349, %v364
      %vm1395 = vcmp.eq.s32.totalorder %v1352, %v363
      %vm1396 = vcmp.eq.s32.totalorder %v1352, %v364
      %vm1397 = vcmp.eq.s32.totalorder %v1355, %v363
      %vm1398 = vcmp.eq.s32.totalorder %v1355, %v364
      %vm1399 = vcmp.eq.s32.totalorder %v1358, %v363
      %vm1400 = vcmp.eq.s32.totalorder %v1358, %v364
      %vm1401 = vcmp.eq.s32.totalorder %v1361, %v363
      %vm1402 = vcmp.eq.s32.totalorder %v1361, %v364
      %vm1403 = vcmp.eq.s32.totalorder %v1364, %v363
      %vm1404 = vcmp.eq.s32.totalorder %v1364, %v364
      %vm1405 = vcmp.eq.s32.totalorder %v1367, %v363
      %vm1406 = vcmp.eq.s32.totalorder %v1367, %v364
      %vm1407 = vcmp.eq.s32.totalorder %v1370, %v363
      %vm1408 = vcmp.eq.s32.totalorder %v1370, %v364
      %vm1409 = vcmp.eq.s32.totalorder %v1373, %v363
      %vm1410 = vcmp.eq.s32.totalorder %v1373, %v364
      %vm1411 = vcmp.eq.s32.totalorder %v1376, %v363
      %vm1412 = vcmp.eq.s32.totalorder %v1376, %v364
      %vm1413 = vcmp.eq.s32.totalorder %v1379, %v363
      %vm1414 = vcmp.eq.s32.totalorder %v1379, %v364
      %vm1415 = vcmp.eq.s32.totalorder %v1382, %v363
      %vm1416 = vcmp.eq.s32.totalorder %v1382, %v364
      %vm1417 = vcmp.eq.s32.totalorder %v1385, %v363
      %vm1418 = vcmp.eq.s32.totalorder %v1385, %v364
      %vm1419 = vcmp.eq.s32.totalorder %v1388, %v363
      %vm1420 = vcmp.eq.s32.totalorder %v1388, %v364
      %v1421 = vsel %vm1389, 1.0, 0.0
      %v1422 = vsel %vm1390, 1.0, 0.0
      %v1423 = vsel %vm1391, 1.0, 0.0
      %v1424 = vsel %vm1392, 1.0, 0.0
      %v1425 = vsel %vm1393, 1.0, 0.0
      %v1426 = vsel %vm1394, 1.0, 0.0
      %v1427 = vsel %vm1395, 1.0, 0.0
      %v1428 = vsel %vm1396, 1.0, 0.0
      %v1429 = vsel %vm1397, 1.0, 0.0
      %v1430 = vsel %vm1398, 1.0, 0.0
      %v1431 = vsel %vm1399, 1.0, 0.0
      %v1432 = vsel %vm1400, 1.0, 0.0
      %v1433 = vsel %vm1401, 1.0, 0.0
      %v1434 = vsel %vm1402, 1.0, 0.0
      %v1435 = vsel %vm1403, 1.0, 0.0
      %v1436 = vsel %vm1404, 1.0, 0.0
      %v1437 = vsel %vm1405, 1.0, 0.0
      %v1438 = vsel %vm1406, 1.0, 0.0
      %v1439 = vsel %vm1407, 1.0, 0.0
      %v1440 = vsel %vm1408, 1.0, 0.0
      %v1441 = vsel %vm1409, 1.0, 0.0
      %v1442 = vsel %vm1410, 1.0, 0.0
      %v1443 = vsel %vm1411, 1.0, 0.0
      %v1444 = vsel %vm1412, 1.0, 0.0
      %v1445 = vsel %vm1413, 1.0, 0.0
      %v1446 = vsel %vm1414, 1.0, 0.0
      %v1447 = vsel %vm1415, 1.0, 0.0
      %v1448 = vsel %vm1416, 1.0, 0.0
      %v1449 = vsel %vm1417, 1.0, 0.0
      %v1450 = vsel %vm1418, 1.0, 0.0
      %v1451 = vsel %vm1419, 1.0, 0.0
      %v1452 = vsel %vm1420, 1.0, 0.0
      %v1453 = vadd.f32 %v1309, %v1421
      %v1454 = vadd.f32 %v1310, %v1422
      %v1455 = vadd.f32 %v1311, %v1423
      %v1456 = vadd.f32 %v1312, %v1424
      %v1457 = vadd.f32 %v1313, %v1425
      %v1458 = vadd.f32 %v1314, %v1426
      %v1459 = vadd.f32 %v1315, %v1427
      %v1460 = vadd.f32 %v1316, %v1428
      %v1461 = vadd.f32 %v1317, %v1429
      %v1462 = vadd.f32 %v1318, %v1430
      %v1463 = vadd.f32 %v1319, %v1431
      %v1464 = vadd.f32 %v1320, %v1432
      %v1465 = vadd.f32 %v1321, %v1433
      %v1466 = vadd.f32 %v1322, %v1434
      %v1467 = vadd.f32 %v1323, %v1435
      %v1468 = vadd.f32 %v1324, %v1436
      %v1469 = vadd.f32 %v1325, %v1437
      %v1470 = vadd.f32 %v1326, %v1438
      %v1471 = vadd.f32 %v1327, %v1439
      %v1472 = vadd.f32 %v1328, %v1440
      %v1473 = vadd.f32 %v1329, %v1441
      %v1474 = vadd.f32 %v1330, %v1442
      %v1475 = vadd.f32 %v1331, %v1443
      %v1476 = vadd.f32 %v1332, %v1444
      %v1477 = vadd.f32 %v1333, %v1445
      %v1478 = vadd.f32 %v1334, %v1446
      %v1479 = vadd.f32 %v1335, %v1447
      %v1480 = vadd.f32 %v1336, %v1448
      %v1481 = vadd.f32 %v1337, %v1449
      %v1482 = vadd.f32 %v1338, %v1450
      %v1483 = vadd.f32 %v1339, %v1451
      %v1484 = vadd.f32 %v1340, %v1452
      %v1485 = vpack.c.bf16 %v1455, %v1453
      %v1486 = vpack.c.bf16 %v1456, %v1454
      %v1487 = vpack.c.bf16 %v1459, %v1457
      %v1488 = vpack.c.bf16 %v1460, %v1458
      %v1489 = vpack.c.bf16 %v1463, %v1461
      %v1490 = vpack.c.bf16 %v1464, %v1462
      %v1491 = vpack.c.bf16 %v1467, %v1465
      %v1492 = vpack.c.bf16 %v1468, %v1466
      %v1493 = vpack.c.bf16 %v1471, %v1469
      %v1494 = vpack.c.bf16 %v1472, %v1470
      %v1495 = vpack.c.bf16 %v1475, %v1473
      %v1496 = vpack.c.bf16 %v1476, %v1474
      %v1497 = vpack.c.bf16 %v1479, %v1477
      %v1498 = vpack.c.bf16 %v1480, %v1478
      %v1499 = vpack.c.bf16 %v1483, %v1481
      %v1500 = vpack.c.bf16 %v1484, %v1482
      %v1501 = vld [vmem:[%s1] sm:$0xff]
      %v1502 = vld [vmem:[%s1 + $0x8] sm:$0xff]
      %v1503 = vld [vmem:[%s1 + $0x10] sm:$0xff]
      %v1504 = vld [vmem:[%s1 + $0x18] sm:$0xff]
      %v1505 = vld [vmem:[%s1 + $0x20] sm:$0xff]
      %v1506 = vld [vmem:[%s1 + $0x28] sm:$0xff]
      %v1507 = vld [vmem:[%s1 + $0x30] sm:$0xff]
      %v1508 = vld [vmem:[%s1 + $0x38] sm:$0xff]
      %v1509 = vld [vmem:[%s1 + $0x40] sm:$0xff]
      %v1510 = vld [vmem:[%s1 + $0x48] sm:$0xff]
      %v1511 = vld [vmem:[%s1 + $0x50] sm:$0xff]
      %v1512 = vld [vmem:[%s1 + $0x58] sm:$0xff]
      %v1513 = vld [vmem:[%s1 + $0x60] sm:$0xff]
      %v1514 = vld [vmem:[%s1 + $0x68] sm:$0xff]
      %v1515 = vld [vmem:[%s1 + $0x70] sm:$0xff]
      %v1516 = vld [vmem:[%s1 + $0x78] sm:$0xff]
      %v1517 = vld [vmem:[%s1 + $0x80] sm:$0xff]
      %v1518 = vld [vmem:[%s1 + $0x88] sm:$0xff]
      %v1519 = vld [vmem:[%s1 + $0x90] sm:$0xff]
      %v1520 = vld [vmem:[%s1 + $0x98] sm:$0xff]
      %v1521 = vld [vmem:[%s1 + $0xa0] sm:$0xff]
      %v1522 = vld [vmem:[%s1 + $0xa8] sm:$0xff]
      %v1523 = vld [vmem:[%s1 + $0xb0] sm:$0xff]
      %v1524 = vld [vmem:[%s1 + $0xb8] sm:$0xff]
      %v1525 = vld [vmem:[%s1 + $0xc0] sm:$0xff]
      %v1526 = vld [vmem:[%s1 + $0xc8] sm:$0xff]
      %v1527 = vld [vmem:[%s1 + $0xd0] sm:$0xff]
      %v1528 = vld [vmem:[%s1 + $0xd8] sm:$0xff]
      %v1529 = vld [vmem:[%s1 + $0xe0] sm:$0xff]
      %v1530 = vld [vmem:[%s1 + $0xe8] sm:$0xff]
      %v1531 = vld [vmem:[%s1 + $0xf0] sm:$0xff]
      %v1532 = vld [vmem:[%s1 + $0xf8] sm:$0xff]
      %v1533 = vpack.c.bf16 %v1502, %v1501
      %v1534 = vpack.c.bf16 %v1504, %v1503
      %v1535 = vpack.c.bf16 %v1506, %v1505
      %v1536 = vpack.c.bf16 %v1508, %v1507
      %v1537 = vpack.c.bf16 %v1510, %v1509
      %v1538 = vpack.c.bf16 %v1512, %v1511
      %v1539 = vpack.c.bf16 %v1514, %v1513
      %v1540 = vpack.c.bf16 %v1516, %v1515
      %v1541 = vpack.c.bf16 %v1518, %v1517
      %v1542 = vpack.c.bf16 %v1520, %v1519
      %v1543 = vpack.c.bf16 %v1522, %v1521
      %v1544 = vpack.c.bf16 %v1524, %v1523
      %v1545 = vpack.c.bf16 %v1526, %v1525
      %v1546 = vpack.c.bf16 %v1528, %v1527
      %v1547 = vpack.c.bf16 %v1530, %v1529
      %v1548 = vpack.c.bf16 %v1532, %v1531
      %1549 = vmatprep.subr.bf16.mxu0 0
      %1550 = vmatpush1.bf16.msra.mxu0 %v1533
      %1551 = vmatprep.subr.bf16.mxu0 0
      %1552 = vmatpush1.bf16.msra.mxu0 %v1534
      %1553 = vmatprep.subr.bf16.mxu0 0
      %1554 = vmatpush1.bf16.msra.mxu0 %v1535
      %1555 = vmatprep.subr.bf16.mxu0 0
      %1556 = vmatpush1.bf16.msra.mxu0 %v1536
      %1557 = vmatprep.subr.bf16.mxu0 0
      %1558 = vmatpush1.bf16.msra.mxu0 %v1537
      %1559 = vmatprep.subr.bf16.mxu0 0
      %1560 = vmatpush1.bf16.msra.mxu0 %v1538
      %1561 = vmatprep.subr.bf16.mxu0 0
      %1562 = vmatpush1.bf16.msra.mxu0 %v1539
      %1563 = vmatprep.subr.bf16.mxu0 0
      %1564 = vmatpush1.bf16.msra.mxu0 %v1540
      %1565 = vmatprep.subr.bf16.mxu0 0
      %1566 = vmatpush1.bf16.msra.mxu0 %v1541
      %1567 = vmatprep.subr.bf16.mxu0 0
      %1568 = vmatpush1.bf16.msra.mxu0 %v1542
      %1569 = vmatprep.subr.bf16.mxu0 0
      %1570 = vmatpush1.bf16.msra.mxu0 %v1543
      %1571 = vmatprep.subr.bf16.mxu0 0
      %1572 = vmatpush1.bf16.msra.mxu0 %v1544
      %1573 = vmatprep.subr.bf16.mxu0 0
      %1574 = vmatpush1.bf16.msra.mxu0 %v1545
      %1575 = vmatprep.subr.bf16.mxu0 0
      %1576 = vmatpush1.bf16.msra.mxu0 %v1546
      %1577 = vmatprep.subr.bf16.mxu0 0
      %1578 = vmatpush1.bf16.msra.mxu0 %v1547
      %1579 = vmatprep.subr.bf16.mxu0 0
      %1580 = vmatpush1.bf16.msra.mxu0 %v1548
      %1581 = vmatprep.mubr.bf16.mxu0 %v1486
      %1582 = vmatmul.mubr.bf16.gmra.mrb[0].mxu0 %v1485
      %v1583 = vpop.f32.mrb[0].mxu0
      %v1584 = vadd.f32 0.0, %v1583
      %v1585 = vpop.f32.mrb[0].mxu0
      %v1586 = vpop.f32.mrb[0].mxu0
      %v1587 = vadd.f32 0.0, %v1586
      %v1588 = vpop.f32.mrb[0].mxu0
      %1589 = vmatprep.mubr.bf16.mxu0 %v1488
      %1590 = vmatmul.mubr.bf16.gmra.mrb[0].mxu0 %v1487
      %v1591 = vpop.f32.mrb[0].mxu0
      %v1592 = vadd.f32 0.0, %v1591
      %v1593 = vpop.f32.mrb[0].mxu0
      %v1594 = vpop.f32.mrb[0].mxu0
      %v1595 = vadd.f32 0.0, %v1594
      %v1596 = vpop.f32.mrb[0].mxu0
      %1597 = vmatprep.mubr.bf16.mxu0 %v1490
      %1598 = vmatmul.mubr.bf16.gmra.mrb[0].mxu0 %v1489
      %v1599 = vpop.f32.mrb[0].mxu0
      %v1600 = vadd.f32 0.0, %v1599
      %v1601 = vpop.f32.mrb[0].mxu0
      %v1602 = vpop.f32.mrb[0].mxu0
      %v1603 = vadd.f32 0.0, %v1602
      %v1604 = vpop.f32.mrb[0].mxu0
      %1605 = vmatprep.mubr.bf16.mxu0 %v1492
      %1606 = vmatmul.mubr.bf16.gmra.mrb[0].mxu0 %v1491
      %v1607 = vpop.f32.mrb[0].mxu0
      %v1608 = vadd.f32 0.0, %v1607
      %v1609 = vpop.f32.mrb[0].mxu0
      %v1610 = vpop.f32.mrb[0].mxu0
      %v1611 = vadd.f32 0.0, %v1610
      %v1612 = vpop.f32.mrb[0].mxu0
      %1613 = vmatprep.mubr.bf16.mxu0 %v1494
      %1614 = vmatmul.mubr.bf16.gmra.mrb[0].mxu0 %v1493
      %v1615 = vpop.f32.mrb[0].mxu0
      %v1616 = vadd.f32 0.0, %v1615
      %v1617 = vpop.f32.mrb[0].mxu0
      %v1618 = vpop.f32.mrb[0].mxu0
      %v1619 = vadd.f32 0.0, %v1618
      %v1620 = vpop.f32.mrb[0].mxu0
      %1621 = vmatprep.mubr.bf16.mxu0 %v1496
      %1622 = vmatmul.mubr.bf16.gmra.mrb[0].mxu0 %v1495
      %v1623 = vpop.f32.mrb[0].mxu0
      %v1624 = vadd.f32 0.0, %v1623
      %v1625 = vpop.f32.mrb[0].mxu0
      %v1626 = vpop.f32.mrb[0].mxu0
      %v1627 = vadd.f32 0.0, %v1626
      %v1628 = vpop.f32.mrb[0].mxu0
      %1629 = vmatprep.mubr.bf16.mxu0 %v1498
      %1630 = vmatmul.mubr.bf16.gmra.mrb[0].mxu0 %v1497
      %v1631 = vpop.f32.mrb[0].mxu0
      %v1632 = vadd.f32 0.0, %v1631
      %v1633 = vpop.f32.mrb[0].mxu0
      %v1634 = vpop.f32.mrb[0].mxu0
      %v1635 = vadd.f32 0.0, %v1634
      %v1636 = vpop.f32.mrb[0].mxu0
      %1637 = vmatprep.mubr.bf16.mxu0 %v1500
      %1638 = vmatmul.mubr.bf16.gmra.mrb[0].mxu0 %v1499
      %v1639 = vpop.f32.mrb[0].mxu0
      %v1640 = vadd.f32 0.0, %v1639
      %v1641 = vpop.f32.mrb[0].mxu0
      %v1642 = vpop.f32.mrb[0].mxu0
      %v1643 = vadd.f32 0.0, %v1642
      %v1644 = vpop.f32.mrb[0].mxu0
      %1645 = vdwg.mxu0
      %v1646 = vmul.f32 %v1584, 0.125
      %v1647 = vmul.f32 %v1587, 0.125
      %v1648 = vmul.f32 %v1592, 0.125
      %v1649 = vmul.f32 %v1595, 0.125
      %v1650 = vmul.f32 %v1600, 0.125
      %v1651 = vmul.f32 %v1603, 0.125
      %v1652 = vmul.f32 %v1608, 0.125
      %v1653 = vmul.f32 %v1611, 0.125
      %v1654 = vmul.f32 %v1616, 0.125
      %v1655 = vmul.f32 %v1619, 0.125
      %v1656 = vmul.f32 %v1624, 0.125
      %v1657 = vmul.f32 %v1627, 0.125
      %v1658 = vmul.f32 %v1632, 0.125
      %v1659 = vmul.f32 %v1635, 0.125
      %v1660 = vmul.f32 %v1640, 0.125
      %v1661 = vmul.f32 %v1643, 0.125
      %v1662 = vld [vmem:[%s323] sm:$0xff]
      %v1663 = vld [vmem:[%s323 + $0x8] sm:$0xff]
      %v1664 = vld [vmem:[%s323 + $0x10] sm:$0xff]
      %v1665 = vld [vmem:[%s323 + $0x18] sm:$0xff]
      %v1666 = vld [vmem:[%s323 + $0x20] sm:$0xff]
      %v1667 = vld [vmem:[%s323 + $0x28] sm:$0xff]
      %v1668 = vld [vmem:[%s323 + $0x30] sm:$0xff]
      %v1669 = vld [vmem:[%s323 + $0x38] sm:$0xff]
      %v1670 = vld [vmem:[%s323 + $0x40] sm:$0xff]
      %v1671 = vld [vmem:[%s323 + $0x48] sm:$0xff]
      %v1672 = vld [vmem:[%s323 + $0x50] sm:$0xff]
      %v1673 = vld [vmem:[%s323 + $0x58] sm:$0xff]
      %v1674 = vld [vmem:[%s323 + $0x60] sm:$0xff]
      %v1675 = vld [vmem:[%s323 + $0x68] sm:$0xff]
      %v1676 = vld [vmem:[%s323 + $0x70] sm:$0xff]
      %v1677 = vld [vmem:[%s323 + $0x78] sm:$0xff]
      %v1678 = vpack.c.bf16 %v1663, %v1662
      %v1679 = vpack.c.bf16 %v1665, %v1664
      %v1680 = vpack.c.bf16 %v1667, %v1666
      %v1681 = vpack.c.bf16 %v1669, %v1668
      %v1682 = vpack.c.bf16 %v1671, %v1670
      %v1683 = vpack.c.bf16 %v1673, %v1672
      %v1684 = vpack.c.bf16 %v1675, %v1674
      %v1685 = vpack.c.bf16 %v1677, %v1676
      %v1686 = vld [vmem:[%s328] sm:$0xff]
      %v1687 = vld [vmem:[%s328 + $0x8] sm:$0xff]
      %v1688 = vld [vmem:[%s328 + $0x10] sm:$0xff]
      %v1689 = vld [vmem:[%s328 + $0x18] sm:$0xff]
      %v1690 = vld [vmem:[%s328 + $0x20] sm:$0xff]
      %v1691 = vld [vmem:[%s328 + $0x28] sm:$0xff]
      %v1692 = vld [vmem:[%s328 + $0x30] sm:$0xff]
      %v1693 = vld [vmem:[%s328 + $0x38] sm:$0xff]
      %v1694 = vld [vmem:[%s328 + $0x40] sm:$0xff]
      %v1695 = vld [vmem:[%s328 + $0x48] sm:$0xff]
      %v1696 = vld [vmem:[%s328 + $0x50] sm:$0xff]
      %v1697 = vld [vmem:[%s328 + $0x58] sm:$0xff]
      %v1698 = vld [vmem:[%s328 + $0x60] sm:$0xff]
      %v1699 = vld [vmem:[%s328 + $0x68] sm:$0xff]
      %v1700 = vld [vmem:[%s328 + $0x70] sm:$0xff]
      %v1701 = vld [vmem:[%s328 + $0x78] sm:$0xff]
      %v1702 = vpack.c.bf16 %v1687, %v1686
      %v1703 = vpack.c.bf16 %v1689, %v1688
      %v1704 = vpack.c.bf16 %v1691, %v1690
      %v1705 = vpack.c.bf16 %v1693, %v1692
      %v1706 = vpack.c.bf16 %v1695, %v1694
      %v1707 = vpack.c.bf16 %v1697, %v1696
      %v1708 = vpack.c.bf16 %v1699, %v1698
      %v1709 = vpack.c.bf16 %v1701, %v1700
      %v1710 = vpack.c.bf16 %v1647, %v1646
      %v1711 = vpack.c.bf16 %v1649, %v1648
      %v1712 = vpack.c.bf16 %v1651, %v1650
      %v1713 = vpack.c.bf16 %v1653, %v1652
      %v1714 = vpack.c.bf16 %v1655, %v1654
      %v1715 = vpack.c.bf16 %v1657, %v1656
      %v1716 = vpack.c.bf16 %v1659, %v1658
      %v1717 = vpack.c.bf16 %v1661, %v1660
      %v1718 = vld [vmem:[%s332] sm:$0xff]
      %v1719 = vld [vmem:[%s332 + $0x8] sm:$0xff]
      %v1720 = vld [vmem:[%s332 + $0x10] sm:$0xff]
      %v1721 = vld [vmem:[%s332 + $0x18] sm:$0xff]
      %v1722 = vld [vmem:[%s332 + $0x20] sm:$0xff]
      %v1723 = vld [vmem:[%s332 + $0x28] sm:$0xff]
      %v1724 = vld [vmem:[%s332 + $0x30] sm:$0xff]
      %v1725 = vld [vmem:[%s332 + $0x38] sm:$0xff]
      %v1726 = vld [vmem:[%s332 + $0x40] sm:$0xff]
      %v1727 = vld [vmem:[%s332 + $0x48] sm:$0xff]
      %v1728 = vld [vmem:[%s332 + $0x50] sm:$0xff]
      %v1729 = vld [vmem:[%s332 + $0x58] sm:$0xff]
      %v1730 = vld [vmem:[%s332 + $0x60] sm:$0xff]
      %v1731 = vld [vmem:[%s332 + $0x68] sm:$0xff]
      %v1732 = vld [vmem:[%s332 + $0x70] sm:$0xff]
      %v1733 = vld [vmem:[%s332 + $0x78] sm:$0xff]
      %v1734 = vpack.c.bf16 %v1719, %v1718
      %v1735 = vpack.c.bf16 %v1721, %v1720
      %v1736 = vpack.c.bf16 %v1723, %v1722
      %v1737 = vpack.c.bf16 %v1725, %v1724
      %v1738 = vpack.c.bf16 %v1727, %v1726
      %v1739 = vpack.c.bf16 %v1729, %v1728
      %v1740 = vpack.c.bf16 %v1731, %v1730
      %v1741 = vpack.c.bf16 %v1733, %v1732
      %1742 = vmatprep.subr.bf16.mxu0 0
      %1743 = vmatpush1.bf16.msra.mxu0 %v1734
      %1744 = vmatprep.subr.bf16.mxu0 0
      %1745 = vmatpush1.bf16.msra.mxu0 %v1735
      %1746 = vmatprep.subr.bf16.mxu0 0
      %1747 = vmatpush1.bf16.msra.mxu0 %v1736
      %1748 = vmatprep.subr.bf16.mxu0 0
      %1749 = vmatpush1.bf16.msra.mxu0 %v1737
      %1750 = vmatprep.subr.bf16.mxu0 0
      %1751 = vmatpush1.bf16.msra.mxu0 %v1738
      %1752 = vmatprep.subr.bf16.mxu0 0
      %1753 = vmatpush1.bf16.msra.mxu0 %v1739
      %1754 = vmatprep.subr.bf16.mxu0 0
      %1755 = vmatpush1.bf16.msra.mxu0 %v1740
      %1756 = vmatprep.subr.bf16.mxu0 0
      %1757 = vmatpush1.bf16.msra.mxu0 %v1741
      %1758 = vmatprep.subr.bf16.mxu0 0
      %1759 = vmatpush1.bf16.msra.mxu0 0
      %1760 = vmatprep.subr.bf16.mxu0 0
      %1761 = vmatpush1.bf16.msra.mxu0 0
      %1762 = vmatprep.subr.bf16.mxu0 0
      %1763 = vmatpush1.bf16.msra.mxu0 0
      %1764 = vmatprep.subr.bf16.mxu0 0
      %1765 = vmatpush1.bf16.msra.mxu0 0
      %1766 = vmatprep.subr.bf16.mxu0 0
      %1767 = vmatpush1.bf16.msra.mxu0 0
      %1768 = vmatprep.subr.bf16.mxu0 0
      %1769 = vmatpush1.bf16.msra.mxu0 0
      %1770 = vmatprep.subr.bf16.mxu0 0
      %1771 = vmatpush1.bf16.msra.mxu0 0
      %1772 = vmatprep.subr.bf16.mxu0 0
      %1773 = vmatpush1.bf16.msra.mxu0 0
      %1774 = vmatprep.mubr.bf16.mxu0 0
      %1775 = vmatmul.mubr.bf16.gmra.mrb[0].mxu0 %v1710
      %v1776 = vpop.f32.mrb[0].mxu0
      %v1777 = vadd.f32 0.0, %v1776
      %v1778 = vpop.f32.mrb[0].mxu0
      %v1779 = vpop.f32.mrb[0].mxu0
      %v1780 = vadd.f32 0.0, %v1779
      %v1781 = vpop.f32.mrb[0].mxu0
      %1782 = vmatprep.mubr.bf16.mxu0 0
      %1783 = vmatmul.mubr.bf16.gmra.mrb[0].mxu0 %v1711
      %v1784 = vpop.f32.mrb[0].mxu0
      %v1785 = vadd.f32 0.0, %v1784
      %v1786 = vpop.f32.mrb[0].mxu0
      %v1787 = vpop.f32.mrb[0].mxu0
      %v1788 = vadd.f32 0.0, %v1787
      %v1789 = vpop.f32.mrb[0].mxu0
      %1790 = vmatprep.mubr.bf16.mxu0 0
      %1791 = vmatmul.mubr.bf16.gmra.mrb[0].mxu0 %v1712
      %v1792 = vpop.f32.mrb[0].mxu0
      %v1793 = vadd.f32 0.0, %v1792
      %v1794 = vpop.f32.mrb[0].mxu0
      %v1795 = vpop.f32.mrb[0].mxu0
      %v1796 = vadd.f32 0.0, %v1795
      %v1797 = vpop.f32.mrb[0].mxu0
      %1798 = vmatprep.mubr.bf16.mxu0 0
      %1799 = vmatmul.mubr.bf16.gmra.mrb[0].mxu0 %v1713
      %v1800 = vpop.f32.mrb[0].mxu0
      %v1801 = vadd.f32 0.0, %v1800
      %v1802 = vpop.f32.mrb[0].mxu0
      %v1803 = vpop.f32.mrb[0].mxu0
      %v1804 = vadd.f32 0.0, %v1803
      %v1805 = vpop.f32.mrb[0].mxu0
      %1806 = vmatprep.mubr.bf16.mxu0 0
      %1807 = vmatmul.mubr.bf16.gmra.mrb[0].mxu0 %v1714
      %v1808 = vpop.f32.mrb[0].mxu0
      %v1809 = vadd.f32 0.0, %v1808
      %v1810 = vpop.f32.mrb[0].mxu0
      %v1811 = vpop.f32.mrb[0].mxu0
      %v1812 = vadd.f32 0.0, %v1811
      %v1813 = vpop.f32.mrb[0].mxu0
      %1814 = vmatprep.mubr.bf16.mxu0 0
      %1815 = vmatmul.mubr.bf16.gmra.mrb[0].mxu0 %v1715
      %v1816 = vpop.f32.mrb[0].mxu0
      %v1817 = vadd.f32 0.0, %v1816
      %v1818 = vpop.f32.mrb[0].mxu0
      %v1819 = vpop.f32.mrb[0].mxu0
      %v1820 = vadd.f32 0.0, %v1819
      %v1821 = vpop.f32.mrb[0].mxu0
      %1822 = vmatprep.mubr.bf16.mxu0 0
      %1823 = vmatmul.mubr.bf16.gmra.mrb[0].mxu0 %v1716
      %v1824 = vpop.f32.mrb[0].mxu0
      %v1825 = vadd.f32 0.0, %v1824
      %v1826 = vpop.f32.mrb[0].mxu0
      %v1827 = vpop.f32.mrb[0].mxu0
      %v1828 = vadd.f32 0.0, %v1827
      %v1829 = vpop.f32.mrb[0].mxu0
      %1830 = vmatprep.mubr.bf16.mxu0 0
      %1831 = vmatmul.mubr.bf16.gmra.mrb[0].mxu0 %v1717
      %v1832 = vpop.f32.mrb[0].mxu0
      %v1833 = vadd.f32 0.0, %v1832
      %v1834 = vpop.f32.mrb[0].mxu0
      %v1835 = vpop.f32.mrb[0].mxu0
      %v1836 = vadd.f32 0.0, %v1835
      %v1837 = vpop.f32.mrb[0].mxu0
      %1838 = vdwg.mxu0
      %1839 = vmatprep.subr.bf16.mxu0 0
      %1840 = vmatpush1.bf16.msra.mxu0 %v1702
      %1841 = vmatprep.subr.bf16.mxu0 0
      %1842 = vmatpush1.bf16.msra.mxu0 %v1703
      %1843 = vmatprep.subr.bf16.mxu0 0
      %1844 = vmatpush1.bf16.msra.mxu0 %v1704
      %1845 = vmatprep.subr.bf16.mxu0 0
      %1846 = vmatpush1.bf16.msra.mxu0 %v1705
      %1847 = vmatprep.subr.bf16.mxu0 0
      %1848 = vmatpush1.bf16.msra.mxu0 %v1706
      %1849 = vmatprep.subr.bf16.mxu0 0
      %1850 = vmatpush1.bf16.msra.mxu0 %v1707
      %1851 = vmatprep.subr.bf16.mxu0 0
      %1852 = vmatpush1.bf16.msra.mxu0 %v1708
      %1853 = vmatprep.subr.bf16.mxu0 0
      %1854 = vmatpush1.bf16.msra.mxu0 %v1709
      %1855 = vmatprep.subr.bf16.mxu0 0
      %1856 = vmatpush1.bf16.msra.mxu0 0
      %1857 = vmatprep.subr.bf16.mxu0 0
      %1858 = vmatpush1.bf16.msra.mxu0 0
      %1859 = vmatprep.subr.bf16.mxu0 0
      %1860 = vmatpush1.bf16.msra.mxu0 0
      %1861 = vmatprep.subr.bf16.mxu0 0
      %1862 = vmatpush1.bf16.msra.mxu0 0
      %1863 = vmatprep.subr.bf16.mxu0 0
      %1864 = vmatpush1.bf16.msra.mxu0 0
      %1865 = vmatprep.subr.bf16.mxu0 0
      %1866 = vmatpush1.bf16.msra.mxu0 0
      %1867 = vmatprep.subr.bf16.mxu0 0
      %1868 = vmatpush1.bf16.msra.mxu0 0
      %1869 = vmatprep.subr.bf16.mxu0 0
      %1870 = vmatpush1.bf16.msra.mxu0 0
      %1871 = vmatprep.mubr.bf16.mxu0 0
      %1872 = vmatmul.mubr.bf16.gmra.mrb[0].mxu0 %v1678
      %v1873 = vpop.f32.mrb[0].mxu0
      %v1874 = vadd.f32 %v1777, %v1873
      %v1875 = vpop.f32.mrb[0].mxu0
      %v1876 = vpop.f32.mrb[0].mxu0
      %v1877 = vadd.f32 %v1780, %v1876
      %v1878 = vpop.f32.mrb[0].mxu0
      %1879 = vmatprep.mubr.bf16.mxu0 0
      %1880 = vmatmul.mubr.bf16.gmra.mrb[0].mxu0 %v1679
      %v1881 = vpop.f32.mrb[0].mxu0
      %v1882 = vadd.f32 %v1785, %v1881
      %v1883 = vpop.f32.mrb[0].mxu0
      %v1884 = vpop.f32.mrb[0].mxu0
      %v1885 = vadd.f32 %v1788, %v1884
      %v1886 = vpop.f32.mrb[0].mxu0
      %1887 = vmatprep.mubr.bf16.mxu0 0
      %1888 = vmatmul.mubr.bf16.gmra.mrb[0].mxu0 %v1680
      %v1889 = vpop.f32.mrb[0].mxu0
      %v1890 = vadd.f32 %v1793, %v1889
      %v1891 = vpop.f32.mrb[0].mxu0
      %v1892 = vpop.f32.mrb[0].mxu0
      %v1893 = vadd.f32 %v1796, %v1892
      %v1894 = vpop.f32.mrb[0].mxu0
      %1895 = vmatprep.mubr.bf16.mxu0 0
      %1896 = vmatmul.mubr.bf16.gmra.mrb[0].mxu0 %v1681
      %v1897 = vpop.f32.mrb[0].mxu0
      %v1898 = vadd.f32 %v1801, %v1897
      %v1899 = vpop.f32.mrb[0].mxu0
      %v1900 = vpop.f32.mrb[0].mxu0
      %v1901 = vadd.f32 %v1804, %v1900
      %v1902 = vpop.f32.mrb[0].mxu0
      %1903 = vmatprep.mubr.bf16.mxu0 0
      %1904 = vmatmul.mubr.bf16.gmra.mrb[0].mxu0 %v1682
      %v1905 = vpop.f32.mrb[0].mxu0
      %v1906 = vadd.f32 %v1809, %v1905
      %v1907 = vpop.f32.mrb[0].mxu0
      %v1908 = vpop.f32.mrb[0].mxu0
      %v1909 = vadd.f32 %v1812, %v1908
      %v1910 = vpop.f32.mrb[0].mxu0
      %1911 = vmatprep.mubr.bf16.mxu0 0
      %1912 = vmatmul.mubr.bf16.gmra.mrb[0].mxu0 %v1683
      %v1913 = vpop.f32.mrb[0].mxu0
      %v1914 = vadd.f32 %v1817, %v1913
      %v1915 = vpop.f32.mrb[0].mxu0
      %v1916 = vpop.f32.mrb[0].mxu0
      %v1917 = vadd.f32 %v1820, %v1916
      %v1918 = vpop.f32.mrb[0].mxu0
      %1919 = vmatprep.mubr.bf16.mxu0 0
      %1920 = vmatmul.mubr.bf16.gmra.mrb[0].mxu0 %v1684
      %v1921 = vpop.f32.mrb[0].mxu0
      %v1922 = vadd.f32 %v1825, %v1921
      %v1923 = vpop.f32.mrb[0].mxu0
      %v1924 = vpop.f32.mrb[0].mxu0
      %v1925 = vadd.f32 %v1828, %v1924
      %v1926 = vpop.f32.mrb[0].mxu0
      %1927 = vmatprep.mubr.bf16.mxu0 0
      %1928 = vmatmul.mubr.bf16.gmra.mrb[0].mxu0 %v1685
      %v1929 = vpop.f32.mrb[0].mxu0
      %v1930 = vadd.f32 %v1833, %v1929
      %v1931 = vpop.f32.mrb[0].mxu0
      %v1932 = vpop.f32.mrb[0].mxu0
      %v1933 = vadd.f32 %v1836, %v1932
      %v1934 = vpop.f32.mrb[0].mxu0
      %1935 = vdwg.mxu0
      %v1936 = vld [vmem:[%s335] sm:$0x1]
      %v1938 = vlaneseq
      %v1939 = vshrl.u32 %v1938, 7
      %v1940 = vsub.s32 0, %v1939
      %v1941 = vrot.slane %v1936, %v1940
      %v1943 = vadd.f32 %v1874, %v1941
      %v1944 = vadd.f32 %v1877, %v1941
      %v1945 = vadd.f32 %v1882, %v1941
      %v1946 = vadd.f32 %v1885, %v1941
      %v1947 = vadd.f32 %v1890, %v1941
      %v1948 = vadd.f32 %v1893, %v1941
      %v1949 = vadd.f32 %v1898, %v1941
      %v1950 = vadd.f32 %v1901, %v1941
      %v1951 = vadd.f32 %v1906, %v1941
      %v1952 = vadd.f32 %v1909, %v1941
      %v1953 = vadd.f32 %v1914, %v1941
      %v1954 = vadd.f32 %v1917, %v1941
      %v1955 = vadd.f32 %v1922, %v1941
      %v1956 = vadd.f32 %v1925, %v1941
      %v1957 = vadd.f32 %v1930, %v1941
      %v1958 = vadd.f32 %v1933, %v1941
      %v1959 = vmax.f32 %v1943, 0.0
      %v1960 = vmax.f32 %v1944, 0.0
      %v1961 = vmax.f32 %v1945, 0.0
      %v1962 = vmax.f32 %v1946, 0.0
      %v1963 = vmax.f32 %v1947, 0.0
      %v1964 = vmax.f32 %v1948, 0.0
      %v1965 = vmax.f32 %v1949, 0.0
      %v1966 = vmax.f32 %v1950, 0.0
      %v1967 = vmax.f32 %v1951, 0.0
      %v1968 = vmax.f32 %v1952, 0.0
      %v1969 = vmax.f32 %v1953, 0.0
      %v1970 = vmax.f32 %v1954, 0.0
      %v1971 = vmax.f32 %v1955, 0.0
      %v1972 = vmax.f32 %v1956, 0.0
      %v1973 = vmax.f32 %v1957, 0.0
      %v1974 = vmax.f32 %v1958, 0.0
      %1975 = vst [vmem:[%s343] sm:$0xff] %v1959
      %1976 = vst [vmem:[%s343 + $0x8] sm:$0xff] %v1960
      %1977 = vst [vmem:[%s343 + $0x10] sm:$0xff] %v1961
      %1978 = vst [vmem:[%s343 + $0x18] sm:$0xff] %v1962
      %1979 = vst [vmem:[%s343 + $0x20] sm:$0xff] %v1963
      %1980 = vst [vmem:[%s343 + $0x28] sm:$0xff] %v1964
      %1981 = vst [vmem:[%s343 + $0x30] sm:$0xff] %v1965
      %1982 = vst [vmem:[%s343 + $0x38] sm:$0xff] %v1966
      %1983 = vst [vmem:[%s343 + $0x40] sm:$0xff] %v1967
      %1984 = vst [vmem:[%s343 + $0x48] sm:$0xff] %v1968
      %1985 = vst [vmem:[%s343 + $0x50] sm:$0xff] %v1969
      %1986 = vst [vmem:[%s343 + $0x58] sm:$0xff] %v1970
      %1987 = vst [vmem:[%s343 + $0x60] sm:$0xff] %v1971
      %1988 = vst [vmem:[%s343 + $0x68] sm:$0xff] %v1972
      %1989 = vst [vmem:[%s343 + $0x70] sm:$0xff] %v1973
      %1990 = vst [vmem:[%s343 + $0x78] sm:$0xff] %v1974
      %s1991 = smul.u32 16, %s21
      %p1992 = scmp.lt.s32.totalorder %s1991, 31
      %s1993 = scalar_select %p1992, %s1991, 31
      %p1994 = scmp.lt.s32.totalorder %s22, 0
      %s1995 = scalar_select %p1994, %s22, 0
      %s1996 = sadd.s32 %s1995, %s1993
      %s1997 = smul.addr %s1996, 8
      %s1998 = scalar_lea.vmem %s6, %s1997
      // Predicated region
      $region45: #{inception_gcn_forward.17} parent=43 // pred_check
        %p1999 = pneg %p200
      $region46: #{inception_gcn_forward.17} parent=43 // pred_check_branch
        %2001 = sbr.rel (%p1999) target = $region48
      $region47: #{inception_gcn_forward.17} parent=43 // pred_region
        %s2002 = smul.u32 16, %s21
      $region48: #{inception_gcn_forward.17} parent=43 // pred_fallthru
        _
    $region44: #{inception_gcn_forward.17} parent=5 // pred_fallthru
      _
    %p2003 = scmp.le.s32.totalorder 2, %s12
    // Predicated region
    $region49: #{inception_gcn_forward.17} parent=5 // pred_check
      %p2004 = pneg %p2003
    $region50: #{inception_gcn_forward.17} parent=5 // pred_check_branch
      %2006 = sbr.rel (%p2004) target = $region52
    $region51: #{inception_gcn_forward.17} parent=5 // pred_region
      %s2007 = ssub.s32 %s12, 2
      // Predicated region
      $region53: #{inception_gcn_forward.17} parent=51 // pred_check
        %p2008 = pneg %p206
      $region54: #{inception_gcn_forward.17} parent=51 // pred_check_branch
        %2010 = sbr.rel (%p2008) target = $region56
      $region55: #{inception_gcn_forward.17} parent=51 // pred_region
        %s2011 = smul.u32 16, %s23
        %p2012 = scmp.lt.s32.totalorder %s2011, 31
        %s2013 = scalar_select %p2012, %s2011, 31
        %p2014 = scmp.lt.s32.totalorder %s24, 0
        %s2015 = scalar_select %p2014, %s24, 0
        %s2016 = sadd.s32 %s2015, %s2013
        %s2017 = smul.addr %s2016, 8
        %s2018 = scalar_lea.vmem %s6, %s2017
      $region56: #{inception_gcn_forward.17} parent=51 // pred_fallthru
        _
    $region52: #{inception_gcn_forward.17} parent=5 // pred_fallthru
      _
  $region6: #{inception_gcn_forward.17} parent=0 // loop_footer
    %s16 = sadd.s32 1, %s12
  $region7: #{inception_gcn_forward.17} parent=0 // loop_footer_branch
    %11 = sbr.rel target = $region3
  $region8: #{inception_gcn_forward.17} parent=0 // loop_exit
    _

// kernel: inception_gcn_forward.19
$region0: #{inception_gcn_forward.19}
  #allocation0 [shape = 'u32[]', space=smem, size = 0x4, offset = 0x4, fixed_abs, tag = 'smem constant byte address 0x4 - core index']
  #allocation1 [shape = 'u32[144,128]{1,0:T(1,128)}', space=vmem, size = 0x12000, scoped, tag = 'internal scratch']
  %s0 = inlined_call_operand.vmem [shape: s32[256,8], index: 0, kind: input, shape index: {}]
  %s1 = inlined_call_operand.vmem [shape: f32[256,128], index: 1, kind: input, shape index: {}, may-alias: {1,2}]
  %s2 = inlined_call_operand.vmem [shape: f32[256,128], index: 2, kind: input, shape index: {}, may-alias: {1,2}]
  %s3 = inlined_call_operand.vmem [shape: f32[128,128], index: 3, kind: input, shape index: {}]
  %s4 = inlined_call_operand.vmem [shape: f32[128,128], index: 4, kind: input, shape index: {}]
  %s5 = inlined_call_operand.vmem [shape: f32[1,128], index: 5, kind: input, shape index: {}]
  %s6 = inlined_call_operand.vmem [shape: f32[256,128], index: 6, kind: output, shape index: {}]
  %s7 = sld [smem:[#allocation0]]
  $region57: #{inception_gcn_forward.19} parent=0
    _
  %s9 = ssub.s32 1, %s7
  %s10 = scalar_select 0, %s9, %s7
  loop: start=0, step=1, limit=4
  $region2: #{inception_gcn_forward.19} parent=0 // loop_pre_header
    _
  $region3: #{inception_gcn_forward.19} parent=0 // loop_header
    %s12 = sphi 0, %s16
    %p13 = scmp.ge.s32.totalorder %s12, 4
    %s19 = sphi 0, %s31
    %s20 = sphi 0, %s27
    %s21 = sphi 0, %s19
    %s22 = sphi 0, %s20
    %s23 = sphi 0, %s21
    %s24 = sphi 0, %s22
    %s34 = sphi 0, %s36
    %s37 = sphi 0, %s34
    %s38 = sphi 0, %s37
    %s54 = sphi 0, %s38
    %s58 = sphi 0, %s58
    %s60 = sphi 0, %s58
    %s61 = sphi 0, %s60
    %s75 = sphi 0, %s61
    %s81 = sphi 0, %s83
    %s84 = sphi 0, %s81
    %s85 = sphi 0, %s84
    %s101 = sphi 0, %s85
    %s107 = sphi 0, %s109
    %s110 = sphi 0, %s107
    %s111 = sphi 0, %s110
    %s127 = sphi 0, %s111
    %s133 = sphi 0, %s135
    %s136 = sphi 0, %s133
    %s137 = sphi 0, %s136
    %s153 = sphi 0, %s137
    %s159 = sphi 0, %s161
    %s162 = sphi 0, %s159
    %s163 = sphi 0, %s162
    %s179 = sphi 0, %s163
    %s187 = sphi 0, %s189
    %s190 = sphi 0, %s187
    %s191 = sphi 0, %s190
    %s207 = sphi 0, %s191
  $region4: #{inception_gcn_forward.19} parent=0 // loop_header_branch
    %15 = sbr.rel (%p13) target = $region8
  $region5: #{inception_gcn_forward.19} parent=0 // loop_body
    %s17 = ssub.s32 %s12, 1
    %s18 = ssub.s32 %s12, 2
    %s25 = sadd.s32 1, %s20
    %p26 = scmp.ge.s32.totalorder %s25, 1
    %s27 = scalar_select %p26, 0, %s25
    %s28 = sadd.s32 1, %s19
    %s29 = scalar_select %p26, %s28, %s19
    %p30 = scmp.ge.s32.totalorder %s29, 2
    %s31 = scalar_select %p30, 0, %s29
    %s32 = ssub.s32 %s19, %s31
    %p33 = scmp.eq.s32.totalorder %s32, 0
    %s35 = sadd.s32 %s34, 1
    %s36 = scalar_select %p33, %s34, %s35
    %p39 = pneg %p33
    %p40 = scmp.eq.s32.totalorder %s12, 1
    %p41 = por %p39, %p40
    %p42 = scmp.ne.s32.totalorder %s34, %s37
    %p43 = scmp.eq.s32.totalorder %s12, 0
    %p44 = por %p42, %p43
    %p45 = scmp.ne.s32.totalorder %s34, %s37
    %p46 = scmp.eq.s32.totalorder %s17, 1
    %p47 = por %p45, %p46
    %p48 = scmp.ne.s32.totalorder %s37, %s38
    %p49 = scmp.eq.s32.totalorder %s17, 0
    %p50 = por %p48, %p49
    %p51 = scmp.ne.s32.totalorder %s37, %s38
    %p52 = scmp.eq.s32.totalorder %s18, 1
    %p53 = por %p51, %p52
    %p55 = scmp.ne.s32.totalorder %s38, %s54
    %p56 = scmp.eq.s32.totalorder %s18, 0
    %p57 = por %p55, %p56
    %s59 = sadd.s32 %s58, 1
    %p62 = scmp.eq.s32.totalorder %s12, 1
    %p63 = scmp.ne.s32.totalorder %s58, %s60
    %p64 = scmp.eq.s32.totalorder %s12, 0
    %p65 = por %p63, %p64
    %p66 = scmp.ne.s32.totalorder %s58, %s60
    %p67 = scmp.eq.s32.totalorder %s17, 1
    %p68 = por %p66, %p67
    %p69 = scmp.ne.s32.totalorder %s60, %s61
    %p70 = scmp.eq.s32.totalorder %s17, 0
    %p71 = por %p69, %p70
    %p72 = scmp.ne.s32.totalorder %s60, %s61
    %p73 = scmp.eq.s32.totalorder %s18, 1
    %p74 = por %p72, %p73
    %p76 = scmp.ne.s32.totalorder %s61, %s75
    %p77 = scmp.eq.s32.totalorder %s18, 0
    %p78 = por %p76, %p77
    %s79 = ssub.s32 %s19, %s31
    %p80 = scmp.eq.s32.totalorder %s79, 0
    %s82 = sadd.s32 %s81, 1
    %s83 = scalar_select %p80, %s81, %s82
    %p86 = pneg %p80
    %p87 = scmp.eq.s32.totalorder %s12, 1
    %p88 = por %p86, %p87
    %p89 = scmp.ne.s32.totalorder %s81, %s84
    %p90 = scmp.eq.s32.totalorder %s12, 0
    %p91 = por %p89, %p90
    %p92 = scmp.ne.s32.totalorder %s81, %s84
    %p93 = scmp.eq.s32.totalorder %s17, 1
    %p94 = por %p92, %p93
    %p95 = scmp.ne.s32.totalorder %s84, %s85
    %p96 = scmp.eq.s32.totalorder %s17, 0
    %p97 = por %p95, %p96
    %p98 = scmp.ne.s32.totalorder %s84, %s85
    %p99 = scmp.eq.s32.totalorder %s18, 1
    %p100 = por %p98, %p99
    %p102 = scmp.ne.s32.totalorder %s85, %s101
    %p103 = scmp.eq.s32.totalorder %s18, 0
    %p104 = por %p102, %p103
    %s105 = ssub.s32 %s20, %s27
    %p106 = scmp.eq.s32.totalorder %s105, 0
    %s108 = sadd.s32 %s107, 1
    %s109 = scalar_select %p106, %s107, %s108
    %p112 = pneg %p106
    %p113 = scmp.eq.s32.totalorder %s12, 1
    %p114 = por %p112, %p113
    %p115 = scmp.ne.s32.totalorder %s107, %s110
    %p116 = scmp.eq.s32.totalorder %s12, 0
    %p117 = por %p115, %p116
    %p118 = scmp.ne.s32.totalorder %s107, %s110
    %p119 = scmp.eq.s32.totalorder %s17, 1
    %p120 = por %p118, %p119
    %p121 = scmp.ne.s32.totalorder %s110, %s111
    %p122 = scmp.eq.s32.totalorder %s17, 0
    %p123 = por %p121, %p122
    %p124 = scmp.ne.s32.totalorder %s110, %s111
    %p125 = scmp.eq.s32.totalorder %s18, 1
    %p126 = por %p124, %p125
    %p128 = scmp.ne.s32.totalorder %s111, %s127
    %p129 = scmp.eq.s32.totalorder %s18, 0
    %p130 = por %p128, %p129
    %s131 = ssub.s32 %s20, %s27
    %p132 = scmp.eq.s32.totalorder %s131, 0
    %s134 = sadd.s32 %s133, 1
    %s135 = scalar_select %p132, %s133, %s134
    %p138 = pneg %p132
    %p139 = scmp.eq.s32.totalorder %s12, 1
    %p140 = por %p138, %p139
    %p141 = scmp.ne.s32.totalorder %s133, %s136
    %p142 = scmp.eq.s32.totalorder %s12, 0
    %p143 = por %p141, %p142
    %p144 = scmp.ne.s32.totalorder %s133, %s136
    %p145 = scmp.eq.s32.totalorder %s17, 1
    %p146 = por %p144, %p145
    %p147 = scmp.ne.s32.totalorder %s136, %s137
    %p148 = scmp.eq.s32.totalorder %s17, 0
    %p149 = por %p147, %p148
    %p150 = scmp.ne.s32.totalorder %s136, %s137
    %p151 = scmp.eq.s32.totalorder %s18, 1
    %p152 = por %p150, %p151
    %p154 = scmp.ne.s32.totalorder %s137, %s153
    %p155 = scmp.eq.s32.totalorder %s18, 0
    %p156 = por %p154, %p155
    %s157 = ssub.s32 %s20, %s27
    %p158 = scmp.eq.s32.totalorder %s157, 0
    %s160 = sadd.s32 %s159, 1
    %s161 = scalar_select %p158, %s159, %s160
    %p164 = pneg %p158
    %p165 = scmp.eq.s32.totalorder %s12, 1
    %p166 = por %p164, %p165
    %p167 = scmp.ne.s32.totalorder %s159, %s162
    %p168 = scmp.eq.s32.totalorder %s12, 0
    %p169 = por %p167, %p168
    %p170 = scmp.ne.s32.totalorder %s159, %s162
    %p171 = scmp.eq.s32.totalorder %s17, 1
    %p172 = por %p170, %p171
    %p173 = scmp.ne.s32.totalorder %s162, %s163
    %p174 = scmp.eq.s32.totalorder %s17, 0
    %p175 = por %p173, %p174
    %p176 = scmp.ne.s32.totalorder %s162, %s163
    %p177 = scmp.eq.s32.totalorder %s18, 1
    %p178 = por %p176, %p177
    %p180 = scmp.ne.s32.totalorder %s163, %s179
    %p181 = scmp.eq.s32.totalorder %s18, 0
    %p182 = por %p180, %p181
    %s183 = ssub.s32 %s19, %s31
    %s184 = ssub.s32 %s20, %s27
    %s185 = sor.u32 %s183, %s184
    %p186 = scmp.eq.s32.totalorder %s185, 0
    %s188 = sadd.s32 %s187, 1
    %s189 = scalar_select %p186, %s187, %s188
    %p192 = pneg %p186
    %p193 = scmp.eq.s32.totalorder %s12, 1
    %p194 = por %p192, %p193
    %p195 = scmp.ne.s32.totalorder %s187, %s190
    %p196 = scmp.eq.s32.totalorder %s12, 0
    %p197 = por %p195, %p196
    %p198 = scmp.ne.s32.totalorder %s187, %s190
    %p199 = scmp.eq.s32.totalorder %s17, 1
    %p200 = por %p198, %p199
    %p201 = scmp.ne.s32.totalorder %s190, %s191
    %p202 = scmp.eq.s32.totalorder %s17, 0
    %p203 = por %p201, %p202
    %p204 = scmp.ne.s32.totalorder %s190, %s191
    %p205 = scmp.eq.s32.totalorder %s18, 1
    %p206 = por %p204, %p205
    %p208 = scmp.ne.s32.totalorder %s191, %s207
    %p209 = scmp.eq.s32.totalorder %s18, 0
    %p210 = por %p208, %p209
    %p211 = scmp.le.s32.totalorder 1, %s12
    %p212 = scmp.lt.s32.totalorder %s12, 3
    %p213 = pnand %p211, %p212
    %p214 = pneg %p213
    // Predicated region
    $region9: #{inception_gcn_forward.19} parent=5 // pred_check
      _
    $region10: #{inception_gcn_forward.19} parent=5 // pred_check_branch
      %216 = sbr.rel (%p213) target = $region12
    $region11: #{inception_gcn_forward.19} parent=5 // pred_region
      %s217 = ssub.s32 %s12, 1
      // Predicated region
      $region13: #{inception_gcn_forward.19} parent=11 // pred_check
        %p218 = pneg %p71
      $region14: #{inception_gcn_forward.19} parent=11 // pred_check_branch
        %220 = sbr.rel (%p218) target = $region16
      $region15: #{inception_gcn_forward.19} parent=11 // pred_region
        _
      $region16: #{inception_gcn_forward.19} parent=11 // pred_fallthru
        _
      // Predicated region
      $region17: #{inception_gcn_forward.19} parent=11 // pred_check
        %p221 = pneg %p123
      $region18: #{inception_gcn_forward.19} parent=11 // pred_check_branch
        %223 = sbr.rel (%p221) target = $region20
      $region19: #{inception_gcn_forward.19} parent=11 // pred_region
        %p224 = scmp.lt.s32.totalorder %s22, 0
        %s225 = scalar_select %p224, %s22, 0
        %s226 = smul.addr %s225, 8
        %s227 = scalar_lea.vmem %s3, %s226
      $region20: #{inception_gcn_forward.19} parent=11 // pred_fallthru
        _
      // Predicated region
      $region21: #{inception_gcn_forward.19} parent=11 // pred_check
        %p228 = pneg %p149
      $region22: #{inception_gcn_forward.19} parent=11 // pred_check_branch
        %230 = sbr.rel (%p228) target = $region24
      $region23: #{inception_gcn_forward.19} parent=11 // pred_region
        %p231 = scmp.lt.s32.totalorder %s22, 0
        %s232 = scalar_select %p231, %s22, 0
        %s233 = smul.addr %s232, 8
        %s234 = scalar_lea.vmem %s4, %s233
      $region24: #{inception_gcn_forward.19} parent=11 // pred_fallthru
        _
      // Predicated region
      $region25: #{inception_gcn_forward.19} parent=11 // pred_check
        %p235 = pneg %p175
      $region26: #{inception_gcn_forward.19} parent=11 // pred_check_branch
        %237 = sbr.rel (%p235) target = $region28
      $region27: #{inception_gcn_forward.19} parent=11 // pred_region
        %p238 = scmp.lt.s32.totalorder %s22, 0
        %s239 = scalar_select %p238, %s22, 0
        %s240 = scalar_lea.vmem %s5, %s239
      $region28: #{inception_gcn_forward.19} parent=11 // pred_fallthru
        _
    $region12: #{inception_gcn_forward.19} parent=5 // pred_fallthru
      _
    %p241 = scmp.lt.s32.totalorder %s12, 2
    // Predicated region
    $region29: #{inception_gcn_forward.19} parent=5 // pred_check
      %p242 = pneg %p241
    $region30: #{inception_gcn_forward.19} parent=5 // pred_check_branch
      %244 = sbr.rel (%p242) target = $region32
    $region31: #{inception_gcn_forward.19} parent=5 // pred_region
      // Predicated region
      $region33: #{inception_gcn_forward.19} parent=31 // pred_check
        %p245 = pneg %p44
      $region34: #{inception_gcn_forward.19} parent=31 // pred_check_branch
        %247 = sbr.rel (%p245) target = $region36
      $region35: #{inception_gcn_forward.19} parent=31 // pred_region
        %s248 = smul.u32 16, %s19
        %p249 = scmp.lt.s32.totalorder %s248, 31
        %s250 = scalar_select %p249, %s248, 31
        %s251 = smul.addr %s250, 8
        %s252 = scalar_lea.vmem %s0, %s251
        %s253 = smul.u32 16, %s19
      $region36: #{inception_gcn_forward.19} parent=31 // pred_fallthru
        _
      // Predicated region
      $region37: #{inception_gcn_forward.19} parent=31 // pred_check
        %p254 = pneg %p91
      $region38: #{inception_gcn_forward.19} parent=31 // pred_check_branch
        %256 = sbr.rel (%p254) target = $region40
      $region39: #{inception_gcn_forward.19} parent=31 // pred_region
        %s257 = smul.u32 16, %s19
        %p258 = scmp.lt.s32.totalorder %s257, 31
        %s259 = scalar_select %p258, %s257, 31
        %s260 = smul.addr %s259, 8
        %s261 = scalar_lea.vmem %s2, %s260
        %s262 = smul.u32 16, %s19
      $region40: #{inception_gcn_forward.19} parent=31 // pred_fallthru
        _
    $region32: #{inception_gcn_forward.19} parent=5 // pred_fallthru
      _
    %p263 = scmp.le.s32.totalorder 1, %s12
    %p264 = scmp.lt.s32.totalorder %s12, 3
    %p265 = pnand %p263, %p264
    %p266 = pneg %p265
    // Predicated region
    $region41: #{inception_gcn_forward.19} parent=5 // pred_check
      _
    $region42: #{inception_gcn_forward.19} parent=5 // pred_check_branch
      %268 = sbr.rel (%p265) target = $region44
    $region43: #{inception_gcn_forward.19} parent=5 // pred_region
      %s269 = ssub.s32 %s12, 1
      %s270 = smul.u32 16, %s21
      %p271 = scmp.lt.s32.totalorder %s270, 31
      %s272 = scalar_select %p271, %s270, 31
      %s273 = smul.addr %s272, 8
      %s274 = scalar_lea.vmem %s0, %s273
      %p275 = pneg %p50
      %p276 = pneg %p47
      %p277 = pneg %p71
      %p278 = pneg %p68
      %s279 = smul.u32 16, %s21
      %p280 = scmp.lt.s32.totalorder %s279, 31
      %s281 = scalar_select %p280, %s279, 31
      %s282 = smul.addr %s281, 8
      %s283 = scalar_lea.vmem %s2, %s282
      %p284 = pneg %p97
      %p285 = pneg %p94
      %p286 = scmp.lt.s32.totalorder %s22, 0
      %s287 = scalar_select %p286, %s22, 0
      %s288 = smul.addr %s287, 8
      %s289 = scalar_lea.vmem %s3, %s288
      %p290 = pneg %p123
      %p291 = pneg %p120
      %p292 = scmp.lt.s32.totalorder %s22, 0
      %s293 = scalar_select %p292, %s22, 0
      %s294 = smul.addr %s293, 8
      %s295 = scalar_lea.vmem %s4, %s294
      %p296 = pneg %p149
      %p297 = pneg %p146
      %p298 = scmp.lt.s32.totalorder %s22, 0
      %s299 = scalar_select %p298, %s22, 0
      %s300 = scalar_lea.vmem %s5, %s299
      %p301 = pneg %p175
      %p302 = pneg %p172
      %p303 = pneg %p203
      %p304 = pneg %p200
      %s305 = smul.u32 16, %s21
      %p306 = scmp.lt.s32.totalorder %s305, 31
      %s307 = scalar_select %p306, %s305, 31
      %p308 = scmp.lt.s32.totalorder %s22, 0
      %s309 = scalar_select %p308, %s22, 0
      %s310 = sadd.s32 %s309, %s307
      %s311 = smul.addr %s310, 8
      %s312 = scalar_lea.vmem %s6, %s311
      %s313 = smul.u32 16, %s21
      %p314 = scmp.lt.s32.totalorder %s313, 31
      %s315 = scalar_select %p314, %s313, 31
      %s316 = smul.addr %s315, 8
      %s317 = scalar_lea.vmem %s0, %s316
      %s318 = smul.u32 16, %s21
      %s319 = smul.u32 16, %s21
      %p320 = scmp.lt.s32.totalorder %s319, 31
      %s321 = scalar_select %p320, %s319, 31
      %s322 = smul.addr %s321, 8
      %s323 = scalar_lea.vmem %s2, %s322
      %s324 = smul.u32 16, %s21
      %p325 = scmp.lt.s32.totalorder %s22, 0
      %s326 = scalar_select %p325, %s22, 0
      %s327 = smul.addr %s326, 8
      %s328 = scalar_lea.vmem %s3, %s327
      %p329 = scmp.lt.s32.totalorder %s22, 0
      %s330 = scalar_select %p329, %s22, 0
      %s331 = smul.addr %s330, 8
      %s332 = scalar_lea.vmem %s4, %s331
      %p333 = scmp.lt.s32.totalorder %s22, 0
      %s334 = scalar_select %p333, %s22, 0
      %s335 = scalar_lea.vmem %s5, %s334
      %s336 = smul.u32 16, %s21
      %p337 = scmp.lt.s32.totalorder %s336, 31
      %s338 = scalar_select %p337, %s336, 31
      %p339 = scmp.lt.s32.totalorder %s22, 0
      %s340 = scalar_select %p339, %s22, 0
      %s341 = sadd.s32 %s340, %s338
      %s342 = smul.addr %s341, 8
      %s343 = scalar_lea.vmem %s6, %s342
      %s344 = smul.u32 16, %s21
      %v346 = vld [vmem:[%s317] sm:$0xff]
      %v347 = vld [vmem:[%s317 + $0x8] sm:$0xff]
      %v348 = vld [vmem:[%s317 + $0x10] sm:$0xff]
      %v349 = vld [vmem:[%s317 + $0x18] sm:$0xff]
      %v350 = vld [vmem:[%s317 + $0x20] sm:$0xff]
      %v351 = vld [vmem:[%s317 + $0x28] sm:$0xff]
      %v352 = vld [vmem:[%s317 + $0x30] sm:$0xff]
      %v353 = vld [vmem:[%s317 + $0x38] sm:$0xff]
      %v354 = vld [vmem:[%s317 + $0x40] sm:$0xff]
      %v355 = vld [vmem:[%s317 + $0x48] sm:$0xff]
      %v356 = vld [vmem:[%s317 + $0x50] sm:$0xff]
      %v357 = vld [vmem:[%s317 + $0x58] sm:$0xff]
      %v358 = vld [vmem:[%s317 + $0x60] sm:$0xff]
      %v359 = vld [vmem:[%s317 + $0x68] sm:$0xff]
      %v360 = vld [vmem:[%s317 + $0x70] sm:$0xff]
      %v361 = vld [vmem:[%s317 + $0x78] sm:$0xff]
      %v362 = vlaneseq
      %v363 = vand.u32 %v362, 127
      %v364 = vadd.s32 %v363, 128
      %365 = vset.pattern.permute.xlu0 0
      %366 = vperm.xlu0 %365, %v346
      %v367 = vpop.permute.xlu0 %366
      %368 = vset.pattern.permute.xlu0 0
      %369 = vperm.xlu0 %368, %v347
      %v370 = vpop.permute.xlu0 %369
      %371 = vset.pattern.permute.xlu0 0
      %372 = vperm.xlu0 %371, %v348
      %v373 = vpop.permute.xlu0 %372
      %374 = vset.pattern.permute.xlu0 0
      %375 = vperm.xlu0 %374, %v349
      %v376 = vpop.permute.xlu0 %375
      %377 = vset.pattern.permute.xlu0 0
      %378 = vperm.xlu0 %377, %v350
      %v379 = vpop.permute.xlu0 %378
      %380 = vset.pattern.permute.xlu0 0
      %381 = vperm.xlu0 %380, %v351
      %v382 = vpop.permute.xlu0 %381
      %383 = vset.pattern.permute.xlu0 0
      %384 = vperm.xlu0 %383, %v352
      %v385 = vpop.permute.xlu0 %384
      %386 = vset.pattern.permute.xlu0 0
      %387 = vperm.xlu0 %386, %v353
      %v388 = vpop.permute.xlu0 %387
      %389 = vset.pattern.permute.xlu0 0
      %390 = vperm.xlu0 %389, %v354
      %v391 = vpop.permute.xlu0 %390
      %392 = vset.pattern.permute.xlu0 0
      %393 = vperm.xlu0 %392, %v355
      %v394 = vpop.permute.xlu0 %393
      %395 = vset.pattern.permute.xlu0 0
      %396 = vperm.xlu0 %395, %v356
      %v397 = vpop.permute.xlu0 %396
      %398 = vset.pattern.permute.xlu0 0
      %399 = vperm.xlu0 %398, %v357
      %v400 = vpop.permute.xlu0 %399
      %401 = vset.pattern.permute.xlu0 0
      %402 = vperm.xlu0 %401, %v358
      %v403 = vpop.permute.xlu0 %402
      %404 = vset.pattern.permute.xlu0 0
      %405 = vperm.xlu0 %404, %v359
      %v406 = vpop.permute.xlu0 %405
      %407 = vset.pattern.permute.xlu0 0
      %408 = vperm.xlu0 %407, %v360
      %v409 = vpop.permute.xlu0 %408
      %410 = vset.pattern.permute.xlu0 0
      %411 = vperm.xlu0 %410, %v361
      %v412 = vpop.permute.xlu0 %411
      %vm413 = vcmp.eq.s32.totalorder %v367, %v363
      %vm414 = vcmp.eq.s32.totalorder %v367, %v364
      %vm415 = vcmp.eq.s32.totalorder %v370, %v363
      %vm416 = vcmp.eq.s32.totalorder %v370, %v364
      %vm417 = vcmp.eq.s32.totalorder %v373, %v363
      %vm418 = vcmp.eq.s32.totalorder %v373, %v364
      %vm419 = vcmp.eq.s32.totalorder %v376, %v363
      %vm420 = vcmp.eq.s32.totalorder %v376, %v364
      %vm421 = vcmp.eq.s32.totalorder %v379, %v363
      %vm422 = vcmp.eq.s32.totalorder %v379, %v364
      %vm423 = vcmp.eq.s32.totalorder %v382, %v363
      %vm424 = vcmp.eq.s32.totalorder %v382, %v364
      %vm425 = vcmp.eq.s32.totalorder %v385, %v363
      %vm426 = vcmp.eq.s32.totalorder %v385, %v364
      %vm427 = vcmp.eq.s32.totalorder %v388, %v363
      %vm428 = vcmp.eq.s32.totalorder %v388, %v364
      %vm429 = vcmp.eq.s32.totalorder %v391, %v363
      %vm430 = vcmp.eq.s32.totalorder %v391, %v364
      %vm431 = vcmp.eq.s32.totalorder %v394, %v363
      %vm432 = vcmp.eq.s32.totalorder %v394, %v364
      %vm433 = vcmp.eq.s32.totalorder %v397, %v363
      %vm434 = vcmp.eq.s32.totalorder %v397, %v364
      %vm435 = vcmp.eq.s32.totalorder %v400, %v363
      %vm436 = vcmp.eq.s32.totalorder %v400, %v364
      %vm437 = vcmp.eq.s32.totalorder %v403, %v363
      %vm438 = vcmp.eq.s32.totalorder %v403, %v364
      %vm439 = vcmp.eq.s32.totalorder %v406, %v363
      %vm440 = vcmp.eq.s32.totalorder %v406, %v364
      %vm441 = vcmp.eq.s32.totalorder %v409, %v363
      %vm442 = vcmp.eq.s32.totalorder %v409, %v364
      %vm443 = vcmp.eq.s32.totalorder %v412, %v363
      %vm444 = vcmp.eq.s32.totalorder %v412, %v364
      %v445 = vsel %vm413, 1.0, 0.0
      %v446 = vsel %vm414, 1.0, 0.0
      %v447 = vsel %vm415, 1.0, 0.0
      %v448 = vsel %vm416, 1.0, 0.0
      %v449 = vsel %vm417, 1.0, 0.0
      %v450 = vsel %vm418, 1.0, 0.0
      %v451 = vsel %vm419, 1.0, 0.0
      %v452 = vsel %vm420, 1.0, 0.0
      %v453 = vsel %vm421, 1.0, 0.0
      %v454 = vsel %vm422, 1.0, 0.0
      %v455 = vsel %vm423, 1.0, 0.0
      %v456 = vsel %vm424, 1.0, 0.0
      %v457 = vsel %vm425, 1.0, 0.0
      %v458 = vsel %vm426, 1.0, 0.0
      %v459 = vsel %vm427, 1.0, 0.0
      %v460 = vsel %vm428, 1.0, 0.0
      %v461 = vsel %vm429, 1.0, 0.0
      %v462 = vsel %vm430, 1.0, 0.0
      %v463 = vsel %vm431, 1.0, 0.0
      %v464 = vsel %vm432, 1.0, 0.0
      %v465 = vsel %vm433, 1.0, 0.0
      %v466 = vsel %vm434, 1.0, 0.0
      %v467 = vsel %vm435, 1.0, 0.0
      %v468 = vsel %vm436, 1.0, 0.0
      %v469 = vsel %vm437, 1.0, 0.0
      %v470 = vsel %vm438, 1.0, 0.0
      %v471 = vsel %vm439, 1.0, 0.0
      %v472 = vsel %vm440, 1.0, 0.0
      %v473 = vsel %vm441, 1.0, 0.0
      %v474 = vsel %vm442, 1.0, 0.0
      %v475 = vsel %vm443, 1.0, 0.0
      %v476 = vsel %vm444, 1.0, 0.0
      %477 = vset.pattern.permute.xlu0 1
      %478 = vperm.xlu0 %477, %v346
      %v479 = vpop.permute.xlu0 %478
      %480 = vset.pattern.permute.xlu0 1
      %481 = vperm.xlu0 %480, %v347
      %v482 = vpop.permute.xlu0 %481
      %483 = vset.pattern.permute.xlu0 1
      %484 = vperm.xlu0 %483, %v348
      %v485 = vpop.permute.xlu0 %484
      %486 = vset.pattern.permute.xlu0 1
      %487 = vperm.xlu0 %486, %v349
      %v488 = vpop.permute.xlu0 %487
      %489 = vset.pattern.permute.xlu0 1
      %490 = vperm.xlu0 %489, %v350
      %v491 = vpop.permute.xlu0 %490
      %492 = vset.pattern.permute.xlu0 1
      %493 = vperm.xlu0 %492, %v351
      %v494 = vpop.permute.xlu0 %493
      %495 = vset.pattern.permute.xlu0 1
      %496 = vperm.xlu0 %495, %v352
      %v497 = vpop.permute.xlu0 %496
      %498 = vset.pattern.permute.xlu0 1
      %499 = vperm.xlu0 %498, %v353
      %v500 = vpop.permute.xlu0 %499
      %501 = vset.pattern.permute.xlu0 1
      %502 = vperm.xlu0 %501, %v354
      %v503 = vpop.permute.xlu0 %502
      %504 = vset.pattern.permute.xlu0 1
      %505 = vperm.xlu0 %504, %v355
      %v506 = vpop.permute.xlu0 %505
      %507 = vset.pattern.permute.xlu0 1
      %508 = vperm.xlu0 %507, %v356
      %v509 = vpop.permute.xlu0 %508
      %510 = vset.pattern.permute.xlu0 1
      %511 = vperm.xlu0 %510, %v357
      %v512 = vpop.permute.xlu0 %511
      %513 = vset.pattern.permute.xlu0 1
      %514 = vperm.xlu0 %513, %v358
      %v515 = vpop.permute.xlu0 %514
      %516 = vset.pattern.permute.xlu0 1
      %517 = vperm.xlu0 %516, %v359
      %v518 = vpop.permute.xlu0 %517
      %519 = vset.pattern.permute.xlu0 1
      %520 = vperm.xlu0 %519, %v360
      %v521 = vpop.permute.xlu0 %520
      %522 = vset.pattern.permute.xlu0 1
      %523 = vperm.xlu0 %522, %v361
      %v524 = vpop.permute.xlu0 %523
      %vm525 = vcmp.eq.s32.totalorder %v479, %v363
      %vm526 = vcmp.eq.s32.totalorder %v479, %v364
      %vm527 = vcmp.eq.s32.totalorder %v482, %v363
      %vm528 = vcmp.eq.s32.totalorder %v482, %v364
      %vm529 = vcmp.eq.s32.totalorder %v485, %v363
      %vm530 = vcmp.eq.s32.totalorder %v485, %v364
      %vm531 = vcmp.eq.s32.totalorder %v488, %v363
      %vm532 = vcmp.eq.s32.totalorder %v488, %v364
      %vm533 = vcmp.eq.s32.totalorder %v491, %v363
      %vm534 = vcmp.eq.s32.totalorder %v491, %v364
      %vm535 = vcmp.eq.s32.totalorder %v494, %v363
      %vm536 = vcmp.eq.s32.totalorder %v494, %v364
      %vm537 = vcmp.eq.s32.totalorder %v497, %v363
      %vm538 = vcmp.eq.s32.totalorder %v497, %v364
      %vm539 = vcmp.eq.s32.totalorder %v500, %v363
      %vm540 = vcmp.eq.s32.totalorder %v500, %v364
      %vm541 = vcmp.eq.s32.totalorder %v503, %v363
      %vm542 = vcmp.eq.s32.totalorder %v503, %v364
      %vm543 = vcmp.eq.s32.totalorder %v506, %v363
      %vm544 = vcmp.eq.s32.totalorder %v506, %v364
      %vm545 = vcmp.eq.s32.totalorder %v509, %v363
      %vm546 = vcmp.eq.s32.totalorder %v509, %v364
      %vm547 = vcmp.eq.s32.totalorder %v512, %v363
      %vm548 = vcmp.eq.s32.totalorder %v512, %v364
      %vm549 = vcmp.eq.s32.totalorder %v515, %v363
      %vm550 = vcmp.eq.s32.totalorder %v515, %v364
      %vm551 = vcmp.eq.s32.totalorder %v518, %v363
      %vm552 = vcmp.eq.s32.totalorder %v518, %v364
      %vm553 = vcmp.eq.s32.totalorder %v521, %v363
      %vm554 = vcmp.eq.s32.totalorder %v521, %v364
      %vm555 = vcmp.eq.s32.totalorder %v524, %v363
      %vm556 = vcmp.eq.s32.totalorder %v524, %v364
      %v557 = vsel %vm525, 1.0, 0.0
      %v558 = vsel %vm526, 1.0, 0.0
      %v559 = vsel %vm527, 1.0, 0.0
      %v560 = vsel %vm528, 1.0, 0.0
      %v561 = vsel %vm529, 1.0, 0.0
      %v562 = vsel %vm530, 1.0, 0.0
      %v563 = vsel %vm531, 1.0, 0.0
      %v564 = vsel %vm532, 1.0, 0.0
      %v565 = vsel %vm533, 1.0, 0.0
      %v566 = vsel %vm534, 1.0, 0.0
      %v567 = vsel %vm535, 1.0, 0.0
      %v568 = vsel %vm536, 1.0, 0.0
      %v569 = vsel %vm537, 1.0, 0.0
      %v570 = vsel %vm538, 1.0, 0.0
      %v571 = vsel %vm539, 1.0, 0.0
      %v572 = vsel %vm540, 1.0, 0.0
      %v573 = vsel %vm541, 1.0, 0.0
      %v574 = vsel %vm542, 1.0, 0.0
      %v575 = vsel %vm543, 1.0, 0.0
      %v576 = vsel %vm544, 1.0, 0.0
      %v577 = vsel %vm545, 1.0, 0.0
      %v578 = vsel %vm546, 1.0, 0.0
      %v579 = vsel %vm547, 1.0, 0.0
      %v580 = vsel %vm548, 1.0, 0.0
      %v581 = vsel %vm549, 1.0, 0.0
      %v582 = vsel %vm550, 1.0, 0.0
      %v583 = vsel %vm551, 1.0, 0.0
      %v584 = vsel %vm552, 1.0, 0.0
      %v585 = vsel %vm553, 1.0, 0.0
      %v586 = vsel %vm554, 1.0, 0.0
      %v587 = vsel %vm555, 1.0, 0.0
      %v588 = vsel %vm556, 1.0, 0.0
      %v589 = vadd.f32 %v445, %v557
      %v590 = vadd.f32 %v446, %v558
      %v591 = vadd.f32 %v447, %v559
      %v592 = vadd.f32 %v448, %v560
      %v593 = vadd.f32 %v449, %v561
      %v594 = vadd.f32 %v450, %v562
      %v595 = vadd.f32 %v451, %v563
      %v596 = vadd.f32 %v452, %v564
      %v597 = vadd.f32 %v453, %v565
      %v598 = vadd.f32 %v454, %v566
      %v599 = vadd.f32 %v455, %v567
      %v600 = vadd.f32 %v456, %v568
      %v601 = vadd.f32 %v457, %v569
      %v602 = vadd.f32 %v458, %v570
      %v603 = vadd.f32 %v459, %v571
      %v604 = vadd.f32 %v460, %v572
      %v605 = vadd.f32 %v461, %v573
      %v606 = vadd.f32 %v462, %v574
      %v607 = vadd.f32 %v463, %v575
      %v608 = vadd.f32 %v464, %v576
      %v609 = vadd.f32 %v465, %v577
      %v610 = vadd.f32 %v466, %v578
      %v611 = vadd.f32 %v467, %v579
      %v612 = vadd.f32 %v468, %v580
      %v613 = vadd.f32 %v469, %v581
      %v614 = vadd.f32 %v470, %v582
      %v615 = vadd.f32 %v471, %v583
      %v616 = vadd.f32 %v472, %v584
      %v617 = vadd.f32 %v473, %v585
      %v618 = vadd.f32 %v474, %v586
      %v619 = vadd.f32 %v475, %v587
      %v620 = vadd.f32 %v476, %v588
      %621 = vset.pattern.permute.xlu0 2
      %622 = vperm.xlu0 %621, %v346
      %v623 = vpop.permute.xlu0 %622
      %624 = vset.pattern.permute.xlu0 2
      %625 = vperm.xlu0 %624, %v347
      %v626 = vpop.permute.xlu0 %625
      %627 = vset.pattern.permute.xlu0 2
      %628 = vperm.xlu0 %627, %v348
      %v629 = vpop.permute.xlu0 %628
      %630 = vset.pattern.permute.xlu0 2
      %631 = vperm.xlu0 %630, %v349
      %v632 = vpop.permute.xlu0 %631
      %633 = vset.pattern.permute.xlu0 2
      %634 = vperm.xlu0 %633, %v350
      %v635 = vpop.permute.xlu0 %634
      %636 = vset.pattern.permute.xlu0 2
      %637 = vperm.xlu0 %636, %v351
      %v638 = vpop.permute.xlu0 %637
      %639 = vset.pattern.permute.xlu0 2
      %640 = vperm.xlu0 %639, %v352
      %v641 = vpop.permute.xlu0 %640
      %642 = vset.pattern.permute.xlu0 2
      %643 = vperm.xlu0 %642, %v353
      %v644 = vpop.permute.xlu0 %643
      %645 = vset.pattern.permute.xlu0 2
      %646 = vperm.xlu0 %645, %v354
      %v647 = vpop.permute.xlu0 %646
      %648 = vset.pattern.permute.xlu0 2
      %649 = vperm.xlu0 %648, %v355
      %v650 = vpop.permute.xlu0 %649
      %651 = vset.pattern.permute.xlu0 2
      %652 = vperm.xlu0 %651, %v356
      %v653 = vpop.permute.xlu0 %652
      %654 = vset.pattern.permute.xlu0 2
      %655 = vperm.xlu0 %654, %v357
      %v656 = vpop.permute.xlu0 %655
      %657 = vset.pattern.permute.xlu0 2
      %658 = vperm.xlu0 %657, %v358
      %v659 = vpop.permute.xlu0 %658
      %660 = vset.pattern.permute.xlu0 2
      %661 = vperm.xlu0 %660, %v359
      %v662 = vpop.permute.xlu0 %661
      %663 = vset.pattern.permute.xlu0 2
      %664 = vperm.xlu0 %663, %v360
      %v665 = vpop.permute.xlu0 %664
      %666 = vset.pattern.permute.xlu0 2
      %667 = vperm.xlu0 %666, %v361
      %v668 = vpop.permute.xlu0 %667
      %vm669 = vcmp.eq.s32.totalorder %v623, %v363
      %vm670 = vcmp.eq.s32.totalorder %v623, %v364
      %vm671 = vcmp.eq.s32.totalorder %v626, %v363
      %vm672 = vcmp.eq.s32.totalorder %v626, %v364
      %vm673 = vcmp.eq.s32.totalorder %v629, %v363
      %vm674 = vcmp.eq.s32.totalorder %v629, %v364
      %vm675 = vcmp.eq.s32.totalorder %v632, %v363
      %vm676 = vcmp.eq.s32.totalorder %v632, %v364
      %vm677 = vcmp.eq.s32.totalorder %v635, %v363
      %vm678 = vcmp.eq.s32.totalorder %v635, %v364
      %vm679 = vcmp.eq.s32.totalorder %v638, %v363
      %vm680 = vcmp.eq.s32.totalorder %v638, %v364
      %vm681 = vcmp.eq.s32.totalorder %v641, %v363
      %vm682 = vcmp.eq.s32.totalorder %v641, %v364
      %vm683 = vcmp.eq.s32.totalorder %v644, %v363
      %vm684 = vcmp.eq.s32.totalorder %v644, %v364
      %vm685 = vcmp.eq.s32.totalorder %v647, %v363
      %vm686 = vcmp.eq.s32.totalorder %v647, %v364
      %vm687 = vcmp.eq.s32.totalorder %v650, %v363
      %vm688 = vcmp.eq.s32.totalorder %v650, %v364
      %vm689 = vcmp.eq.s32.totalorder %v653, %v363
      %vm690 = vcmp.eq.s32.totalorder %v653, %v364
      %vm691 = vcmp.eq.s32.totalorder %v656, %v363
      %vm692 = vcmp.eq.s32.totalorder %v656, %v364
      %vm693 = vcmp.eq.s32.totalorder %v659, %v363
      %vm694 = vcmp.eq.s32.totalorder %v659, %v364
      %vm695 = vcmp.eq.s32.totalorder %v662, %v363
      %vm696 = vcmp.eq.s32.totalorder %v662, %v364
      %vm697 = vcmp.eq.s32.totalorder %v665, %v363
      %vm698 = vcmp.eq.s32.totalorder %v665, %v364
      %vm699 = vcmp.eq.s32.totalorder %v668, %v363
      %vm700 = vcmp.eq.s32.totalorder %v668, %v364
      %v701 = vsel %vm669, 1.0, 0.0
      %v702 = vsel %vm670, 1.0, 0.0
      %v703 = vsel %vm671, 1.0, 0.0
      %v704 = vsel %vm672, 1.0, 0.0
      %v705 = vsel %vm673, 1.0, 0.0
      %v706 = vsel %vm674, 1.0, 0.0
      %v707 = vsel %vm675, 1.0, 0.0
      %v708 = vsel %vm676, 1.0, 0.0
      %v709 = vsel %vm677, 1.0, 0.0
      %v710 = vsel %vm678, 1.0, 0.0
      %v711 = vsel %vm679, 1.0, 0.0
      %v712 = vsel %vm680, 1.0, 0.0
      %v713 = vsel %vm681, 1.0, 0.0
      %v714 = vsel %vm682, 1.0, 0.0
      %v715 = vsel %vm683, 1.0, 0.0
      %v716 = vsel %vm684, 1.0, 0.0
      %v717 = vsel %vm685, 1.0, 0.0
      %v718 = vsel %vm686, 1.0, 0.0
      %v719 = vsel %vm687, 1.0, 0.0
      %v720 = vsel %vm688, 1.0, 0.0
      %v721 = vsel %vm689, 1.0, 0.0
      %v722 = vsel %vm690, 1.0, 0.0
      %v723 = vsel %vm691, 1.0, 0.0
      %v724 = vsel %vm692, 1.0, 0.0
      %v725 = vsel %vm693, 1.0, 0.0
      %v726 = vsel %vm694, 1.0, 0.0
      %v727 = vsel %vm695, 1.0, 0.0
      %v728 = vsel %vm696, 1.0, 0.0
      %v729 = vsel %vm697, 1.0, 0.0
      %v730 = vsel %vm698, 1.0, 0.0
      %v731 = vsel %vm699, 1.0, 0.0
      %v732 = vsel %vm700, 1.0, 0.0
      %v733 = vadd.f32 %v589, %v701
      %v734 = vadd.f32 %v590, %v702
      %v735 = vadd.f32 %v591, %v703
      %v736 = vadd.f32 %v592, %v704
      %v737 = vadd.f32 %v593, %v705
      %v738 = vadd.f32 %v594, %v706
      %v739 = vadd.f32 %v595, %v707
      %v740 = vadd.f32 %v596, %v708
      %v741 = vadd.f32 %v597, %v709
      %v742 = vadd.f32 %v598, %v710
      %v743 = vadd.f32 %v599, %v711
      %v744 = vadd.f32 %v600, %v712
      %v745 = vadd.f32 %v601, %v713
      %v746 = vadd.f32 %v602, %v714
      %v747 = vadd.f32 %v603, %v715
      %v748 = vadd.f32 %v604, %v716
      %v749 = vadd.f32 %v605, %v717
      %v750 = vadd.f32 %v606, %v718
      %v751 = vadd.f32 %v607, %v719
      %v752 = vadd.f32 %v608, %v720
      %v753 = vadd.f32 %v609, %v721
      %v754 = vadd.f32 %v610, %v722
      %v755 = vadd.f32 %v611, %v723
      %v756 = vadd.f32 %v612, %v724
      %v757 = vadd.f32 %v613, %v725
      %v758 = vadd.f32 %v614, %v726
      %v759 = vadd.f32 %v615, %v727
      %v760 = vadd.f32 %v616, %v728
      %v761 = vadd.f32 %v617, %v729
      %v762 = vadd.f32 %v618, %v730
      %v763 = vadd.f32 %v619, %v731
      %v764 = vadd.f32 %v620, %v732
      %765 = vset.pattern.permute.xlu0 3
      %766 = vperm.xlu0 %765, %v346
      %v767 = vpop.permute.xlu0 %766
      %768 = vset.pattern.permute.xlu0 3
      %769 = vperm.xlu0 %768, %v347
      %v770 = vpop.permute.xlu0 %769
      %771 = vset.pattern.permute.xlu0 3
      %772 = vperm.xlu0 %771, %v348
      %v773 = vpop.permute.xlu0 %772
      %774 = vset.pattern.permute.xlu0 3
      %775 = vperm.xlu0 %774, %v349
      %v776 = vpop.permute.xlu0 %775
      %777 = vset.pattern.permute.xlu0 3
      %778 = vperm.xlu0 %777, %v350
      %v779 = vpop.permute.xlu0 %778
      %780 = vset.pattern.permute.xlu0 3
      %781 = vperm.xlu0 %780, %v351
      %v782 = vpop.permute.xlu0 %781
      %783 = vset.pattern.permute.xlu0 3
      %784 = vperm.xlu0 %783, %v352
      %v785 = vpop.permute.xlu0 %784
      %786 = vset.pattern.permute.xlu0 3
      %787 = vperm.xlu0 %786, %v353
      %v788 = vpop.permute.xlu0 %787
      %789 = vset.pattern.permute.xlu0 3
      %790 = vperm.xlu0 %789, %v354
      %v791 = vpop.permute.xlu0 %790
      %792 = vset.pattern.permute.xlu0 3
      %793 = vperm.xlu0 %792, %v355
      %v794 = vpop.permute.xlu0 %793
      %795 = vset.pattern.permute.xlu0 3
      %796 = vperm.xlu0 %795, %v356
      %v797 = vpop.permute.xlu0 %796
      %798 = vset.pattern.permute.xlu0 3
      %799 = vperm.xlu0 %798, %v357
      %v800 = vpop.permute.xlu0 %799
      %801 = vset.pattern.permute.xlu0 3
      %802 = vperm.xlu0 %801, %v358
      %v803 = vpop.permute.xlu0 %802
      %804 = vset.pattern.permute.xlu0 3
      %805 = vperm.xlu0 %804, %v359
      %v806 = vpop.permute.xlu0 %805
      %807 = vset.pattern.permute.xlu0 3
      %808 = vperm.xlu0 %807, %v360
      %v809 = vpop.permute.xlu0 %808
      %810 = vset.pattern.permute.xlu0 3
      %811 = vperm.xlu0 %810, %v361
      %v812 = vpop.permute.xlu0 %811
      %vm813 = vcmp.eq.s32.totalorder %v767, %v363
      %vm814 = vcmp.eq.s32.totalorder %v767, %v364
      %vm815 = vcmp.eq.s32.totalorder %v770, %v363
      %vm816 = vcmp.eq.s32.totalorder %v770, %v364
      %vm817 = vcmp.eq.s32.totalorder %v773, %v363
      %vm818 = vcmp.eq.s32.totalorder %v773, %v364
      %vm819 = vcmp.eq.s32.totalorder %v776, %v363
      %vm820 = vcmp.eq.s32.totalorder %v776, %v364
      %vm821 = vcmp.eq.s32.totalorder %v779, %v363
      %vm822 = vcmp.eq.s32.totalorder %v779, %v364
      %vm823 = vcmp.eq.s32.totalorder %v782, %v363
      %vm824 = vcmp.eq.s32.totalorder %v782, %v364
      %vm825 = vcmp.eq.s32.totalorder %v785, %v363
      %vm826 = vcmp.eq.s32.totalorder %v785, %v364
      %vm827 = vcmp.eq.s32.totalorder %v788, %v363
      %vm828 = vcmp.eq.s32.totalorder %v788, %v364
      %vm829 = vcmp.eq.s32.totalorder %v791, %v363
      %vm830 = vcmp.eq.s32.totalorder %v791, %v364
      %vm831 = vcmp.eq.s32.totalorder %v794, %v363
      %vm832 = vcmp.eq.s32.totalorder %v794, %v364
      %vm833 = vcmp.eq.s32.totalorder %v797, %v363
      %vm834 = vcmp.eq.s32.totalorder %v797, %v364
      %vm835 = vcmp.eq.s32.totalorder %v800, %v363
      %vm836 = vcmp.eq.s32.totalorder %v800, %v364
      %vm837 = vcmp.eq.s32.totalorder %v803, %v363
      %vm838 = vcmp.eq.s32.totalorder %v803, %v364
      %vm839 = vcmp.eq.s32.totalorder %v806, %v363
      %vm840 = vcmp.eq.s32.totalorder %v806, %v364
      %vm841 = vcmp.eq.s32.totalorder %v809, %v363
      %vm842 = vcmp.eq.s32.totalorder %v809, %v364
      %vm843 = vcmp.eq.s32.totalorder %v812, %v363
      %vm844 = vcmp.eq.s32.totalorder %v812, %v364
      %v845 = vsel %vm813, 1.0, 0.0
      %v846 = vsel %vm814, 1.0, 0.0
      %v847 = vsel %vm815, 1.0, 0.0
      %v848 = vsel %vm816, 1.0, 0.0
      %v849 = vsel %vm817, 1.0, 0.0
      %v850 = vsel %vm818, 1.0, 0.0
      %v851 = vsel %vm819, 1.0, 0.0
      %v852 = vsel %vm820, 1.0, 0.0
      %v853 = vsel %vm821, 1.0, 0.0
      %v854 = vsel %vm822, 1.0, 0.0
      %v855 = vsel %vm823, 1.0, 0.0
      %v856 = vsel %vm824, 1.0, 0.0
      %v857 = vsel %vm825, 1.0, 0.0
      %v858 = vsel %vm826, 1.0, 0.0
      %v859 = vsel %vm827, 1.0, 0.0
      %v860 = vsel %vm828, 1.0, 0.0
      %v861 = vsel %vm829, 1.0, 0.0
      %v862 = vsel %vm830, 1.0, 0.0
      %v863 = vsel %vm831, 1.0, 0.0
      %v864 = vsel %vm832, 1.0, 0.0
      %v865 = vsel %vm833, 1.0, 0.0
      %v866 = vsel %vm834, 1.0, 0.0
      %v867 = vsel %vm835, 1.0, 0.0
      %v868 = vsel %vm836, 1.0, 0.0
      %v869 = vsel %vm837, 1.0, 0.0
      %v870 = vsel %vm838, 1.0, 0.0
      %v871 = vsel %vm839, 1.0, 0.0
      %v872 = vsel %vm840, 1.0, 0.0
      %v873 = vsel %vm841, 1.0, 0.0
      %v874 = vsel %vm842, 1.0, 0.0
      %v875 = vsel %vm843, 1.0, 0.0
      %v876 = vsel %vm844, 1.0, 0.0
      %v877 = vadd.f32 %v733, %v845
      %v878 = vadd.f32 %v734, %v846
      %v879 = vadd.f32 %v735, %v847
      %v880 = vadd.f32 %v736, %v848
      %v881 = vadd.f32 %v737, %v849
      %v882 = vadd.f32 %v738, %v850
      %v883 = vadd.f32 %v739, %v851
      %v884 = vadd.f32 %v740, %v852
      %v885 = vadd.f32 %v741, %v853
      %v886 = vadd.f32 %v742, %v854
      %v887 = vadd.f32 %v743, %v855
      %v888 = vadd.f32 %v744, %v856
      %v889 = vadd.f32 %v745, %v857
      %v890 = vadd.f32 %v746, %v858
      %v891 = vadd.f32 %v747, %v859
      %v892 = vadd.f32 %v748, %v860
      %v893 = vadd.f32 %v749, %v861
      %v894 = vadd.f32 %v750, %v862
      %v895 = vadd.f32 %v751, %v863
      %v896 = vadd.f32 %v752, %v864
      %v897 = vadd.f32 %v753, %v865
      %v898 = vadd.f32 %v754, %v866
      %v899 = vadd.f32 %v755, %v867
      %v900 = vadd.f32 %v756, %v868
      %v901 = vadd.f32 %v757, %v869
      %v902 = vadd.f32 %v758, %v870
      %v903 = vadd.f32 %v759, %v871
      %v904 = vadd.f32 %v760, %v872
      %v905 = vadd.f32 %v761, %v873
      %v906 = vadd.f32 %v762, %v874
      %v907 = vadd.f32 %v763, %v875
      %v908 = vadd.f32 %v764, %v876
      %909 = vset.pattern.permute.xlu0 4
      %910 = vperm.xlu0 %909, %v346
      %v911 = vpop.permute.xlu0 %910
      %912 = vset.pattern.permute.xlu0 4
      %913 = vperm.xlu0 %912, %v347
      %v914 = vpop.permute.xlu0 %913
      %915 = vset.pattern.permute.xlu0 4
      %916 = vperm.xlu0 %915, %v348
      %v917 = vpop.permute.xlu0 %916
      %918 = vset.pattern.permute.xlu0 4
      %919 = vperm.xlu0 %918, %v349
      %v920 = vpop.permute.xlu0 %919
      %921 = vset.pattern.permute.xlu0 4
      %922 = vperm.xlu0 %921, %v350
      %v923 = vpop.permute.xlu0 %922
      %924 = vset.pattern.permute.xlu0 4
      %925 = vperm.xlu0 %924, %v351
      %v926 = vpop.permute.xlu0 %925
      %927 = vset.pattern.permute.xlu0 4
      %928 = vperm.xlu0 %927, %v352
      %v929 = vpop.permute.xlu0 %928
      %930 = vset.pattern.permute.xlu0 4
      %931 = vperm.xlu0 %930, %v353
      %v932 = vpop.permute.xlu0 %931
      %933 = vset.pattern.permute.xlu0 4
      %934 = vperm.xlu0 %933, %v354
      %v935 = vpop.permute.xlu0 %934
      %936 = vset.pattern.permute.xlu0 4
      %937 = vperm.xlu0 %936, %v355
      %v938 = vpop.permute.xlu0 %937
      %939 = vset.pattern.permute.xlu0 4
      %940 = vperm.xlu0 %939, %v356
      %v941 = vpop.permute.xlu0 %940
      %942 = vset.pattern.permute.xlu0 4
      %943 = vperm.xlu0 %942, %v357
      %v944 = vpop.permute.xlu0 %943
      %945 = vset.pattern.permute.xlu0 4
      %946 = vperm.xlu0 %945, %v358
      %v947 = vpop.permute.xlu0 %946
      %948 = vset.pattern.permute.xlu0 4
      %949 = vperm.xlu0 %948, %v359
      %v950 = vpop.permute.xlu0 %949
      %951 = vset.pattern.permute.xlu0 4
      %952 = vperm.xlu0 %951, %v360
      %v953 = vpop.permute.xlu0 %952
      %954 = vset.pattern.permute.xlu0 4
      %955 = vperm.xlu0 %954, %v361
      %v956 = vpop.permute.xlu0 %955
      %vm957 = vcmp.eq.s32.totalorder %v911, %v363
      %vm958 = vcmp.eq.s32.totalorder %v911, %v364
      %vm959 = vcmp.eq.s32.totalorder %v914, %v363
      %vm960 = vcmp.eq.s32.totalorder %v914, %v364
      %vm961 = vcmp.eq.s32.totalorder %v917, %v363
      %vm962 = vcmp.eq.s32.totalorder %v917, %v364
      %vm963 = vcmp.eq.s32.totalorder %v920, %v363
      %vm964 = vcmp.eq.s32.totalorder %v920, %v364
      %vm965 = vcmp.eq.s32.totalorder %v923, %v363
      %vm966 = vcmp.eq.s32.totalorder %v923, %v364
      %vm967 = vcmp.eq.s32.totalorder %v926, %v363
      %vm968 = vcmp.eq.s32.totalorder %v926, %v364
      %vm969 = vcmp.eq.s32.totalorder %v929, %v363
      %vm970 = vcmp.eq.s32.totalorder %v929, %v364
      %vm971 = vcmp.eq.s32.totalorder %v932, %v363
      %vm972 = vcmp.eq.s32.totalorder %v932, %v364
      %vm973 = vcmp.eq.s32.totalorder %v935, %v363
      %vm974 = vcmp.eq.s32.totalorder %v935, %v364
      %vm975 = vcmp.eq.s32.totalorder %v938, %v363
      %vm976 = vcmp.eq.s32.totalorder %v938, %v364
      %vm977 = vcmp.eq.s32.totalorder %v941, %v363
      %vm978 = vcmp.eq.s32.totalorder %v941, %v364
      %vm979 = vcmp.eq.s32.totalorder %v944, %v363
      %vm980 = vcmp.eq.s32.totalorder %v944, %v364
      %vm981 = vcmp.eq.s32.totalorder %v947, %v363
      %vm982 = vcmp.eq.s32.totalorder %v947, %v364
      %vm983 = vcmp.eq.s32.totalorder %v950, %v363
      %vm984 = vcmp.eq.s32.totalorder %v950, %v364
      %vm985 = vcmp.eq.s32.totalorder %v953, %v363
      %vm986 = vcmp.eq.s32.totalorder %v953, %v364
      %vm987 = vcmp.eq.s32.totalorder %v956, %v363
      %vm988 = vcmp.eq.s32.totalorder %v956, %v364
      %v989 = vsel %vm957, 1.0, 0.0
      %v990 = vsel %vm958, 1.0, 0.0
      %v991 = vsel %vm959, 1.0, 0.0
      %v992 = vsel %vm960, 1.0, 0.0
      %v993 = vsel %vm961, 1.0, 0.0
      %v994 = vsel %vm962, 1.0, 0.0
      %v995 = vsel %vm963, 1.0, 0.0
      %v996 = vsel %vm964, 1.0, 0.0
      %v997 = vsel %vm965, 1.0, 0.0
      %v998 = vsel %vm966, 1.0, 0.0
      %v999 = vsel %vm967, 1.0, 0.0
      %v1000 = vsel %vm968, 1.0, 0.0
      %v1001 = vsel %vm969, 1.0, 0.0
      %v1002 = vsel %vm970, 1.0, 0.0
      %v1003 = vsel %vm971, 1.0, 0.0
      %v1004 = vsel %vm972, 1.0, 0.0
      %v1005 = vsel %vm973, 1.0, 0.0
      %v1006 = vsel %vm974, 1.0, 0.0
      %v1007 = vsel %vm975, 1.0, 0.0
      %v1008 = vsel %vm976, 1.0, 0.0
      %v1009 = vsel %vm977, 1.0, 0.0
      %v1010 = vsel %vm978, 1.0, 0.0
      %v1011 = vsel %vm979, 1.0, 0.0
      %v1012 = vsel %vm980, 1.0, 0.0
      %v1013 = vsel %vm981, 1.0, 0.0
      %v1014 = vsel %vm982, 1.0, 0.0
      %v1015 = vsel %vm983, 1.0, 0.0
      %v1016 = vsel %vm984, 1.0, 0.0
      %v1017 = vsel %vm985, 1.0, 0.0
      %v1018 = vsel %vm986, 1.0, 0.0
      %v1019 = vsel %vm987, 1.0, 0.0
      %v1020 = vsel %vm988, 1.0, 0.0
      %v1021 = vadd.f32 %v877, %v989
      %v1022 = vadd.f32 %v878, %v990
      %v1023 = vadd.f32 %v879, %v991
      %v1024 = vadd.f32 %v880, %v992
      %v1025 = vadd.f32 %v881, %v993
      %v1026 = vadd.f32 %v882, %v994
      %v1027 = vadd.f32 %v883, %v995
      %v1028 = vadd.f32 %v884, %v996
      %v1029 = vadd.f32 %v885, %v997
      %v1030 = vadd.f32 %v886, %v998
      %v1031 = vadd.f32 %v887, %v999
      %v1032 = vadd.f32 %v888, %v1000
      %v1033 = vadd.f32 %v889, %v1001
      %v1034 = vadd.f32 %v890, %v1002
      %v1035 = vadd.f32 %v891, %v1003
      %v1036 = vadd.f32 %v892, %v1004
      %v1037 = vadd.f32 %v893, %v1005
      %v1038 = vadd.f32 %v894, %v1006
      %v1039 = vadd.f32 %v895, %v1007
      %v1040 = vadd.f32 %v896, %v1008
      %v1041 = vadd.f32 %v897, %v1009
      %v1042 = vadd.f32 %v898, %v1010
      %v1043 = vadd.f32 %v899, %v1011
      %v1044 = vadd.f32 %v900, %v1012
      %v1045 = vadd.f32 %v901, %v1013
      %v1046 = vadd.f32 %v902, %v1014
      %v1047 = vadd.f32 %v903, %v1015
      %v1048 = vadd.f32 %v904, %v1016
      %v1049 = vadd.f32 %v905, %v1017
      %v1050 = vadd.f32 %v906, %v1018
      %v1051 = vadd.f32 %v907, %v1019
      %v1052 = vadd.f32 %v908, %v1020
      %1053 = vset.pattern.permute.xlu0 5
      %1054 = vperm.xlu0 %1053, %v346
      %v1055 = vpop.permute.xlu0 %1054
      %1056 = vset.pattern.permute.xlu0 5
      %1057 = vperm.xlu0 %1056, %v347
      %v1058 = vpop.permute.xlu0 %1057
      %1059 = vset.pattern.permute.xlu0 5
      %1060 = vperm.xlu0 %1059, %v348
      %v1061 = vpop.permute.xlu0 %1060
      %1062 = vset.pattern.permute.xlu0 5
      %1063 = vperm.xlu0 %1062, %v349
      %v1064 = vpop.permute.xlu0 %1063
      %1065 = vset.pattern.permute.xlu0 5
      %1066 = vperm.xlu0 %1065, %v350
      %v1067 = vpop.permute.xlu0 %1066
      %1068 = vset.pattern.permute.xlu0 5
      %1069 = vperm.xlu0 %1068, %v351
      %v1070 = vpop.permute.xlu0 %1069
      %1071 = vset.pattern.permute.xlu0 5
      %1072 = vperm.xlu0 %1071, %v352
      %v1073 = vpop.permute.xlu0 %1072
      %1074 = vset.pattern.permute.xlu0 5
      %1075 = vperm.xlu0 %1074, %v353
      %v1076 = vpop.permute.xlu0 %1075
      %1077 = vset.pattern.permute.xlu0 5
      %1078 = vperm.xlu0 %1077, %v354
      %v1079 = vpop.permute.xlu0 %1078
      %1080 = vset.pattern.permute.xlu0 5
      %1081 = vperm.xlu0 %1080, %v355
      %v1082 = vpop.permute.xlu0 %1081
      %1083 = vset.pattern.permute.xlu0 5
      %1084 = vperm.xlu0 %1083, %v356
      %v1085 = vpop.permute.xlu0 %1084
      %1086 = vset.pattern.permute.xlu0 5
      %1087 = vperm.xlu0 %1086, %v357
      %v1088 = vpop.permute.xlu0 %1087
      %1089 = vset.pattern.permute.xlu0 5
      %1090 = vperm.xlu0 %1089, %v358
      %v1091 = vpop.permute.xlu0 %1090
      %1092 = vset.pattern.permute.xlu0 5
      %1093 = vperm.xlu0 %1092, %v359
      %v1094 = vpop.permute.xlu0 %1093
      %1095 = vset.pattern.permute.xlu0 5
      %1096 = vperm.xlu0 %1095, %v360
      %v1097 = vpop.permute.xlu0 %1096
      %1098 = vset.pattern.permute.xlu0 5
      %1099 = vperm.xlu0 %1098, %v361
      %v1100 = vpop.permute.xlu0 %1099
      %vm1101 = vcmp.eq.s32.totalorder %v1055, %v363
      %vm1102 = vcmp.eq.s32.totalorder %v1055, %v364
      %vm1103 = vcmp.eq.s32.totalorder %v1058, %v363
      %vm1104 = vcmp.eq.s32.totalorder %v1058, %v364
      %vm1105 = vcmp.eq.s32.totalorder %v1061, %v363
      %vm1106 = vcmp.eq.s32.totalorder %v1061, %v364
      %vm1107 = vcmp.eq.s32.totalorder %v1064, %v363
      %vm1108 = vcmp.eq.s32.totalorder %v1064, %v364
      %vm1109 = vcmp.eq.s32.totalorder %v1067, %v363
      %vm1110 = vcmp.eq.s32.totalorder %v1067, %v364
      %vm1111 = vcmp.eq.s32.totalorder %v1070, %v363
      %vm1112 = vcmp.eq.s32.totalorder %v1070, %v364
      %vm1113 = vcmp.eq.s32.totalorder %v1073, %v363
      %vm1114 = vcmp.eq.s32.totalorder %v1073, %v364
      %vm1115 = vcmp.eq.s32.totalorder %v1076, %v363
      %vm1116 = vcmp.eq.s32.totalorder %v1076, %v364
      %vm1117 = vcmp.eq.s32.totalorder %v1079, %v363
      %vm1118 = vcmp.eq.s32.totalorder %v1079, %v364
      %vm1119 = vcmp.eq.s32.totalorder %v1082, %v363
      %vm1120 = vcmp.eq.s32.totalorder %v1082, %v364
      %vm1121 = vcmp.eq.s32.totalorder %v1085, %v363
      %vm1122 = vcmp.eq.s32.totalorder %v1085, %v364
      %vm1123 = vcmp.eq.s32.totalorder %v1088, %v363
      %vm1124 = vcmp.eq.s32.totalorder %v1088, %v364
      %vm1125 = vcmp.eq.s32.totalorder %v1091, %v363
      %vm1126 = vcmp.eq.s32.totalorder %v1091, %v364
      %vm1127 = vcmp.eq.s32.totalorder %v1094, %v363
      %vm1128 = vcmp.eq.s32.totalorder %v1094, %v364
      %vm1129 = vcmp.eq.s32.totalorder %v1097, %v363
      %vm1130 = vcmp.eq.s32.totalorder %v1097, %v364
      %vm1131 = vcmp.eq.s32.totalorder %v1100, %v363
      %vm1132 = vcmp.eq.s32.totalorder %v1100, %v364
      %v1133 = vsel %vm1101, 1.0, 0.0
      %v1134 = vsel %vm1102, 1.0, 0.0
      %v1135 = vsel %vm1103, 1.0, 0.0
      %v1136 = vsel %vm1104, 1.0, 0.0
      %v1137 = vsel %vm1105, 1.0, 0.0
      %v1138 = vsel %vm1106, 1.0, 0.0
      %v1139 = vsel %vm1107, 1.0, 0.0
      %v1140 = vsel %vm1108, 1.0, 0.0
      %v1141 = vsel %vm1109, 1.0, 0.0
      %v1142 = vsel %vm1110, 1.0, 0.0
      %v1143 = vsel %vm1111, 1.0, 0.0
      %v1144 = vsel %vm1112, 1.0, 0.0
      %v1145 = vsel %vm1113, 1.0, 0.0
      %v1146 = vsel %vm1114, 1.0, 0.0
      %v1147 = vsel %vm1115, 1.0, 0.0
      %v1148 = vsel %vm1116, 1.0, 0.0
      %v1149 = vsel %vm1117, 1.0, 0.0
      %v1150 = vsel %vm1118, 1.0, 0.0
      %v1151 = vsel %vm1119, 1.0, 0.0
      %v1152 = vsel %vm1120, 1.0, 0.0
      %v1153 = vsel %vm1121, 1.0, 0.0
      %v1154 = vsel %vm1122, 1.0, 0.0
      %v1155 = vsel %vm1123, 1.0, 0.0
      %v1156 = vsel %vm1124, 1.0, 0.0
      %v1157 = vsel %vm1125, 1.0, 0.0
      %v1158 = vsel %vm1126, 1.0, 0.0
      %v1159 = vsel %vm1127, 1.0, 0.0
      %v1160 = vsel %vm1128, 1.0, 0.0
      %v1161 = vsel %vm1129, 1.0, 0.0
      %v1162 = vsel %vm1130, 1.0, 0.0
      %v1163 = vsel %vm1131, 1.0, 0.0
      %v1164 = vsel %vm1132, 1.0, 0.0
      %v1165 = vadd.f32 %v1021, %v1133
      %v1166 = vadd.f32 %v1022, %v1134
      %v1167 = vadd.f32 %v1023, %v1135
      %v1168 = vadd.f32 %v1024, %v1136
      %v1169 = vadd.f32 %v1025, %v1137
      %v1170 = vadd.f32 %v1026, %v1138
      %v1171 = vadd.f32 %v1027, %v1139
      %v1172 = vadd.f32 %v1028, %v1140
      %v1173 = vadd.f32 %v1029, %v1141
      %v1174 = vadd.f32 %v1030, %v1142
      %v1175 = vadd.f32 %v1031, %v1143
      %v1176 = vadd.f32 %v1032, %v1144
      %v1177 = vadd.f32 %v1033, %v1145
      %v1178 = vadd.f32 %v1034, %v1146
      %v1179 = vadd.f32 %v1035, %v1147
      %v1180 = vadd.f32 %v1036, %v1148
      %v1181 = vadd.f32 %v1037, %v1149
      %v1182 = vadd.f32 %v1038, %v1150
      %v1183 = vadd.f32 %v1039, %v1151
      %v1184 = vadd.f32 %v1040, %v1152
      %v1185 = vadd.f32 %v1041, %v1153
      %v1186 = vadd.f32 %v1042, %v1154
      %v1187 = vadd.f32 %v1043, %v1155
      %v1188 = vadd.f32 %v1044, %v1156
      %v1189 = vadd.f32 %v1045, %v1157
      %v1190 = vadd.f32 %v1046, %v1158
      %v1191 = vadd.f32 %v1047, %v1159
      %v1192 = vadd.f32 %v1048, %v1160
      %v1193 = vadd.f32 %v1049, %v1161
      %v1194 = vadd.f32 %v1050, %v1162
      %v1195 = vadd.f32 %v1051, %v1163
      %v1196 = vadd.f32 %v1052, %v1164
      %1197 = vset.pattern.permute.xlu0 6
      %1198 = vperm.xlu0 %1197, %v346
      %v1199 = vpop.permute.xlu0 %1198
      %1200 = vset.pattern.permute.xlu0 6
      %1201 = vperm.xlu0 %1200, %v347
      %v1202 = vpop.permute.xlu0 %1201
      %1203 = vset.pattern.permute.xlu0 6
      %1204 = vperm.xlu0 %1203, %v348
      %v1205 = vpop.permute.xlu0 %1204
      %1206 = vset.pattern.permute.xlu0 6
      %1207 = vperm.xlu0 %1206, %v349
      %v1208 = vpop.permute.xlu0 %1207
      %1209 = vset.pattern.permute.xlu0 6
      %1210 = vperm.xlu0 %1209, %v350
      %v1211 = vpop.permute.xlu0 %1210
      %1212 = vset.pattern.permute.xlu0 6
      %1213 = vperm.xlu0 %1212, %v351
      %v1214 = vpop.permute.xlu0 %1213
      %1215 = vset.pattern.permute.xlu0 6
      %1216 = vperm.xlu0 %1215, %v352
      %v1217 = vpop.permute.xlu0 %1216
      %1218 = vset.pattern.permute.xlu0 6
      %1219 = vperm.xlu0 %1218, %v353
      %v1220 = vpop.permute.xlu0 %1219
      %1221 = vset.pattern.permute.xlu0 6
      %1222 = vperm.xlu0 %1221, %v354
      %v1223 = vpop.permute.xlu0 %1222
      %1224 = vset.pattern.permute.xlu0 6
      %1225 = vperm.xlu0 %1224, %v355
      %v1226 = vpop.permute.xlu0 %1225
      %1227 = vset.pattern.permute.xlu0 6
      %1228 = vperm.xlu0 %1227, %v356
      %v1229 = vpop.permute.xlu0 %1228
      %1230 = vset.pattern.permute.xlu0 6
      %1231 = vperm.xlu0 %1230, %v357
      %v1232 = vpop.permute.xlu0 %1231
      %1233 = vset.pattern.permute.xlu0 6
      %1234 = vperm.xlu0 %1233, %v358
      %v1235 = vpop.permute.xlu0 %1234
      %1236 = vset.pattern.permute.xlu0 6
      %1237 = vperm.xlu0 %1236, %v359
      %v1238 = vpop.permute.xlu0 %1237
      %1239 = vset.pattern.permute.xlu0 6
      %1240 = vperm.xlu0 %1239, %v360
      %v1241 = vpop.permute.xlu0 %1240
      %1242 = vset.pattern.permute.xlu0 6
      %1243 = vperm.xlu0 %1242, %v361
      %v1244 = vpop.permute.xlu0 %1243
      %vm1245 = vcmp.eq.s32.totalorder %v1199, %v363
      %vm1246 = vcmp.eq.s32.totalorder %v1199, %v364
      %vm1247 = vcmp.eq.s32.totalorder %v1202, %v363
      %vm1248 = vcmp.eq.s32.totalorder %v1202, %v364
      %vm1249 = vcmp.eq.s32.totalorder %v1205, %v363
      %vm1250 = vcmp.eq.s32.totalorder %v1205, %v364
      %vm1251 = vcmp.eq.s32.totalorder %v1208, %v363
      %vm1252 = vcmp.eq.s32.totalorder %v1208, %v364
      %vm1253 = vcmp.eq.s32.totalorder %v1211, %v363
      %vm1254 = vcmp.eq.s32.totalorder %v1211, %v364
      %vm1255 = vcmp.eq.s32.totalorder %v1214, %v363
      %vm1256 = vcmp.eq.s32.totalorder %v1214, %v364
      %vm1257 = vcmp.eq.s32.totalorder %v1217, %v363
      %vm1258 = vcmp.eq.s32.totalorder %v1217, %v364
      %vm1259 = vcmp.eq.s32.totalorder %v1220, %v363
      %vm1260 = vcmp.eq.s32.totalorder %v1220, %v364
      %vm1261 = vcmp.eq.s32.totalorder %v1223, %v363
      %vm1262 = vcmp.eq.s32.totalorder %v1223, %v364
      %vm1263 = vcmp.eq.s32.totalorder %v1226, %v363
      %vm1264 = vcmp.eq.s32.totalorder %v1226, %v364
      %vm1265 = vcmp.eq.s32.totalorder %v1229, %v363
      %vm1266 = vcmp.eq.s32.totalorder %v1229, %v364
      %vm1267 = vcmp.eq.s32.totalorder %v1232, %v363
      %vm1268 = vcmp.eq.s32.totalorder %v1232, %v364
      %vm1269 = vcmp.eq.s32.totalorder %v1235, %v363
      %vm1270 = vcmp.eq.s32.totalorder %v1235, %v364
      %vm1271 = vcmp.eq.s32.totalorder %v1238, %v363
      %vm1272 = vcmp.eq.s32.totalorder %v1238, %v364
      %vm1273 = vcmp.eq.s32.totalorder %v1241, %v363
      %vm1274 = vcmp.eq.s32.totalorder %v1241, %v364
      %vm1275 = vcmp.eq.s32.totalorder %v1244, %v363
      %vm1276 = vcmp.eq.s32.totalorder %v1244, %v364
      %v1277 = vsel %vm1245, 1.0, 0.0
      %v1278 = vsel %vm1246, 1.0, 0.0
      %v1279 = vsel %vm1247, 1.0, 0.0
      %v1280 = vsel %vm1248, 1.0, 0.0
      %v1281 = vsel %vm1249, 1.0, 0.0
      %v1282 = vsel %vm1250, 1.0, 0.0
      %v1283 = vsel %vm1251, 1.0, 0.0
      %v1284 = vsel %vm1252, 1.0, 0.0
      %v1285 = vsel %vm1253, 1.0, 0.0
      %v1286 = vsel %vm1254, 1.0, 0.0
      %v1287 = vsel %vm1255, 1.0, 0.0
      %v1288 = vsel %vm1256, 1.0, 0.0
      %v1289 = vsel %vm1257, 1.0, 0.0
      %v1290 = vsel %vm1258, 1.0, 0.0
      %v1291 = vsel %vm1259, 1.0, 0.0
      %v1292 = vsel %vm1260, 1.0, 0.0
      %v1293 = vsel %vm1261, 1.0, 0.0
      %v1294 = vsel %vm1262, 1.0, 0.0
      %v1295 = vsel %vm1263, 1.0, 0.0
      %v1296 = vsel %vm1264, 1.0, 0.0
      %v1297 = vsel %vm1265, 1.0, 0.0
      %v1298 = vsel %vm1266, 1.0, 0.0
      %v1299 = vsel %vm1267, 1.0, 0.0
      %v1300 = vsel %vm1268, 1.0, 0.0
      %v1301 = vsel %vm1269, 1.0, 0.0
      %v1302 = vsel %vm1270, 1.0, 0.0
      %v1303 = vsel %vm1271, 1.0, 0.0
      %v1304 = vsel %vm1272, 1.0, 0.0
      %v1305 = vsel %vm1273, 1.0, 0.0
      %v1306 = vsel %vm1274, 1.0, 0.0
      %v1307 = vsel %vm1275, 1.0, 0.0
      %v1308 = vsel %vm1276, 1.0, 0.0
      %v1309 = vadd.f32 %v1165, %v1277
      %v1310 = vadd.f32 %v1166, %v1278
      %v1311 = vadd.f32 %v1167, %v1279
      %v1312 = vadd.f32 %v1168, %v1280
      %v1313 = vadd.f32 %v1169, %v1281
      %v1314 = vadd.f32 %v1170, %v1282
      %v1315 = vadd.f32 %v1171, %v1283
      %v1316 = vadd.f32 %v1172, %v1284
      %v1317 = vadd.f32 %v1173, %v1285
      %v1318 = vadd.f32 %v1174, %v1286
      %v1319 = vadd.f32 %v1175, %v1287
      %v1320 = vadd.f32 %v1176, %v1288
      %v1321 = vadd.f32 %v1177, %v1289
      %v1322 = vadd.f32 %v1178, %v1290
      %v1323 = vadd.f32 %v1179, %v1291
      %v1324 = vadd.f32 %v1180, %v1292
      %v1325 = vadd.f32 %v1181, %v1293
      %v1326 = vadd.f32 %v1182, %v1294
      %v1327 = vadd.f32 %v1183, %v1295
      %v1328 = vadd.f32 %v1184, %v1296
      %v1329 = vadd.f32 %v1185, %v1297
      %v1330 = vadd.f32 %v1186, %v1298
      %v1331 = vadd.f32 %v1187, %v1299
      %v1332 = vadd.f32 %v1188, %v1300
      %v1333 = vadd.f32 %v1189, %v1301
      %v1334 = vadd.f32 %v1190, %v1302
      %v1335 = vadd.f32 %v1191, %v1303
      %v1336 = vadd.f32 %v1192, %v1304
      %v1337 = vadd.f32 %v1193, %v1305
      %v1338 = vadd.f32 %v1194, %v1306
      %v1339 = vadd.f32 %v1195, %v1307
      %v1340 = vadd.f32 %v1196, %v1308
      %1341 = vset.pattern.permute.xlu0 7
      %1342 = vperm.xlu0 %1341, %v346
      %v1343 = vpop.permute.xlu0 %1342
      %1344 = vset.pattern.permute.xlu0 7
      %1345 = vperm.xlu0 %1344, %v347
      %v1346 = vpop.permute.xlu0 %1345
      %1347 = vset.pattern.permute.xlu0 7
      %1348 = vperm.xlu0 %1347, %v348
      %v1349 = vpop.permute.xlu0 %1348
      %1350 = vset.pattern.permute.xlu0 7
      %1351 = vperm.xlu0 %1350, %v349
      %v1352 = vpop.permute.xlu0 %1351
      %1353 = vset.pattern.permute.xlu0 7
      %1354 = vperm.xlu0 %1353, %v350
      %v1355 = vpop.permute.xlu0 %1354
      %1356 = vset.pattern.permute.xlu0 7
      %1357 = vperm.xlu0 %1356, %v351
      %v1358 = vpop.permute.xlu0 %1357
      %1359 = vset.pattern.permute.xlu0 7
      %1360 = vperm.xlu0 %1359, %v352
      %v1361 = vpop.permute.xlu0 %1360
      %1362 = vset.pattern.permute.xlu0 7
      %1363 = vperm.xlu0 %1362, %v353
      %v1364 = vpop.permute.xlu0 %1363
      %1365 = vset.pattern.permute.xlu0 7
      %1366 = vperm.xlu0 %1365, %v354
      %v1367 = vpop.permute.xlu0 %1366
      %1368 = vset.pattern.permute.xlu0 7
      %1369 = vperm.xlu0 %1368, %v355
      %v1370 = vpop.permute.xlu0 %1369
      %1371 = vset.pattern.permute.xlu0 7
      %1372 = vperm.xlu0 %1371, %v356
      %v1373 = vpop.permute.xlu0 %1372
      %1374 = vset.pattern.permute.xlu0 7
      %1375 = vperm.xlu0 %1374, %v357
      %v1376 = vpop.permute.xlu0 %1375
      %1377 = vset.pattern.permute.xlu0 7
      %1378 = vperm.xlu0 %1377, %v358
      %v1379 = vpop.permute.xlu0 %1378
      %1380 = vset.pattern.permute.xlu0 7
      %1381 = vperm.xlu0 %1380, %v359
      %v1382 = vpop.permute.xlu0 %1381
      %1383 = vset.pattern.permute.xlu0 7
      %1384 = vperm.xlu0 %1383, %v360
      %v1385 = vpop.permute.xlu0 %1384
      %1386 = vset.pattern.permute.xlu0 7
      %1387 = vperm.xlu0 %1386, %v361
      %v1388 = vpop.permute.xlu0 %1387
      %vm1389 = vcmp.eq.s32.totalorder %v1343, %v363
      %vm1390 = vcmp.eq.s32.totalorder %v1343, %v364
      %vm1391 = vcmp.eq.s32.totalorder %v1346, %v363
      %vm1392 = vcmp.eq.s32.totalorder %v1346, %v364
      %vm1393 = vcmp.eq.s32.totalorder %v1349, %v363
      %vm1394 = vcmp.eq.s32.totalorder %v1349, %v364
      %vm1395 = vcmp.eq.s32.totalorder %v1352, %v363
      %vm1396 = vcmp.eq.s32.totalorder %v1352, %v364
      %vm1397 = vcmp.eq.s32.totalorder %v1355, %v363
      %vm1398 = vcmp.eq.s32.totalorder %v1355, %v364
      %vm1399 = vcmp.eq.s32.totalorder %v1358, %v363
      %vm1400 = vcmp.eq.s32.totalorder %v1358, %v364
      %vm1401 = vcmp.eq.s32.totalorder %v1361, %v363
      %vm1402 = vcmp.eq.s32.totalorder %v1361, %v364
      %vm1403 = vcmp.eq.s32.totalorder %v1364, %v363
      %vm1404 = vcmp.eq.s32.totalorder %v1364, %v364
      %vm1405 = vcmp.eq.s32.totalorder %v1367, %v363
      %vm1406 = vcmp.eq.s32.totalorder %v1367, %v364
      %vm1407 = vcmp.eq.s32.totalorder %v1370, %v363
      %vm1408 = vcmp.eq.s32.totalorder %v1370, %v364
      %vm1409 = vcmp.eq.s32.totalorder %v1373, %v363
      %vm1410 = vcmp.eq.s32.totalorder %v1373, %v364
      %vm1411 = vcmp.eq.s32.totalorder %v1376, %v363
      %vm1412 = vcmp.eq.s32.totalorder %v1376, %v364
      %vm1413 = vcmp.eq.s32.totalorder %v1379, %v363
      %vm1414 = vcmp.eq.s32.totalorder %v1379, %v364
      %vm1415 = vcmp.eq.s32.totalorder %v1382, %v363
      %vm1416 = vcmp.eq.s32.totalorder %v1382, %v364
      %vm1417 = vcmp.eq.s32.totalorder %v1385, %v363
      %vm1418 = vcmp.eq.s32.totalorder %v1385, %v364
      %vm1419 = vcmp.eq.s32.totalorder %v1388, %v363
      %vm1420 = vcmp.eq.s32.totalorder %v1388, %v364
      %v1421 = vsel %vm1389, 1.0, 0.0
      %v1422 = vsel %vm1390, 1.0, 0.0
      %v1423 = vsel %vm1391, 1.0, 0.0
      %v1424 = vsel %vm1392, 1.0, 0.0
      %v1425 = vsel %vm1393, 1.0, 0.0
      %v1426 = vsel %vm1394, 1.0, 0.0
      %v1427 = vsel %vm1395, 1.0, 0.0
      %v1428 = vsel %vm1396, 1.0, 0.0
      %v1429 = vsel %vm1397, 1.0, 0.0
      %v1430 = vsel %vm1398, 1.0, 0.0
      %v1431 = vsel %vm1399, 1.0, 0.0
      %v1432 = vsel %vm1400, 1.0, 0.0
      %v1433 = vsel %vm1401, 1.0, 0.0
      %v1434 = vsel %vm1402, 1.0, 0.0
      %v1435 = vsel %vm1403, 1.0, 0.0
      %v1436 = vsel %vm1404, 1.0, 0.0
      %v1437 = vsel %vm1405, 1.0, 0.0
      %v1438 = vsel %vm1406, 1.0, 0.0
      %v1439 = vsel %vm1407, 1.0, 0.0
      %v1440 = vsel %vm1408, 1.0, 0.0
      %v1441 = vsel %vm1409, 1.0, 0.0
      %v1442 = vsel %vm1410, 1.0, 0.0
      %v1443 = vsel %vm1411, 1.0, 0.0
      %v1444 = vsel %vm1412, 1.0, 0.0
      %v1445 = vsel %vm1413, 1.0, 0.0
      %v1446 = vsel %vm1414, 1.0, 0.0
      %v1447 = vsel %vm1415, 1.0, 0.0
      %v1448 = vsel %vm1416, 1.0, 0.0
      %v1449 = vsel %vm1417, 1.0, 0.0
      %v1450 = vsel %vm1418, 1.0, 0.0
      %v1451 = vsel %vm1419, 1.0, 0.0
      %v1452 = vsel %vm1420, 1.0, 0.0
      %v1453 = vadd.f32 %v1309, %v1421
      %v1454 = vadd.f32 %v1310, %v1422
      %v1455 = vadd.f32 %v1311, %v1423
      %v1456 = vadd.f32 %v1312, %v1424
      %v1457 = vadd.f32 %v1313, %v1425
      %v1458 = vadd.f32 %v1314, %v1426
      %v1459 = vadd.f32 %v1315, %v1427
      %v1460 = vadd.f32 %v1316, %v1428
      %v1461 = vadd.f32 %v1317, %v1429
      %v1462 = vadd.f32 %v1318, %v1430
      %v1463 = vadd.f32 %v1319, %v1431
      %v1464 = vadd.f32 %v1320, %v1432
      %v1465 = vadd.f32 %v1321, %v1433
      %v1466 = vadd.f32 %v1322, %v1434
      %v1467 = vadd.f32 %v1323, %v1435
      %v1468 = vadd.f32 %v1324, %v1436
      %v1469 = vadd.f32 %v1325, %v1437
      %v1470 = vadd.f32 %v1326, %v1438
      %v1471 = vadd.f32 %v1327, %v1439
      %v1472 = vadd.f32 %v1328, %v1440
      %v1473 = vadd.f32 %v1329, %v1441
      %v1474 = vadd.f32 %v1330, %v1442
      %v1475 = vadd.f32 %v1331, %v1443
      %v1476 = vadd.f32 %v1332, %v1444
      %v1477 = vadd.f32 %v1333, %v1445
      %v1478 = vadd.f32 %v1334, %v1446
      %v1479 = vadd.f32 %v1335, %v1447
      %v1480 = vadd.f32 %v1336, %v1448
      %v1481 = vadd.f32 %v1337, %v1449
      %v1482 = vadd.f32 %v1338, %v1450
      %v1483 = vadd.f32 %v1339, %v1451
      %v1484 = vadd.f32 %v1340, %v1452
      %v1485 = vpack.c.bf16 %v1455, %v1453
      %v1486 = vpack.c.bf16 %v1456, %v1454
      %v1487 = vpack.c.bf16 %v1459, %v1457
      %v1488 = vpack.c.bf16 %v1460, %v1458
      %v1489 = vpack.c.bf16 %v1463, %v1461
      %v1490 = vpack.c.bf16 %v1464, %v1462
      %v1491 = vpack.c.bf16 %v1467, %v1465
      %v1492 = vpack.c.bf16 %v1468, %v1466
      %v1493 = vpack.c.bf16 %v1471, %v1469
      %v1494 = vpack.c.bf16 %v1472, %v1470
      %v1495 = vpack.c.bf16 %v1475, %v1473
      %v1496 = vpack.c.bf16 %v1476, %v1474
      %v1497 = vpack.c.bf16 %v1479, %v1477
      %v1498 = vpack.c.bf16 %v1480, %v1478
      %v1499 = vpack.c.bf16 %v1483, %v1481
      %v1500 = vpack.c.bf16 %v1484, %v1482
      %v1501 = vld [vmem:[%s1] sm:$0xff]
      %v1502 = vld [vmem:[%s1 + $0x8] sm:$0xff]
      %v1503 = vld [vmem:[%s1 + $0x10] sm:$0xff]
      %v1504 = vld [vmem:[%s1 + $0x18] sm:$0xff]
      %v1505 = vld [vmem:[%s1 + $0x20] sm:$0xff]
      %v1506 = vld [vmem:[%s1 + $0x28] sm:$0xff]
      %v1507 = vld [vmem:[%s1 + $0x30] sm:$0xff]
      %v1508 = vld [vmem:[%s1 + $0x38] sm:$0xff]
      %v1509 = vld [vmem:[%s1 + $0x40] sm:$0xff]
      %v1510 = vld [vmem:[%s1 + $0x48] sm:$0xff]
      %v1511 = vld [vmem:[%s1 + $0x50] sm:$0xff]
      %v1512 = vld [vmem:[%s1 + $0x58] sm:$0xff]
      %v1513 = vld [vmem:[%s1 + $0x60] sm:$0xff]
      %v1514 = vld [vmem:[%s1 + $0x68] sm:$0xff]
      %v1515 = vld [vmem:[%s1 + $0x70] sm:$0xff]
      %v1516 = vld [vmem:[%s1 + $0x78] sm:$0xff]
      %v1517 = vld [vmem:[%s1 + $0x80] sm:$0xff]
      %v1518 = vld [vmem:[%s1 + $0x88] sm:$0xff]
      %v1519 = vld [vmem:[%s1 + $0x90] sm:$0xff]
      %v1520 = vld [vmem:[%s1 + $0x98] sm:$0xff]
      %v1521 = vld [vmem:[%s1 + $0xa0] sm:$0xff]
      %v1522 = vld [vmem:[%s1 + $0xa8] sm:$0xff]
      %v1523 = vld [vmem:[%s1 + $0xb0] sm:$0xff]
      %v1524 = vld [vmem:[%s1 + $0xb8] sm:$0xff]
      %v1525 = vld [vmem:[%s1 + $0xc0] sm:$0xff]
      %v1526 = vld [vmem:[%s1 + $0xc8] sm:$0xff]
      %v1527 = vld [vmem:[%s1 + $0xd0] sm:$0xff]
      %v1528 = vld [vmem:[%s1 + $0xd8] sm:$0xff]
      %v1529 = vld [vmem:[%s1 + $0xe0] sm:$0xff]
      %v1530 = vld [vmem:[%s1 + $0xe8] sm:$0xff]
      %v1531 = vld [vmem:[%s1 + $0xf0] sm:$0xff]
      %v1532 = vld [vmem:[%s1 + $0xf8] sm:$0xff]
      %v1533 = vpack.c.bf16 %v1502, %v1501
      %v1534 = vpack.c.bf16 %v1504, %v1503
      %v1535 = vpack.c.bf16 %v1506, %v1505
      %v1536 = vpack.c.bf16 %v1508, %v1507
      %v1537 = vpack.c.bf16 %v1510, %v1509
      %v1538 = vpack.c.bf16 %v1512, %v1511
      %v1539 = vpack.c.bf16 %v1514, %v1513
      %v1540 = vpack.c.bf16 %v1516, %v1515
      %v1541 = vpack.c.bf16 %v1518, %v1517
      %v1542 = vpack.c.bf16 %v1520, %v1519
      %v1543 = vpack.c.bf16 %v1522, %v1521
      %v1544 = vpack.c.bf16 %v1524, %v1523
      %v1545 = vpack.c.bf16 %v1526, %v1525
      %v1546 = vpack.c.bf16 %v1528, %v1527
      %v1547 = vpack.c.bf16 %v1530, %v1529
      %v1548 = vpack.c.bf16 %v1532, %v1531
      %1549 = vmatprep.subr.bf16.mxu0 0
      %1550 = vmatpush1.bf16.msra.mxu0 %v1533
      %1551 = vmatprep.subr.bf16.mxu0 0
      %1552 = vmatpush1.bf16.msra.mxu0 %v1534
      %1553 = vmatprep.subr.bf16.mxu0 0
      %1554 = vmatpush1.bf16.msra.mxu0 %v1535
      %1555 = vmatprep.subr.bf16.mxu0 0
      %1556 = vmatpush1.bf16.msra.mxu0 %v1536
      %1557 = vmatprep.subr.bf16.mxu0 0
      %1558 = vmatpush1.bf16.msra.mxu0 %v1537
      %1559 = vmatprep.subr.bf16.mxu0 0
      %1560 = vmatpush1.bf16.msra.mxu0 %v1538
      %1561 = vmatprep.subr.bf16.mxu0 0
      %1562 = vmatpush1.bf16.msra.mxu0 %v1539
      %1563 = vmatprep.subr.bf16.mxu0 0
      %1564 = vmatpush1.bf16.msra.mxu0 %v1540
      %1565 = vmatprep.subr.bf16.mxu0 0
      %1566 = vmatpush1.bf16.msra.mxu0 %v1541
      %1567 = vmatprep.subr.bf16.mxu0 0
      %1568 = vmatpush1.bf16.msra.mxu0 %v1542
      %1569 = vmatprep.subr.bf16.mxu0 0
      %1570 = vmatpush1.bf16.msra.mxu0 %v1543
      %1571 = vmatprep.subr.bf16.mxu0 0
      %1572 = vmatpush1.bf16.msra.mxu0 %v1544
      %1573 = vmatprep.subr.bf16.mxu0 0
      %1574 = vmatpush1.bf16.msra.mxu0 %v1545
      %1575 = vmatprep.subr.bf16.mxu0 0
      %1576 = vmatpush1.bf16.msra.mxu0 %v1546
      %1577 = vmatprep.subr.bf16.mxu0 0
      %1578 = vmatpush1.bf16.msra.mxu0 %v1547
      %1579 = vmatprep.subr.bf16.mxu0 0
      %1580 = vmatpush1.bf16.msra.mxu0 %v1548
      %1581 = vmatprep.mubr.bf16.mxu0 %v1486
      %1582 = vmatmul.mubr.bf16.gmra.mrb[0].mxu0 %v1485
      %v1583 = vpop.f32.mrb[0].mxu0
      %v1584 = vadd.f32 0.0, %v1583
      %v1585 = vpop.f32.mrb[0].mxu0
      %v1586 = vpop.f32.mrb[0].mxu0
      %v1587 = vadd.f32 0.0, %v1586
      %v1588 = vpop.f32.mrb[0].mxu0
      %1589 = vmatprep.mubr.bf16.mxu0 %v1488
      %1590 = vmatmul.mubr.bf16.gmra.mrb[0].mxu0 %v1487
      %v1591 = vpop.f32.mrb[0].mxu0
      %v1592 = vadd.f32 0.0, %v1591
      %v1593 = vpop.f32.mrb[0].mxu0
      %v1594 = vpop.f32.mrb[0].mxu0
      %v1595 = vadd.f32 0.0, %v1594
      %v1596 = vpop.f32.mrb[0].mxu0
      %1597 = vmatprep.mubr.bf16.mxu0 %v1490
      %1598 = vmatmul.mubr.bf16.gmra.mrb[0].mxu0 %v1489
      %v1599 = vpop.f32.mrb[0].mxu0
      %v1600 = vadd.f32 0.0, %v1599
      %v1601 = vpop.f32.mrb[0].mxu0
      %v1602 = vpop.f32.mrb[0].mxu0
      %v1603 = vadd.f32 0.0, %v1602
      %v1604 = vpop.f32.mrb[0].mxu0
      %1605 = vmatprep.mubr.bf16.mxu0 %v1492
      %1606 = vmatmul.mubr.bf16.gmra.mrb[0].mxu0 %v1491
      %v1607 = vpop.f32.mrb[0].mxu0
      %v1608 = vadd.f32 0.0, %v1607
      %v1609 = vpop.f32.mrb[0].mxu0
      %v1610 = vpop.f32.mrb[0].mxu0
      %v1611 = vadd.f32 0.0, %v1610
      %v1612 = vpop.f32.mrb[0].mxu0
      %1613 = vmatprep.mubr.bf16.mxu0 %v1494
      %1614 = vmatmul.mubr.bf16.gmra.mrb[0].mxu0 %v1493
      %v1615 = vpop.f32.mrb[0].mxu0
      %v1616 = vadd.f32 0.0, %v1615
      %v1617 = vpop.f32.mrb[0].mxu0
      %v1618 = vpop.f32.mrb[0].mxu0
      %v1619 = vadd.f32 0.0, %v1618
      %v1620 = vpop.f32.mrb[0].mxu0
      %1621 = vmatprep.mubr.bf16.mxu0 %v1496
      %1622 = vmatmul.mubr.bf16.gmra.mrb[0].mxu0 %v1495
      %v1623 = vpop.f32.mrb[0].mxu0
      %v1624 = vadd.f32 0.0, %v1623
      %v1625 = vpop.f32.mrb[0].mxu0
      %v1626 = vpop.f32.mrb[0].mxu0
      %v1627 = vadd.f32 0.0, %v1626
      %v1628 = vpop.f32.mrb[0].mxu0
      %1629 = vmatprep.mubr.bf16.mxu0 %v1498
      %1630 = vmatmul.mubr.bf16.gmra.mrb[0].mxu0 %v1497
      %v1631 = vpop.f32.mrb[0].mxu0
      %v1632 = vadd.f32 0.0, %v1631
      %v1633 = vpop.f32.mrb[0].mxu0
      %v1634 = vpop.f32.mrb[0].mxu0
      %v1635 = vadd.f32 0.0, %v1634
      %v1636 = vpop.f32.mrb[0].mxu0
      %1637 = vmatprep.mubr.bf16.mxu0 %v1500
      %1638 = vmatmul.mubr.bf16.gmra.mrb[0].mxu0 %v1499
      %v1639 = vpop.f32.mrb[0].mxu0
      %v1640 = vadd.f32 0.0, %v1639
      %v1641 = vpop.f32.mrb[0].mxu0
      %v1642 = vpop.f32.mrb[0].mxu0
      %v1643 = vadd.f32 0.0, %v1642
      %v1644 = vpop.f32.mrb[0].mxu0
      %1645 = vdwg.mxu0
      %v1646 = vmul.f32 %v1584, 0.125
      %v1647 = vmul.f32 %v1587, 0.125
      %v1648 = vmul.f32 %v1592, 0.125
      %v1649 = vmul.f32 %v1595, 0.125
      %v1650 = vmul.f32 %v1600, 0.125
      %v1651 = vmul.f32 %v1603, 0.125
      %v1652 = vmul.f32 %v1608, 0.125
      %v1653 = vmul.f32 %v1611, 0.125
      %v1654 = vmul.f32 %v1616, 0.125
      %v1655 = vmul.f32 %v1619, 0.125
      %v1656 = vmul.f32 %v1624, 0.125
      %v1657 = vmul.f32 %v1627, 0.125
      %v1658 = vmul.f32 %v1632, 0.125
      %v1659 = vmul.f32 %v1635, 0.125
      %v1660 = vmul.f32 %v1640, 0.125
      %v1661 = vmul.f32 %v1643, 0.125
      %v1662 = vld [vmem:[%s323] sm:$0xff]
      %v1663 = vld [vmem:[%s323 + $0x8] sm:$0xff]
      %v1664 = vld [vmem:[%s323 + $0x10] sm:$0xff]
      %v1665 = vld [vmem:[%s323 + $0x18] sm:$0xff]
      %v1666 = vld [vmem:[%s323 + $0x20] sm:$0xff]
      %v1667 = vld [vmem:[%s323 + $0x28] sm:$0xff]
      %v1668 = vld [vmem:[%s323 + $0x30] sm:$0xff]
      %v1669 = vld [vmem:[%s323 + $0x38] sm:$0xff]
      %v1670 = vld [vmem:[%s323 + $0x40] sm:$0xff]
      %v1671 = vld [vmem:[%s323 + $0x48] sm:$0xff]
      %v1672 = vld [vmem:[%s323 + $0x50] sm:$0xff]
      %v1673 = vld [vmem:[%s323 + $0x58] sm:$0xff]
      %v1674 = vld [vmem:[%s323 + $0x60] sm:$0xff]
      %v1675 = vld [vmem:[%s323 + $0x68] sm:$0xff]
      %v1676 = vld [vmem:[%s323 + $0x70] sm:$0xff]
      %v1677 = vld [vmem:[%s323 + $0x78] sm:$0xff]
      %v1678 = vpack.c.bf16 %v1663, %v1662
      %v1679 = vpack.c.bf16 %v1665, %v1664
      %v1680 = vpack.c.bf16 %v1667, %v1666
      %v1681 = vpack.c.bf16 %v1669, %v1668
      %v1682 = vpack.c.bf16 %v1671, %v1670
      %v1683 = vpack.c.bf16 %v1673, %v1672
      %v1684 = vpack.c.bf16 %v1675, %v1674
      %v1685 = vpack.c.bf16 %v1677, %v1676
      %v1686 = vld [vmem:[%s328] sm:$0xff]
      %v1687 = vld [vmem:[%s328 + $0x8] sm:$0xff]
      %v1688 = vld [vmem:[%s328 + $0x10] sm:$0xff]
      %v1689 = vld [vmem:[%s328 + $0x18] sm:$0xff]
      %v1690 = vld [vmem:[%s328 + $0x20] sm:$0xff]
      %v1691 = vld [vmem:[%s328 + $0x28] sm:$0xff]
      %v1692 = vld [vmem:[%s328 + $0x30] sm:$0xff]
      %v1693 = vld [vmem:[%s328 + $0x38] sm:$0xff]
      %v1694 = vld [vmem:[%s328 + $0x40] sm:$0xff]
      %v1695 = vld [vmem:[%s328 + $0x48] sm:$0xff]
      %v1696 = vld [vmem:[%s328 + $0x50] sm:$0xff]
      %v1697 = vld [vmem:[%s328 + $0x58] sm:$0xff]
      %v1698 = vld [vmem:[%s328 + $0x60] sm:$0xff]
      %v1699 = vld [vmem:[%s328 + $0x68] sm:$0xff]
      %v1700 = vld [vmem:[%s328 + $0x70] sm:$0xff]
      %v1701 = vld [vmem:[%s328 + $0x78] sm:$0xff]
      %v1702 = vpack.c.bf16 %v1687, %v1686
      %v1703 = vpack.c.bf16 %v1689, %v1688
      %v1704 = vpack.c.bf16 %v1691, %v1690
      %v1705 = vpack.c.bf16 %v1693, %v1692
      %v1706 = vpack.c.bf16 %v1695, %v1694
      %v1707 = vpack.c.bf16 %v1697, %v1696
      %v1708 = vpack.c.bf16 %v1699, %v1698
      %v1709 = vpack.c.bf16 %v1701, %v1700
      %v1710 = vpack.c.bf16 %v1647, %v1646
      %v1711 = vpack.c.bf16 %v1649, %v1648
      %v1712 = vpack.c.bf16 %v1651, %v1650
      %v1713 = vpack.c.bf16 %v1653, %v1652
      %v1714 = vpack.c.bf16 %v1655, %v1654
      %v1715 = vpack.c.bf16 %v1657, %v1656
      %v1716 = vpack.c.bf16 %v1659, %v1658
      %v1717 = vpack.c.bf16 %v1661, %v1660
      %v1718 = vld [vmem:[%s332] sm:$0xff]
      %v1719 = vld [vmem:[%s332 + $0x8] sm:$0xff]
      %v1720 = vld [vmem:[%s332 + $0x10] sm:$0xff]
      %v1721 = vld [vmem:[%s332 + $0x18] sm:$0xff]
      %v1722 = vld [vmem:[%s332 + $0x20] sm:$0xff]
      %v1723 = vld [vmem:[%s332 + $0x28] sm:$0xff]
      %v1724 = vld [vmem:[%s332 + $0x30] sm:$0xff]
      %v1725 = vld [vmem:[%s332 + $0x38] sm:$0xff]
      %v1726 = vld [vmem:[%s332 + $0x40] sm:$0xff]
      %v1727 = vld [vmem:[%s332 + $0x48] sm:$0xff]
      %v1728 = vld [vmem:[%s332 + $0x50] sm:$0xff]
      %v1729 = vld [vmem:[%s332 + $0x58] sm:$0xff]
      %v1730 = vld [vmem:[%s332 + $0x60] sm:$0xff]
      %v1731 = vld [vmem:[%s332 + $0x68] sm:$0xff]
      %v1732 = vld [vmem:[%s332 + $0x70] sm:$0xff]
      %v1733 = vld [vmem:[%s332 + $0x78] sm:$0xff]
      %v1734 = vpack.c.bf16 %v1719, %v1718
      %v1735 = vpack.c.bf16 %v1721, %v1720
      %v1736 = vpack.c.bf16 %v1723, %v1722
      %v1737 = vpack.c.bf16 %v1725, %v1724
      %v1738 = vpack.c.bf16 %v1727, %v1726
      %v1739 = vpack.c.bf16 %v1729, %v1728
      %v1740 = vpack.c.bf16 %v1731, %v1730
      %v1741 = vpack.c.bf16 %v1733, %v1732
      %1742 = vmatprep.subr.bf16.mxu0 0
      %1743 = vmatpush1.bf16.msra.mxu0 %v1734
      %1744 = vmatprep.subr.bf16.mxu0 0
      %1745 = vmatpush1.bf16.msra.mxu0 %v1735
      %1746 = vmatprep.subr.bf16.mxu0 0
      %1747 = vmatpush1.bf16.msra.mxu0 %v1736
      %1748 = vmatprep.subr.bf16.mxu0 0
      %1749 = vmatpush1.bf16.msra.mxu0 %v1737
      %1750 = vmatprep.subr.bf16.mxu0 0
      %1751 = vmatpush1.bf16.msra.mxu0 %v1738
      %1752 = vmatprep.subr.bf16.mxu0 0
      %1753 = vmatpush1.bf16.msra.mxu0 %v1739
      %1754 = vmatprep.subr.bf16.mxu0 0
      %1755 = vmatpush1.bf16.msra.mxu0 %v1740
      %1756 = vmatprep.subr.bf16.mxu0 0
      %1757 = vmatpush1.bf16.msra.mxu0 %v1741
      %1758 = vmatprep.subr.bf16.mxu0 0
      %1759 = vmatpush1.bf16.msra.mxu0 0
      %1760 = vmatprep.subr.bf16.mxu0 0
      %1761 = vmatpush1.bf16.msra.mxu0 0
      %1762 = vmatprep.subr.bf16.mxu0 0
      %1763 = vmatpush1.bf16.msra.mxu0 0
      %1764 = vmatprep.subr.bf16.mxu0 0
      %1765 = vmatpush1.bf16.msra.mxu0 0
      %1766 = vmatprep.subr.bf16.mxu0 0
      %1767 = vmatpush1.bf16.msra.mxu0 0
      %1768 = vmatprep.subr.bf16.mxu0 0
      %1769 = vmatpush1.bf16.msra.mxu0 0
      %1770 = vmatprep.subr.bf16.mxu0 0
      %1771 = vmatpush1.bf16.msra.mxu0 0
      %1772 = vmatprep.subr.bf16.mxu0 0
      %1773 = vmatpush1.bf16.msra.mxu0 0
      %1774 = vmatprep.mubr.bf16.mxu0 0
      %1775 = vmatmul.mubr.bf16.gmra.mrb[0].mxu0 %v1710
      %v1776 = vpop.f32.mrb[0].mxu0
      %v1777 = vadd.f32 0.0, %v1776
      %v1778 = vpop.f32.mrb[0].mxu0
      %v1779 = vpop.f32.mrb[0].mxu0
      %v1780 = vadd.f32 0.0, %v1779
      %v1781 = vpop.f32.mrb[0].mxu0
      %1782 = vmatprep.mubr.bf16.mxu0 0
      %1783 = vmatmul.mubr.bf16.gmra.mrb[0].mxu0 %v1711
      %v1784 = vpop.f32.mrb[0].mxu0
      %v1785 = vadd.f32 0.0, %v1784
      %v1786 = vpop.f32.mrb[0].mxu0
      %v1787 = vpop.f32.mrb[0].mxu0
      %v1788 = vadd.f32 0.0, %v1787
      %v1789 = vpop.f32.mrb[0].mxu0
      %1790 = vmatprep.mubr.bf16.mxu0 0
      %1791 = vmatmul.mubr.bf16.gmra.mrb[0].mxu0 %v1712
      %v1792 = vpop.f32.mrb[0].mxu0
      %v1793 = vadd.f32 0.0, %v1792
      %v1794 = vpop.f32.mrb[0].mxu0
      %v1795 = vpop.f32.mrb[0].mxu0
      %v1796 = vadd.f32 0.0, %v1795
      %v1797 = vpop.f32.mrb[0].mxu0
      %1798 = vmatprep.mubr.bf16.mxu0 0
      %1799 = vmatmul.mubr.bf16.gmra.mrb[0].mxu0 %v1713
      %v1800 = vpop.f32.mrb[0].mxu0
      %v1801 = vadd.f32 0.0, %v1800
      %v1802 = vpop.f32.mrb[0].mxu0
      %v1803 = vpop.f32.mrb[0].mxu0
      %v1804 = vadd.f32 0.0, %v1803
      %v1805 = vpop.f32.mrb[0].mxu0
      %1806 = vmatprep.mubr.bf16.mxu0 0
      %1807 = vmatmul.mubr.bf16.gmra.mrb[0].mxu0 %v1714
      %v1808 = vpop.f32.mrb[0].mxu0
      %v1809 = vadd.f32 0.0, %v1808
      %v1810 = vpop.f32.mrb[0].mxu0
      %v1811 = vpop.f32.mrb[0].mxu0
      %v1812 = vadd.f32 0.0, %v1811
      %v1813 = vpop.f32.mrb[0].mxu0
      %1814 = vmatprep.mubr.bf16.mxu0 0
      %1815 = vmatmul.mubr.bf16.gmra.mrb[0].mxu0 %v1715
      %v1816 = vpop.f32.mrb[0].mxu0
      %v1817 = vadd.f32 0.0, %v1816
      %v1818 = vpop.f32.mrb[0].mxu0
      %v1819 = vpop.f32.mrb[0].mxu0
      %v1820 = vadd.f32 0.0, %v1819
      %v1821 = vpop.f32.mrb[0].mxu0
      %1822 = vmatprep.mubr.bf16.mxu0 0
      %1823 = vmatmul.mubr.bf16.gmra.mrb[0].mxu0 %v1716
      %v1824 = vpop.f32.mrb[0].mxu0
      %v1825 = vadd.f32 0.0, %v1824
      %v1826 = vpop.f32.mrb[0].mxu0
      %v1827 = vpop.f32.mrb[0].mxu0
      %v1828 = vadd.f32 0.0, %v1827
      %v1829 = vpop.f32.mrb[0].mxu0
      %1830 = vmatprep.mubr.bf16.mxu0 0
      %1831 = vmatmul.mubr.bf16.gmra.mrb[0].mxu0 %v1717
      %v1832 = vpop.f32.mrb[0].mxu0
      %v1833 = vadd.f32 0.0, %v1832
      %v1834 = vpop.f32.mrb[0].mxu0
      %v1835 = vpop.f32.mrb[0].mxu0
      %v1836 = vadd.f32 0.0, %v1835
      %v1837 = vpop.f32.mrb[0].mxu0
      %1838 = vdwg.mxu0
      %1839 = vmatprep.subr.bf16.mxu0 0
      %1840 = vmatpush1.bf16.msra.mxu0 %v1702
      %1841 = vmatprep.subr.bf16.mxu0 0
      %1842 = vmatpush1.bf16.msra.mxu0 %v1703
      %1843 = vmatprep.subr.bf16.mxu0 0
      %1844 = vmatpush1.bf16.msra.mxu0 %v1704
      %1845 = vmatprep.subr.bf16.mxu0 0
      %1846 = vmatpush1.bf16.msra.mxu0 %v1705
      %1847 = vmatprep.subr.bf16.mxu0 0
      %1848 = vmatpush1.bf16.msra.mxu0 %v1706
      %1849 = vmatprep.subr.bf16.mxu0 0
      %1850 = vmatpush1.bf16.msra.mxu0 %v1707
      %1851 = vmatprep.subr.bf16.mxu0 0
      %1852 = vmatpush1.bf16.msra.mxu0 %v1708
      %1853 = vmatprep.subr.bf16.mxu0 0
      %1854 = vmatpush1.bf16.msra.mxu0 %v1709
      %1855 = vmatprep.subr.bf16.mxu0 0
      %1856 = vmatpush1.bf16.msra.mxu0 0
      %1857 = vmatprep.subr.bf16.mxu0 0
      %1858 = vmatpush1.bf16.msra.mxu0 0
      %1859 = vmatprep.subr.bf16.mxu0 0
      %1860 = vmatpush1.bf16.msra.mxu0 0
      %1861 = vmatprep.subr.bf16.mxu0 0
      %1862 = vmatpush1.bf16.msra.mxu0 0
      %1863 = vmatprep.subr.bf16.mxu0 0
      %1864 = vmatpush1.bf16.msra.mxu0 0
      %1865 = vmatprep.subr.bf16.mxu0 0
      %1866 = vmatpush1.bf16.msra.mxu0 0
      %1867 = vmatprep.subr.bf16.mxu0 0
      %1868 = vmatpush1.bf16.msra.mxu0 0
      %1869 = vmatprep.subr.bf16.mxu0 0
      %1870 = vmatpush1.bf16.msra.mxu0 0
      %1871 = vmatprep.mubr.bf16.mxu0 0
      %1872 = vmatmul.mubr.bf16.gmra.mrb[0].mxu0 %v1678
      %v1873 = vpop.f32.mrb[0].mxu0
      %v1874 = vadd.f32 %v1777, %v1873
      %v1875 = vpop.f32.mrb[0].mxu0
      %v1876 = vpop.f32.mrb[0].mxu0
      %v1877 = vadd.f32 %v1780, %v1876
      %v1878 = vpop.f32.mrb[0].mxu0
      %1879 = vmatprep.mubr.bf16.mxu0 0
      %1880 = vmatmul.mubr.bf16.gmra.mrb[0].mxu0 %v1679
      %v1881 = vpop.f32.mrb[0].mxu0
      %v1882 = vadd.f32 %v1785, %v1881
      %v1883 = vpop.f32.mrb[0].mxu0
      %v1884 = vpop.f32.mrb[0].mxu0
      %v1885 = vadd.f32 %v1788, %v1884
      %v1886 = vpop.f32.mrb[0].mxu0
      %1887 = vmatprep.mubr.bf16.mxu0 0
      %1888 = vmatmul.mubr.bf16.gmra.mrb[0].mxu0 %v1680
      %v1889 = vpop.f32.mrb[0].mxu0
      %v1890 = vadd.f32 %v1793, %v1889
      %v1891 = vpop.f32.mrb[0].mxu0
      %v1892 = vpop.f32.mrb[0].mxu0
      %v1893 = vadd.f32 %v1796, %v1892
      %v1894 = vpop.f32.mrb[0].mxu0
      %1895 = vmatprep.mubr.bf16.mxu0 0
      %1896 = vmatmul.mubr.bf16.gmra.mrb[0].mxu0 %v1681
      %v1897 = vpop.f32.mrb[0].mxu0
      %v1898 = vadd.f32 %v1801, %v1897
      %v1899 = vpop.f32.mrb[0].mxu0
      %v1900 = vpop.f32.mrb[0].mxu0
      %v1901 = vadd.f32 %v1804, %v1900
      %v1902 = vpop.f32.mrb[0].mxu0
      %1903 = vmatprep.mubr.bf16.mxu0 0
      %1904 = vmatmul.mubr.bf16.gmra.mrb[0].mxu0 %v1682
      %v1905 = vpop.f32.mrb[0].mxu0
      %v1906 = vadd.f32 %v1809, %v1905
      %v1907 = vpop.f32.mrb[0].mxu0
      %v1908 = vpop.f32.mrb[0].mxu0
      %v1909 = vadd.f32 %v1812, %v1908
      %v1910 = vpop.f32.mrb[0].mxu0
      %1911 = vmatprep.mubr.bf16.mxu0 0
      %1912 = vmatmul.mubr.bf16.gmra.mrb[0].mxu0 %v1683
      %v1913 = vpop.f32.mrb[0].mxu0
      %v1914 = vadd.f32 %v1817, %v1913
      %v1915 = vpop.f32.mrb[0].mxu0
      %v1916 = vpop.f32.mrb[0].mxu0
      %v1917 = vadd.f32 %v1820, %v1916
      %v1918 = vpop.f32.mrb[0].mxu0
      %1919 = vmatprep.mubr.bf16.mxu0 0
      %1920 = vmatmul.mubr.bf16.gmra.mrb[0].mxu0 %v1684
      %v1921 = vpop.f32.mrb[0].mxu0
      %v1922 = vadd.f32 %v1825, %v1921
      %v1923 = vpop.f32.mrb[0].mxu0
      %v1924 = vpop.f32.mrb[0].mxu0
      %v1925 = vadd.f32 %v1828, %v1924
      %v1926 = vpop.f32.mrb[0].mxu0
      %1927 = vmatprep.mubr.bf16.mxu0 0
      %1928 = vmatmul.mubr.bf16.gmra.mrb[0].mxu0 %v1685
      %v1929 = vpop.f32.mrb[0].mxu0
      %v1930 = vadd.f32 %v1833, %v1929
      %v1931 = vpop.f32.mrb[0].mxu0
      %v1932 = vpop.f32.mrb[0].mxu0
      %v1933 = vadd.f32 %v1836, %v1932
      %v1934 = vpop.f32.mrb[0].mxu0
      %1935 = vdwg.mxu0
      %v1936 = vld [vmem:[%s335] sm:$0x1]
      %v1938 = vlaneseq
      %v1939 = vshrl.u32 %v1938, 7
      %v1940 = vsub.s32 0, %v1939
      %v1941 = vrot.slane %v1936, %v1940
      %v1943 = vadd.f32 %v1874, %v1941
      %v1944 = vadd.f32 %v1877, %v1941
      %v1945 = vadd.f32 %v1882, %v1941
      %v1946 = vadd.f32 %v1885, %v1941
      %v1947 = vadd.f32 %v1890, %v1941
      %v1948 = vadd.f32 %v1893, %v1941
      %v1949 = vadd.f32 %v1898, %v1941
      %v1950 = vadd.f32 %v1901, %v1941
      %v1951 = vadd.f32 %v1906, %v1941
      %v1952 = vadd.f32 %v1909, %v1941
      %v1953 = vadd.f32 %v1914, %v1941
      %v1954 = vadd.f32 %v1917, %v1941
      %v1955 = vadd.f32 %v1922, %v1941
      %v1956 = vadd.f32 %v1925, %v1941
      %v1957 = vadd.f32 %v1930, %v1941
      %v1958 = vadd.f32 %v1933, %v1941
      %v1959 = vand.u32 2147483647, %v1943
      %v1960 = vand.u32 2147483647, %v1944
      %v1961 = vand.u32 2147483647, %v1945
      %v1962 = vand.u32 2147483647, %v1946
      %v1963 = vand.u32 2147483647, %v1947
      %v1964 = vand.u32 2147483647, %v1948
      %v1965 = vand.u32 2147483647, %v1949
      %v1966 = vand.u32 2147483647, %v1950
      %v1967 = vand.u32 2147483647, %v1951
      %v1968 = vand.u32 2147483647, %v1952
      %v1969 = vand.u32 2147483647, %v1953
      %v1970 = vand.u32 2147483647, %v1954
      %v1971 = vand.u32 2147483647, %v1955
      %v1972 = vand.u32 2147483647, %v1956
      %v1973 = vand.u32 2147483647, %v1957
      %v1974 = vand.u32 2147483647, %v1958
      %1975 = vst [vmem:[%s343] sm:$0xff] %v1959
      %1976 = vst [vmem:[%s343 + $0x8] sm:$0xff] %v1960
      %1977 = vst [vmem:[%s343 + $0x10] sm:$0xff] %v1961
      %1978 = vst [vmem:[%s343 + $0x18] sm:$0xff] %v1962
      %1979 = vst [vmem:[%s343 + $0x20] sm:$0xff] %v1963
      %1980 = vst [vmem:[%s343 + $0x28] sm:$0xff] %v1964
      %1981 = vst [vmem:[%s343 + $0x30] sm:$0xff] %v1965
      %1982 = vst [vmem:[%s343 + $0x38] sm:$0xff] %v1966
      %1983 = vst [vmem:[%s343 + $0x40] sm:$0xff] %v1967
      %1984 = vst [vmem:[%s343 + $0x48] sm:$0xff] %v1968
      %1985 = vst [vmem:[%s343 + $0x50] sm:$0xff] %v1969
      %1986 = vst [vmem:[%s343 + $0x58] sm:$0xff] %v1970
      %1987 = vst [vmem:[%s343 + $0x60] sm:$0xff] %v1971
      %1988 = vst [vmem:[%s343 + $0x68] sm:$0xff] %v1972
      %1989 = vst [vmem:[%s343 + $0x70] sm:$0xff] %v1973
      %1990 = vst [vmem:[%s343 + $0x78] sm:$0xff] %v1974
      %s1991 = smul.u32 16, %s21
      %p1992 = scmp.lt.s32.totalorder %s1991, 31
      %s1993 = scalar_select %p1992, %s1991, 31
      %p1994 = scmp.lt.s32.totalorder %s22, 0
      %s1995 = scalar_select %p1994, %s22, 0
      %s1996 = sadd.s32 %s1995, %s1993
      %s1997 = smul.addr %s1996, 8
      %s1998 = scalar_lea.vmem %s6, %s1997
      // Predicated region
      $region45: #{inception_gcn_forward.19} parent=43 // pred_check
        %p1999 = pneg %p200
      $region46: #{inception_gcn_forward.19} parent=43 // pred_check_branch
        %2001 = sbr.rel (%p1999) target = $region48
      $region47: #{inception_gcn_forward.19} parent=43 // pred_region
        %s2002 = smul.u32 16, %s21
      $region48: #{inception_gcn_forward.19} parent=43 // pred_fallthru
        _
    $region44: #{inception_gcn_forward.19} parent=5 // pred_fallthru
      _
    %p2003 = scmp.le.s32.totalorder 2, %s12
    // Predicated region
    $region49: #{inception_gcn_forward.19} parent=5 // pred_check
      %p2004 = pneg %p2003
    $region50: #{inception_gcn_forward.19} parent=5 // pred_check_branch
      %2006 = sbr.rel (%p2004) target = $region52
    $region51: #{inception_gcn_forward.19} parent=5 // pred_region
      %s2007 = ssub.s32 %s12, 2
      // Predicated region
      $region53: #{inception_gcn_forward.19} parent=51 // pred_check
        %p2008 = pneg %p206
      $region54: #{inception_gcn_forward.19} parent=51 // pred_check_branch
        %2010 = sbr.rel (%p2008) target = $region56
      $region55: #{inception_gcn_forward.19} parent=51 // pred_region
        %s2011 = smul.u32 16, %s23
        %p2012 = scmp.lt.s32.totalorder %s2011, 31
        %s2013 = scalar_select %p2012, %s2011, 31
        %p2014 = scmp.lt.s32.totalorder %s24, 0
        %s2015 = scalar_select %p2014, %s24, 0
        %s2016 = sadd.s32 %s2015, %s2013
        %s2017 = smul.addr %s2016, 8
        %s2018 = scalar_lea.vmem %s6, %s2017
      $region56: #{inception_gcn_forward.19} parent=51 // pred_fallthru
        _
    $region52: #{inception_gcn_forward.19} parent=5 // pred_fallthru
      _
  $region6: #{inception_gcn_forward.19} parent=0 // loop_footer
    %s16 = sadd.s32 1, %s12
  $region7: #{inception_gcn_forward.19} parent=0 // loop_footer_branch
    %11 = sbr.rel target = $region3
  $region8: #{inception_gcn_forward.19} parent=0 // loop_exit
    _

// kernel: inception_gcn_forward.25
$region0: #{inception_gcn_forward.25}
  #allocation0 [shape = 'u32[]', space=smem, size = 0x4, offset = 0x4, fixed_abs, tag = 'smem constant byte address 0x4 - core index']
  #allocation1 [shape = 'u32[144,128]{1,0:T(1,128)}', space=vmem, size = 0x12000, scoped, tag = 'internal scratch']
  %s0 = inlined_call_operand.vmem [shape: f32[256,128], index: 0, kind: input, shape index: {}]
  %s1 = inlined_call_operand.vmem [shape: f32[256,128], index: 1, kind: input, shape index: {}]
  %s2 = inlined_call_operand.vmem [shape: f32[256,128], index: 2, kind: input, shape index: {}]
  %s3 = inlined_call_operand.vmem [shape: f32[128,128], index: 3, kind: input, shape index: {}]
  %s4 = inlined_call_operand.vmem [shape: f32[128,128], index: 4, kind: input, shape index: {}]
  %s5 = inlined_call_operand.vmem [shape: f32[128,128], index: 5, kind: input, shape index: {}]
  %s6 = inlined_call_operand.vmem [shape: f32[1,128], index: 6, kind: input, shape index: {}]
  %s7 = inlined_call_operand.vmem [shape: f32[256,128], index: 7, kind: output, shape index: {}]
  %s8 = sld [smem:[#allocation0]]
  $region61: #{inception_gcn_forward.25} parent=0
    _
  %s10 = ssub.s32 1, %s8
  %s11 = scalar_select 0, %s10, %s8
  loop: start=0, step=1, limit=4
  $region2: #{inception_gcn_forward.25} parent=0 // loop_pre_header
    _
  $region3: #{inception_gcn_forward.25} parent=0 // loop_header
    %s13 = sphi 0, %s17
    %p14 = scmp.ge.s32.totalorder %s13, 4
    %s20 = sphi 0, %s32
    %s21 = sphi 0, %s28
    %s22 = sphi 0, %s20
    %s23 = sphi 0, %s21
    %s24 = sphi 0, %s22
    %s25 = sphi 0, %s23
    %s35 = sphi 0, %s37
    %s38 = sphi 0, %s35
    %s39 = sphi 0, %s38
    %s55 = sphi 0, %s39
    %s61 = sphi 0, %s63
    %s64 = sphi 0, %s61
    %s65 = sphi 0, %s64
    %s81 = sphi 0, %s65
    %s87 = sphi 0, %s89
    %s90 = sphi 0, %s87
    %s91 = sphi 0, %s90
    %s107 = sphi 0, %s91
    %s113 = sphi 0, %s115
    %s116 = sphi 0, %s113
    %s117 = sphi 0, %s116
    %s133 = sphi 0, %s117
    %s139 = sphi 0, %s141
    %s142 = sphi 0, %s139
    %s143 = sphi 0, %s142
    %s159 = sphi 0, %s143
    %s165 = sphi 0, %s167
    %s168 = sphi 0, %s165
    %s169 = sphi 0, %s168
    %s185 = sphi 0, %s169
    %s191 = sphi 0, %s193
    %s194 = sphi 0, %s191
    %s195 = sphi 0, %s194
    %s211 = sphi 0, %s195
    %s219 = sphi 0, %s221
    %s222 = sphi 0, %s219
    %s223 = sphi 0, %s222
    %s239 = sphi 0, %s223
  $region4: #{inception_gcn_forward.25} parent=0 // loop_header_branch
    %16 = sbr.rel (%p14) target = $region8
  $region5: #{inception_gcn_forward.25} parent=0 // loop_body
    %s18 = ssub.s32 %s13, 1
    %s19 = ssub.s32 %s13, 2
    %s26 = sadd.s32 1, %s21
    %p27 = scmp.ge.s32.totalorder %s26, 1
    %s28 = scalar_select %p27, 0, %s26
    %s29 = sadd.s32 1, %s20
    %s30 = scalar_select %p27, %s29, %s20
    %p31 = scmp.ge.s32.totalorder %s30, 2
    %s32 = scalar_select %p31, 0, %s30
    %s33 = ssub.s32 %s20, %s32
    %p34 = scmp.eq.s32.totalorder %s33, 0
    %s36 = sadd.s32 %s35, 1
    %s37 = scalar_select %p34, %s35, %s36
    %p40 = pneg %p34
    %p41 = scmp.eq.s32.totalorder %s13, 1
    %p42 = por %p40, %p41
    %p43 = scmp.ne.s32.totalorder %s35, %s38
    %p44 = scmp.eq.s32.totalorder %s13, 0
    %p45 = por %p43, %p44
    %p46 = scmp.ne.s32.totalorder %s35, %s38
    %p47 = scmp.eq.s32.totalorder %s18, 1
    %p48 = por %p46, %p47
    %p49 = scmp.ne.s32.totalorder %s38, %s39
    %p50 = scmp.eq.s32.totalorder %s18, 0
    %p51 = por %p49, %p50
    %p52 = scmp.ne.s32.totalorder %s38, %s39
    %p53 = scmp.eq.s32.totalorder %s19, 1
    %p54 = por %p52, %p53
    %p56 = scmp.ne.s32.totalorder %s39, %s55
    %p57 = scmp.eq.s32.totalorder %s19, 0
    %p58 = por %p56, %p57
    %s59 = ssub.s32 %s20, %s32
    %p60 = scmp.eq.s32.totalorder %s59, 0
    %s62 = sadd.s32 %s61, 1
    %s63 = scalar_select %p60, %s61, %s62
    %p66 = pneg %p60
    %p67 = scmp.eq.s32.totalorder %s13, 1
    %p68 = por %p66, %p67
    %p69 = scmp.ne.s32.totalorder %s61, %s64
    %p70 = scmp.eq.s32.totalorder %s13, 0
    %p71 = por %p69, %p70
    %p72 = scmp.ne.s32.totalorder %s61, %s64
    %p73 = scmp.eq.s32.totalorder %s18, 1
    %p74 = por %p72, %p73
    %p75 = scmp.ne.s32.totalorder %s64, %s65
    %p76 = scmp.eq.s32.totalorder %s18, 0
    %p77 = por %p75, %p76
    %p78 = scmp.ne.s32.totalorder %s64, %s65
    %p79 = scmp.eq.s32.totalorder %s19, 1
    %p80 = por %p78, %p79
    %p82 = scmp.ne.s32.totalorder %s65, %s81
    %p83 = scmp.eq.s32.totalorder %s19, 0
    %p84 = por %p82, %p83
    %s85 = ssub.s32 %s20, %s32
    %p86 = scmp.eq.s32.totalorder %s85, 0
    %s88 = sadd.s32 %s87, 1
    %s89 = scalar_select %p86, %s87, %s88
    %p92 = pneg %p86
    %p93 = scmp.eq.s32.totalorder %s13, 1
    %p94 = por %p92, %p93
    %p95 = scmp.ne.s32.totalorder %s87, %s90
    %p96 = scmp.eq.s32.totalorder %s13, 0
    %p97 = por %p95, %p96
    %p98 = scmp.ne.s32.totalorder %s87, %s90
    %p99 = scmp.eq.s32.totalorder %s18, 1
    %p100 = por %p98, %p99
    %p101 = scmp.ne.s32.totalorder %s90, %s91
    %p102 = scmp.eq.s32.totalorder %s18, 0
    %p103 = por %p101, %p102
    %p104 = scmp.ne.s32.totalorder %s90, %s91
    %p105 = scmp.eq.s32.totalorder %s19, 1
    %p106 = por %p104, %p105
    %p108 = scmp.ne.s32.totalorder %s91, %s107
    %p109 = scmp.eq.s32.totalorder %s19, 0
    %p110 = por %p108, %p109
    %s111 = ssub.s32 %s21, %s28
    %p112 = scmp.eq.s32.totalorder %s111, 0
    %s114 = sadd.s32 %s113, 1
    %s115 = scalar_select %p112, %s113, %s114
    %p118 = pneg %p112
    %p119 = scmp.eq.s32.totalorder %s13, 1
    %p120 = por %p118, %p119
    %p121 = scmp.ne.s32.totalorder %s113, %s116
    %p122 = scmp.eq.s32.totalorder %s13, 0
    %p123 = por %p121, %p122
    %p124 = scmp.ne.s32.totalorder %s113, %s116
    %p125 = scmp.eq.s32.totalorder %s18, 1
    %p126 = por %p124, %p125
    %p127 = scmp.ne.s32.totalorder %s116, %s117
    %p128 = scmp.eq.s32.totalorder %s18, 0
    %p129 = por %p127, %p128
    %p130 = scmp.ne.s32.totalorder %s116, %s117
    %p131 = scmp.eq.s32.totalorder %s19, 1
    %p132 = por %p130, %p131
    %p134 = scmp.ne.s32.totalorder %s117, %s133
    %p135 = scmp.eq.s32.totalorder %s19, 0
    %p136 = por %p134, %p135
    %s137 = ssub.s32 %s21, %s28
    %p138 = scmp.eq.s32.totalorder %s137, 0
    %s140 = sadd.s32 %s139, 1
    %s141 = scalar_select %p138, %s139, %s140
    %p144 = pneg %p138
    %p145 = scmp.eq.s32.totalorder %s13, 1
    %p146 = por %p144, %p145
    %p147 = scmp.ne.s32.totalorder %s139, %s142
    %p148 = scmp.eq.s32.totalorder %s13, 0
    %p149 = por %p147, %p148
    %p150 = scmp.ne.s32.totalorder %s139, %s142
    %p151 = scmp.eq.s32.totalorder %s18, 1
    %p152 = por %p150, %p151
    %p153 = scmp.ne.s32.totalorder %s142, %s143
    %p154 = scmp.eq.s32.totalorder %s18, 0
    %p155 = por %p153, %p154
    %p156 = scmp.ne.s32.totalorder %s142, %s143
    %p157 = scmp.eq.s32.totalorder %s19, 1
    %p158 = por %p156, %p157
    %p160 = scmp.ne.s32.totalorder %s143, %s159
    %p161 = scmp.eq.s32.totalorder %s19, 0
    %p162 = por %p160, %p161
    %s163 = ssub.s32 %s21, %s28
    %p164 = scmp.eq.s32.totalorder %s163, 0
    %s166 = sadd.s32 %s165, 1
    %s167 = scalar_select %p164, %s165, %s166
    %p170 = pneg %p164
    %p171 = scmp.eq.s32.totalorder %s13, 1
    %p172 = por %p170, %p171
    %p173 = scmp.ne.s32.totalorder %s165, %s168
    %p174 = scmp.eq.s32.totalorder %s13, 0
    %p175 = por %p173, %p174
    %p176 = scmp.ne.s32.totalorder %s165, %s168
    %p177 = scmp.eq.s32.totalorder %s18, 1
    %p178 = por %p176, %p177
    %p179 = scmp.ne.s32.totalorder %s168, %s169
    %p180 = scmp.eq.s32.totalorder %s18, 0
    %p181 = por %p179, %p180
    %p182 = scmp.ne.s32.totalorder %s168, %s169
    %p183 = scmp.eq.s32.totalorder %s19, 1
    %p184 = por %p182, %p183
    %p186 = scmp.ne.s32.totalorder %s169, %s185
    %p187 = scmp.eq.s32.totalorder %s19, 0
    %p188 = por %p186, %p187
    %s189 = ssub.s32 %s21, %s28
    %p190 = scmp.eq.s32.totalorder %s189, 0
    %s192 = sadd.s32 %s191, 1
    %s193 = scalar_select %p190, %s191, %s192
    %p196 = pneg %p190
    %p197 = scmp.eq.s32.totalorder %s13, 1
    %p198 = por %p196, %p197
    %p199 = scmp.ne.s32.totalorder %s191, %s194
    %p200 = scmp.eq.s32.totalorder %s13, 0
    %p201 = por %p199, %p200
    %p202 = scmp.ne.s32.totalorder %s191, %s194
    %p203 = scmp.eq.s32.totalorder %s18, 1
    %p204 = por %p202, %p203
    %p205 = scmp.ne.s32.totalorder %s194, %s195
    %p206 = scmp.eq.s32.totalorder %s18, 0
    %p207 = por %p205, %p206
    %p208 = scmp.ne.s32.totalorder %s194, %s195
    %p209 = scmp.eq.s32.totalorder %s19, 1
    %p210 = por %p208, %p209
    %p212 = scmp.ne.s32.totalorder %s195, %s211
    %p213 = scmp.eq.s32.totalorder %s19, 0
    %p214 = por %p212, %p213
    %s215 = ssub.s32 %s20, %s32
    %s216 = ssub.s32 %s21, %s28
    %s217 = sor.u32 %s215, %s216
    %p218 = scmp.eq.s32.totalorder %s217, 0
    %s220 = sadd.s32 %s219, 1
    %s221 = scalar_select %p218, %s219, %s220
    %p224 = pneg %p218
    %p225 = scmp.eq.s32.totalorder %s13, 1
    %p226 = por %p224, %p225
    %p227 = scmp.ne.s32.totalorder %s219, %s222
    %p228 = scmp.eq.s32.totalorder %s13, 0
    %p229 = por %p227, %p228
    %p230 = scmp.ne.s32.totalorder %s219, %s222
    %p231 = scmp.eq.s32.totalorder %s18, 1
    %p232 = por %p230, %p231
    %p233 = scmp.ne.s32.totalorder %s222, %s223
    %p234 = scmp.eq.s32.totalorder %s18, 0
    %p235 = por %p233, %p234
    %p236 = scmp.ne.s32.totalorder %s222, %s223
    %p237 = scmp.eq.s32.totalorder %s19, 1
    %p238 = por %p236, %p237
    %p240 = scmp.ne.s32.totalorder %s223, %s239
    %p241 = scmp.eq.s32.totalorder %s19, 0
    %p242 = por %p240, %p241
    %p243 = scmp.le.s32.totalorder 1, %s13
    %p244 = scmp.lt.s32.totalorder %s13, 3
    %p245 = pnand %p243, %p244
    %p246 = pneg %p245
    // Predicated region
    $region9: #{inception_gcn_forward.25} parent=5 // pred_check
      _
    $region10: #{inception_gcn_forward.25} parent=5 // pred_check_branch
      %248 = sbr.rel (%p245) target = $region12
    $region11: #{inception_gcn_forward.25} parent=5 // pred_region
      %s249 = ssub.s32 %s13, 1
      // Predicated region
      $region13: #{inception_gcn_forward.25} parent=11 // pred_check
        %p250 = pneg %p129
      $region14: #{inception_gcn_forward.25} parent=11 // pred_check_branch
        %252 = sbr.rel (%p250) target = $region16
      $region15: #{inception_gcn_forward.25} parent=11 // pred_region
        %p253 = scmp.lt.s32.totalorder %s23, 0
        %s254 = scalar_select %p253, %s23, 0
        %s255 = smul.addr %s254, 8
        %s256 = scalar_lea.vmem %s3, %s255
      $region16: #{inception_gcn_forward.25} parent=11 // pred_fallthru
        _
      // Predicated region
      $region17: #{inception_gcn_forward.25} parent=11 // pred_check
        %p257 = pneg %p155
      $region18: #{inception_gcn_forward.25} parent=11 // pred_check_branch
        %259 = sbr.rel (%p257) target = $region20
      $region19: #{inception_gcn_forward.25} parent=11 // pred_region
        %p260 = scmp.lt.s32.totalorder %s23, 0
        %s261 = scalar_select %p260, %s23, 0
        %s262 = smul.addr %s261, 8
        %s263 = scalar_lea.vmem %s4, %s262
      $region20: #{inception_gcn_forward.25} parent=11 // pred_fallthru
        _
      // Predicated region
      $region21: #{inception_gcn_forward.25} parent=11 // pred_check
        %p264 = pneg %p181
      $region22: #{inception_gcn_forward.25} parent=11 // pred_check_branch
        %266 = sbr.rel (%p264) target = $region24
      $region23: #{inception_gcn_forward.25} parent=11 // pred_region
        %p267 = scmp.lt.s32.totalorder %s23, 0
        %s268 = scalar_select %p267, %s23, 0
        %s269 = smul.addr %s268, 8
        %s270 = scalar_lea.vmem %s5, %s269
      $region24: #{inception_gcn_forward.25} parent=11 // pred_fallthru
        _
      // Predicated region
      $region25: #{inception_gcn_forward.25} parent=11 // pred_check
        %p271 = pneg %p207
      $region26: #{inception_gcn_forward.25} parent=11 // pred_check_branch
        %273 = sbr.rel (%p271) target = $region28
      $region27: #{inception_gcn_forward.25} parent=11 // pred_region
        %p274 = scmp.lt.s32.totalorder %s23, 0
        %s275 = scalar_select %p274, %s23, 0
        %s276 = scalar_lea.vmem %s6, %s275
      $region28: #{inception_gcn_forward.25} parent=11 // pred_fallthru
        _
    $region12: #{inception_gcn_forward.25} parent=5 // pred_fallthru
      _
    %p277 = scmp.lt.s32.totalorder %s13, 2
    // Predicated region
    $region29: #{inception_gcn_forward.25} parent=5 // pred_check
      %p278 = pneg %p277
    $region30: #{inception_gcn_forward.25} parent=5 // pred_check_branch
      %280 = sbr.rel (%p278) target = $region32
    $region31: #{inception_gcn_forward.25} parent=5 // pred_region
      // Predicated region
      $region33: #{inception_gcn_forward.25} parent=31 // pred_check
        %p281 = pneg %p45
      $region34: #{inception_gcn_forward.25} parent=31 // pred_check_branch
        %283 = sbr.rel (%p281) target = $region36
      $region35: #{inception_gcn_forward.25} parent=31 // pred_region
        %s284 = smul.u32 16, %s20
        %p285 = scmp.lt.s32.totalorder %s284, 31
        %s286 = scalar_select %p285, %s284, 31
        %s287 = smul.addr %s286, 8
        %s288 = scalar_lea.vmem %s0, %s287
        %s289 = smul.u32 16, %s20
      $region36: #{inception_gcn_forward.25} parent=31 // pred_fallthru
        _
      // Predicated region
      $region37: #{inception_gcn_forward.25} parent=31 // pred_check
        %p290 = pneg %p71
      $region38: #{inception_gcn_forward.25} parent=31 // pred_check_branch
        %292 = sbr.rel (%p290) target = $region40
      $region39: #{inception_gcn_forward.25} parent=31 // pred_region
        %s293 = smul.u32 16, %s20
        %p294 = scmp.lt.s32.totalorder %s293, 31
        %s295 = scalar_select %p294, %s293, 31
        %s296 = smul.addr %s295, 8
        %s297 = scalar_lea.vmem %s1, %s296
        %s298 = smul.u32 16, %s20
      $region40: #{inception_gcn_forward.25} parent=31 // pred_fallthru
        _
      // Predicated region
      $region41: #{inception_gcn_forward.25} parent=31 // pred_check
        %p299 = pneg %p97
      $region42: #{inception_gcn_forward.25} parent=31 // pred_check_branch
        %301 = sbr.rel (%p299) target = $region44
      $region43: #{inception_gcn_forward.25} parent=31 // pred_region
        %s302 = smul.u32 16, %s20
        %p303 = scmp.lt.s32.totalorder %s302, 31
        %s304 = scalar_select %p303, %s302, 31
        %s305 = smul.addr %s304, 8
        %s306 = scalar_lea.vmem %s2, %s305
        %s307 = smul.u32 16, %s20
      $region44: #{inception_gcn_forward.25} parent=31 // pred_fallthru
        _
    $region32: #{inception_gcn_forward.25} parent=5 // pred_fallthru
      _
    %p308 = scmp.le.s32.totalorder 1, %s13
    %p309 = scmp.lt.s32.totalorder %s13, 3
    %p310 = pnand %p308, %p309
    %p311 = pneg %p310
    // Predicated region
    $region45: #{inception_gcn_forward.25} parent=5 // pred_check
      _
    $region46: #{inception_gcn_forward.25} parent=5 // pred_check_branch
      %313 = sbr.rel (%p310) target = $region48
    $region47: #{inception_gcn_forward.25} parent=5 // pred_region
      %s314 = ssub.s32 %s13, 1
      %s315 = smul.u32 16, %s22
      %p316 = scmp.lt.s32.totalorder %s315, 31
      %s317 = scalar_select %p316, %s315, 31
      %s318 = smul.addr %s317, 8
      %s319 = scalar_lea.vmem %s0, %s318
      %p320 = pneg %p51
      %p321 = pneg %p48
      %s322 = smul.u32 16, %s22
      %p323 = scmp.lt.s32.totalorder %s322, 31
      %s324 = scalar_select %p323, %s322, 31
      %s325 = smul.addr %s324, 8
      %s326 = scalar_lea.vmem %s1, %s325
      %p327 = pneg %p77
      %p328 = pneg %p74
      %s329 = smul.u32 16, %s22
      %p330 = scmp.lt.s32.totalorder %s329, 31
      %s331 = scalar_select %p330, %s329, 31
      %s332 = smul.addr %s331, 8
      %s333 = scalar_lea.vmem %s2, %s332
      %p334 = pneg %p103
      %p335 = pneg %p100
      %p336 = scmp.lt.s32.totalorder %s23, 0
      %s337 = scalar_select %p336, %s23, 0
      %s338 = smul.addr %s337, 8
      %s339 = scalar_lea.vmem %s3, %s338
      %p340 = pneg %p129
      %p341 = pneg %p126
      %p342 = scmp.lt.s32.totalorder %s23, 0
      %s343 = scalar_select %p342, %s23, 0
      %s344 = smul.addr %s343, 8
      %s345 = scalar_lea.vmem %s4, %s344
      %p346 = pneg %p155
      %p347 = pneg %p152
      %p348 = scmp.lt.s32.totalorder %s23, 0
      %s349 = scalar_select %p348, %s23, 0
      %s350 = smul.addr %s349, 8
      %s351 = scalar_lea.vmem %s5, %s350
      %p352 = pneg %p181
      %p353 = pneg %p178
      %p354 = scmp.lt.s32.totalorder %s23, 0
      %s355 = scalar_select %p354, %s23, 0
      %s356 = scalar_lea.vmem %s6, %s355
      %p357 = pneg %p207
      %p358 = pneg %p204
      %p359 = pneg %p235
      %p360 = pneg %p232
      %s361 = smul.u32 16, %s22
      %p362 = scmp.lt.s32.totalorder %s361, 31
      %s363 = scalar_select %p362, %s361, 31
      %p364 = scmp.lt.s32.totalorder %s23, 0
      %s365 = scalar_select %p364, %s23, 0
      %s366 = sadd.s32 %s365, %s363
      %s367 = smul.addr %s366, 8
      %s368 = scalar_lea.vmem %s7, %s367
      %s369 = smul.u32 16, %s22
      %p370 = scmp.lt.s32.totalorder %s369, 31
      %s371 = scalar_select %p370, %s369, 31
      %s372 = smul.addr %s371, 8
      %s373 = scalar_lea.vmem %s0, %s372
      %s374 = smul.u32 16, %s22
      %s375 = smul.u32 16, %s22
      %p376 = scmp.lt.s32.totalorder %s375, 31
      %s377 = scalar_select %p376, %s375, 31
      %s378 = smul.addr %s377, 8
      %s379 = scalar_lea.vmem %s1, %s378
      %s380 = smul.u32 16, %s22
      %s381 = smul.u32 16, %s22
      %p382 = scmp.lt.s32.totalorder %s381, 31
      %s383 = scalar_select %p382, %s381, 31
      %s384 = smul.addr %s383, 8
      %s385 = scalar_lea.vmem %s2, %s384
      %s386 = smul.u32 16, %s22
      %p387 = scmp.lt.s32.totalorder %s23, 0
      %s388 = scalar_select %p387, %s23, 0
      %s389 = smul.addr %s388, 8
      %s390 = scalar_lea.vmem %s3, %s389
      %p391 = scmp.lt.s32.totalorder %s23, 0
      %s392 = scalar_select %p391, %s23, 0
      %s393 = smul.addr %s392, 8
      %s394 = scalar_lea.vmem %s4, %s393
      %p395 = scmp.lt.s32.totalorder %s23, 0
      %s396 = scalar_select %p395, %s23, 0
      %s397 = smul.addr %s396, 8
      %s398 = scalar_lea.vmem %s5, %s397
      %p399 = scmp.lt.s32.totalorder %s23, 0
      %s400 = scalar_select %p399, %s23, 0
      %s401 = scalar_lea.vmem %s6, %s400
      %s402 = smul.u32 16, %s22
      %p403 = scmp.lt.s32.totalorder %s402, 31
      %s404 = scalar_select %p403, %s402, 31
      %p405 = scmp.lt.s32.totalorder %s23, 0
      %s406 = scalar_select %p405, %s23, 0
      %s407 = sadd.s32 %s406, %s404
      %s408 = smul.addr %s407, 8
      %s409 = scalar_lea.vmem %s7, %s408
      %s410 = smul.u32 16, %s22
      %v412 = vld [vmem:[%s373] sm:$0xff]
      %v413 = vld [vmem:[%s373 + $0x8] sm:$0xff]
      %v414 = vld [vmem:[%s373 + $0x10] sm:$0xff]
      %v415 = vld [vmem:[%s373 + $0x18] sm:$0xff]
      %v416 = vld [vmem:[%s373 + $0x20] sm:$0xff]
      %v417 = vld [vmem:[%s373 + $0x28] sm:$0xff]
      %v418 = vld [vmem:[%s373 + $0x30] sm:$0xff]
      %v419 = vld [vmem:[%s373 + $0x38] sm:$0xff]
      %v420 = vld [vmem:[%s373 + $0x40] sm:$0xff]
      %v421 = vld [vmem:[%s373 + $0x48] sm:$0xff]
      %v422 = vld [vmem:[%s373 + $0x50] sm:$0xff]
      %v423 = vld [vmem:[%s373 + $0x58] sm:$0xff]
      %v424 = vld [vmem:[%s373 + $0x60] sm:$0xff]
      %v425 = vld [vmem:[%s373 + $0x68] sm:$0xff]
      %v426 = vld [vmem:[%s373 + $0x70] sm:$0xff]
      %v427 = vld [vmem:[%s373 + $0x78] sm:$0xff]
      %v428 = vpack.c.bf16 %v413, %v412
      %v429 = vpack.c.bf16 %v415, %v414
      %v430 = vpack.c.bf16 %v417, %v416
      %v431 = vpack.c.bf16 %v419, %v418
      %v432 = vpack.c.bf16 %v421, %v420
      %v433 = vpack.c.bf16 %v423, %v422
      %v434 = vpack.c.bf16 %v425, %v424
      %v435 = vpack.c.bf16 %v427, %v426
      %v436 = vld [vmem:[%s390] sm:$0xff]
      %v437 = vld [vmem:[%s390 + $0x8] sm:$0xff]
      %v438 = vld [vmem:[%s390 + $0x10] sm:$0xff]
      %v439 = vld [vmem:[%s390 + $0x18] sm:$0xff]
      %v440 = vld [vmem:[%s390 + $0x20] sm:$0xff]
      %v441 = vld [vmem:[%s390 + $0x28] sm:$0xff]
      %v442 = vld [vmem:[%s390 + $0x30] sm:$0xff]
      %v443 = vld [vmem:[%s390 + $0x38] sm:$0xff]
      %v444 = vld [vmem:[%s390 + $0x40] sm:$0xff]
      %v445 = vld [vmem:[%s390 + $0x48] sm:$0xff]
      %v446 = vld [vmem:[%s390 + $0x50] sm:$0xff]
      %v447 = vld [vmem:[%s390 + $0x58] sm:$0xff]
      %v448 = vld [vmem:[%s390 + $0x60] sm:$0xff]
      %v449 = vld [vmem:[%s390 + $0x68] sm:$0xff]
      %v450 = vld [vmem:[%s390 + $0x70] sm:$0xff]
      %v451 = vld [vmem:[%s390 + $0x78] sm:$0xff]
      %v452 = vpack.c.bf16 %v437, %v436
      %v453 = vpack.c.bf16 %v439, %v438
      %v454 = vpack.c.bf16 %v441, %v440
      %v455 = vpack.c.bf16 %v443, %v442
      %v456 = vpack.c.bf16 %v445, %v444
      %v457 = vpack.c.bf16 %v447, %v446
      %v458 = vpack.c.bf16 %v449, %v448
      %v459 = vpack.c.bf16 %v451, %v450
      %v460 = vld [vmem:[%s379] sm:$0xff]
      %v461 = vld [vmem:[%s379 + $0x8] sm:$0xff]
      %v462 = vld [vmem:[%s379 + $0x10] sm:$0xff]
      %v463 = vld [vmem:[%s379 + $0x18] sm:$0xff]
      %v464 = vld [vmem:[%s379 + $0x20] sm:$0xff]
      %v465 = vld [vmem:[%s379 + $0x28] sm:$0xff]
      %v466 = vld [vmem:[%s379 + $0x30] sm:$0xff]
      %v467 = vld [vmem:[%s379 + $0x38] sm:$0xff]
      %v468 = vld [vmem:[%s379 + $0x40] sm:$0xff]
      %v469 = vld [vmem:[%s379 + $0x48] sm:$0xff]
      %v470 = vld [vmem:[%s379 + $0x50] sm:$0xff]
      %v471 = vld [vmem:[%s379 + $0x58] sm:$0xff]
      %v472 = vld [vmem:[%s379 + $0x60] sm:$0xff]
      %v473 = vld [vmem:[%s379 + $0x68] sm:$0xff]
      %v474 = vld [vmem:[%s379 + $0x70] sm:$0xff]
      %v475 = vld [vmem:[%s379 + $0x78] sm:$0xff]
      %v476 = vpack.c.bf16 %v461, %v460
      %v477 = vpack.c.bf16 %v463, %v462
      %v478 = vpack.c.bf16 %v465, %v464
      %v479 = vpack.c.bf16 %v467, %v466
      %v480 = vpack.c.bf16 %v469, %v468
      %v481 = vpack.c.bf16 %v471, %v470
      %v482 = vpack.c.bf16 %v473, %v472
      %v483 = vpack.c.bf16 %v475, %v474
      %v484 = vld [vmem:[%s394] sm:$0xff]
      %v485 = vld [vmem:[%s394 + $0x8] sm:$0xff]
      %v486 = vld [vmem:[%s394 + $0x10] sm:$0xff]
      %v487 = vld [vmem:[%s394 + $0x18] sm:$0xff]
      %v488 = vld [vmem:[%s394 + $0x20] sm:$0xff]
      %v489 = vld [vmem:[%s394 + $0x28] sm:$0xff]
      %v490 = vld [vmem:[%s394 + $0x30] sm:$0xff]
      %v491 = vld [vmem:[%s394 + $0x38] sm:$0xff]
      %v492 = vld [vmem:[%s394 + $0x40] sm:$0xff]
      %v493 = vld [vmem:[%s394 + $0x48] sm:$0xff]
      %v494 = vld [vmem:[%s394 + $0x50] sm:$0xff]
      %v495 = vld [vmem:[%s394 + $0x58] sm:$0xff]
      %v496 = vld [vmem:[%s394 + $0x60] sm:$0xff]
      %v497 = vld [vmem:[%s394 + $0x68] sm:$0xff]
      %v498 = vld [vmem:[%s394 + $0x70] sm:$0xff]
      %v499 = vld [vmem:[%s394 + $0x78] sm:$0xff]
      %v500 = vpack.c.bf16 %v485, %v484
      %v501 = vpack.c.bf16 %v487, %v486
      %v502 = vpack.c.bf16 %v489, %v488
      %v503 = vpack.c.bf16 %v491, %v490
      %v504 = vpack.c.bf16 %v493, %v492
      %v505 = vpack.c.bf16 %v495, %v494
      %v506 = vpack.c.bf16 %v497, %v496
      %v507 = vpack.c.bf16 %v499, %v498
      %508 = vmatprep.subr.bf16.mxu0 0
      %509 = vmatpush1.bf16.msra.mxu0 %v500
      %510 = vmatprep.subr.bf16.mxu0 0
      %511 = vmatpush1.bf16.msra.mxu0 %v501
      %512 = vmatprep.subr.bf16.mxu0 0
      %513 = vmatpush1.bf16.msra.mxu0 %v502
      %514 = vmatprep.subr.bf16.mxu0 0
      %515 = vmatpush1.bf16.msra.mxu0 %v503
      %516 = vmatprep.subr.bf16.mxu0 0
      %517 = vmatpush1.bf16.msra.mxu0 %v504
      %518 = vmatprep.subr.bf16.mxu0 0
      %519 = vmatpush1.bf16.msra.mxu0 %v505
      %520 = vmatprep.subr.bf16.mxu0 0
      %521 = vmatpush1.bf16.msra.mxu0 %v506
      %522 = vmatprep.subr.bf16.mxu0 0
      %523 = vmatpush1.bf16.msra.mxu0 %v507
      %524 = vmatprep.subr.bf16.mxu0 0
      %525 = vmatpush1.bf16.msra.mxu0 0
      %526 = vmatprep.subr.bf16.mxu0 0
      %527 = vmatpush1.bf16.msra.mxu0 0
      %528 = vmatprep.subr.bf16.mxu0 0
      %529 = vmatpush1.bf16.msra.mxu0 0
      %530 = vmatprep.subr.bf16.mxu0 0
      %531 = vmatpush1.bf16.msra.mxu0 0
      %532 = vmatprep.subr.bf16.mxu0 0
      %533 = vmatpush1.bf16.msra.mxu0 0
      %534 = vmatprep.subr.bf16.mxu0 0
      %535 = vmatpush1.bf16.msra.mxu0 0
      %536 = vmatprep.subr.bf16.mxu0 0
      %537 = vmatpush1.bf16.msra.mxu0 0
      %538 = vmatprep.subr.bf16.mxu0 0
      %539 = vmatpush1.bf16.msra.mxu0 0
      %540 = vmatprep.mubr.bf16.mxu0 0
      %541 = vmatmul.mubr.bf16.gmra.mrb[0].mxu0 %v476
      %v542 = vpop.f32.mrb[0].mxu0
      %v543 = vadd.f32 0.0, %v542
      %v544 = vpop.f32.mrb[0].mxu0
      %v545 = vpop.f32.mrb[0].mxu0
      %v546 = vadd.f32 0.0, %v545
      %v547 = vpop.f32.mrb[0].mxu0
      %548 = vmatprep.mubr.bf16.mxu0 0
      %549 = vmatmul.mubr.bf16.gmra.mrb[0].mxu0 %v477
      %v550 = vpop.f32.mrb[0].mxu0
      %v551 = vadd.f32 0.0, %v550
      %v552 = vpop.f32.mrb[0].mxu0
      %v553 = vpop.f32.mrb[0].mxu0
      %v554 = vadd.f32 0.0, %v553
      %v555 = vpop.f32.mrb[0].mxu0
      %556 = vmatprep.mubr.bf16.mxu0 0
      %557 = vmatmul.mubr.bf16.gmra.mrb[0].mxu0 %v478
      %v558 = vpop.f32.mrb[0].mxu0
      %v559 = vadd.f32 0.0, %v558
      %v560 = vpop.f32.mrb[0].mxu0
      %v561 = vpop.f32.mrb[0].mxu0
      %v562 = vadd.f32 0.0, %v561
      %v563 = vpop.f32.mrb[0].mxu0
      %564 = vmatprep.mubr.bf16.mxu0 0
      %565 = vmatmul.mubr.bf16.gmra.mrb[0].mxu0 %v479
      %v566 = vpop.f32.mrb[0].mxu0
      %v567 = vadd.f32 0.0, %v566
      %v568 = vpop.f32.mrb[0].mxu0
      %v569 = vpop.f32.mrb[0].mxu0
      %v570 = vadd.f32 0.0, %v569
      %v571 = vpop.f32.mrb[0].mxu0
      %572 = vmatprep.mubr.bf16.mxu0 0
      %573 = vmatmul.mubr.bf16.gmra.mrb[0].mxu0 %v480
      %v574 = vpop.f32.mrb[0].mxu0
      %v575 = vadd.f32 0.0, %v574
      %v576 = vpop.f32.mrb[0].mxu0
      %v577 = vpop.f32.mrb[0].mxu0
      %v578 = vadd.f32 0.0, %v577
      %v579 = vpop.f32.mrb[0].mxu0
      %580 = vmatprep.mubr.bf16.mxu0 0
      %581 = vmatmul.mubr.bf16.gmra.mrb[0].mxu0 %v481
      %v582 = vpop.f32.mrb[0].mxu0
      %v583 = vadd.f32 0.0, %v582
      %v584 = vpop.f32.mrb[0].mxu0
      %v585 = vpop.f32.mrb[0].mxu0
      %v586 = vadd.f32 0.0, %v585
      %v587 = vpop.f32.mrb[0].mxu0
      %588 = vmatprep.mubr.bf16.mxu0 0
      %589 = vmatmul.mubr.bf16.gmra.mrb[0].mxu0 %v482
      %v590 = vpop.f32.mrb[0].mxu0
      %v591 = vadd.f32 0.0, %v590
      %v592 = vpop.f32.mrb[0].mxu0
      %v593 = vpop.f32.mrb[0].mxu0
      %v594 = vadd.f32 0.0, %v593
      %v595 = vpop.f32.mrb[0].mxu0
      %596 = vmatprep.mubr.bf16.mxu0 0
      %597 = vmatmul.mubr.bf16.gmra.mrb[0].mxu0 %v483
      %v598 = vpop.f32.mrb[0].mxu0
      %v599 = vadd.f32 0.0, %v598
      %v600 = vpop.f32.mrb[0].mxu0
      %v601 = vpop.f32.mrb[0].mxu0
      %v602 = vadd.f32 0.0, %v601
      %v603 = vpop.f32.mrb[0].mxu0
      %604 = vdwg.mxu0
      %605 = vmatprep.subr.bf16.mxu0 0
      %606 = vmatpush1.bf16.msra.mxu0 %v452
      %607 = vmatprep.subr.bf16.mxu0 0
      %608 = vmatpush1.bf16.msra.mxu0 %v453
      %609 = vmatprep.subr.bf16.mxu0 0
      %610 = vmatpush1.bf16.msra.mxu0 %v454
      %611 = vmatprep.subr.bf16.mxu0 0
      %612 = vmatpush1.bf16.msra.mxu0 %v455
      %613 = vmatprep.subr.bf16.mxu0 0
      %614 = vmatpush1.bf16.msra.mxu0 %v456
      %615 = vmatprep.subr.bf16.mxu0 0
      %616 = vmatpush1.bf16.msra.mxu0 %v457
      %617 = vmatprep.subr.bf16.mxu0 0
      %618 = vmatpush1.bf16.msra.mxu0 %v458
      %619 = vmatprep.subr.bf16.mxu0 0
      %620 = vmatpush1.bf16.msra.mxu0 %v459
      %621 = vmatprep.subr.bf16.mxu0 0
      %622 = vmatpush1.bf16.msra.mxu0 0
      %623 = vmatprep.subr.bf16.mxu0 0
      %624 = vmatpush1.bf16.msra.mxu0 0
      %625 = vmatprep.subr.bf16.mxu0 0
      %626 = vmatpush1.bf16.msra.mxu0 0
      %627 = vmatprep.subr.bf16.mxu0 0
      %628 = vmatpush1.bf16.msra.mxu0 0
      %629 = vmatprep.subr.bf16.mxu0 0
      %630 = vmatpush1.bf16.msra.mxu0 0
      %631 = vmatprep.subr.bf16.mxu0 0
      %632 = vmatpush1.bf16.msra.mxu0 0
      %633 = vmatprep.subr.bf16.mxu0 0
      %634 = vmatpush1.bf16.msra.mxu0 0
      %635 = vmatprep.subr.bf16.mxu0 0
      %636 = vmatpush1.bf16.msra.mxu0 0
      %637 = vmatprep.mubr.bf16.mxu0 0
      %638 = vmatmul.mubr.bf16.gmra.mrb[0].mxu0 %v428
      %v639 = vpop.f32.mrb[0].mxu0
      %v640 = vadd.f32 %v543, %v639
      %v641 = vpop.f32.mrb[0].mxu0
      %v642 = vpop.f32.mrb[0].mxu0
      %v643 = vadd.f32 %v546, %v642
      %v644 = vpop.f32.mrb[0].mxu0
      %645 = vmatprep.mubr.bf16.mxu0 0
      %646 = vmatmul.mubr.bf16.gmra.mrb[0].mxu0 %v429
      %v647 = vpop.f32.mrb[0].mxu0
      %v648 = vadd.f32 %v551, %v647
      %v649 = vpop.f32.mrb[0].mxu0
      %v650 = vpop.f32.mrb[0].mxu0
      %v651 = vadd.f32 %v554, %v650
      %v652 = vpop.f32.mrb[0].mxu0
      %653 = vmatprep.mubr.bf16.mxu0 0
      %654 = vmatmul.mubr.bf16.gmra.mrb[0].mxu0 %v430
      %v655 = vpop.f32.mrb[0].mxu0
      %v656 = vadd.f32 %v559, %v655
      %v657 = vpop.f32.mrb[0].mxu0
      %v658 = vpop.f32.mrb[0].mxu0
      %v659 = vadd.f32 %v562, %v658
      %v660 = vpop.f32.mrb[0].mxu0
      %661 = vmatprep.mubr.bf16.mxu0 0
      %662 = vmatmul.mubr.bf16.gmra.mrb[0].mxu0 %v431
      %v663 = vpop.f32.mrb[0].mxu0
      %v664 = vadd.f32 %v567, %v663
      %v665 = vpop.f32.mrb[0].mxu0
      %v666 = vpop.f32.mrb[0].mxu0
      %v667 = vadd.f32 %v570, %v666
      %v668 = vpop.f32.mrb[0].mxu0
      %669 = vmatprep.mubr.bf16.mxu0 0
      %670 = vmatmul.mubr.bf16.gmra.mrb[0].mxu0 %v432
      %v671 = vpop.f32.mrb[0].mxu0
      %v672 = vadd.f32 %v575, %v671
      %v673 = vpop.f32.mrb[0].mxu0
      %v674 = vpop.f32.mrb[0].mxu0
      %v675 = vadd.f32 %v578, %v674
      %v676 = vpop.f32.mrb[0].mxu0
      %677 = vmatprep.mubr.bf16.mxu0 0
      %678 = vmatmul.mubr.bf16.gmra.mrb[0].mxu0 %v433
      %v679 = vpop.f32.mrb[0].mxu0
      %v680 = vadd.f32 %v583, %v679
      %v681 = vpop.f32.mrb[0].mxu0
      %v682 = vpop.f32.mrb[0].mxu0
      %v683 = vadd.f32 %v586, %v682
      %v684 = vpop.f32.mrb[0].mxu0
      %685 = vmatprep.mubr.bf16.mxu0 0
      %686 = vmatmul.mubr.bf16.gmra.mrb[0].mxu0 %v434
      %v687 = vpop.f32.mrb[0].mxu0
      %v688 = vadd.f32 %v591, %v687
      %v689 = vpop.f32.mrb[0].mxu0
      %v690 = vpop.f32.mrb[0].mxu0
      %v691 = vadd.f32 %v594, %v690
      %v692 = vpop.f32.mrb[0].mxu0
      %693 = vmatprep.mubr.bf16.mxu0 0
      %694 = vmatmul.mubr.bf16.gmra.mrb[0].mxu0 %v435
      %v695 = vpop.f32.mrb[0].mxu0
      %v696 = vadd.f32 %v599, %v695
      %v697 = vpop.f32.mrb[0].mxu0
      %v698 = vpop.f32.mrb[0].mxu0
      %v699 = vadd.f32 %v602, %v698
      %v700 = vpop.f32.mrb[0].mxu0
      %701 = vdwg.mxu0
      %v702 = vld [vmem:[%s385] sm:$0xff]
      %v703 = vld [vmem:[%s385 + $0x8] sm:$0xff]
      %v704 = vld [vmem:[%s385 + $0x10] sm:$0xff]
      %v705 = vld [vmem:[%s385 + $0x18] sm:$0xff]
      %v706 = vld [vmem:[%s385 + $0x20] sm:$0xff]
      %v707 = vld [vmem:[%s385 + $0x28] sm:$0xff]
      %v708 = vld [vmem:[%s385 + $0x30] sm:$0xff]
      %v709 = vld [vmem:[%s385 + $0x38] sm:$0xff]
      %v710 = vld [vmem:[%s385 + $0x40] sm:$0xff]
      %v711 = vld [vmem:[%s385 + $0x48] sm:$0xff]
      %v712 = vld [vmem:[%s385 + $0x50] sm:$0xff]
      %v713 = vld [vmem:[%s385 + $0x58] sm:$0xff]
      %v714 = vld [vmem:[%s385 + $0x60] sm:$0xff]
      %v715 = vld [vmem:[%s385 + $0x68] sm:$0xff]
      %v716 = vld [vmem:[%s385 + $0x70] sm:$0xff]
      %v717 = vld [vmem:[%s385 + $0x78] sm:$0xff]
      %v718 = vpack.c.bf16 %v703, %v702
      %v719 = vpack.c.bf16 %v705, %v704
      %v720 = vpack.c.bf16 %v707, %v706
      %v721 = vpack.c.bf16 %v709, %v708
      %v722 = vpack.c.bf16 %v711, %v710
      %v723 = vpack.c.bf16 %v713, %v712
      %v724 = vpack.c.bf16 %v715, %v714
      %v725 = vpack.c.bf16 %v717, %v716
      %v726 = vld [vmem:[%s398] sm:$0xff]
      %v727 = vld [vmem:[%s398 + $0x8] sm:$0xff]
      %v728 = vld [vmem:[%s398 + $0x10] sm:$0xff]
      %v729 = vld [vmem:[%s398 + $0x18] sm:$0xff]
      %v730 = vld [vmem:[%s398 + $0x20] sm:$0xff]
      %v731 = vld [vmem:[%s398 + $0x28] sm:$0xff]
      %v732 = vld [vmem:[%s398 + $0x30] sm:$0xff]
      %v733 = vld [vmem:[%s398 + $0x38] sm:$0xff]
      %v734 = vld [vmem:[%s398 + $0x40] sm:$0xff]
      %v735 = vld [vmem:[%s398 + $0x48] sm:$0xff]
      %v736 = vld [vmem:[%s398 + $0x50] sm:$0xff]
      %v737 = vld [vmem:[%s398 + $0x58] sm:$0xff]
      %v738 = vld [vmem:[%s398 + $0x60] sm:$0xff]
      %v739 = vld [vmem:[%s398 + $0x68] sm:$0xff]
      %v740 = vld [vmem:[%s398 + $0x70] sm:$0xff]
      %v741 = vld [vmem:[%s398 + $0x78] sm:$0xff]
      %v742 = vpack.c.bf16 %v727, %v726
      %v743 = vpack.c.bf16 %v729, %v728
      %v744 = vpack.c.bf16 %v731, %v730
      %v745 = vpack.c.bf16 %v733, %v732
      %v746 = vpack.c.bf16 %v735, %v734
      %v747 = vpack.c.bf16 %v737, %v736
      %v748 = vpack.c.bf16 %v739, %v738
      %v749 = vpack.c.bf16 %v741, %v740
      %750 = vmatprep.subr.bf16.mxu0 0
      %751 = vmatpush1.bf16.msra.mxu0 %v742
      %752 = vmatprep.subr.bf16.mxu0 0
      %753 = vmatpush1.bf16.msra.mxu0 %v743
      %754 = vmatprep.subr.bf16.mxu0 0
      %755 = vmatpush1.bf16.msra.mxu0 %v744
      %756 = vmatprep.subr.bf16.mxu0 0
      %757 = vmatpush1.bf16.msra.mxu0 %v745
      %758 = vmatprep.subr.bf16.mxu0 0
      %759 = vmatpush1.bf16.msra.mxu0 %v746
      %760 = vmatprep.subr.bf16.mxu0 0
      %761 = vmatpush1.bf16.msra.mxu0 %v747
      %762 = vmatprep.subr.bf16.mxu0 0
      %763 = vmatpush1.bf16.msra.mxu0 %v748
      %764 = vmatprep.subr.bf16.mxu0 0
      %765 = vmatpush1.bf16.msra.mxu0 %v749
      %766 = vmatprep.subr.bf16.mxu0 0
      %767 = vmatpush1.bf16.msra.mxu0 0
      %768 = vmatprep.subr.bf16.mxu0 0
      %769 = vmatpush1.bf16.msra.mxu0 0
      %770 = vmatprep.subr.bf16.mxu0 0
      %771 = vmatpush1.bf16.msra.mxu0 0
      %772 = vmatprep.subr.bf16.mxu0 0
      %773 = vmatpush1.bf16.msra.mxu0 0
      %774 = vmatprep.subr.bf16.mxu0 0
      %775 = vmatpush1.bf16.msra.mxu0 0
      %776 = vmatprep.subr.bf16.mxu0 0
      %777 = vmatpush1.bf16.msra.mxu0 0
      %778 = vmatprep.subr.bf16.mxu0 0
      %779 = vmatpush1.bf16.msra.mxu0 0
      %780 = vmatprep.subr.bf16.mxu0 0
      %781 = vmatpush1.bf16.msra.mxu0 0
      %782 = vmatprep.mubr.bf16.mxu0 0
      %783 = vmatmul.mubr.bf16.gmra.mrb[0].mxu0 %v718
      %v784 = vpop.f32.mrb[0].mxu0
      %v785 = vadd.f32 0.0, %v784
      %v786 = vpop.f32.mrb[0].mxu0
      %v787 = vpop.f32.mrb[0].mxu0
      %v788 = vadd.f32 0.0, %v787
      %v789 = vpop.f32.mrb[0].mxu0
      %790 = vmatprep.mubr.bf16.mxu0 0
      %791 = vmatmul.mubr.bf16.gmra.mrb[0].mxu0 %v719
      %v792 = vpop.f32.mrb[0].mxu0
      %v793 = vadd.f32 0.0, %v792
      %v794 = vpop.f32.mrb[0].mxu0
      %v795 = vpop.f32.mrb[0].mxu0
      %v796 = vadd.f32 0.0, %v795
      %v797 = vpop.f32.mrb[0].mxu0
      %798 = vmatprep.mubr.bf16.mxu0 0
      %799 = vmatmul.mubr.bf16.gmra.mrb[0].mxu0 %v720
      %v800 = vpop.f32.mrb[0].mxu0
      %v801 = vadd.f32 0.0, %v800
      %v802 = vpop.f32.mrb[0].mxu0
      %v803 = vpop.f32.mrb[0].mxu0
      %v804 = vadd.f32 0.0, %v803
      %v805 = vpop.f32.mrb[0].mxu0
      %806 = vmatprep.mubr.bf16.mxu0 0
      %807 = vmatmul.mubr.bf16.gmra.mrb[0].mxu0 %v721
      %v808 = vpop.f32.mrb[0].mxu0
      %v809 = vadd.f32 0.0, %v808
      %v810 = vpop.f32.mrb[0].mxu0
      %v811 = vpop.f32.mrb[0].mxu0
      %v812 = vadd.f32 0.0, %v811
      %v813 = vpop.f32.mrb[0].mxu0
      %814 = vmatprep.mubr.bf16.mxu0 0
      %815 = vmatmul.mubr.bf16.gmra.mrb[0].mxu0 %v722
      %v816 = vpop.f32.mrb[0].mxu0
      %v817 = vadd.f32 0.0, %v816
      %v818 = vpop.f32.mrb[0].mxu0
      %v819 = vpop.f32.mrb[0].mxu0
      %v820 = vadd.f32 0.0, %v819
      %v821 = vpop.f32.mrb[0].mxu0
      %822 = vmatprep.mubr.bf16.mxu0 0
      %823 = vmatmul.mubr.bf16.gmra.mrb[0].mxu0 %v723
      %v824 = vpop.f32.mrb[0].mxu0
      %v825 = vadd.f32 0.0, %v824
      %v826 = vpop.f32.mrb[0].mxu0
      %v827 = vpop.f32.mrb[0].mxu0
      %v828 = vadd.f32 0.0, %v827
      %v829 = vpop.f32.mrb[0].mxu0
      %830 = vmatprep.mubr.bf16.mxu0 0
      %831 = vmatmul.mubr.bf16.gmra.mrb[0].mxu0 %v724
      %v832 = vpop.f32.mrb[0].mxu0
      %v833 = vadd.f32 0.0, %v832
      %v834 = vpop.f32.mrb[0].mxu0
      %v835 = vpop.f32.mrb[0].mxu0
      %v836 = vadd.f32 0.0, %v835
      %v837 = vpop.f32.mrb[0].mxu0
      %838 = vmatprep.mubr.bf16.mxu0 0
      %839 = vmatmul.mubr.bf16.gmra.mrb[0].mxu0 %v725
      %v840 = vpop.f32.mrb[0].mxu0
      %v841 = vadd.f32 0.0, %v840
      %v842 = vpop.f32.mrb[0].mxu0
      %v843 = vpop.f32.mrb[0].mxu0
      %v844 = vadd.f32 0.0, %v843
      %v845 = vpop.f32.mrb[0].mxu0
      %846 = vdwg.mxu0
      %v847 = vadd.f32 %v640, %v785
      %v848 = vadd.f32 %v643, %v788
      %v849 = vadd.f32 %v648, %v793
      %v850 = vadd.f32 %v651, %v796
      %v851 = vadd.f32 %v656, %v801
      %v852 = vadd.f32 %v659, %v804
      %v853 = vadd.f32 %v664, %v809
      %v854 = vadd.f32 %v667, %v812
      %v855 = vadd.f32 %v672, %v817
      %v856 = vadd.f32 %v675, %v820
      %v857 = vadd.f32 %v680, %v825
      %v858 = vadd.f32 %v683, %v828
      %v859 = vadd.f32 %v688, %v833
      %v860 = vadd.f32 %v691, %v836
      %v861 = vadd.f32 %v696, %v841
      %v862 = vadd.f32 %v699, %v844
      %v863 = vld [vmem:[%s401] sm:$0x1]
      %v865 = vlaneseq
      %v866 = vshrl.u32 %v865, 7
      %v867 = vsub.s32 0, %v866
      %v868 = vrot.slane %v863, %v867
      %v870 = vadd.f32 %v847, %v868
      %v871 = vadd.f32 %v848, %v868
      %v872 = vadd.f32 %v849, %v868
      %v873 = vadd.f32 %v850, %v868
      %v874 = vadd.f32 %v851, %v868
      %v875 = vadd.f32 %v852, %v868
      %v876 = vadd.f32 %v853, %v868
      %v877 = vadd.f32 %v854, %v868
      %v878 = vadd.f32 %v855, %v868
      %v879 = vadd.f32 %v856, %v868
      %v880 = vadd.f32 %v857, %v868
      %v881 = vadd.f32 %v858, %v868
      %v882 = vadd.f32 %v859, %v868
      %v883 = vadd.f32 %v860, %v868
      %v884 = vadd.f32 %v861, %v868
      %v885 = vadd.f32 %v862, %v868
      %886 = vst [vmem:[%s409] sm:$0xff] %v870
      %887 = vst [vmem:[%s409 + $0x8] sm:$0xff] %v871
      %888 = vst [vmem:[%s409 + $0x10] sm:$0xff] %v872
      %889 = vst [vmem:[%s409 + $0x18] sm:$0xff] %v873
      %890 = vst [vmem:[%s409 + $0x20] sm:$0xff] %v874
      %891 = vst [vmem:[%s409 + $0x28] sm:$0xff] %v875
      %892 = vst [vmem:[%s409 + $0x30] sm:$0xff] %v876
      %893 = vst [vmem:[%s409 + $0x38] sm:$0xff] %v877
      %894 = vst [vmem:[%s409 + $0x40] sm:$0xff] %v878
      %895 = vst [vmem:[%s409 + $0x48] sm:$0xff] %v879
      %896 = vst [vmem:[%s409 + $0x50] sm:$0xff] %v880
      %897 = vst [vmem:[%s409 + $0x58] sm:$0xff] %v881
      %898 = vst [vmem:[%s409 + $0x60] sm:$0xff] %v882
      %899 = vst [vmem:[%s409 + $0x68] sm:$0xff] %v883
      %900 = vst [vmem:[%s409 + $0x70] sm:$0xff] %v884
      %901 = vst [vmem:[%s409 + $0x78] sm:$0xff] %v885
      %s902 = smul.u32 16, %s22
      %p903 = scmp.lt.s32.totalorder %s902, 31
      %s904 = scalar_select %p903, %s902, 31
      %p905 = scmp.lt.s32.totalorder %s23, 0
      %s906 = scalar_select %p905, %s23, 0
      %s907 = sadd.s32 %s906, %s904
      %s908 = smul.addr %s907, 8
      %s909 = scalar_lea.vmem %s7, %s908
      // Predicated region
      $region49: #{inception_gcn_forward.25} parent=47 // pred_check
        %p910 = pneg %p232
      $region50: #{inception_gcn_forward.25} parent=47 // pred_check_branch
        %912 = sbr.rel (%p910) target = $region52
      $region51: #{inception_gcn_forward.25} parent=47 // pred_region
        %s913 = smul.u32 16, %s22
      $region52: #{inception_gcn_forward.25} parent=47 // pred_fallthru
        _
    $region48: #{inception_gcn_forward.25} parent=5 // pred_fallthru
      _
    %p914 = scmp.le.s32.totalorder 2, %s13
    // Predicated region
    $region53: #{inception_gcn_forward.25} parent=5 // pred_check
      %p915 = pneg %p914
    $region54: #{inception_gcn_forward.25} parent=5 // pred_check_branch
      %917 = sbr.rel (%p915) target = $region56
    $region55: #{inception_gcn_forward.25} parent=5 // pred_region
      %s918 = ssub.s32 %s13, 2
      // Predicated region
      $region57: #{inception_gcn_forward.25} parent=55 // pred_check
        %p919 = pneg %p238
      $region58: #{inception_gcn_forward.25} parent=55 // pred_check_branch
        %921 = sbr.rel (%p919) target = $region60
      $region59: #{inception_gcn_forward.25} parent=55 // pred_region
        %s922 = smul.u32 16, %s24
        %p923 = scmp.lt.s32.totalorder %s922, 31
        %s924 = scalar_select %p923, %s922, 31
        %p925 = scmp.lt.s32.totalorder %s25, 0
        %s926 = scalar_select %p925, %s25, 0
        %s927 = sadd.s32 %s926, %s924
        %s928 = smul.addr %s927, 8
        %s929 = scalar_lea.vmem %s7, %s928
      $region60: #{inception_gcn_forward.25} parent=55 // pred_fallthru
        _
    $region56: #{inception_gcn_forward.25} parent=5 // pred_fallthru
      _
  $region6: #{inception_gcn_forward.25} parent=0 // loop_footer
    %s17 = sadd.s32 1, %s13
  $region7: #{inception_gcn_forward.25} parent=0 // loop_footer_branch
    %12 = sbr.rel target = $region3
  $region8: #{inception_gcn_forward.25} parent=0 // loop_exit
    _

// kernel: inception_gcn_forward.27
$region0: #{inception_gcn_forward.27}
  #allocation0 [shape = 'u32[]', space=smem, size = 0x4, offset = 0x4, fixed_abs, tag = 'smem constant byte address 0x4 - core index']
  #allocation1 [shape = 'u32[144,128]{1,0:T(1,128)}', space=vmem, size = 0x12000, scoped, tag = 'internal scratch']
  %s0 = inlined_call_operand.vmem [shape: s32[256,8], index: 0, kind: input, shape index: {}]
  %s1 = inlined_call_operand.vmem [shape: f32[256,128], index: 1, kind: input, shape index: {}, may-alias: {1,2}]
  %s2 = inlined_call_operand.vmem [shape: f32[256,128], index: 2, kind: input, shape index: {}, may-alias: {1,2}]
  %s3 = inlined_call_operand.vmem [shape: f32[128,128], index: 3, kind: input, shape index: {}]
  %s4 = inlined_call_operand.vmem [shape: f32[128,128], index: 4, kind: input, shape index: {}]
  %s5 = inlined_call_operand.vmem [shape: f32[1,128], index: 5, kind: input, shape index: {}]
  %s6 = inlined_call_operand.hbm [shape: f32[256,128], index: 6, kind: output, shape index: {}]
  %s7 = sld [smem:[#allocation0]]
  $region57: #{inception_gcn_forward.27} parent=0
    _
  %s9 = ssub.s32 1, %s7
  %s10 = scalar_select 0, %s9, %s7
  $region1: #{inception_gcn_forward.27} parent=0
    #allocation2 [shape = 'u8[131072]{0}', space=vmem, size = 0x20000, scoped, tag = 'output window, operand 0']
    #allocation3 [shape = 's32[2]{0}', space=sflag, size = 0x8, scoped, tag = 'scoped memory for inception_gcn_forward.27']
    %11 = vsyncpa [#allocation3], 0
    %s12 = scalar_lea.sflag [#allocation3], 1
    %13 = vsyncpa %s12, 0
    loop: start=0, step=1, limit=4
    $region2: #{inception_gcn_forward.27} parent=1 // loop_pre_header
      _
    $region3: #{inception_gcn_forward.27} parent=1 // loop_header
      %s15 = sphi 0, %s19
      %p16 = scmp.ge.s32.totalorder %s15, 4
      %s22 = sphi 0, %s34
      %s23 = sphi 0, %s30
      %s24 = sphi 0, %s22
      %s25 = sphi 0, %s23
      %s26 = sphi 0, %s24
      %s27 = sphi 0, %s25
      %s37 = sphi 0, %s39
      %s40 = sphi 0, %s37
      %s41 = sphi 0, %s40
      %s57 = sphi 0, %s41
      %s61 = sphi 0, %s61
      %s63 = sphi 0, %s61
      %s64 = sphi 0, %s63
      %s78 = sphi 0, %s64
      %s84 = sphi 0, %s86
      %s87 = sphi 0, %s84
      %s88 = sphi 0, %s87
      %s104 = sphi 0, %s88
      %s110 = sphi 0, %s112
      %s113 = sphi 0, %s110
      %s114 = sphi 0, %s113
      %s130 = sphi 0, %s114
      %s136 = sphi 0, %s138
      %s139 = sphi 0, %s136
      %s140 = sphi 0, %s139
      %s156 = sphi 0, %s140
      %s162 = sphi 0, %s164
      %s165 = sphi 0, %s162
      %s166 = sphi 0, %s165
      %s182 = sphi 0, %s166
      %s190 = sphi 0, %s192
      %s193 = sphi 0, %s190
      %s194 = sphi 0, %s193
      %s210 = sphi 0, %s194
    $region4: #{inception_gcn_forward.27} parent=1 // loop_header_branch
      %18 = sbr.rel (%p16) target = $region8
    $region5: #{inception_gcn_forward.27} parent=1 // loop_body
      %s20 = ssub.s32 %s15, 1
      %s21 = ssub.s32 %s15, 2
      %s28 = sadd.s32 1, %s23
      %p29 = scmp.ge.s32.totalorder %s28, 1
      %s30 = scalar_select %p29, 0, %s28
      %s31 = sadd.s32 1, %s22
      %s32 = scalar_select %p29, %s31, %s22
      %p33 = scmp.ge.s32.totalorder %s32, 2
      %s34 = scalar_select %p33, 0, %s32
      %s35 = ssub.s32 %s22, %s34
      %p36 = scmp.eq.s32.totalorder %s35, 0
      %s38 = sadd.s32 %s37, 1
      %s39 = scalar_select %p36, %s37, %s38
      %p42 = pneg %p36
      %p43 = scmp.eq.s32.totalorder %s15, 1
      %p44 = por %p42, %p43
      %p45 = scmp.ne.s32.totalorder %s37, %s40
      %p46 = scmp.eq.s32.totalorder %s15, 0
      %p47 = por %p45, %p46
      %p48 = scmp.ne.s32.totalorder %s37, %s40
      %p49 = scmp.eq.s32.totalorder %s20, 1
      %p50 = por %p48, %p49
      %p51 = scmp.ne.s32.totalorder %s40, %s41
      %p52 = scmp.eq.s32.totalorder %s20, 0
      %p53 = por %p51, %p52
      %p54 = scmp.ne.s32.totalorder %s40, %s41
      %p55 = scmp.eq.s32.totalorder %s21, 1
      %p56 = por %p54, %p55
      %p58 = scmp.ne.s32.totalorder %s41, %s57
      %p59 = scmp.eq.s32.totalorder %s21, 0
      %p60 = por %p58, %p59
      %s62 = sadd.s32 %s61, 1
      %p65 = scmp.eq.s32.totalorder %s15, 1
      %p66 = scmp.ne.s32.totalorder %s61, %s63
      %p67 = scmp.eq.s32.totalorder %s15, 0
      %p68 = por %p66, %p67
      %p69 = scmp.ne.s32.totalorder %s61, %s63
      %p70 = scmp.eq.s32.totalorder %s20, 1
      %p71 = por %p69, %p70
      %p72 = scmp.ne.s32.totalorder %s63, %s64
      %p73 = scmp.eq.s32.totalorder %s20, 0
      %p74 = por %p72, %p73
      %p75 = scmp.ne.s32.totalorder %s63, %s64
      %p76 = scmp.eq.s32.totalorder %s21, 1
      %p77 = por %p75, %p76
      %p79 = scmp.ne.s32.totalorder %s64, %s78
      %p80 = scmp.eq.s32.totalorder %s21, 0
      %p81 = por %p79, %p80
      %s82 = ssub.s32 %s22, %s34
      %p83 = scmp.eq.s32.totalorder %s82, 0
      %s85 = sadd.s32 %s84, 1
      %s86 = scalar_select %p83, %s84, %s85
      %p89 = pneg %p83
      %p90 = scmp.eq.s32.totalorder %s15, 1
      %p91 = por %p89, %p90
      %p92 = scmp.ne.s32.totalorder %s84, %s87
      %p93 = scmp.eq.s32.totalorder %s15, 0
      %p94 = por %p92, %p93
      %p95 = scmp.ne.s32.totalorder %s84, %s87
      %p96 = scmp.eq.s32.totalorder %s20, 1
      %p97 = por %p95, %p96
      %p98 = scmp.ne.s32.totalorder %s87, %s88
      %p99 = scmp.eq.s32.totalorder %s20, 0
      %p100 = por %p98, %p99
      %p101 = scmp.ne.s32.totalorder %s87, %s88
      %p102 = scmp.eq.s32.totalorder %s21, 1
      %p103 = por %p101, %p102
      %p105 = scmp.ne.s32.totalorder %s88, %s104
      %p106 = scmp.eq.s32.totalorder %s21, 0
      %p107 = por %p105, %p106
      %s108 = ssub.s32 %s23, %s30
      %p109 = scmp.eq.s32.totalorder %s108, 0
      %s111 = sadd.s32 %s110, 1
      %s112 = scalar_select %p109, %s110, %s111
      %p115 = pneg %p109
      %p116 = scmp.eq.s32.totalorder %s15, 1
      %p117 = por %p115, %p116
      %p118 = scmp.ne.s32.totalorder %s110, %s113
      %p119 = scmp.eq.s32.totalorder %s15, 0
      %p120 = por %p118, %p119
      %p121 = scmp.ne.s32.totalorder %s110, %s113
      %p122 = scmp.eq.s32.totalorder %s20, 1
      %p123 = por %p121, %p122
      %p124 = scmp.ne.s32.totalorder %s113, %s114
      %p125 = scmp.eq.s32.totalorder %s20, 0
      %p126 = por %p124, %p125
      %p127 = scmp.ne.s32.totalorder %s113, %s114
      %p128 = scmp.eq.s32.totalorder %s21, 1
      %p129 = por %p127, %p128
      %p131 = scmp.ne.s32.totalorder %s114, %s130
      %p132 = scmp.eq.s32.totalorder %s21, 0
      %p133 = por %p131, %p132
      %s134 = ssub.s32 %s23, %s30
      %p135 = scmp.eq.s32.totalorder %s134, 0
      %s137 = sadd.s32 %s136, 1
      %s138 = scalar_select %p135, %s136, %s137
      %p141 = pneg %p135
      %p142 = scmp.eq.s32.totalorder %s15, 1
      %p143 = por %p141, %p142
      %p144 = scmp.ne.s32.totalorder %s136, %s139
      %p145 = scmp.eq.s32.totalorder %s15, 0
      %p146 = por %p144, %p145
      %p147 = scmp.ne.s32.totalorder %s136, %s139
      %p148 = scmp.eq.s32.totalorder %s20, 1
      %p149 = por %p147, %p148
      %p150 = scmp.ne.s32.totalorder %s139, %s140
      %p151 = scmp.eq.s32.totalorder %s20, 0
      %p152 = por %p150, %p151
      %p153 = scmp.ne.s32.totalorder %s139, %s140
      %p154 = scmp.eq.s32.totalorder %s21, 1
      %p155 = por %p153, %p154
      %p157 = scmp.ne.s32.totalorder %s140, %s156
      %p158 = scmp.eq.s32.totalorder %s21, 0
      %p159 = por %p157, %p158
      %s160 = ssub.s32 %s23, %s30
      %p161 = scmp.eq.s32.totalorder %s160, 0
      %s163 = sadd.s32 %s162, 1
      %s164 = scalar_select %p161, %s162, %s163
      %p167 = pneg %p161
      %p168 = scmp.eq.s32.totalorder %s15, 1
      %p169 = por %p167, %p168
      %p170 = scmp.ne.s32.totalorder %s162, %s165
      %p171 = scmp.eq.s32.totalorder %s15, 0
      %p172 = por %p170, %p171
      %p173 = scmp.ne.s32.totalorder %s162, %s165
      %p174 = scmp.eq.s32.totalorder %s20, 1
      %p175 = por %p173, %p174
      %p176 = scmp.ne.s32.totalorder %s165, %s166
      %p177 = scmp.eq.s32.totalorder %s20, 0
      %p178 = por %p176, %p177
      %p179 = scmp.ne.s32.totalorder %s165, %s166
      %p180 = scmp.eq.s32.totalorder %s21, 1
      %p181 = por %p179, %p180
      %p183 = scmp.ne.s32.totalorder %s166, %s182
      %p184 = scmp.eq.s32.totalorder %s21, 0
      %p185 = por %p183, %p184
      %s186 = ssub.s32 %s22, %s34
      %s187 = ssub.s32 %s23, %s30
      %s188 = sor.u32 %s186, %s187
      %p189 = scmp.eq.s32.totalorder %s188, 0
      %s191 = sadd.s32 %s190, 1
      %s192 = scalar_select %p189, %s190, %s191
      %p195 = pneg %p189
      %p196 = scmp.eq.s32.totalorder %s15, 1
      %p197 = por %p195, %p196
      %p198 = scmp.ne.s32.totalorder %s190, %s193
      %p199 = scmp.eq.s32.totalorder %s15, 0
      %p200 = por %p198, %p199
      %p201 = scmp.ne.s32.totalorder %s190, %s193
      %p202 = scmp.eq.s32.totalorder %s20, 1
      %p203 = por %p201, %p202
      %p204 = scmp.ne.s32.totalorder %s193, %s194
      %p205 = scmp.eq.s32.totalorder %s20, 0
      %p206 = por %p204, %p205
      %p207 = scmp.ne.s32.totalorder %s193, %s194
      %p208 = scmp.eq.s32.totalorder %s21, 1
      %p209 = por %p207, %p208
      %p211 = scmp.ne.s32.totalorder %s194, %s210
      %p212 = scmp.eq.s32.totalorder %s21, 0
      %p213 = por %p211, %p212
      %p214 = scmp.le.s32.totalorder 1, %s15
      %p215 = scmp.lt.s32.totalorder %s15, 3
      %p216 = pnand %p214, %p215
      %p217 = pneg %p216
      // Predicated region
      $region9: #{inception_gcn_forward.27} parent=5 // pred_check
        _
      $region10: #{inception_gcn_forward.27} parent=5 // pred_check_branch
        %219 = sbr.rel (%p216) target = $region12
      $region11: #{inception_gcn_forward.27} parent=5 // pred_region
        %s220 = ssub.s32 %s15, 1
        // Predicated region
        $region13: #{inception_gcn_forward.27} parent=11 // pred_check
          %p221 = pneg %p74
        $region14: #{inception_gcn_forward.27} parent=11 // pred_check_branch
          %223 = sbr.rel (%p221) target = $region16
        $region15: #{inception_gcn_forward.27} parent=11 // pred_region
          _
        $region16: #{inception_gcn_forward.27} parent=11 // pred_fallthru
          _
        // Predicated region
        $region17: #{inception_gcn_forward.27} parent=11 // pred_check
          %p224 = pneg %p126
        $region18: #{inception_gcn_forward.27} parent=11 // pred_check_branch
          %226 = sbr.rel (%p224) target = $region20
        $region19: #{inception_gcn_forward.27} parent=11 // pred_region
          %p227 = scmp.lt.s32.totalorder %s25, 0
          %s228 = scalar_select %p227, %s25, 0
          %s229 = smul.addr %s228, 8
          %s230 = scalar_lea.vmem %s3, %s229
        $region20: #{inception_gcn_forward.27} parent=11 // pred_fallthru
          _
        // Predicated region
        $region21: #{inception_gcn_forward.27} parent=11 // pred_check
          %p231 = pneg %p152
        $region22: #{inception_gcn_forward.27} parent=11 // pred_check_branch
          %233 = sbr.rel (%p231) target = $region24
        $region23: #{inception_gcn_forward.27} parent=11 // pred_region
          %p234 = scmp.lt.s32.totalorder %s25, 0
          %s235 = scalar_select %p234, %s25, 0
          %s236 = smul.addr %s235, 8
          %s237 = scalar_lea.vmem %s4, %s236
        $region24: #{inception_gcn_forward.27} parent=11 // pred_fallthru
          _
        // Predicated region
        $region25: #{inception_gcn_forward.27} parent=11 // pred_check
          %p238 = pneg %p178
        $region26: #{inception_gcn_forward.27} parent=11 // pred_check_branch
          %240 = sbr.rel (%p238) target = $region28
        $region27: #{inception_gcn_forward.27} parent=11 // pred_region
          %p241 = scmp.lt.s32.totalorder %s25, 0
          %s242 = scalar_select %p241, %s25, 0
          %s243 = scalar_lea.vmem %s5, %s242
        $region28: #{inception_gcn_forward.27} parent=11 // pred_fallthru
          _
      $region12: #{inception_gcn_forward.27} parent=5 // pred_fallthru
        _
      %p244 = scmp.lt.s32.totalorder %s15, 2
      // Predicated region
      $region29: #{inception_gcn_forward.27} parent=5 // pred_check
        %p245 = pneg %p244
      $region30: #{inception_gcn_forward.27} parent=5 // pred_check_branch
        %247 = sbr.rel (%p245) target = $region32
      $region31: #{inception_gcn_forward.27} parent=5 // pred_region
        // Predicated region
        $region33: #{inception_gcn_forward.27} parent=31 // pred_check
          %p248 = pneg %p47
        $region34: #{inception_gcn_forward.27} parent=31 // pred_check_branch
          %250 = sbr.rel (%p248) target = $region36
        $region35: #{inception_gcn_forward.27} parent=31 // pred_region
          %s251 = smul.u32 16, %s22
          %p252 = scmp.lt.s32.totalorder %s251, 31
          %s253 = scalar_select %p252, %s251, 31
          %s254 = smul.addr %s253, 8
          %s255 = scalar_lea.vmem %s0, %s254
          %s256 = smul.u32 16, %s22
        $region36: #{inception_gcn_forward.27} parent=31 // pred_fallthru
          _
        // Predicated region
        $region37: #{inception_gcn_forward.27} parent=31 // pred_check
          %p257 = pneg %p94
        $region38: #{inception_gcn_forward.27} parent=31 // pred_check_branch
          %259 = sbr.rel (%p257) target = $region40
        $region39: #{inception_gcn_forward.27} parent=31 // pred_region
          %s260 = smul.u32 16, %s22
          %p261 = scmp.lt.s32.totalorder %s260, 31
          %s262 = scalar_select %p261, %s260, 31
          %s263 = smul.addr %s262, 8
          %s264 = scalar_lea.vmem %s2, %s263
          %s265 = smul.u32 16, %s22
        $region40: #{inception_gcn_forward.27} parent=31 // pred_fallthru
          _
      $region32: #{inception_gcn_forward.27} parent=5 // pred_fallthru
        _
      %p266 = scmp.le.s32.totalorder 1, %s15
      %p267 = scmp.lt.s32.totalorder %s15, 3
      %p268 = pnand %p266, %p267
      %p269 = pneg %p268
      // Predicated region
      $region41: #{inception_gcn_forward.27} parent=5 // pred_check
        _
      $region42: #{inception_gcn_forward.27} parent=5 // pred_check_branch
        %271 = sbr.rel (%p268) target = $region44
      $region43: #{inception_gcn_forward.27} parent=5 // pred_region
        %s272 = ssub.s32 %s15, 1
        %s273 = smul.u32 16, %s24
        %p274 = scmp.lt.s32.totalorder %s273, 31
        %s275 = scalar_select %p274, %s273, 31
        %s276 = smul.addr %s275, 8
        %s277 = scalar_lea.vmem %s0, %s276
        %p278 = pneg %p53
        %p279 = pneg %p50
        %p280 = pneg %p74
        %p281 = pneg %p71
        %s282 = smul.u32 16, %s24
        %p283 = scmp.lt.s32.totalorder %s282, 31
        %s284 = scalar_select %p283, %s282, 31
        %s285 = smul.addr %s284, 8
        %s286 = scalar_lea.vmem %s2, %s285
        %p287 = pneg %p100
        %p288 = pneg %p97
        %p289 = scmp.lt.s32.totalorder %s25, 0
        %s290 = scalar_select %p289, %s25, 0
        %s291 = smul.addr %s290, 8
        %s292 = scalar_lea.vmem %s3, %s291
        %p293 = pneg %p126
        %p294 = pneg %p123
        %p295 = scmp.lt.s32.totalorder %s25, 0
        %s296 = scalar_select %p295, %s25, 0
        %s297 = smul.addr %s296, 8
        %s298 = scalar_lea.vmem %s4, %s297
        %p299 = pneg %p152
        %p300 = pneg %p149
        %p301 = scmp.lt.s32.totalorder %s25, 0
        %s302 = scalar_select %p301, %s25, 0
        %s303 = scalar_lea.vmem %s5, %s302
        %p304 = pneg %p178
        %p305 = pneg %p175
        %p306 = pneg %p206
        %p307 = pneg %p203
        %s308 = sand.u32 %s193, 1
        %s309 = scalar_lea.sflag [#allocation3], %s308
        %s310 = sand.u32 %s193, 1
        %s311 = smul.addr %s310, 128
        %s312 = scalar_lea.vmem [#allocation2], %s311
        %s313 = smul.u32 16, %s24
        %p314 = scmp.lt.s32.totalorder %s313, 31
        %s315 = scalar_select %p314, %s313, 31
        %s316 = smul.addr %s315, 8
        %s317 = scalar_lea.vmem %s0, %s316
        %s318 = smul.u32 16, %s24
        %s319 = smul.u32 16, %s24
        %p320 = scmp.lt.s32.totalorder %s319, 31
        %s321 = scalar_select %p320, %s319, 31
        %s322 = smul.addr %s321, 8
        %s323 = scalar_lea.vmem %s2, %s322
        %s324 = smul.u32 16, %s24
        %p325 = scmp.lt.s32.totalorder %s25, 0
        %s326 = scalar_select %p325, %s25, 0
        %s327 = smul.addr %s326, 8
        %s328 = scalar_lea.vmem %s3, %s327
        %p329 = scmp.lt.s32.totalorder %s25, 0
        %s330 = scalar_select %p329, %s25, 0
        %s331 = smul.addr %s330, 8
        %s332 = scalar_lea.vmem %s4, %s331
        %p333 = scmp.lt.s32.totalorder %s25, 0
        %s334 = scalar_select %p333, %s25, 0
        %s335 = scalar_lea.vmem %s5, %s334
        %s336 = smul.u32 16, %s24
        %v338 = vld [vmem:[%s317] sm:$0xff]
        %v339 = vld [vmem:[%s317 + $0x8] sm:$0xff]
        %v340 = vld [vmem:[%s317 + $0x10] sm:$0xff]
        %v341 = vld [vmem:[%s317 + $0x18] sm:$0xff]
        %v342 = vld [vmem:[%s317 + $0x20] sm:$0xff]
        %v343 = vld [vmem:[%s317 + $0x28] sm:$0xff]
        %v344 = vld [vmem:[%s317 + $0x30] sm:$0xff]
        %v345 = vld [vmem:[%s317 + $0x38] sm:$0xff]
        %v346 = vld [vmem:[%s317 + $0x40] sm:$0xff]
        %v347 = vld [vmem:[%s317 + $0x48] sm:$0xff]
        %v348 = vld [vmem:[%s317 + $0x50] sm:$0xff]
        %v349 = vld [vmem:[%s317 + $0x58] sm:$0xff]
        %v350 = vld [vmem:[%s317 + $0x60] sm:$0xff]
        %v351 = vld [vmem:[%s317 + $0x68] sm:$0xff]
        %v352 = vld [vmem:[%s317 + $0x70] sm:$0xff]
        %v353 = vld [vmem:[%s317 + $0x78] sm:$0xff]
        %v354 = vlaneseq
        %v355 = vand.u32 %v354, 127
        %v356 = vadd.s32 %v355, 128
        %357 = vset.pattern.permute.xlu0 0
        %358 = vperm.xlu0 %357, %v338
        %v359 = vpop.permute.xlu0 %358
        %360 = vset.pattern.permute.xlu0 0
        %361 = vperm.xlu0 %360, %v339
        %v362 = vpop.permute.xlu0 %361
        %363 = vset.pattern.permute.xlu0 0
        %364 = vperm.xlu0 %363, %v340
        %v365 = vpop.permute.xlu0 %364
        %366 = vset.pattern.permute.xlu0 0
        %367 = vperm.xlu0 %366, %v341
        %v368 = vpop.permute.xlu0 %367
        %369 = vset.pattern.permute.xlu0 0
        %370 = vperm.xlu0 %369, %v342
        %v371 = vpop.permute.xlu0 %370
        %372 = vset.pattern.permute.xlu0 0
        %373 = vperm.xlu0 %372, %v343
        %v374 = vpop.permute.xlu0 %373
        %375 = vset.pattern.permute.xlu0 0
        %376 = vperm.xlu0 %375, %v344
        %v377 = vpop.permute.xlu0 %376
        %378 = vset.pattern.permute.xlu0 0
        %379 = vperm.xlu0 %378, %v345
        %v380 = vpop.permute.xlu0 %379
        %381 = vset.pattern.permute.xlu0 0
        %382 = vperm.xlu0 %381, %v346
        %v383 = vpop.permute.xlu0 %382
        %384 = vset.pattern.permute.xlu0 0
        %385 = vperm.xlu0 %384, %v347
        %v386 = vpop.permute.xlu0 %385
        %387 = vset.pattern.permute.xlu0 0
        %388 = vperm.xlu0 %387, %v348
        %v389 = vpop.permute.xlu0 %388
        %390 = vset.pattern.permute.xlu0 0
        %391 = vperm.xlu0 %390, %v349
        %v392 = vpop.permute.xlu0 %391
        %393 = vset.pattern.permute.xlu0 0
        %394 = vperm.xlu0 %393, %v350
        %v395 = vpop.permute.xlu0 %394
        %396 = vset.pattern.permute.xlu0 0
        %397 = vperm.xlu0 %396, %v351
        %v398 = vpop.permute.xlu0 %397
        %399 = vset.pattern.permute.xlu0 0
        %400 = vperm.xlu0 %399, %v352
        %v401 = vpop.permute.xlu0 %400
        %402 = vset.pattern.permute.xlu0 0
        %403 = vperm.xlu0 %402, %v353
        %v404 = vpop.permute.xlu0 %403
        %vm405 = vcmp.eq.s32.totalorder %v359, %v355
        %vm406 = vcmp.eq.s32.totalorder %v359, %v356
        %vm407 = vcmp.eq.s32.totalorder %v362, %v355
        %vm408 = vcmp.eq.s32.totalorder %v362, %v356
        %vm409 = vcmp.eq.s32.totalorder %v365, %v355
        %vm410 = vcmp.eq.s32.totalorder %v365, %v356
        %vm411 = vcmp.eq.s32.totalorder %v368, %v355
        %vm412 = vcmp.eq.s32.totalorder %v368, %v356
        %vm413 = vcmp.eq.s32.totalorder %v371, %v355
        %vm414 = vcmp.eq.s32.totalorder %v371, %v356
        %vm415 = vcmp.eq.s32.totalorder %v374, %v355
        %vm416 = vcmp.eq.s32.totalorder %v374, %v356
        %vm417 = vcmp.eq.s32.totalorder %v377, %v355
        %vm418 = vcmp.eq.s32.totalorder %v377, %v356
        %vm419 = vcmp.eq.s32.totalorder %v380, %v355
        %vm420 = vcmp.eq.s32.totalorder %v380, %v356
        %vm421 = vcmp.eq.s32.totalorder %v383, %v355
        %vm422 = vcmp.eq.s32.totalorder %v383, %v356
        %vm423 = vcmp.eq.s32.totalorder %v386, %v355
        %vm424 = vcmp.eq.s32.totalorder %v386, %v356
        %vm425 = vcmp.eq.s32.totalorder %v389, %v355
        %vm426 = vcmp.eq.s32.totalorder %v389, %v356
        %vm427 = vcmp.eq.s32.totalorder %v392, %v355
        %vm428 = vcmp.eq.s32.totalorder %v392, %v356
        %vm429 = vcmp.eq.s32.totalorder %v395, %v355
        %vm430 = vcmp.eq.s32.totalorder %v395, %v356
        %vm431 = vcmp.eq.s32.totalorder %v398, %v355
        %vm432 = vcmp.eq.s32.totalorder %v398, %v356
        %vm433 = vcmp.eq.s32.totalorder %v401, %v355
        %vm434 = vcmp.eq.s32.totalorder %v401, %v356
        %vm435 = vcmp.eq.s32.totalorder %v404, %v355
        %vm436 = vcmp.eq.s32.totalorder %v404, %v356
        %v437 = vsel %vm405, 1.0, 0.0
        %v438 = vsel %vm406, 1.0, 0.0
        %v439 = vsel %vm407, 1.0, 0.0
        %v440 = vsel %vm408, 1.0, 0.0
        %v441 = vsel %vm409, 1.0, 0.0
        %v442 = vsel %vm410, 1.0, 0.0
        %v443 = vsel %vm411, 1.0, 0.0
        %v444 = vsel %vm412, 1.0, 0.0
        %v445 = vsel %vm413, 1.0, 0.0
        %v446 = vsel %vm414, 1.0, 0.0
        %v447 = vsel %vm415, 1.0, 0.0
        %v448 = vsel %vm416, 1.0, 0.0
        %v449 = vsel %vm417, 1.0, 0.0
        %v450 = vsel %vm418, 1.0, 0.0
        %v451 = vsel %vm419, 1.0, 0.0
        %v452 = vsel %vm420, 1.0, 0.0
        %v453 = vsel %vm421, 1.0, 0.0
        %v454 = vsel %vm422, 1.0, 0.0
        %v455 = vsel %vm423, 1.0, 0.0
        %v456 = vsel %vm424, 1.0, 0.0
        %v457 = vsel %vm425, 1.0, 0.0
        %v458 = vsel %vm426, 1.0, 0.0
        %v459 = vsel %vm427, 1.0, 0.0
        %v460 = vsel %vm428, 1.0, 0.0
        %v461 = vsel %vm429, 1.0, 0.0
        %v462 = vsel %vm430, 1.0, 0.0
        %v463 = vsel %vm431, 1.0, 0.0
        %v464 = vsel %vm432, 1.0, 0.0
        %v465 = vsel %vm433, 1.0, 0.0
        %v466 = vsel %vm434, 1.0, 0.0
        %v467 = vsel %vm435, 1.0, 0.0
        %v468 = vsel %vm436, 1.0, 0.0
        %469 = vset.pattern.permute.xlu0 1
        %470 = vperm.xlu0 %469, %v338
        %v471 = vpop.permute.xlu0 %470
        %472 = vset.pattern.permute.xlu0 1
        %473 = vperm.xlu0 %472, %v339
        %v474 = vpop.permute.xlu0 %473
        %475 = vset.pattern.permute.xlu0 1
        %476 = vperm.xlu0 %475, %v340
        %v477 = vpop.permute.xlu0 %476
        %478 = vset.pattern.permute.xlu0 1
        %479 = vperm.xlu0 %478, %v341
        %v480 = vpop.permute.xlu0 %479
        %481 = vset.pattern.permute.xlu0 1
        %482 = vperm.xlu0 %481, %v342
        %v483 = vpop.permute.xlu0 %482
        %484 = vset.pattern.permute.xlu0 1
        %485 = vperm.xlu0 %484, %v343
        %v486 = vpop.permute.xlu0 %485
        %487 = vset.pattern.permute.xlu0 1
        %488 = vperm.xlu0 %487, %v344
        %v489 = vpop.permute.xlu0 %488
        %490 = vset.pattern.permute.xlu0 1
        %491 = vperm.xlu0 %490, %v345
        %v492 = vpop.permute.xlu0 %491
        %493 = vset.pattern.permute.xlu0 1
        %494 = vperm.xlu0 %493, %v346
        %v495 = vpop.permute.xlu0 %494
        %496 = vset.pattern.permute.xlu0 1
        %497 = vperm.xlu0 %496, %v347
        %v498 = vpop.permute.xlu0 %497
        %499 = vset.pattern.permute.xlu0 1
        %500 = vperm.xlu0 %499, %v348
        %v501 = vpop.permute.xlu0 %500
        %502 = vset.pattern.permute.xlu0 1
        %503 = vperm.xlu0 %502, %v349
        %v504 = vpop.permute.xlu0 %503
        %505 = vset.pattern.permute.xlu0 1
        %506 = vperm.xlu0 %505, %v350
        %v507 = vpop.permute.xlu0 %506
        %508 = vset.pattern.permute.xlu0 1
        %509 = vperm.xlu0 %508, %v351
        %v510 = vpop.permute.xlu0 %509
        %511 = vset.pattern.permute.xlu0 1
        %512 = vperm.xlu0 %511, %v352
        %v513 = vpop.permute.xlu0 %512
        %514 = vset.pattern.permute.xlu0 1
        %515 = vperm.xlu0 %514, %v353
        %v516 = vpop.permute.xlu0 %515
        %vm517 = vcmp.eq.s32.totalorder %v471, %v355
        %vm518 = vcmp.eq.s32.totalorder %v471, %v356
        %vm519 = vcmp.eq.s32.totalorder %v474, %v355
        %vm520 = vcmp.eq.s32.totalorder %v474, %v356
        %vm521 = vcmp.eq.s32.totalorder %v477, %v355
        %vm522 = vcmp.eq.s32.totalorder %v477, %v356
        %vm523 = vcmp.eq.s32.totalorder %v480, %v355
        %vm524 = vcmp.eq.s32.totalorder %v480, %v356
        %vm525 = vcmp.eq.s32.totalorder %v483, %v355
        %vm526 = vcmp.eq.s32.totalorder %v483, %v356
        %vm527 = vcmp.eq.s32.totalorder %v486, %v355
        %vm528 = vcmp.eq.s32.totalorder %v486, %v356
        %vm529 = vcmp.eq.s32.totalorder %v489, %v355
        %vm530 = vcmp.eq.s32.totalorder %v489, %v356
        %vm531 = vcmp.eq.s32.totalorder %v492, %v355
        %vm532 = vcmp.eq.s32.totalorder %v492, %v356
        %vm533 = vcmp.eq.s32.totalorder %v495, %v355
        %vm534 = vcmp.eq.s32.totalorder %v495, %v356
        %vm535 = vcmp.eq.s32.totalorder %v498, %v355
        %vm536 = vcmp.eq.s32.totalorder %v498, %v356
        %vm537 = vcmp.eq.s32.totalorder %v501, %v355
        %vm538 = vcmp.eq.s32.totalorder %v501, %v356
        %vm539 = vcmp.eq.s32.totalorder %v504, %v355
        %vm540 = vcmp.eq.s32.totalorder %v504, %v356
        %vm541 = vcmp.eq.s32.totalorder %v507, %v355
        %vm542 = vcmp.eq.s32.totalorder %v507, %v356
        %vm543 = vcmp.eq.s32.totalorder %v510, %v355
        %vm544 = vcmp.eq.s32.totalorder %v510, %v356
        %vm545 = vcmp.eq.s32.totalorder %v513, %v355
        %vm546 = vcmp.eq.s32.totalorder %v513, %v356
        %vm547 = vcmp.eq.s32.totalorder %v516, %v355
        %vm548 = vcmp.eq.s32.totalorder %v516, %v356
        %v549 = vsel %vm517, 1.0, 0.0
        %v550 = vsel %vm518, 1.0, 0.0
        %v551 = vsel %vm519, 1.0, 0.0
        %v552 = vsel %vm520, 1.0, 0.0
        %v553 = vsel %vm521, 1.0, 0.0
        %v554 = vsel %vm522, 1.0, 0.0
        %v555 = vsel %vm523, 1.0, 0.0
        %v556 = vsel %vm524, 1.0, 0.0
        %v557 = vsel %vm525, 1.0, 0.0
        %v558 = vsel %vm526, 1.0, 0.0
        %v559 = vsel %vm527, 1.0, 0.0
        %v560 = vsel %vm528, 1.0, 0.0
        %v561 = vsel %vm529, 1.0, 0.0
        %v562 = vsel %vm530, 1.0, 0.0
        %v563 = vsel %vm531, 1.0, 0.0
        %v564 = vsel %vm532, 1.0, 0.0
        %v565 = vsel %vm533, 1.0, 0.0
        %v566 = vsel %vm534, 1.0, 0.0
        %v567 = vsel %vm535, 1.0, 0.0
        %v568 = vsel %vm536, 1.0, 0.0
        %v569 = vsel %vm537, 1.0, 0.0
        %v570 = vsel %vm538, 1.0, 0.0
        %v571 = vsel %vm539, 1.0, 0.0
        %v572 = vsel %vm540, 1.0, 0.0
        %v573 = vsel %vm541, 1.0, 0.0
        %v574 = vsel %vm542, 1.0, 0.0
        %v575 = vsel %vm543, 1.0, 0.0
        %v576 = vsel %vm544, 1.0, 0.0
        %v577 = vsel %vm545, 1.0, 0.0
        %v578 = vsel %vm546, 1.0, 0.0
        %v579 = vsel %vm547, 1.0, 0.0
        %v580 = vsel %vm548, 1.0, 0.0
        %v581 = vadd.f32 %v437, %v549
        %v582 = vadd.f32 %v438, %v550
        %v583 = vadd.f32 %v439, %v551
        %v584 = vadd.f32 %v440, %v552
        %v585 = vadd.f32 %v441, %v553
        %v586 = vadd.f32 %v442, %v554
        %v587 = vadd.f32 %v443, %v555
        %v588 = vadd.f32 %v444, %v556
        %v589 = vadd.f32 %v445, %v557
        %v590 = vadd.f32 %v446, %v558
        %v591 = vadd.f32 %v447, %v559
        %v592 = vadd.f32 %v448, %v560
        %v593 = vadd.f32 %v449, %v561
        %v594 = vadd.f32 %v450, %v562
        %v595 = vadd.f32 %v451, %v563
        %v596 = vadd.f32 %v452, %v564
        %v597 = vadd.f32 %v453, %v565
        %v598 = vadd.f32 %v454, %v566
        %v599 = vadd.f32 %v455, %v567
        %v600 = vadd.f32 %v456, %v568
        %v601 = vadd.f32 %v457, %v569
        %v602 = vadd.f32 %v458, %v570
        %v603 = vadd.f32 %v459, %v571
        %v604 = vadd.f32 %v460, %v572
        %v605 = vadd.f32 %v461, %v573
        %v606 = vadd.f32 %v462, %v574
        %v607 = vadd.f32 %v463, %v575
        %v608 = vadd.f32 %v464, %v576
        %v609 = vadd.f32 %v465, %v577
        %v610 = vadd.f32 %v466, %v578
        %v611 = vadd.f32 %v467, %v579
        %v612 = vadd.f32 %v468, %v580
        %613 = vset.pattern.permute.xlu0 2
        %614 = vperm.xlu0 %613, %v338
        %v615 = vpop.permute.xlu0 %614
        %616 = vset.pattern.permute.xlu0 2
        %617 = vperm.xlu0 %616, %v339
        %v618 = vpop.permute.xlu0 %617
        %619 = vset.pattern.permute.xlu0 2
        %620 = vperm.xlu0 %619, %v340
        %v621 = vpop.permute.xlu0 %620
        %622 = vset.pattern.permute.xlu0 2
        %623 = vperm.xlu0 %622, %v341
        %v624 = vpop.permute.xlu0 %623
        %625 = vset.pattern.permute.xlu0 2
        %626 = vperm.xlu0 %625, %v342
        %v627 = vpop.permute.xlu0 %626
        %628 = vset.pattern.permute.xlu0 2
        %629 = vperm.xlu0 %628, %v343
        %v630 = vpop.permute.xlu0 %629
        %631 = vset.pattern.permute.xlu0 2
        %632 = vperm.xlu0 %631, %v344
        %v633 = vpop.permute.xlu0 %632
        %634 = vset.pattern.permute.xlu0 2
        %635 = vperm.xlu0 %634, %v345
        %v636 = vpop.permute.xlu0 %635
        %637 = vset.pattern.permute.xlu0 2
        %638 = vperm.xlu0 %637, %v346
        %v639 = vpop.permute.xlu0 %638
        %640 = vset.pattern.permute.xlu0 2
        %641 = vperm.xlu0 %640, %v347
        %v642 = vpop.permute.xlu0 %641
        %643 = vset.pattern.permute.xlu0 2
        %644 = vperm.xlu0 %643, %v348
        %v645 = vpop.permute.xlu0 %644
        %646 = vset.pattern.permute.xlu0 2
        %647 = vperm.xlu0 %646, %v349
        %v648 = vpop.permute.xlu0 %647
        %649 = vset.pattern.permute.xlu0 2
        %650 = vperm.xlu0 %649, %v350
        %v651 = vpop.permute.xlu0 %650
        %652 = vset.pattern.permute.xlu0 2
        %653 = vperm.xlu0 %652, %v351
        %v654 = vpop.permute.xlu0 %653
        %655 = vset.pattern.permute.xlu0 2
        %656 = vperm.xlu0 %655, %v352
        %v657 = vpop.permute.xlu0 %656
        %658 = vset.pattern.permute.xlu0 2
        %659 = vperm.xlu0 %658, %v353
        %v660 = vpop.permute.xlu0 %659
        %vm661 = vcmp.eq.s32.totalorder %v615, %v355
        %vm662 = vcmp.eq.s32.totalorder %v615, %v356
        %vm663 = vcmp.eq.s32.totalorder %v618, %v355
        %vm664 = vcmp.eq.s32.totalorder %v618, %v356
        %vm665 = vcmp.eq.s32.totalorder %v621, %v355
        %vm666 = vcmp.eq.s32.totalorder %v621, %v356
        %vm667 = vcmp.eq.s32.totalorder %v624, %v355
        %vm668 = vcmp.eq.s32.totalorder %v624, %v356
        %vm669 = vcmp.eq.s32.totalorder %v627, %v355
        %vm670 = vcmp.eq.s32.totalorder %v627, %v356
        %vm671 = vcmp.eq.s32.totalorder %v630, %v355
        %vm672 = vcmp.eq.s32.totalorder %v630, %v356
        %vm673 = vcmp.eq.s32.totalorder %v633, %v355
        %vm674 = vcmp.eq.s32.totalorder %v633, %v356
        %vm675 = vcmp.eq.s32.totalorder %v636, %v355
        %vm676 = vcmp.eq.s32.totalorder %v636, %v356
        %vm677 = vcmp.eq.s32.totalorder %v639, %v355
        %vm678 = vcmp.eq.s32.totalorder %v639, %v356
        %vm679 = vcmp.eq.s32.totalorder %v642, %v355
        %vm680 = vcmp.eq.s32.totalorder %v642, %v356
        %vm681 = vcmp.eq.s32.totalorder %v645, %v355
        %vm682 = vcmp.eq.s32.totalorder %v645, %v356
        %vm683 = vcmp.eq.s32.totalorder %v648, %v355
        %vm684 = vcmp.eq.s32.totalorder %v648, %v356
        %vm685 = vcmp.eq.s32.totalorder %v651, %v355
        %vm686 = vcmp.eq.s32.totalorder %v651, %v356
        %vm687 = vcmp.eq.s32.totalorder %v654, %v355
        %vm688 = vcmp.eq.s32.totalorder %v654, %v356
        %vm689 = vcmp.eq.s32.totalorder %v657, %v355
        %vm690 = vcmp.eq.s32.totalorder %v657, %v356
        %vm691 = vcmp.eq.s32.totalorder %v660, %v355
        %vm692 = vcmp.eq.s32.totalorder %v660, %v356
        %v693 = vsel %vm661, 1.0, 0.0
        %v694 = vsel %vm662, 1.0, 0.0
        %v695 = vsel %vm663, 1.0, 0.0
        %v696 = vsel %vm664, 1.0, 0.0
        %v697 = vsel %vm665, 1.0, 0.0
        %v698 = vsel %vm666, 1.0, 0.0
        %v699 = vsel %vm667, 1.0, 0.0
        %v700 = vsel %vm668, 1.0, 0.0
        %v701 = vsel %vm669, 1.0, 0.0
        %v702 = vsel %vm670, 1.0, 0.0
        %v703 = vsel %vm671, 1.0, 0.0
        %v704 = vsel %vm672, 1.0, 0.0
        %v705 = vsel %vm673, 1.0, 0.0
        %v706 = vsel %vm674, 1.0, 0.0
        %v707 = vsel %vm675, 1.0, 0.0
        %v708 = vsel %vm676, 1.0, 0.0
        %v709 = vsel %vm677, 1.0, 0.0
        %v710 = vsel %vm678, 1.0, 0.0
        %v711 = vsel %vm679, 1.0, 0.0
        %v712 = vsel %vm680, 1.0, 0.0
        %v713 = vsel %vm681, 1.0, 0.0
        %v714 = vsel %vm682, 1.0, 0.0
        %v715 = vsel %vm683, 1.0, 0.0
        %v716 = vsel %vm684, 1.0, 0.0
        %v717 = vsel %vm685, 1.0, 0.0
        %v718 = vsel %vm686, 1.0, 0.0
        %v719 = vsel %vm687, 1.0, 0.0
        %v720 = vsel %vm688, 1.0, 0.0
        %v721 = vsel %vm689, 1.0, 0.0
        %v722 = vsel %vm690, 1.0, 0.0
        %v723 = vsel %vm691, 1.0, 0.0
        %v724 = vsel %vm692, 1.0, 0.0
        %v725 = vadd.f32 %v581, %v693
        %v726 = vadd.f32 %v582, %v694
        %v727 = vadd.f32 %v583, %v695
        %v728 = vadd.f32 %v584, %v696
        %v729 = vadd.f32 %v585, %v697
        %v730 = vadd.f32 %v586, %v698
        %v731 = vadd.f32 %v587, %v699
        %v732 = vadd.f32 %v588, %v700
        %v733 = vadd.f32 %v589, %v701
        %v734 = vadd.f32 %v590, %v702
        %v735 = vadd.f32 %v591, %v703
        %v736 = vadd.f32 %v592, %v704
        %v737 = vadd.f32 %v593, %v705
        %v738 = vadd.f32 %v594, %v706
        %v739 = vadd.f32 %v595, %v707
        %v740 = vadd.f32 %v596, %v708
        %v741 = vadd.f32 %v597, %v709
        %v742 = vadd.f32 %v598, %v710
        %v743 = vadd.f32 %v599, %v711
        %v744 = vadd.f32 %v600, %v712
        %v745 = vadd.f32 %v601, %v713
        %v746 = vadd.f32 %v602, %v714
        %v747 = vadd.f32 %v603, %v715
        %v748 = vadd.f32 %v604, %v716
        %v749 = vadd.f32 %v605, %v717
        %v750 = vadd.f32 %v606, %v718
        %v751 = vadd.f32 %v607, %v719
        %v752 = vadd.f32 %v608, %v720
        %v753 = vadd.f32 %v609, %v721
        %v754 = vadd.f32 %v610, %v722
        %v755 = vadd.f32 %v611, %v723
        %v756 = vadd.f32 %v612, %v724
        %757 = vset.pattern.permute.xlu0 3
        %758 = vperm.xlu0 %757, %v338
        %v759 = vpop.permute.xlu0 %758
        %760 = vset.pattern.permute.xlu0 3
        %761 = vperm.xlu0 %760, %v339
        %v762 = vpop.permute.xlu0 %761
        %763 = vset.pattern.permute.xlu0 3
        %764 = vperm.xlu0 %763, %v340
        %v765 = vpop.permute.xlu0 %764
        %766 = vset.pattern.permute.xlu0 3
        %767 = vperm.xlu0 %766, %v341
        %v768 = vpop.permute.xlu0 %767
        %769 = vset.pattern.permute.xlu0 3
        %770 = vperm.xlu0 %769, %v342
        %v771 = vpop.permute.xlu0 %770
        %772 = vset.pattern.permute.xlu0 3
        %773 = vperm.xlu0 %772, %v343
        %v774 = vpop.permute.xlu0 %773
        %775 = vset.pattern.permute.xlu0 3
        %776 = vperm.xlu0 %775, %v344
        %v777 = vpop.permute.xlu0 %776
        %778 = vset.pattern.permute.xlu0 3
        %779 = vperm.xlu0 %778, %v345
        %v780 = vpop.permute.xlu0 %779
        %781 = vset.pattern.permute.xlu0 3
        %782 = vperm.xlu0 %781, %v346
        %v783 = vpop.permute.xlu0 %782
        %784 = vset.pattern.permute.xlu0 3
        %785 = vperm.xlu0 %784, %v347
        %v786 = vpop.permute.xlu0 %785
        %787 = vset.pattern.permute.xlu0 3
        %788 = vperm.xlu0 %787, %v348
        %v789 = vpop.permute.xlu0 %788
        %790 = vset.pattern.permute.xlu0 3
        %791 = vperm.xlu0 %790, %v349
        %v792 = vpop.permute.xlu0 %791
        %793 = vset.pattern.permute.xlu0 3
        %794 = vperm.xlu0 %793, %v350
        %v795 = vpop.permute.xlu0 %794
        %796 = vset.pattern.permute.xlu0 3
        %797 = vperm.xlu0 %796, %v351
        %v798 = vpop.permute.xlu0 %797
        %799 = vset.pattern.permute.xlu0 3
        %800 = vperm.xlu0 %799, %v352
        %v801 = vpop.permute.xlu0 %800
        %802 = vset.pattern.permute.xlu0 3
        %803 = vperm.xlu0 %802, %v353
        %v804 = vpop.permute.xlu0 %803
        %vm805 = vcmp.eq.s32.totalorder %v759, %v355
        %vm806 = vcmp.eq.s32.totalorder %v759, %v356
        %vm807 = vcmp.eq.s32.totalorder %v762, %v355
        %vm808 = vcmp.eq.s32.totalorder %v762, %v356
        %vm809 = vcmp.eq.s32.totalorder %v765, %v355
        %vm810 = vcmp.eq.s32.totalorder %v765, %v356
        %vm811 = vcmp.eq.s32.totalorder %v768, %v355
        %vm812 = vcmp.eq.s32.totalorder %v768, %v356
        %vm813 = vcmp.eq.s32.totalorder %v771, %v355
        %vm814 = vcmp.eq.s32.totalorder %v771, %v356
        %vm815 = vcmp.eq.s32.totalorder %v774, %v355
        %vm816 = vcmp.eq.s32.totalorder %v774, %v356
        %vm817 = vcmp.eq.s32.totalorder %v777, %v355
        %vm818 = vcmp.eq.s32.totalorder %v777, %v356
        %vm819 = vcmp.eq.s32.totalorder %v780, %v355
        %vm820 = vcmp.eq.s32.totalorder %v780, %v356
        %vm821 = vcmp.eq.s32.totalorder %v783, %v355
        %vm822 = vcmp.eq.s32.totalorder %v783, %v356
        %vm823 = vcmp.eq.s32.totalorder %v786, %v355
        %vm824 = vcmp.eq.s32.totalorder %v786, %v356
        %vm825 = vcmp.eq.s32.totalorder %v789, %v355
        %vm826 = vcmp.eq.s32.totalorder %v789, %v356
        %vm827 = vcmp.eq.s32.totalorder %v792, %v355
        %vm828 = vcmp.eq.s32.totalorder %v792, %v356
        %vm829 = vcmp.eq.s32.totalorder %v795, %v355
        %vm830 = vcmp.eq.s32.totalorder %v795, %v356
        %vm831 = vcmp.eq.s32.totalorder %v798, %v355
        %vm832 = vcmp.eq.s32.totalorder %v798, %v356
        %vm833 = vcmp.eq.s32.totalorder %v801, %v355
        %vm834 = vcmp.eq.s32.totalorder %v801, %v356
        %vm835 = vcmp.eq.s32.totalorder %v804, %v355
        %vm836 = vcmp.eq.s32.totalorder %v804, %v356
        %v837 = vsel %vm805, 1.0, 0.0
        %v838 = vsel %vm806, 1.0, 0.0
        %v839 = vsel %vm807, 1.0, 0.0
        %v840 = vsel %vm808, 1.0, 0.0
        %v841 = vsel %vm809, 1.0, 0.0
        %v842 = vsel %vm810, 1.0, 0.0
        %v843 = vsel %vm811, 1.0, 0.0
        %v844 = vsel %vm812, 1.0, 0.0
        %v845 = vsel %vm813, 1.0, 0.0
        %v846 = vsel %vm814, 1.0, 0.0
        %v847 = vsel %vm815, 1.0, 0.0
        %v848 = vsel %vm816, 1.0, 0.0
        %v849 = vsel %vm817, 1.0, 0.0
        %v850 = vsel %vm818, 1.0, 0.0
        %v851 = vsel %vm819, 1.0, 0.0
        %v852 = vsel %vm820, 1.0, 0.0
        %v853 = vsel %vm821, 1.0, 0.0
        %v854 = vsel %vm822, 1.0, 0.0
        %v855 = vsel %vm823, 1.0, 0.0
        %v856 = vsel %vm824, 1.0, 0.0
        %v857 = vsel %vm825, 1.0, 0.0
        %v858 = vsel %vm826, 1.0, 0.0
        %v859 = vsel %vm827, 1.0, 0.0
        %v860 = vsel %vm828, 1.0, 0.0
        %v861 = vsel %vm829, 1.0, 0.0
        %v862 = vsel %vm830, 1.0, 0.0
        %v863 = vsel %vm831, 1.0, 0.0
        %v864 = vsel %vm832, 1.0, 0.0
        %v865 = vsel %vm833, 1.0, 0.0
        %v866 = vsel %vm834, 1.0, 0.0
        %v867 = vsel %vm835, 1.0, 0.0
        %v868 = vsel %vm836, 1.0, 0.0
        %v869 = vadd.f32 %v725, %v837
        %v870 = vadd.f32 %v726, %v838
        %v871 = vadd.f32 %v727, %v839
        %v872 = vadd.f32 %v728, %v840
        %v873 = vadd.f32 %v729, %v841
        %v874 = vadd.f32 %v730, %v842
        %v875 = vadd.f32 %v731, %v843
        %v876 = vadd.f32 %v732, %v844
        %v877 = vadd.f32 %v733, %v845
        %v878 = vadd.f32 %v734, %v846
        %v879 = vadd.f32 %v735, %v847
        %v880 = vadd.f32 %v736, %v848
        %v881 = vadd.f32 %v737, %v849
        %v882 = vadd.f32 %v738, %v850
        %v883 = vadd.f32 %v739, %v851
        %v884 = vadd.f32 %v740, %v852
        %v885 = vadd.f32 %v741, %v853
        %v886 = vadd.f32 %v742, %v854
        %v887 = vadd.f32 %v743, %v855
        %v888 = vadd.f32 %v744, %v856
        %v889 = vadd.f32 %v745, %v857
        %v890 = vadd.f32 %v746, %v858
        %v891 = vadd.f32 %v747, %v859
        %v892 = vadd.f32 %v748, %v860
        %v893 = vadd.f32 %v749, %v861
        %v894 = vadd.f32 %v750, %v862
        %v895 = vadd.f32 %v751, %v863
        %v896 = vadd.f32 %v752, %v864
        %v897 = vadd.f32 %v753, %v865
        %v898 = vadd.f32 %v754, %v866
        %v899 = vadd.f32 %v755, %v867
        %v900 = vadd.f32 %v756, %v868
        %901 = vset.pattern.permute.xlu0 4
        %902 = vperm.xlu0 %901, %v338
        %v903 = vpop.permute.xlu0 %902
        %904 = vset.pattern.permute.xlu0 4
        %905 = vperm.xlu0 %904, %v339
        %v906 = vpop.permute.xlu0 %905
        %907 = vset.pattern.permute.xlu0 4
        %908 = vperm.xlu0 %907, %v340
        %v909 = vpop.permute.xlu0 %908
        %910 = vset.pattern.permute.xlu0 4
        %911 = vperm.xlu0 %910, %v341
        %v912 = vpop.permute.xlu0 %911
        %913 = vset.pattern.permute.xlu0 4
        %914 = vperm.xlu0 %913, %v342
        %v915 = vpop.permute.xlu0 %914
        %916 = vset.pattern.permute.xlu0 4
        %917 = vperm.xlu0 %916, %v343
        %v918 = vpop.permute.xlu0 %917
        %919 = vset.pattern.permute.xlu0 4
        %920 = vperm.xlu0 %919, %v344
        %v921 = vpop.permute.xlu0 %920
        %922 = vset.pattern.permute.xlu0 4
        %923 = vperm.xlu0 %922, %v345
        %v924 = vpop.permute.xlu0 %923
        %925 = vset.pattern.permute.xlu0 4
        %926 = vperm.xlu0 %925, %v346
        %v927 = vpop.permute.xlu0 %926
        %928 = vset.pattern.permute.xlu0 4
        %929 = vperm.xlu0 %928, %v347
        %v930 = vpop.permute.xlu0 %929
        %931 = vset.pattern.permute.xlu0 4
        %932 = vperm.xlu0 %931, %v348
        %v933 = vpop.permute.xlu0 %932
        %934 = vset.pattern.permute.xlu0 4
        %935 = vperm.xlu0 %934, %v349
        %v936 = vpop.permute.xlu0 %935
        %937 = vset.pattern.permute.xlu0 4
        %938 = vperm.xlu0 %937, %v350
        %v939 = vpop.permute.xlu0 %938
        %940 = vset.pattern.permute.xlu0 4
        %941 = vperm.xlu0 %940, %v351
        %v942 = vpop.permute.xlu0 %941
        %943 = vset.pattern.permute.xlu0 4
        %944 = vperm.xlu0 %943, %v352
        %v945 = vpop.permute.xlu0 %944
        %946 = vset.pattern.permute.xlu0 4
        %947 = vperm.xlu0 %946, %v353
        %v948 = vpop.permute.xlu0 %947
        %vm949 = vcmp.eq.s32.totalorder %v903, %v355
        %vm950 = vcmp.eq.s32.totalorder %v903, %v356
        %vm951 = vcmp.eq.s32.totalorder %v906, %v355
        %vm952 = vcmp.eq.s32.totalorder %v906, %v356
        %vm953 = vcmp.eq.s32.totalorder %v909, %v355
        %vm954 = vcmp.eq.s32.totalorder %v909, %v356
        %vm955 = vcmp.eq.s32.totalorder %v912, %v355
        %vm956 = vcmp.eq.s32.totalorder %v912, %v356
        %vm957 = vcmp.eq.s32.totalorder %v915, %v355
        %vm958 = vcmp.eq.s32.totalorder %v915, %v356
        %vm959 = vcmp.eq.s32.totalorder %v918, %v355
        %vm960 = vcmp.eq.s32.totalorder %v918, %v356
        %vm961 = vcmp.eq.s32.totalorder %v921, %v355
        %vm962 = vcmp.eq.s32.totalorder %v921, %v356
        %vm963 = vcmp.eq.s32.totalorder %v924, %v355
        %vm964 = vcmp.eq.s32.totalorder %v924, %v356
        %vm965 = vcmp.eq.s32.totalorder %v927, %v355
        %vm966 = vcmp.eq.s32.totalorder %v927, %v356
        %vm967 = vcmp.eq.s32.totalorder %v930, %v355
        %vm968 = vcmp.eq.s32.totalorder %v930, %v356
        %vm969 = vcmp.eq.s32.totalorder %v933, %v355
        %vm970 = vcmp.eq.s32.totalorder %v933, %v356
        %vm971 = vcmp.eq.s32.totalorder %v936, %v355
        %vm972 = vcmp.eq.s32.totalorder %v936, %v356
        %vm973 = vcmp.eq.s32.totalorder %v939, %v355
        %vm974 = vcmp.eq.s32.totalorder %v939, %v356
        %vm975 = vcmp.eq.s32.totalorder %v942, %v355
        %vm976 = vcmp.eq.s32.totalorder %v942, %v356
        %vm977 = vcmp.eq.s32.totalorder %v945, %v355
        %vm978 = vcmp.eq.s32.totalorder %v945, %v356
        %vm979 = vcmp.eq.s32.totalorder %v948, %v355
        %vm980 = vcmp.eq.s32.totalorder %v948, %v356
        %v981 = vsel %vm949, 1.0, 0.0
        %v982 = vsel %vm950, 1.0, 0.0
        %v983 = vsel %vm951, 1.0, 0.0
        %v984 = vsel %vm952, 1.0, 0.0
        %v985 = vsel %vm953, 1.0, 0.0
        %v986 = vsel %vm954, 1.0, 0.0
        %v987 = vsel %vm955, 1.0, 0.0
        %v988 = vsel %vm956, 1.0, 0.0
        %v989 = vsel %vm957, 1.0, 0.0
        %v990 = vsel %vm958, 1.0, 0.0
        %v991 = vsel %vm959, 1.0, 0.0
        %v992 = vsel %vm960, 1.0, 0.0
        %v993 = vsel %vm961, 1.0, 0.0
        %v994 = vsel %vm962, 1.0, 0.0
        %v995 = vsel %vm963, 1.0, 0.0
        %v996 = vsel %vm964, 1.0, 0.0
        %v997 = vsel %vm965, 1.0, 0.0
        %v998 = vsel %vm966, 1.0, 0.0
        %v999 = vsel %vm967, 1.0, 0.0
        %v1000 = vsel %vm968, 1.0, 0.0
        %v1001 = vsel %vm969, 1.0, 0.0
        %v1002 = vsel %vm970, 1.0, 0.0
        %v1003 = vsel %vm971, 1.0, 0.0
        %v1004 = vsel %vm972, 1.0, 0.0
        %v1005 = vsel %vm973, 1.0, 0.0
        %v1006 = vsel %vm974, 1.0, 0.0
        %v1007 = vsel %vm975, 1.0, 0.0
        %v1008 = vsel %vm976, 1.0, 0.0
        %v1009 = vsel %vm977, 1.0, 0.0
        %v1010 = vsel %vm978, 1.0, 0.0
        %v1011 = vsel %vm979, 1.0, 0.0
        %v1012 = vsel %vm980, 1.0, 0.0
        %v1013 = vadd.f32 %v869, %v981
        %v1014 = vadd.f32 %v870, %v982
        %v1015 = vadd.f32 %v871, %v983
        %v1016 = vadd.f32 %v872, %v984
        %v1017 = vadd.f32 %v873, %v985
        %v1018 = vadd.f32 %v874, %v986
        %v1019 = vadd.f32 %v875, %v987
        %v1020 = vadd.f32 %v876, %v988
        %v1021 = vadd.f32 %v877, %v989
        %v1022 = vadd.f32 %v878, %v990
        %v1023 = vadd.f32 %v879, %v991
        %v1024 = vadd.f32 %v880, %v992
        %v1025 = vadd.f32 %v881, %v993
        %v1026 = vadd.f32 %v882, %v994
        %v1027 = vadd.f32 %v883, %v995
        %v1028 = vadd.f32 %v884, %v996
        %v1029 = vadd.f32 %v885, %v997
        %v1030 = vadd.f32 %v886, %v998
        %v1031 = vadd.f32 %v887, %v999
        %v1032 = vadd.f32 %v888, %v1000
        %v1033 = vadd.f32 %v889, %v1001
        %v1034 = vadd.f32 %v890, %v1002
        %v1035 = vadd.f32 %v891, %v1003
        %v1036 = vadd.f32 %v892, %v1004
        %v1037 = vadd.f32 %v893, %v1005
        %v1038 = vadd.f32 %v894, %v1006
        %v1039 = vadd.f32 %v895, %v1007
        %v1040 = vadd.f32 %v896, %v1008
        %v1041 = vadd.f32 %v897, %v1009
        %v1042 = vadd.f32 %v898, %v1010
        %v1043 = vadd.f32 %v899, %v1011
        %v1044 = vadd.f32 %v900, %v1012
        %1045 = vset.pattern.permute.xlu0 5
        %1046 = vperm.xlu0 %1045, %v338
        %v1047 = vpop.permute.xlu0 %1046
        %1048 = vset.pattern.permute.xlu0 5
        %1049 = vperm.xlu0 %1048, %v339
        %v1050 = vpop.permute.xlu0 %1049
        %1051 = vset.pattern.permute.xlu0 5
        %1052 = vperm.xlu0 %1051, %v340
        %v1053 = vpop.permute.xlu0 %1052
        %1054 = vset.pattern.permute.xlu0 5
        %1055 = vperm.xlu0 %1054, %v341
        %v1056 = vpop.permute.xlu0 %1055
        %1057 = vset.pattern.permute.xlu0 5
        %1058 = vperm.xlu0 %1057, %v342
        %v1059 = vpop.permute.xlu0 %1058
        %1060 = vset.pattern.permute.xlu0 5
        %1061 = vperm.xlu0 %1060, %v343
        %v1062 = vpop.permute.xlu0 %1061
        %1063 = vset.pattern.permute.xlu0 5
        %1064 = vperm.xlu0 %1063, %v344
        %v1065 = vpop.permute.xlu0 %1064
        %1066 = vset.pattern.permute.xlu0 5
        %1067 = vperm.xlu0 %1066, %v345
        %v1068 = vpop.permute.xlu0 %1067
        %1069 = vset.pattern.permute.xlu0 5
        %1070 = vperm.xlu0 %1069, %v346
        %v1071 = vpop.permute.xlu0 %1070
        %1072 = vset.pattern.permute.xlu0 5
        %1073 = vperm.xlu0 %1072, %v347
        %v1074 = vpop.permute.xlu0 %1073
        %1075 = vset.pattern.permute.xlu0 5
        %1076 = vperm.xlu0 %1075, %v348
        %v1077 = vpop.permute.xlu0 %1076
        %1078 = vset.pattern.permute.xlu0 5
        %1079 = vperm.xlu0 %1078, %v349
        %v1080 = vpop.permute.xlu0 %1079
        %1081 = vset.pattern.permute.xlu0 5
        %1082 = vperm.xlu0 %1081, %v350
        %v1083 = vpop.permute.xlu0 %1082
        %1084 = vset.pattern.permute.xlu0 5
        %1085 = vperm.xlu0 %1084, %v351
        %v1086 = vpop.permute.xlu0 %1085
        %1087 = vset.pattern.permute.xlu0 5
        %1088 = vperm.xlu0 %1087, %v352
        %v1089 = vpop.permute.xlu0 %1088
        %1090 = vset.pattern.permute.xlu0 5
        %1091 = vperm.xlu0 %1090, %v353
        %v1092 = vpop.permute.xlu0 %1091
        %vm1093 = vcmp.eq.s32.totalorder %v1047, %v355
        %vm1094 = vcmp.eq.s32.totalorder %v1047, %v356
        %vm1095 = vcmp.eq.s32.totalorder %v1050, %v355
        %vm1096 = vcmp.eq.s32.totalorder %v1050, %v356
        %vm1097 = vcmp.eq.s32.totalorder %v1053, %v355
        %vm1098 = vcmp.eq.s32.totalorder %v1053, %v356
        %vm1099 = vcmp.eq.s32.totalorder %v1056, %v355
        %vm1100 = vcmp.eq.s32.totalorder %v1056, %v356
        %vm1101 = vcmp.eq.s32.totalorder %v1059, %v355
        %vm1102 = vcmp.eq.s32.totalorder %v1059, %v356
        %vm1103 = vcmp.eq.s32.totalorder %v1062, %v355
        %vm1104 = vcmp.eq.s32.totalorder %v1062, %v356
        %vm1105 = vcmp.eq.s32.totalorder %v1065, %v355
        %vm1106 = vcmp.eq.s32.totalorder %v1065, %v356
        %vm1107 = vcmp.eq.s32.totalorder %v1068, %v355
        %vm1108 = vcmp.eq.s32.totalorder %v1068, %v356
        %vm1109 = vcmp.eq.s32.totalorder %v1071, %v355
        %vm1110 = vcmp.eq.s32.totalorder %v1071, %v356
        %vm1111 = vcmp.eq.s32.totalorder %v1074, %v355
        %vm1112 = vcmp.eq.s32.totalorder %v1074, %v356
        %vm1113 = vcmp.eq.s32.totalorder %v1077, %v355
        %vm1114 = vcmp.eq.s32.totalorder %v1077, %v356
        %vm1115 = vcmp.eq.s32.totalorder %v1080, %v355
        %vm1116 = vcmp.eq.s32.totalorder %v1080, %v356
        %vm1117 = vcmp.eq.s32.totalorder %v1083, %v355
        %vm1118 = vcmp.eq.s32.totalorder %v1083, %v356
        %vm1119 = vcmp.eq.s32.totalorder %v1086, %v355
        %vm1120 = vcmp.eq.s32.totalorder %v1086, %v356
        %vm1121 = vcmp.eq.s32.totalorder %v1089, %v355
        %vm1122 = vcmp.eq.s32.totalorder %v1089, %v356
        %vm1123 = vcmp.eq.s32.totalorder %v1092, %v355
        %vm1124 = vcmp.eq.s32.totalorder %v1092, %v356
        %v1125 = vsel %vm1093, 1.0, 0.0
        %v1126 = vsel %vm1094, 1.0, 0.0
        %v1127 = vsel %vm1095, 1.0, 0.0
        %v1128 = vsel %vm1096, 1.0, 0.0
        %v1129 = vsel %vm1097, 1.0, 0.0
        %v1130 = vsel %vm1098, 1.0, 0.0
        %v1131 = vsel %vm1099, 1.0, 0.0
        %v1132 = vsel %vm1100, 1.0, 0.0
        %v1133 = vsel %vm1101, 1.0, 0.0
        %v1134 = vsel %vm1102, 1.0, 0.0
        %v1135 = vsel %vm1103, 1.0, 0.0
        %v1136 = vsel %vm1104, 1.0, 0.0
        %v1137 = vsel %vm1105, 1.0, 0.0
        %v1138 = vsel %vm1106, 1.0, 0.0
        %v1139 = vsel %vm1107, 1.0, 0.0
        %v1140 = vsel %vm1108, 1.0, 0.0
        %v1141 = vsel %vm1109, 1.0, 0.0
        %v1142 = vsel %vm1110, 1.0, 0.0
        %v1143 = vsel %vm1111, 1.0, 0.0
        %v1144 = vsel %vm1112, 1.0, 0.0
        %v1145 = vsel %vm1113, 1.0, 0.0
        %v1146 = vsel %vm1114, 1.0, 0.0
        %v1147 = vsel %vm1115, 1.0, 0.0
        %v1148 = vsel %vm1116, 1.0, 0.0
        %v1149 = vsel %vm1117, 1.0, 0.0
        %v1150 = vsel %vm1118, 1.0, 0.0
        %v1151 = vsel %vm1119, 1.0, 0.0
        %v1152 = vsel %vm1120, 1.0, 0.0
        %v1153 = vsel %vm1121, 1.0, 0.0
        %v1154 = vsel %vm1122, 1.0, 0.0
        %v1155 = vsel %vm1123, 1.0, 0.0
        %v1156 = vsel %vm1124, 1.0, 0.0
        %v1157 = vadd.f32 %v1013, %v1125
        %v1158 = vadd.f32 %v1014, %v1126
        %v1159 = vadd.f32 %v1015, %v1127
        %v1160 = vadd.f32 %v1016, %v1128
        %v1161 = vadd.f32 %v1017, %v1129
        %v1162 = vadd.f32 %v1018, %v1130
        %v1163 = vadd.f32 %v1019, %v1131
        %v1164 = vadd.f32 %v1020, %v1132
        %v1165 = vadd.f32 %v1021, %v1133
        %v1166 = vadd.f32 %v1022, %v1134
        %v1167 = vadd.f32 %v1023, %v1135
        %v1168 = vadd.f32 %v1024, %v1136
        %v1169 = vadd.f32 %v1025, %v1137
        %v1170 = vadd.f32 %v1026, %v1138
        %v1171 = vadd.f32 %v1027, %v1139
        %v1172 = vadd.f32 %v1028, %v1140
        %v1173 = vadd.f32 %v1029, %v1141
        %v1174 = vadd.f32 %v1030, %v1142
        %v1175 = vadd.f32 %v1031, %v1143
        %v1176 = vadd.f32 %v1032, %v1144
        %v1177 = vadd.f32 %v1033, %v1145
        %v1178 = vadd.f32 %v1034, %v1146
        %v1179 = vadd.f32 %v1035, %v1147
        %v1180 = vadd.f32 %v1036, %v1148
        %v1181 = vadd.f32 %v1037, %v1149
        %v1182 = vadd.f32 %v1038, %v1150
        %v1183 = vadd.f32 %v1039, %v1151
        %v1184 = vadd.f32 %v1040, %v1152
        %v1185 = vadd.f32 %v1041, %v1153
        %v1186 = vadd.f32 %v1042, %v1154
        %v1187 = vadd.f32 %v1043, %v1155
        %v1188 = vadd.f32 %v1044, %v1156
        %1189 = vset.pattern.permute.xlu0 6
        %1190 = vperm.xlu0 %1189, %v338
        %v1191 = vpop.permute.xlu0 %1190
        %1192 = vset.pattern.permute.xlu0 6
        %1193 = vperm.xlu0 %1192, %v339
        %v1194 = vpop.permute.xlu0 %1193
        %1195 = vset.pattern.permute.xlu0 6
        %1196 = vperm.xlu0 %1195, %v340
        %v1197 = vpop.permute.xlu0 %1196
        %1198 = vset.pattern.permute.xlu0 6
        %1199 = vperm.xlu0 %1198, %v341
        %v1200 = vpop.permute.xlu0 %1199
        %1201 = vset.pattern.permute.xlu0 6
        %1202 = vperm.xlu0 %1201, %v342
        %v1203 = vpop.permute.xlu0 %1202
        %1204 = vset.pattern.permute.xlu0 6
        %1205 = vperm.xlu0 %1204, %v343
        %v1206 = vpop.permute.xlu0 %1205
        %1207 = vset.pattern.permute.xlu0 6
        %1208 = vperm.xlu0 %1207, %v344
        %v1209 = vpop.permute.xlu0 %1208
        %1210 = vset.pattern.permute.xlu0 6
        %1211 = vperm.xlu0 %1210, %v345
        %v1212 = vpop.permute.xlu0 %1211
        %1213 = vset.pattern.permute.xlu0 6
        %1214 = vperm.xlu0 %1213, %v346
        %v1215 = vpop.permute.xlu0 %1214
        %1216 = vset.pattern.permute.xlu0 6
        %1217 = vperm.xlu0 %1216, %v347
        %v1218 = vpop.permute.xlu0 %1217
        %1219 = vset.pattern.permute.xlu0 6
        %1220 = vperm.xlu0 %1219, %v348
        %v1221 = vpop.permute.xlu0 %1220
        %1222 = vset.pattern.permute.xlu0 6
        %1223 = vperm.xlu0 %1222, %v349
        %v1224 = vpop.permute.xlu0 %1223
        %1225 = vset.pattern.permute.xlu0 6
        %1226 = vperm.xlu0 %1225, %v350
        %v1227 = vpop.permute.xlu0 %1226
        %1228 = vset.pattern.permute.xlu0 6
        %1229 = vperm.xlu0 %1228, %v351
        %v1230 = vpop.permute.xlu0 %1229
        %1231 = vset.pattern.permute.xlu0 6
        %1232 = vperm.xlu0 %1231, %v352
        %v1233 = vpop.permute.xlu0 %1232
        %1234 = vset.pattern.permute.xlu0 6
        %1235 = vperm.xlu0 %1234, %v353
        %v1236 = vpop.permute.xlu0 %1235
        %vm1237 = vcmp.eq.s32.totalorder %v1191, %v355
        %vm1238 = vcmp.eq.s32.totalorder %v1191, %v356
        %vm1239 = vcmp.eq.s32.totalorder %v1194, %v355
        %vm1240 = vcmp.eq.s32.totalorder %v1194, %v356
        %vm1241 = vcmp.eq.s32.totalorder %v1197, %v355
        %vm1242 = vcmp.eq.s32.totalorder %v1197, %v356
        %vm1243 = vcmp.eq.s32.totalorder %v1200, %v355
        %vm1244 = vcmp.eq.s32.totalorder %v1200, %v356
        %vm1245 = vcmp.eq.s32.totalorder %v1203, %v355
        %vm1246 = vcmp.eq.s32.totalorder %v1203, %v356
        %vm1247 = vcmp.eq.s32.totalorder %v1206, %v355
        %vm1248 = vcmp.eq.s32.totalorder %v1206, %v356
        %vm1249 = vcmp.eq.s32.totalorder %v1209, %v355
        %vm1250 = vcmp.eq.s32.totalorder %v1209, %v356
        %vm1251 = vcmp.eq.s32.totalorder %v1212, %v355
        %vm1252 = vcmp.eq.s32.totalorder %v1212, %v356
        %vm1253 = vcmp.eq.s32.totalorder %v1215, %v355
        %vm1254 = vcmp.eq.s32.totalorder %v1215, %v356
        %vm1255 = vcmp.eq.s32.totalorder %v1218, %v355
        %vm1256 = vcmp.eq.s32.totalorder %v1218, %v356
        %vm1257 = vcmp.eq.s32.totalorder %v1221, %v355
        %vm1258 = vcmp.eq.s32.totalorder %v1221, %v356
        %vm1259 = vcmp.eq.s32.totalorder %v1224, %v355
        %vm1260 = vcmp.eq.s32.totalorder %v1224, %v356
        %vm1261 = vcmp.eq.s32.totalorder %v1227, %v355
        %vm1262 = vcmp.eq.s32.totalorder %v1227, %v356
        %vm1263 = vcmp.eq.s32.totalorder %v1230, %v355
        %vm1264 = vcmp.eq.s32.totalorder %v1230, %v356
        %vm1265 = vcmp.eq.s32.totalorder %v1233, %v355
        %vm1266 = vcmp.eq.s32.totalorder %v1233, %v356
        %vm1267 = vcmp.eq.s32.totalorder %v1236, %v355
        %vm1268 = vcmp.eq.s32.totalorder %v1236, %v356
        %v1269 = vsel %vm1237, 1.0, 0.0
        %v1270 = vsel %vm1238, 1.0, 0.0
        %v1271 = vsel %vm1239, 1.0, 0.0
        %v1272 = vsel %vm1240, 1.0, 0.0
        %v1273 = vsel %vm1241, 1.0, 0.0
        %v1274 = vsel %vm1242, 1.0, 0.0
        %v1275 = vsel %vm1243, 1.0, 0.0
        %v1276 = vsel %vm1244, 1.0, 0.0
        %v1277 = vsel %vm1245, 1.0, 0.0
        %v1278 = vsel %vm1246, 1.0, 0.0
        %v1279 = vsel %vm1247, 1.0, 0.0
        %v1280 = vsel %vm1248, 1.0, 0.0
        %v1281 = vsel %vm1249, 1.0, 0.0
        %v1282 = vsel %vm1250, 1.0, 0.0
        %v1283 = vsel %vm1251, 1.0, 0.0
        %v1284 = vsel %vm1252, 1.0, 0.0
        %v1285 = vsel %vm1253, 1.0, 0.0
        %v1286 = vsel %vm1254, 1.0, 0.0
        %v1287 = vsel %vm1255, 1.0, 0.0
        %v1288 = vsel %vm1256, 1.0, 0.0
        %v1289 = vsel %vm1257, 1.0, 0.0
        %v1290 = vsel %vm1258, 1.0, 0.0
        %v1291 = vsel %vm1259, 1.0, 0.0
        %v1292 = vsel %vm1260, 1.0, 0.0
        %v1293 = vsel %vm1261, 1.0, 0.0
        %v1294 = vsel %vm1262, 1.0, 0.0
        %v1295 = vsel %vm1263, 1.0, 0.0
        %v1296 = vsel %vm1264, 1.0, 0.0
        %v1297 = vsel %vm1265, 1.0, 0.0
        %v1298 = vsel %vm1266, 1.0, 0.0
        %v1299 = vsel %vm1267, 1.0, 0.0
        %v1300 = vsel %vm1268, 1.0, 0.0
        %v1301 = vadd.f32 %v1157, %v1269
        %v1302 = vadd.f32 %v1158, %v1270
        %v1303 = vadd.f32 %v1159, %v1271
        %v1304 = vadd.f32 %v1160, %v1272
        %v1305 = vadd.f32 %v1161, %v1273
        %v1306 = vadd.f32 %v1162, %v1274
        %v1307 = vadd.f32 %v1163, %v1275
        %v1308 = vadd.f32 %v1164, %v1276
        %v1309 = vadd.f32 %v1165, %v1277
        %v1310 = vadd.f32 %v1166, %v1278
        %v1311 = vadd.f32 %v1167, %v1279
        %v1312 = vadd.f32 %v1168, %v1280
        %v1313 = vadd.f32 %v1169, %v1281
        %v1314 = vadd.f32 %v1170, %v1282
        %v1315 = vadd.f32 %v1171, %v1283
        %v1316 = vadd.f32 %v1172, %v1284
        %v1317 = vadd.f32 %v1173, %v1285
        %v1318 = vadd.f32 %v1174, %v1286
        %v1319 = vadd.f32 %v1175, %v1287
        %v1320 = vadd.f32 %v1176, %v1288
        %v1321 = vadd.f32 %v1177, %v1289
        %v1322 = vadd.f32 %v1178, %v1290
        %v1323 = vadd.f32 %v1179, %v1291
        %v1324 = vadd.f32 %v1180, %v1292
        %v1325 = vadd.f32 %v1181, %v1293
        %v1326 = vadd.f32 %v1182, %v1294
        %v1327 = vadd.f32 %v1183, %v1295
        %v1328 = vadd.f32 %v1184, %v1296
        %v1329 = vadd.f32 %v1185, %v1297
        %v1330 = vadd.f32 %v1186, %v1298
        %v1331 = vadd.f32 %v1187, %v1299
        %v1332 = vadd.f32 %v1188, %v1300
        %1333 = vset.pattern.permute.xlu0 7
        %1334 = vperm.xlu0 %1333, %v338
        %v1335 = vpop.permute.xlu0 %1334
        %1336 = vset.pattern.permute.xlu0 7
        %1337 = vperm.xlu0 %1336, %v339
        %v1338 = vpop.permute.xlu0 %1337
        %1339 = vset.pattern.permute.xlu0 7
        %1340 = vperm.xlu0 %1339, %v340
        %v1341 = vpop.permute.xlu0 %1340
        %1342 = vset.pattern.permute.xlu0 7
        %1343 = vperm.xlu0 %1342, %v341
        %v1344 = vpop.permute.xlu0 %1343
        %1345 = vset.pattern.permute.xlu0 7
        %1346 = vperm.xlu0 %1345, %v342
        %v1347 = vpop.permute.xlu0 %1346
        %1348 = vset.pattern.permute.xlu0 7
        %1349 = vperm.xlu0 %1348, %v343
        %v1350 = vpop.permute.xlu0 %1349
        %1351 = vset.pattern.permute.xlu0 7
        %1352 = vperm.xlu0 %1351, %v344
        %v1353 = vpop.permute.xlu0 %1352
        %1354 = vset.pattern.permute.xlu0 7
        %1355 = vperm.xlu0 %1354, %v345
        %v1356 = vpop.permute.xlu0 %1355
        %1357 = vset.pattern.permute.xlu0 7
        %1358 = vperm.xlu0 %1357, %v346
        %v1359 = vpop.permute.xlu0 %1358
        %1360 = vset.pattern.permute.xlu0 7
        %1361 = vperm.xlu0 %1360, %v347
        %v1362 = vpop.permute.xlu0 %1361
        %1363 = vset.pattern.permute.xlu0 7
        %1364 = vperm.xlu0 %1363, %v348
        %v1365 = vpop.permute.xlu0 %1364
        %1366 = vset.pattern.permute.xlu0 7
        %1367 = vperm.xlu0 %1366, %v349
        %v1368 = vpop.permute.xlu0 %1367
        %1369 = vset.pattern.permute.xlu0 7
        %1370 = vperm.xlu0 %1369, %v350
        %v1371 = vpop.permute.xlu0 %1370
        %1372 = vset.pattern.permute.xlu0 7
        %1373 = vperm.xlu0 %1372, %v351
        %v1374 = vpop.permute.xlu0 %1373
        %1375 = vset.pattern.permute.xlu0 7
        %1376 = vperm.xlu0 %1375, %v352
        %v1377 = vpop.permute.xlu0 %1376
        %1378 = vset.pattern.permute.xlu0 7
        %1379 = vperm.xlu0 %1378, %v353
        %v1380 = vpop.permute.xlu0 %1379
        %vm1381 = vcmp.eq.s32.totalorder %v1335, %v355
        %vm1382 = vcmp.eq.s32.totalorder %v1335, %v356
        %vm1383 = vcmp.eq.s32.totalorder %v1338, %v355
        %vm1384 = vcmp.eq.s32.totalorder %v1338, %v356
        %vm1385 = vcmp.eq.s32.totalorder %v1341, %v355
        %vm1386 = vcmp.eq.s32.totalorder %v1341, %v356
        %vm1387 = vcmp.eq.s32.totalorder %v1344, %v355
        %vm1388 = vcmp.eq.s32.totalorder %v1344, %v356
        %vm1389 = vcmp.eq.s32.totalorder %v1347, %v355
        %vm1390 = vcmp.eq.s32.totalorder %v1347, %v356
        %vm1391 = vcmp.eq.s32.totalorder %v1350, %v355
        %vm1392 = vcmp.eq.s32.totalorder %v1350, %v356
        %vm1393 = vcmp.eq.s32.totalorder %v1353, %v355
        %vm1394 = vcmp.eq.s32.totalorder %v1353, %v356
        %vm1395 = vcmp.eq.s32.totalorder %v1356, %v355
        %vm1396 = vcmp.eq.s32.totalorder %v1356, %v356
        %vm1397 = vcmp.eq.s32.totalorder %v1359, %v355
        %vm1398 = vcmp.eq.s32.totalorder %v1359, %v356
        %vm1399 = vcmp.eq.s32.totalorder %v1362, %v355
        %vm1400 = vcmp.eq.s32.totalorder %v1362, %v356
        %vm1401 = vcmp.eq.s32.totalorder %v1365, %v355
        %vm1402 = vcmp.eq.s32.totalorder %v1365, %v356
        %vm1403 = vcmp.eq.s32.totalorder %v1368, %v355
        %vm1404 = vcmp.eq.s32.totalorder %v1368, %v356
        %vm1405 = vcmp.eq.s32.totalorder %v1371, %v355
        %vm1406 = vcmp.eq.s32.totalorder %v1371, %v356
        %vm1407 = vcmp.eq.s32.totalorder %v1374, %v355
        %vm1408 = vcmp.eq.s32.totalorder %v1374, %v356
        %vm1409 = vcmp.eq.s32.totalorder %v1377, %v355
        %vm1410 = vcmp.eq.s32.totalorder %v1377, %v356
        %vm1411 = vcmp.eq.s32.totalorder %v1380, %v355
        %vm1412 = vcmp.eq.s32.totalorder %v1380, %v356
        %v1413 = vsel %vm1381, 1.0, 0.0
        %v1414 = vsel %vm1382, 1.0, 0.0
        %v1415 = vsel %vm1383, 1.0, 0.0
        %v1416 = vsel %vm1384, 1.0, 0.0
        %v1417 = vsel %vm1385, 1.0, 0.0
        %v1418 = vsel %vm1386, 1.0, 0.0
        %v1419 = vsel %vm1387, 1.0, 0.0
        %v1420 = vsel %vm1388, 1.0, 0.0
        %v1421 = vsel %vm1389, 1.0, 0.0
        %v1422 = vsel %vm1390, 1.0, 0.0
        %v1423 = vsel %vm1391, 1.0, 0.0
        %v1424 = vsel %vm1392, 1.0, 0.0
        %v1425 = vsel %vm1393, 1.0, 0.0
        %v1426 = vsel %vm1394, 1.0, 0.0
        %v1427 = vsel %vm1395, 1.0, 0.0
        %v1428 = vsel %vm1396, 1.0, 0.0
        %v1429 = vsel %vm1397, 1.0, 0.0
        %v1430 = vsel %vm1398, 1.0, 0.0
        %v1431 = vsel %vm1399, 1.0, 0.0
        %v1432 = vsel %vm1400, 1.0, 0.0
        %v1433 = vsel %vm1401, 1.0, 0.0
        %v1434 = vsel %vm1402, 1.0, 0.0
        %v1435 = vsel %vm1403, 1.0, 0.0
        %v1436 = vsel %vm1404, 1.0, 0.0
        %v1437 = vsel %vm1405, 1.0, 0.0
        %v1438 = vsel %vm1406, 1.0, 0.0
        %v1439 = vsel %vm1407, 1.0, 0.0
        %v1440 = vsel %vm1408, 1.0, 0.0
        %v1441 = vsel %vm1409, 1.0, 0.0
        %v1442 = vsel %vm1410, 1.0, 0.0
        %v1443 = vsel %vm1411, 1.0, 0.0
        %v1444 = vsel %vm1412, 1.0, 0.0
        %v1445 = vadd.f32 %v1301, %v1413
        %v1446 = vadd.f32 %v1302, %v1414
        %v1447 = vadd.f32 %v1303, %v1415
        %v1448 = vadd.f32 %v1304, %v1416
        %v1449 = vadd.f32 %v1305, %v1417
        %v1450 = vadd.f32 %v1306, %v1418
        %v1451 = vadd.f32 %v1307, %v1419
        %v1452 = vadd.f32 %v1308, %v1420
        %v1453 = vadd.f32 %v1309, %v1421
        %v1454 = vadd.f32 %v1310, %v1422
        %v1455 = vadd.f32 %v1311, %v1423
        %v1456 = vadd.f32 %v1312, %v1424
        %v1457 = vadd.f32 %v1313, %v1425
        %v1458 = vadd.f32 %v1314, %v1426
        %v1459 = vadd.f32 %v1315, %v1427
        %v1460 = vadd.f32 %v1316, %v1428
        %v1461 = vadd.f32 %v1317, %v1429
        %v1462 = vadd.f32 %v1318, %v1430
        %v1463 = vadd.f32 %v1319, %v1431
        %v1464 = vadd.f32 %v1320, %v1432
        %v1465 = vadd.f32 %v1321, %v1433
        %v1466 = vadd.f32 %v1322, %v1434
        %v1467 = vadd.f32 %v1323, %v1435
        %v1468 = vadd.f32 %v1324, %v1436
        %v1469 = vadd.f32 %v1325, %v1437
        %v1470 = vadd.f32 %v1326, %v1438
        %v1471 = vadd.f32 %v1327, %v1439
        %v1472 = vadd.f32 %v1328, %v1440
        %v1473 = vadd.f32 %v1329, %v1441
        %v1474 = vadd.f32 %v1330, %v1442
        %v1475 = vadd.f32 %v1331, %v1443
        %v1476 = vadd.f32 %v1332, %v1444
        %v1477 = vpack.c.bf16 %v1447, %v1445
        %v1478 = vpack.c.bf16 %v1448, %v1446
        %v1479 = vpack.c.bf16 %v1451, %v1449
        %v1480 = vpack.c.bf16 %v1452, %v1450
        %v1481 = vpack.c.bf16 %v1455, %v1453
        %v1482 = vpack.c.bf16 %v1456, %v1454
        %v1483 = vpack.c.bf16 %v1459, %v1457
        %v1484 = vpack.c.bf16 %v1460, %v1458
        %v1485 = vpack.c.bf16 %v1463, %v1461
        %v1486 = vpack.c.bf16 %v1464, %v1462
        %v1487 = vpack.c.bf16 %v1467, %v1465
        %v1488 = vpack.c.bf16 %v1468, %v1466
        %v1489 = vpack.c.bf16 %v1471, %v1469
        %v1490 = vpack.c.bf16 %v1472, %v1470
        %v1491 = vpack.c.bf16 %v1475, %v1473
        %v1492 = vpack.c.bf16 %v1476, %v1474
        %v1493 = vld [vmem:[%s1] sm:$0xff]
        %v1494 = vld [vmem:[%s1 + $0x8] sm:$0xff]
        %v1495 = vld [vmem:[%s1 + $0x10] sm:$0xff]
        %v1496 = vld [vmem:[%s1 + $0x18] sm:$0xff]
        %v1497 = vld [vmem:[%s1 + $0x20] sm:$0xff]
        %v1498 = vld [vmem:[%s1 + $0x28] sm:$0xff]
        %v1499 = vld [vmem:[%s1 + $0x30] sm:$0xff]
        %v1500 = vld [vmem:[%s1 + $0x38] sm:$0xff]
        %v1501 = vld [vmem:[%s1 + $0x40] sm:$0xff]
        %v1502 = vld [vmem:[%s1 + $0x48] sm:$0xff]
        %v1503 = vld [vmem:[%s1 + $0x50] sm:$0xff]
        %v1504 = vld [vmem:[%s1 + $0x58] sm:$0xff]
        %v1505 = vld [vmem:[%s1 + $0x60] sm:$0xff]
        %v1506 = vld [vmem:[%s1 + $0x68] sm:$0xff]
        %v1507 = vld [vmem:[%s1 + $0x70] sm:$0xff]
        %v1508 = vld [vmem:[%s1 + $0x78] sm:$0xff]
        %v1509 = vld [vmem:[%s1 + $0x80] sm:$0xff]
        %v1510 = vld [vmem:[%s1 + $0x88] sm:$0xff]
        %v1511 = vld [vmem:[%s1 + $0x90] sm:$0xff]
        %v1512 = vld [vmem:[%s1 + $0x98] sm:$0xff]
        %v1513 = vld [vmem:[%s1 + $0xa0] sm:$0xff]
        %v1514 = vld [vmem:[%s1 + $0xa8] sm:$0xff]
        %v1515 = vld [vmem:[%s1 + $0xb0] sm:$0xff]
        %v1516 = vld [vmem:[%s1 + $0xb8] sm:$0xff]
        %v1517 = vld [vmem:[%s1 + $0xc0] sm:$0xff]
        %v1518 = vld [vmem:[%s1 + $0xc8] sm:$0xff]
        %v1519 = vld [vmem:[%s1 + $0xd0] sm:$0xff]
        %v1520 = vld [vmem:[%s1 + $0xd8] sm:$0xff]
        %v1521 = vld [vmem:[%s1 + $0xe0] sm:$0xff]
        %v1522 = vld [vmem:[%s1 + $0xe8] sm:$0xff]
        %v1523 = vld [vmem:[%s1 + $0xf0] sm:$0xff]
        %v1524 = vld [vmem:[%s1 + $0xf8] sm:$0xff]
        %v1525 = vpack.c.bf16 %v1494, %v1493
        %v1526 = vpack.c.bf16 %v1496, %v1495
        %v1527 = vpack.c.bf16 %v1498, %v1497
        %v1528 = vpack.c.bf16 %v1500, %v1499
        %v1529 = vpack.c.bf16 %v1502, %v1501
        %v1530 = vpack.c.bf16 %v1504, %v1503
        %v1531 = vpack.c.bf16 %v1506, %v1505
        %v1532 = vpack.c.bf16 %v1508, %v1507
        %v1533 = vpack.c.bf16 %v1510, %v1509
        %v1534 = vpack.c.bf16 %v1512, %v1511
        %v1535 = vpack.c.bf16 %v1514, %v1513
        %v1536 = vpack.c.bf16 %v1516, %v1515
        %v1537 = vpack.c.bf16 %v1518, %v1517
        %v1538 = vpack.c.bf16 %v1520, %v1519
        %v1539 = vpack.c.bf16 %v1522, %v1521
        %v1540 = vpack.c.bf16 %v1524, %v1523
        %1541 = vmatprep.subr.bf16.mxu0 0
        %1542 = vmatpush1.bf16.msra.mxu0 %v1525
        %1543 = vmatprep.subr.bf16.mxu0 0
        %1544 = vmatpush1.bf16.msra.mxu0 %v1526
        %1545 = vmatprep.subr.bf16.mxu0 0
        %1546 = vmatpush1.bf16.msra.mxu0 %v1527
        %1547 = vmatprep.subr.bf16.mxu0 0
        %1548 = vmatpush1.bf16.msra.mxu0 %v1528
        %1549 = vmatprep.subr.bf16.mxu0 0
        %1550 = vmatpush1.bf16.msra.mxu0 %v1529
        %1551 = vmatprep.subr.bf16.mxu0 0
        %1552 = vmatpush1.bf16.msra.mxu0 %v1530
        %1553 = vmatprep.subr.bf16.mxu0 0
        %1554 = vmatpush1.bf16.msra.mxu0 %v1531
        %1555 = vmatprep.subr.bf16.mxu0 0
        %1556 = vmatpush1.bf16.msra.mxu0 %v1532
        %1557 = vmatprep.subr.bf16.mxu0 0
        %1558 = vmatpush1.bf16.msra.mxu0 %v1533
        %1559 = vmatprep.subr.bf16.mxu0 0
        %1560 = vmatpush1.bf16.msra.mxu0 %v1534
        %1561 = vmatprep.subr.bf16.mxu0 0
        %1562 = vmatpush1.bf16.msra.mxu0 %v1535
        %1563 = vmatprep.subr.bf16.mxu0 0
        %1564 = vmatpush1.bf16.msra.mxu0 %v1536
        %1565 = vmatprep.subr.bf16.mxu0 0
        %1566 = vmatpush1.bf16.msra.mxu0 %v1537
        %1567 = vmatprep.subr.bf16.mxu0 0
        %1568 = vmatpush1.bf16.msra.mxu0 %v1538
        %1569 = vmatprep.subr.bf16.mxu0 0
        %1570 = vmatpush1.bf16.msra.mxu0 %v1539
        %1571 = vmatprep.subr.bf16.mxu0 0
        %1572 = vmatpush1.bf16.msra.mxu0 %v1540
        %1573 = vmatprep.mubr.bf16.mxu0 %v1478
        %1574 = vmatmul.mubr.bf16.gmra.mrb[0].mxu0 %v1477
        %v1575 = vpop.f32.mrb[0].mxu0
        %v1576 = vadd.f32 0.0, %v1575
        %v1577 = vpop.f32.mrb[0].mxu0
        %v1578 = vpop.f32.mrb[0].mxu0
        %v1579 = vadd.f32 0.0, %v1578
        %v1580 = vpop.f32.mrb[0].mxu0
        %1581 = vmatprep.mubr.bf16.mxu0 %v1480
        %1582 = vmatmul.mubr.bf16.gmra.mrb[0].mxu0 %v1479
        %v1583 = vpop.f32.mrb[0].mxu0
        %v1584 = vadd.f32 0.0, %v1583
        %v1585 = vpop.f32.mrb[0].mxu0
        %v1586 = vpop.f32.mrb[0].mxu0
        %v1587 = vadd.f32 0.0, %v1586
        %v1588 = vpop.f32.mrb[0].mxu0
        %1589 = vmatprep.mubr.bf16.mxu0 %v1482
        %1590 = vmatmul.mubr.bf16.gmra.mrb[0].mxu0 %v1481
        %v1591 = vpop.f32.mrb[0].mxu0
        %v1592 = vadd.f32 0.0, %v1591
        %v1593 = vpop.f32.mrb[0].mxu0
        %v1594 = vpop.f32.mrb[0].mxu0
        %v1595 = vadd.f32 0.0, %v1594
        %v1596 = vpop.f32.mrb[0].mxu0
        %1597 = vmatprep.mubr.bf16.mxu0 %v1484
        %1598 = vmatmul.mubr.bf16.gmra.mrb[0].mxu0 %v1483
        %v1599 = vpop.f32.mrb[0].mxu0
        %v1600 = vadd.f32 0.0, %v1599
        %v1601 = vpop.f32.mrb[0].mxu0
        %v1602 = vpop.f32.mrb[0].mxu0
        %v1603 = vadd.f32 0.0, %v1602
        %v1604 = vpop.f32.mrb[0].mxu0
        %1605 = vmatprep.mubr.bf16.mxu0 %v1486
        %1606 = vmatmul.mubr.bf16.gmra.mrb[0].mxu0 %v1485
        %v1607 = vpop.f32.mrb[0].mxu0
        %v1608 = vadd.f32 0.0, %v1607
        %v1609 = vpop.f32.mrb[0].mxu0
        %v1610 = vpop.f32.mrb[0].mxu0
        %v1611 = vadd.f32 0.0, %v1610
        %v1612 = vpop.f32.mrb[0].mxu0
        %1613 = vmatprep.mubr.bf16.mxu0 %v1488
        %1614 = vmatmul.mubr.bf16.gmra.mrb[0].mxu0 %v1487
        %v1615 = vpop.f32.mrb[0].mxu0
        %v1616 = vadd.f32 0.0, %v1615
        %v1617 = vpop.f32.mrb[0].mxu0
        %v1618 = vpop.f32.mrb[0].mxu0
        %v1619 = vadd.f32 0.0, %v1618
        %v1620 = vpop.f32.mrb[0].mxu0
        %1621 = vmatprep.mubr.bf16.mxu0 %v1490
        %1622 = vmatmul.mubr.bf16.gmra.mrb[0].mxu0 %v1489
        %v1623 = vpop.f32.mrb[0].mxu0
        %v1624 = vadd.f32 0.0, %v1623
        %v1625 = vpop.f32.mrb[0].mxu0
        %v1626 = vpop.f32.mrb[0].mxu0
        %v1627 = vadd.f32 0.0, %v1626
        %v1628 = vpop.f32.mrb[0].mxu0
        %1629 = vmatprep.mubr.bf16.mxu0 %v1492
        %1630 = vmatmul.mubr.bf16.gmra.mrb[0].mxu0 %v1491
        %v1631 = vpop.f32.mrb[0].mxu0
        %v1632 = vadd.f32 0.0, %v1631
        %v1633 = vpop.f32.mrb[0].mxu0
        %v1634 = vpop.f32.mrb[0].mxu0
        %v1635 = vadd.f32 0.0, %v1634
        %v1636 = vpop.f32.mrb[0].mxu0
        %1637 = vdwg.mxu0
        %v1638 = vmul.f32 %v1576, 0.125
        %v1639 = vmul.f32 %v1579, 0.125
        %v1640 = vmul.f32 %v1584, 0.125
        %v1641 = vmul.f32 %v1587, 0.125
        %v1642 = vmul.f32 %v1592, 0.125
        %v1643 = vmul.f32 %v1595, 0.125
        %v1644 = vmul.f32 %v1600, 0.125
        %v1645 = vmul.f32 %v1603, 0.125
        %v1646 = vmul.f32 %v1608, 0.125
        %v1647 = vmul.f32 %v1611, 0.125
        %v1648 = vmul.f32 %v1616, 0.125
        %v1649 = vmul.f32 %v1619, 0.125
        %v1650 = vmul.f32 %v1624, 0.125
        %v1651 = vmul.f32 %v1627, 0.125
        %v1652 = vmul.f32 %v1632, 0.125
        %v1653 = vmul.f32 %v1635, 0.125
        %v1654 = vld [vmem:[%s323] sm:$0xff]
        %v1655 = vld [vmem:[%s323 + $0x8] sm:$0xff]
        %v1656 = vld [vmem:[%s323 + $0x10] sm:$0xff]
        %v1657 = vld [vmem:[%s323 + $0x18] sm:$0xff]
        %v1658 = vld [vmem:[%s323 + $0x20] sm:$0xff]
        %v1659 = vld [vmem:[%s323 + $0x28] sm:$0xff]
        %v1660 = vld [vmem:[%s323 + $0x30] sm:$0xff]
        %v1661 = vld [vmem:[%s323 + $0x38] sm:$0xff]
        %v1662 = vld [vmem:[%s323 + $0x40] sm:$0xff]
        %v1663 = vld [vmem:[%s323 + $0x48] sm:$0xff]
        %v1664 = vld [vmem:[%s323 + $0x50] sm:$0xff]
        %v1665 = vld [vmem:[%s323 + $0x58] sm:$0xff]
        %v1666 = vld [vmem:[%s323 + $0x60] sm:$0xff]
        %v1667 = vld [vmem:[%s323 + $0x68] sm:$0xff]
        %v1668 = vld [vmem:[%s323 + $0x70] sm:$0xff]
        %v1669 = vld [vmem:[%s323 + $0x78] sm:$0xff]
        %v1670 = vpack.c.bf16 %v1655, %v1654
        %v1671 = vpack.c.bf16 %v1657, %v1656
        %v1672 = vpack.c.bf16 %v1659, %v1658
        %v1673 = vpack.c.bf16 %v1661, %v1660
        %v1674 = vpack.c.bf16 %v1663, %v1662
        %v1675 = vpack.c.bf16 %v1665, %v1664
        %v1676 = vpack.c.bf16 %v1667, %v1666
        %v1677 = vpack.c.bf16 %v1669, %v1668
        %v1678 = vld [vmem:[%s328] sm:$0xff]
        %v1679 = vld [vmem:[%s328 + $0x8] sm:$0xff]
        %v1680 = vld [vmem:[%s328 + $0x10] sm:$0xff]
        %v1681 = vld [vmem:[%s328 + $0x18] sm:$0xff]
        %v1682 = vld [vmem:[%s328 + $0x20] sm:$0xff]
        %v1683 = vld [vmem:[%s328 + $0x28] sm:$0xff]
        %v1684 = vld [vmem:[%s328 + $0x30] sm:$0xff]
        %v1685 = vld [vmem:[%s328 + $0x38] sm:$0xff]
        %v1686 = vld [vmem:[%s328 + $0x40] sm:$0xff]
        %v1687 = vld [vmem:[%s328 + $0x48] sm:$0xff]
        %v1688 = vld [vmem:[%s328 + $0x50] sm:$0xff]
        %v1689 = vld [vmem:[%s328 + $0x58] sm:$0xff]
        %v1690 = vld [vmem:[%s328 + $0x60] sm:$0xff]
        %v1691 = vld [vmem:[%s328 + $0x68] sm:$0xff]
        %v1692 = vld [vmem:[%s328 + $0x70] sm:$0xff]
        %v1693 = vld [vmem:[%s328 + $0x78] sm:$0xff]
        %v1694 = vpack.c.bf16 %v1679, %v1678
        %v1695 = vpack.c.bf16 %v1681, %v1680
        %v1696 = vpack.c.bf16 %v1683, %v1682
        %v1697 = vpack.c.bf16 %v1685, %v1684
        %v1698 = vpack.c.bf16 %v1687, %v1686
        %v1699 = vpack.c.bf16 %v1689, %v1688
        %v1700 = vpack.c.bf16 %v1691, %v1690
        %v1701 = vpack.c.bf16 %v1693, %v1692
        %v1702 = vpack.c.bf16 %v1639, %v1638
        %v1703 = vpack.c.bf16 %v1641, %v1640
        %v1704 = vpack.c.bf16 %v1643, %v1642
        %v1705 = vpack.c.bf16 %v1645, %v1644
        %v1706 = vpack.c.bf16 %v1647, %v1646
        %v1707 = vpack.c.bf16 %v1649, %v1648
        %v1708 = vpack.c.bf16 %v1651, %v1650
        %v1709 = vpack.c.bf16 %v1653, %v1652
        %v1710 = vld [vmem:[%s332] sm:$0xff]
        %v1711 = vld [vmem:[%s332 + $0x8] sm:$0xff]
        %v1712 = vld [vmem:[%s332 + $0x10] sm:$0xff]
        %v1713 = vld [vmem:[%s332 + $0x18] sm:$0xff]
        %v1714 = vld [vmem:[%s332 + $0x20] sm:$0xff]
        %v1715 = vld [vmem:[%s332 + $0x28] sm:$0xff]
        %v1716 = vld [vmem:[%s332 + $0x30] sm:$0xff]
        %v1717 = vld [vmem:[%s332 + $0x38] sm:$0xff]
        %v1718 = vld [vmem:[%s332 + $0x40] sm:$0xff]
        %v1719 = vld [vmem:[%s332 + $0x48] sm:$0xff]
        %v1720 = vld [vmem:[%s332 + $0x50] sm:$0xff]
        %v1721 = vld [vmem:[%s332 + $0x58] sm:$0xff]
        %v1722 = vld [vmem:[%s332 + $0x60] sm:$0xff]
        %v1723 = vld [vmem:[%s332 + $0x68] sm:$0xff]
        %v1724 = vld [vmem:[%s332 + $0x70] sm:$0xff]
        %v1725 = vld [vmem:[%s332 + $0x78] sm:$0xff]
        %v1726 = vpack.c.bf16 %v1711, %v1710
        %v1727 = vpack.c.bf16 %v1713, %v1712
        %v1728 = vpack.c.bf16 %v1715, %v1714
        %v1729 = vpack.c.bf16 %v1717, %v1716
        %v1730 = vpack.c.bf16 %v1719, %v1718
        %v1731 = vpack.c.bf16 %v1721, %v1720
        %v1732 = vpack.c.bf16 %v1723, %v1722
        %v1733 = vpack.c.bf16 %v1725, %v1724
        %1734 = vmatprep.subr.bf16.mxu0 0
        %1735 = vmatpush1.bf16.msra.mxu0 %v1726
        %1736 = vmatprep.subr.bf16.mxu0 0
        %1737 = vmatpush1.bf16.msra.mxu0 %v1727
        %1738 = vmatprep.subr.bf16.mxu0 0
        %1739 = vmatpush1.bf16.msra.mxu0 %v1728
        %1740 = vmatprep.subr.bf16.mxu0 0
        %1741 = vmatpush1.bf16.msra.mxu0 %v1729
        %1742 = vmatprep.subr.bf16.mxu0 0
        %1743 = vmatpush1.bf16.msra.mxu0 %v1730
        %1744 = vmatprep.subr.bf16.mxu0 0
        %1745 = vmatpush1.bf16.msra.mxu0 %v1731
        %1746 = vmatprep.subr.bf16.mxu0 0
        %1747 = vmatpush1.bf16.msra.mxu0 %v1732
        %1748 = vmatprep.subr.bf16.mxu0 0
        %1749 = vmatpush1.bf16.msra.mxu0 %v1733
        %1750 = vmatprep.subr.bf16.mxu0 0
        %1751 = vmatpush1.bf16.msra.mxu0 0
        %1752 = vmatprep.subr.bf16.mxu0 0
        %1753 = vmatpush1.bf16.msra.mxu0 0
        %1754 = vmatprep.subr.bf16.mxu0 0
        %1755 = vmatpush1.bf16.msra.mxu0 0
        %1756 = vmatprep.subr.bf16.mxu0 0
        %1757 = vmatpush1.bf16.msra.mxu0 0
        %1758 = vmatprep.subr.bf16.mxu0 0
        %1759 = vmatpush1.bf16.msra.mxu0 0
        %1760 = vmatprep.subr.bf16.mxu0 0
        %1761 = vmatpush1.bf16.msra.mxu0 0
        %1762 = vmatprep.subr.bf16.mxu0 0
        %1763 = vmatpush1.bf16.msra.mxu0 0
        %1764 = vmatprep.subr.bf16.mxu0 0
        %1765 = vmatpush1.bf16.msra.mxu0 0
        %1766 = vmatprep.mubr.bf16.mxu0 0
        %1767 = vmatmul.mubr.bf16.gmra.mrb[0].mxu0 %v1702
        %v1768 = vpop.f32.mrb[0].mxu0
        %v1769 = vadd.f32 0.0, %v1768
        %v1770 = vpop.f32.mrb[0].mxu0
        %v1771 = vpop.f32.mrb[0].mxu0
        %v1772 = vadd.f32 0.0, %v1771
        %v1773 = vpop.f32.mrb[0].mxu0
        %1774 = vmatprep.mubr.bf16.mxu0 0
        %1775 = vmatmul.mubr.bf16.gmra.mrb[0].mxu0 %v1703
        %v1776 = vpop.f32.mrb[0].mxu0
        %v1777 = vadd.f32 0.0, %v1776
        %v1778 = vpop.f32.mrb[0].mxu0
        %v1779 = vpop.f32.mrb[0].mxu0
        %v1780 = vadd.f32 0.0, %v1779
        %v1781 = vpop.f32.mrb[0].mxu0
        %1782 = vmatprep.mubr.bf16.mxu0 0
        %1783 = vmatmul.mubr.bf16.gmra.mrb[0].mxu0 %v1704
        %v1784 = vpop.f32.mrb[0].mxu0
        %v1785 = vadd.f32 0.0, %v1784
        %v1786 = vpop.f32.mrb[0].mxu0
        %v1787 = vpop.f32.mrb[0].mxu0
        %v1788 = vadd.f32 0.0, %v1787
        %v1789 = vpop.f32.mrb[0].mxu0
        %1790 = vmatprep.mubr.bf16.mxu0 0
        %1791 = vmatmul.mubr.bf16.gmra.mrb[0].mxu0 %v1705
        %v1792 = vpop.f32.mrb[0].mxu0
        %v1793 = vadd.f32 0.0, %v1792
        %v1794 = vpop.f32.mrb[0].mxu0
        %v1795 = vpop.f32.mrb[0].mxu0
        %v1796 = vadd.f32 0.0, %v1795
        %v1797 = vpop.f32.mrb[0].mxu0
        %1798 = vmatprep.mubr.bf16.mxu0 0
        %1799 = vmatmul.mubr.bf16.gmra.mrb[0].mxu0 %v1706
        %v1800 = vpop.f32.mrb[0].mxu0
        %v1801 = vadd.f32 0.0, %v1800
        %v1802 = vpop.f32.mrb[0].mxu0
        %v1803 = vpop.f32.mrb[0].mxu0
        %v1804 = vadd.f32 0.0, %v1803
        %v1805 = vpop.f32.mrb[0].mxu0
        %1806 = vmatprep.mubr.bf16.mxu0 0
        %1807 = vmatmul.mubr.bf16.gmra.mrb[0].mxu0 %v1707
        %v1808 = vpop.f32.mrb[0].mxu0
        %v1809 = vadd.f32 0.0, %v1808
        %v1810 = vpop.f32.mrb[0].mxu0
        %v1811 = vpop.f32.mrb[0].mxu0
        %v1812 = vadd.f32 0.0, %v1811
        %v1813 = vpop.f32.mrb[0].mxu0
        %1814 = vmatprep.mubr.bf16.mxu0 0
        %1815 = vmatmul.mubr.bf16.gmra.mrb[0].mxu0 %v1708
        %v1816 = vpop.f32.mrb[0].mxu0
        %v1817 = vadd.f32 0.0, %v1816
        %v1818 = vpop.f32.mrb[0].mxu0
        %v1819 = vpop.f32.mrb[0].mxu0
        %v1820 = vadd.f32 0.0, %v1819
        %v1821 = vpop.f32.mrb[0].mxu0
        %1822 = vmatprep.mubr.bf16.mxu0 0
        %1823 = vmatmul.mubr.bf16.gmra.mrb[0].mxu0 %v1709
        %v1824 = vpop.f32.mrb[0].mxu0
        %v1825 = vadd.f32 0.0, %v1824
        %v1826 = vpop.f32.mrb[0].mxu0
        %v1827 = vpop.f32.mrb[0].mxu0
        %v1828 = vadd.f32 0.0, %v1827
        %v1829 = vpop.f32.mrb[0].mxu0
        %1830 = vdwg.mxu0
        %1831 = vmatprep.subr.bf16.mxu0 0
        %1832 = vmatpush1.bf16.msra.mxu0 %v1694
        %1833 = vmatprep.subr.bf16.mxu0 0
        %1834 = vmatpush1.bf16.msra.mxu0 %v1695
        %1835 = vmatprep.subr.bf16.mxu0 0
        %1836 = vmatpush1.bf16.msra.mxu0 %v1696
        %1837 = vmatprep.subr.bf16.mxu0 0
        %1838 = vmatpush1.bf16.msra.mxu0 %v1697
        %1839 = vmatprep.subr.bf16.mxu0 0
        %1840 = vmatpush1.bf16.msra.mxu0 %v1698
        %1841 = vmatprep.subr.bf16.mxu0 0
        %1842 = vmatpush1.bf16.msra.mxu0 %v1699
        %1843 = vmatprep.subr.bf16.mxu0 0
        %1844 = vmatpush1.bf16.msra.mxu0 %v1700
        %1845 = vmatprep.subr.bf16.mxu0 0
        %1846 = vmatpush1.bf16.msra.mxu0 %v1701
        %1847 = vmatprep.subr.bf16.mxu0 0
        %1848 = vmatpush1.bf16.msra.mxu0 0
        %1849 = vmatprep.subr.bf16.mxu0 0
        %1850 = vmatpush1.bf16.msra.mxu0 0
        %1851 = vmatprep.subr.bf16.mxu0 0
        %1852 = vmatpush1.bf16.msra.mxu0 0
        %1853 = vmatprep.subr.bf16.mxu0 0
        %1854 = vmatpush1.bf16.msra.mxu0 0
        %1855 = vmatprep.subr.bf16.mxu0 0
        %1856 = vmatpush1.bf16.msra.mxu0 0
        %1857 = vmatprep.subr.bf16.mxu0 0
        %1858 = vmatpush1.bf16.msra.mxu0 0
        %1859 = vmatprep.subr.bf16.mxu0 0
        %1860 = vmatpush1.bf16.msra.mxu0 0
        %1861 = vmatprep.subr.bf16.mxu0 0
        %1862 = vmatpush1.bf16.msra.mxu0 0
        %1863 = vmatprep.mubr.bf16.mxu0 0
        %1864 = vmatmul.mubr.bf16.gmra.mrb[0].mxu0 %v1670
        %v1865 = vpop.f32.mrb[0].mxu0
        %v1866 = vadd.f32 %v1769, %v1865
        %v1867 = vpop.f32.mrb[0].mxu0
        %v1868 = vpop.f32.mrb[0].mxu0
        %v1869 = vadd.f32 %v1772, %v1868
        %v1870 = vpop.f32.mrb[0].mxu0
        %1871 = vmatprep.mubr.bf16.mxu0 0
        %1872 = vmatmul.mubr.bf16.gmra.mrb[0].mxu0 %v1671
        %v1873 = vpop.f32.mrb[0].mxu0
        %v1874 = vadd.f32 %v1777, %v1873
        %v1875 = vpop.f32.mrb[0].mxu0
        %v1876 = vpop.f32.mrb[0].mxu0
        %v1877 = vadd.f32 %v1780, %v1876
        %v1878 = vpop.f32.mrb[0].mxu0
        %1879 = vmatprep.mubr.bf16.mxu0 0
        %1880 = vmatmul.mubr.bf16.gmra.mrb[0].mxu0 %v1672
        %v1881 = vpop.f32.mrb[0].mxu0
        %v1882 = vadd.f32 %v1785, %v1881
        %v1883 = vpop.f32.mrb[0].mxu0
        %v1884 = vpop.f32.mrb[0].mxu0
        %v1885 = vadd.f32 %v1788, %v1884
        %v1886 = vpop.f32.mrb[0].mxu0
        %1887 = vmatprep.mubr.bf16.mxu0 0
        %1888 = vmatmul.mubr.bf16.gmra.mrb[0].mxu0 %v1673
        %v1889 = vpop.f32.mrb[0].mxu0
        %v1890 = vadd.f32 %v1793, %v1889
        %v1891 = vpop.f32.mrb[0].mxu0
        %v1892 = vpop.f32.mrb[0].mxu0
        %v1893 = vadd.f32 %v1796, %v1892
        %v1894 = vpop.f32.mrb[0].mxu0
        %1895 = vmatprep.mubr.bf16.mxu0 0
        %1896 = vmatmul.mubr.bf16.gmra.mrb[0].mxu0 %v1674
        %v1897 = vpop.f32.mrb[0].mxu0
        %v1898 = vadd.f32 %v1801, %v1897
        %v1899 = vpop.f32.mrb[0].mxu0
        %v1900 = vpop.f32.mrb[0].mxu0
        %v1901 = vadd.f32 %v1804, %v1900
        %v1902 = vpop.f32.mrb[0].mxu0
        %1903 = vmatprep.mubr.bf16.mxu0 0
        %1904 = vmatmul.mubr.bf16.gmra.mrb[0].mxu0 %v1675
        %v1905 = vpop.f32.mrb[0].mxu0
        %v1906 = vadd.f32 %v1809, %v1905
        %v1907 = vpop.f32.mrb[0].mxu0
        %v1908 = vpop.f32.mrb[0].mxu0
        %v1909 = vadd.f32 %v1812, %v1908
        %v1910 = vpop.f32.mrb[0].mxu0
        %1911 = vmatprep.mubr.bf16.mxu0 0
        %1912 = vmatmul.mubr.bf16.gmra.mrb[0].mxu0 %v1676
        %v1913 = vpop.f32.mrb[0].mxu0
        %v1914 = vadd.f32 %v1817, %v1913
        %v1915 = vpop.f32.mrb[0].mxu0
        %v1916 = vpop.f32.mrb[0].mxu0
        %v1917 = vadd.f32 %v1820, %v1916
        %v1918 = vpop.f32.mrb[0].mxu0
        %1919 = vmatprep.mubr.bf16.mxu0 0
        %1920 = vmatmul.mubr.bf16.gmra.mrb[0].mxu0 %v1677
        %v1921 = vpop.f32.mrb[0].mxu0
        %v1922 = vadd.f32 %v1825, %v1921
        %v1923 = vpop.f32.mrb[0].mxu0
        %v1924 = vpop.f32.mrb[0].mxu0
        %v1925 = vadd.f32 %v1828, %v1924
        %v1926 = vpop.f32.mrb[0].mxu0
        %1927 = vdwg.mxu0
        %v1928 = vld [vmem:[%s335] sm:$0x1]
        %v1930 = vlaneseq
        %v1931 = vshrl.u32 %v1930, 7
        %v1932 = vsub.s32 0, %v1931
        %v1933 = vrot.slane %v1928, %v1932
        %v1935 = vadd.f32 %v1866, %v1933
        %v1936 = vadd.f32 %v1869, %v1933
        %v1937 = vadd.f32 %v1874, %v1933
        %v1938 = vadd.f32 %v1877, %v1933
        %v1939 = vadd.f32 %v1882, %v1933
        %v1940 = vadd.f32 %v1885, %v1933
        %v1941 = vadd.f32 %v1890, %v1933
        %v1942 = vadd.f32 %v1893, %v1933
        %v1943 = vadd.f32 %v1898, %v1933
        %v1944 = vadd.f32 %v1901, %v1933
        %v1945 = vadd.f32 %v1906, %v1933
        %v1946 = vadd.f32 %v1909, %v1933
        %v1947 = vadd.f32 %v1914, %v1933
        %v1948 = vadd.f32 %v1917, %v1933
        %v1949 = vadd.f32 %v1922, %v1933
        %v1950 = vadd.f32 %v1925, %v1933
        %1951 = vst [vmem:[%s312] sm:$0xff] %v1935
        %1952 = vst [vmem:[%s312 + $0x8] sm:$0xff] %v1936
        %1953 = vst [vmem:[%s312 + $0x10] sm:$0xff] %v1937
        %1954 = vst [vmem:[%s312 + $0x18] sm:$0xff] %v1938
        %1955 = vst [vmem:[%s312 + $0x20] sm:$0xff] %v1939
        %1956 = vst [vmem:[%s312 + $0x28] sm:$0xff] %v1940
        %1957 = vst [vmem:[%s312 + $0x30] sm:$0xff] %v1941
        %1958 = vst [vmem:[%s312 + $0x38] sm:$0xff] %v1942
        %1959 = vst [vmem:[%s312 + $0x40] sm:$0xff] %v1943
        %1960 = vst [vmem:[%s312 + $0x48] sm:$0xff] %v1944
        %1961 = vst [vmem:[%s312 + $0x50] sm:$0xff] %v1945
        %1962 = vst [vmem:[%s312 + $0x58] sm:$0xff] %v1946
        %1963 = vst [vmem:[%s312 + $0x60] sm:$0xff] %v1947
        %1964 = vst [vmem:[%s312 + $0x68] sm:$0xff] %v1948
        %1965 = vst [vmem:[%s312 + $0x70] sm:$0xff] %v1949
        %1966 = vst [vmem:[%s312 + $0x78] sm:$0xff] %v1950
        %s1967 = sand.u32 %s193, 1
        %s1968 = scalar_lea.sflag [#allocation3], %s1967
        %s1969 = sand.u32 %s193, 1
        %s1970 = smul.addr %s1969, 128
        %s1971 = scalar_lea.vmem [#allocation2], %s1970
        // Predicated region
        $region45: #{inception_gcn_forward.27} parent=43 // pred_check
          %p1972 = pneg %p203
        $region46: #{inception_gcn_forward.27} parent=43 // pred_check_branch
          %1974 = sbr.rel (%p1972) target = $region48
        $region47: #{inception_gcn_forward.27} parent=43 // pred_region
          %s1975 = smul.u32 16, %s24
          %s1977 = ssub.s32 2048, 2048
          %1978 = vsyncadd %s1968, %s1977
          %s1979 = sadd.s32 %s25, %s1975
          %s1980 = smul.addr %s1979, 128
          %s1981 = scalar_lea.hbm %s6, %s1980
          %s1982 = sshll.u32 %s1971, 4
          %s1983 = int_to_ptr.vmem [resolvable:$true] %s1982
          %1988 = dma.vmem_to_hbm [thread:$0]  %s1983, 2048, %s1981, %s1968, 128, 128, 8
        $region48: #{inception_gcn_forward.27} parent=43 // pred_fallthru
          _
      $region44: #{inception_gcn_forward.27} parent=5 // pred_fallthru
        _
      %p1989 = scmp.le.s32.totalorder 2, %s15
      // Predicated region
      $region49: #{inception_gcn_forward.27} parent=5 // pred_check
        %p1990 = pneg %p1989
      $region50: #{inception_gcn_forward.27} parent=5 // pred_check_branch
        %1992 = sbr.rel (%p1990) target = $region52
      $region51: #{inception_gcn_forward.27} parent=5 // pred_region
        %s1993 = ssub.s32 %s15, 2
        // Predicated region
        $region53: #{inception_gcn_forward.27} parent=51 // pred_check
          %p1994 = pneg %p209
        $region54: #{inception_gcn_forward.27} parent=51 // pred_check_branch
          %1996 = sbr.rel (%p1994) target = $region56
        $region55: #{inception_gcn_forward.27} parent=51 // pred_region
          %s1997 = sand.u32 %s194, 1
          %s1998 = scalar_lea.sflag [#allocation3], %s1997
          %s1999 = sand.u32 %s194, 1
          %s2000 = smul.addr %s1999, 128
          %s2001 = scalar_lea.vmem [#allocation2], %s2000
          %2002 = dma.done %s1998, 2048
        $region56: #{inception_gcn_forward.27} parent=51 // pred_fallthru
          _
      $region52: #{inception_gcn_forward.27} parent=5 // pred_fallthru
        _
    $region6: #{inception_gcn_forward.27} parent=1 // loop_footer
      %s19 = sadd.s32 1, %s15
    $region7: #{inception_gcn_forward.27} parent=1 // loop_footer_branch
      %14 = sbr.rel target = $region3
    $region8: #{inception_gcn_forward.27} parent=1 // loop_exit
      _
    %2003 = vsyncpa [#allocation3], 1
    %s2004 = scalar_lea.sflag [#allocation3], 1
    %2005 = vsyncpa %s2004, 1

</llo_original>
